<compile_context>
chip_gen: v6e
topology: v6e:2x2x1
jax: 0.10.0
libtpu: 0.0.40
codegen_flags: <defaults>
</compile_context>

<pallas_src>
import functools

import jax
import jax.numpy as jnp
from jax.experimental import pallas as pl
from jax.experimental.pallas import tpu as pltpu

BN_EPS = 1e-5
VMEM_LIMIT = 32 * 1024 * 1024   # keep 32 MiB: safe headroom on v7x's 64 MiB VMEM


# ------------------------------ Pallas kernel --------------------------------

def _conv_kernel(x_ref, w_ref, b_ref, *rest, taps, row_stride, relu,
                 has_residual):
    """One batch element: out = [relu](sum_t x[row-shifted t] @ w[t] + bias [+ res]).

    x_ref : (1, R, K) bf16   rows = output pixels (+ halo rows), K = tap-packed channels
    w_ref : (taps, K, N) bf16  (BN scale already folded into the weights)
    b_ref : (1, N) f32         (folded BN bias)
    rest  : ([r_ref (1, M, N) bf16,] o_ref (1, M, N) bf16)
    """
    if has_residual:
        r_ref, o_ref = rest
    else:
        (o_ref,) = rest
    M, N = o_ref.shape[1], o_ref.shape[2]

    acc = jnp.zeros((M, N), jnp.float32)
    # Static unroll over the row taps: every slice offset is a Python int, so
    # the loads are plain (possibly sublane-shifted) static VMEM slices.
    for t in range(taps):
        xs = x_ref[0, pl.ds(t * row_stride, M), :]
        acc = acc + jnp.dot(xs, w_ref[t], preferred_element_type=jnp.float32)

    out = acc + b_ref[...]
    if has_residual:
        out = out + r_ref[0].astype(jnp.float32)
    if relu:
        out = jnp.maximum(out, 0.0)
    o_ref[0] = out.astype(o_ref.dtype)


# ------------------------------ Pallas wrapper --------------------------------

def fused_conv(x2d, w, bias, *, taps, row_stride, m_out, relu, residual=None):
    """x2d:(B,R,K) bf16, w:(taps,K,N) bf16, bias:(1,N) f32,
    residual:(B,m_out,N) bf16 | None  ->  (B,m_out,N) bf16."""
    B, R, K = x2d.shape
    assert w.shape[0] == taps and w.shape[1] == K, (w.shape, taps, K)
    assert R == m_out + (taps - 1) * row_stride, (R, m_out, taps, row_stride)
    N = w.shape[-1]

    in_specs = [
        pl.BlockSpec((1, R, K), lambda b: (b, 0, 0)),
        pl.BlockSpec((taps, K, N), lambda b: (0, 0, 0)),
        pl.BlockSpec((1, N), lambda b: (0, 0)),
    ]
    args = [x2d, w, bias]
    if residual is not None:
        in_specs.append(pl.BlockSpec((1, m_out, N), lambda b: (b, 0, 0)))
        args.append(residual)

    kernel = functools.partial(_conv_kernel, taps=taps, row_stride=row_stride,
                               relu=relu, has_residual=residual is not None)

    bytes_accessed = (x2d.size * 2 + w.size * 2 + bias.size * 4
                      + B * m_out * N * 2
                      + (residual.size * 2 if residual is not None else 0))
    cost = pl.CostEstimate(flops=2 * B * m_out * K * N * taps,
                           transcendentals=0,
                           bytes_accessed=int(bytes_accessed))

    return pl.pallas_call(
        kernel,
        grid=(B,),                                 # >=2 steps: dual-TC / pipelining
        in_specs=in_specs,
        out_specs=pl.BlockSpec((1, m_out, N), lambda b: (b, 0, 0)),
        out_shape=jax.ShapeDtypeStruct((B, m_out, N), jnp.bfloat16),
        compiler_params=pltpu.CompilerParams(
            dimension_semantics=("parallel",),
            vmem_limit_bytes=VMEM_LIMIT),
        cost_estimate=cost,
    )(*args)


# -------------------------- activation-side glue ------------------------------

def conv3x3_s1_cols(a, H, W, C):
    """(B,H*W,C) -> (B,(H+2)*W,3*C): halo rows + 3 column taps packed into K.
    Row taps are reduced inside the kernel, so no 9x im2col tensor in HBM."""
    B = a.shape[0]
    x = a.reshape(B, H, W, C)
    xp = jnp.pad(x, ((0, 0), (1, 1), (1, 1), (0, 0)))
    xc = jnp.concatenate([xp[:, :, j:j + W, :] for j in range(3)], axis=-1)
    return xc.reshape(B, (H + 2) * W, 3 * C)


def conv3x3_s2_cols(a, H, W, C):
    """(B,H*W,C) -> (B,Ho*Wo,9*C) for the stride-2 3x3 convs."""
    # TODO(synk): the two stride-2 3x3 convs still build their (tiny,
    # output-sized) 9-tap patch tensor in JAX glue; only the stride-1 convs
    # (the bulk of the activation traffic) got the in-kernel tap reduction.
    B = a.shape[0]
    Ho, Wo = H // 2, W // 2
    x = a.reshape(B, H, W, C)
    xp = jnp.pad(x, ((0, 0), (1, 1), (1, 1), (0, 0)))
    taps = [xp[:, i:i + 2 * Ho:2, j:j + 2 * Wo:2, :]
            for i in range(3) for j in range(3)]
    return jnp.concatenate(taps, axis=-1).reshape(B, Ho * Wo, 9 * C)


def conv1x1_s2_rows(a, H, W, C):
    """(B,H*W,C) -> (B,Ho*Wo,C): spatial subsampling for the 1x1 downsample."""
    B = a.shape[0]
    x = a.reshape(B, H, W, C)
    return x[:, ::2, ::2, :].reshape(B, (H // 2) * (W // 2), C)


# ------------------------------ model forward ---------------------------------

def basic_block_forward(x, H, W, p):
    stride = p['stride']
    C = x.shape[-1]
    Cout = p['conv2_w'].shape[-1]
    Ho, Wo = H // stride, W // stride
    identity = x

    if stride == 1:
        out = fused_conv(conv3x3_s1_cols(x, H, W, C), p['conv1_w'], p['bn1_b'],
                         taps=3, row_stride=W, m_out=H * W, relu=True)
    else:
        out = fused_conv(conv3x3_s2_cols(x, H, W, C), p['conv1_w'], p['bn1_b'],
                         taps=1, row_stride=0, m_out=Ho * Wo, relu=True)

    if stride != 1 or C != Cout:
        # TODO(synk): PyTorch constructs this 1x1 conv + BatchNorm *inside*
        # forward() with fresh random weights / training-mode BN every call;
        # here we use fixed deterministic params and inference-mode BN.
        id_in = conv1x1_s2_rows(identity, H, W, C) if stride != 1 else identity
        identity = fused_conv(id_in, p['down_w'], p['down_bn_b'],
                              taps=1, row_stride=0, m_out=Ho * Wo, relu=False)

    # conv2 + bn2 + residual add + relu fused into one Pallas call; the
    # identity path's kernel output is consumed directly (no slice / re-pad).
    out = fused_conv(conv3x3_s1_cols(out, Ho, Wo, Cout), p['conv2_w'],
                     p['bn2_b'], taps=3, row_stride=Wo, m_out=Ho * Wo,
                     relu=True, residual=identity)
    return out, Ho, Wo


def resnet_forward(prep, x_nchw):
    B, Cin, H, W = x_nchw.shape
    x = (jnp.transpose(x_nchw, (0, 2, 3, 1)).astype(jnp.bfloat16)
         .reshape(B, H * W, Cin))
    x = fused_conv(conv3x3_s1_cols(x, H, W, Cin), prep['conv1_w'],
                   prep['bn1_b'], taps=3, row_stride=W, m_out=H * W, relu=True)
    for blocks in prep['layers']:
        for bp in blocks:
            x, H, W = basic_block_forward(x, H, W, bp)
    # Global average pool + final FC touch a few KB: a pallas_call's launch
    # cost would exceed their compute, so they stay in XLA (per review).
    pooled = jnp.mean(x.astype(jnp.float32), axis=1)          # (B, 64)
    return pooled @ prep['fc_w'] + prep['fc_b']               # (B, num_classes)


# --------------------------------- params -------------------------------------

def init_params(key, num_classes=10):
    keys = iter(jax.random.split(key, 256))

    def nk():
        return next(keys)

    def conv_w(cout, cin, k):
        fan_in = k * k * cin
        return (jax.random.normal(nk(), (k, k, cin, cout), jnp.float32)
                * (2.0 / fan_in) ** 0.5)

    def bn(c):
        gamma = 1.0 + 0.1 * jax.random.normal(nk(), (c,), jnp.float32)
        beta = 0.1 * jax.random.normal(nk(), (c,), jnp.float32)
        mean = jnp.zeros((c,), jnp.float32)      # inference-mode running stats
        var = jnp.ones((c,), jnp.float32)
        scale = gamma * jax.lax.rsqrt(var + BN_EPS)
        return scale, beta - mean * scale

    params = {'conv1_w': conv_w(16, 3, 3)}
    params['bn1_s'], params['bn1_b'] = bn(16)

    layers = []
    in_c = 16
    for out_c, stride0 in ((16, 1), (32, 2), (64, 2)):
        blocks = []
        for bi in range(3):
            s = stride0 if bi == 0 else 1
            bp = {'stride': s, 'conv1_w': conv_w(out_c, in_c, 3)}
            bp['bn1_s'], bp['bn1_b'] = bn(out_c)
            bp['conv2_w'] = conv_w(out_c, out_c, 3)
            bp['bn2_s'], bp['bn2_b'] = bn(out_c)
            if s != 1 or in_c != out_c:
                bp['down_w'] = conv_w(out_c, in_c, 1)
                bp['down_bn_s'], bp['down_bn_b'] = bn(out_c)
            blocks.append(bp)
            in_c = out_c
        layers.append(blocks)
    params['layers'] = layers

    lim = 1.0 / (64 ** 0.5)
    params['fc_w'] = jax.random.uniform(nk(), (64, num_classes), jnp.float32,
                                        -lim, lim)
    params['fc_b'] = jax.random.uniform(nk(), (num_classes,), jnp.float32,
                                        -lim, lim)
    return params


def prepare_params(raw):
    """One-time weight prep (hoisted out of the forward): fold the BN scale
    into the conv weights, reshape to the kernel's (taps, K, Cout) layout,
    cast to bf16; biases become (1, Cout) f32."""

    def fold(w, scale):
        return w * scale.reshape((1,) * (w.ndim - 1) + (-1,))

    def w3x3_s1(w, scale):           # (3,3,Ci,Co) -> (3, 3*Ci, Co): row-tap major
        kh, kw, ci, co = w.shape
        return fold(w, scale).reshape(kh, kw * ci, co).astype(jnp.bfloat16)

    def w_flat(w, scale):            # (kh,kw,Ci,Co) -> (1, kh*kw*Ci, Co)
        kh, kw, ci, co = w.shape
        return fold(w, scale).reshape(1, kh * kw * ci, co).astype(jnp.bfloat16)

    def b(bias):
        return bias.reshape(1, -1).astype(jnp.float32)

    prep = {'conv1_w': w3x3_s1(raw['conv1_w'], raw['bn1_s']),
            'bn1_b': b(raw['bn1_b'])}
    layers = []
    for blocks in raw['layers']:
        pblocks = []
        for bp in blocks:
            s = bp['stride']
            pb = {'stride': s,
                  'conv1_w': (w3x3_s1(bp['conv1_w'], bp['bn1_s']) if s == 1
                              else w_flat(bp['conv1_w'], bp['bn1_s'])),
                  'bn1_b': b(bp['bn1_b']),
                  'conv2_w': w3x3_s1(bp['conv2_w'], bp['bn2_s']),
                  'bn2_b': b(bp['bn2_b'])}
            if 'down_w' in bp:
                pb['down_w'] = w_flat(bp['down_w'], bp['down_bn_s'])
                pb['down_bn_b'] = b(bp['down_bn_b'])
            pblocks.append(pb)
        layers.append(pblocks)
    prep['layers'] = layers
    prep['fc_w'] = raw['fc_w']
    prep['fc_b'] = raw['fc_b']
    return prep


# ------------------------------------ main -------------------------------------

if __name__ == "__main__":
    key = jax.random.PRNGKey(0)
    k_params, k_x = jax.random.split(key)
    raw = init_params(k_params, num_classes=10)
    prep = prepare_params(raw)     # one-time weight prep, outside the forward

    # Small input consistent with the module: NCHW, 3 input channels.
    x = jax.random.normal(k_x, (2, 3, 16, 16), jnp.float32)

    fwd = jax.jit(lambda inp: resnet_forward(prep, inp))
    logits = fwd(x)
    jax.block_until_ready(logits)

    assert logits.shape == (2, 10), logits.shape
    assert bool(jnp.all(jnp.isfinite(logits)))
    print("KERNEL_OK")
</pallas_src>

<mosaic_0001>
module attributes {stable_mosaic.version = 11 : i64} {
  func.func @_conv_kernel(%arg0: i32, %arg1: memref<1x288x9xbf16, #tpu.memory_space<vmem>>, %arg2: memref<3x9x16xbf16, #tpu.memory_space<vmem>>, %arg3: memref<1x16xf32, #tpu.memory_space<vmem>>, %arg4: memref<1x256x16xbf16, #tpu.memory_space<vmem>>) attributes {dimension_semantics = [#tpu.dimension_semantics<parallel>], iteration_bounds = array<i64: 2>, scalar_prefetch = 0 : i64, scratch_operands = 0 : i64, tpu.core_type = #tpu.core_type<tc>, window_params = [{transform_indices = @transform_0, window_bounds = array<i64: 1, 288, 9>}, {pipeline_mode = #tpu.pipeline_mode<synchronous>, transform_indices = @transform_1, window_bounds = array<i64: 3, 9, 16>}, {pipeline_mode = #tpu.pipeline_mode<synchronous>, transform_indices = @transform_2, window_bounds = array<i64: 1, 16>}, {transform_indices = @transform_3, window_bounds = array<i64: 1, 256, 16>}]} {
    %cst = arith.constant 0.000000e+00 : f32
    %0 = vector.broadcast %cst : f32 to vector<256x16xf32>
    %c0 = arith.constant 0 : index
    %c0_0 = arith.constant 0 : index
    %c0_1 = arith.constant 0 : index
    %1 = vector.load %arg1[%c0, %c0_0, %c0_1] : memref<1x288x9xbf16, #tpu.memory_space<vmem>>, vector<1x256x9xbf16>
    %2 = vector.shape_cast %1 : vector<1x256x9xbf16> to vector<256x9xbf16>
    %c0_2 = arith.constant 0 : index
    %c0_3 = arith.constant 0 : index
    %c0_4 = arith.constant 0 : index
    %3 = vector.load %arg2[%c0_2, %c0_3, %c0_4] : memref<3x9x16xbf16, #tpu.memory_space<vmem>>, vector<1x9x16xbf16>
    %4 = vector.shape_cast %3 : vector<1x9x16xbf16> to vector<9x16xbf16>
    %cst_5 = arith.constant dense<0.000000e+00> : vector<256x16xf32>
    %5 = tpu.matmul %2, %4, %cst_5 {dimension_numbers = #tpu.dot_dimension_numbers<[1], [0], [0], [1], [0, 0, 1, 1], [], []>} : vector<256x9xbf16>, vector<9x16xbf16>, vector<256x16xf32> -> vector<256x16xf32>
    %6 = arith.addf %0, %5 : vector<256x16xf32>
    %c0_6 = arith.constant 0 : index
    %c16 = arith.constant 16 : index
    %c0_7 = arith.constant 0 : index
    %7 = vector.load %arg1[%c0_6, %c16, %c0_7] : memref<1x288x9xbf16, #tpu.memory_space<vmem>>, vector<1x256x9xbf16>
    %8 = vector.shape_cast %7 : vector<1x256x9xbf16> to vector<256x9xbf16>
    %c1 = arith.constant 1 : index
    %c0_8 = arith.constant 0 : index
    %c0_9 = arith.constant 0 : index
    %9 = vector.load %arg2[%c1, %c0_8, %c0_9] : memref<3x9x16xbf16, #tpu.memory_space<vmem>>, vector<1x9x16xbf16>
    %10 = vector.shape_cast %9 : vector<1x9x16xbf16> to vector<9x16xbf16>
    %cst_10 = arith.constant dense<0.000000e+00> : vector<256x16xf32>
    %11 = tpu.matmul %8, %10, %cst_10 {dimension_numbers = #tpu.dot_dimension_numbers<[1], [0], [0], [1], [0, 0, 1, 1], [], []>} : vector<256x9xbf16>, vector<9x16xbf16>, vector<256x16xf32> -> vector<256x16xf32>
    %12 = arith.addf %6, %11 : vector<256x16xf32>
    %c0_11 = arith.constant 0 : index
    %c32 = arith.constant 32 : index
    %c0_12 = arith.constant 0 : index
    %13 = vector.load %arg1[%c0_11, %c32, %c0_12] : memref<1x288x9xbf16, #tpu.memory_space<vmem>>, vector<1x256x9xbf16>
    %14 = vector.shape_cast %13 : vector<1x256x9xbf16> to vector<256x9xbf16>
    %c2 = arith.constant 2 : index
    %c0_13 = arith.constant 0 : index
    %c0_14 = arith.constant 0 : index
    %15 = vector.load %arg2[%c2, %c0_13, %c0_14] : memref<3x9x16xbf16, #tpu.memory_space<vmem>>, vector<1x9x16xbf16>
    %16 = vector.shape_cast %15 : vector<1x9x16xbf16> to vector<9x16xbf16>
    %cst_15 = arith.constant dense<0.000000e+00> : vector<256x16xf32>
    %17 = tpu.matmul %14, %16, %cst_15 {dimension_numbers = #tpu.dot_dimension_numbers<[1], [0], [0], [1], [0, 0, 1, 1], [], []>} : vector<256x9xbf16>, vector<9x16xbf16>, vector<256x16xf32> -> vector<256x16xf32>
    %18 = arith.addf %12, %17 : vector<256x16xf32>
    %c0_16 = arith.constant 0 : index
    %c0_17 = arith.constant 0 : index
    %19 = vector.load %arg3[%c0_16, %c0_17] : memref<1x16xf32, #tpu.memory_space<vmem>>, vector<1x16xf32>
    %20 = vector.broadcast %19 : vector<1x16xf32> to vector<256x16xf32>
    %21 = arith.addf %18, %20 : vector<256x16xf32>
    %cst_18 = arith.constant 0.000000e+00 : f32
    %22 = vector.broadcast %cst_18 : f32 to vector<256x16xf32>
    %23 = arith.maximumf %21, %22 : vector<256x16xf32>
    %24 = arith.truncf %23 : vector<256x16xf32> to vector<256x16xbf16>
    %c0_19 = arith.constant 0 : index
    %c0_20 = arith.constant 0 : index
    %c0_21 = arith.constant 0 : index
    %25 = vector.load %arg4[%c0_19, %c0_20, %c0_21] : memref<1x256x16xbf16, #tpu.memory_space<vmem>>, vector<1x256x16xbf16>
    %26 = vector.shape_cast %25 : vector<1x256x16xbf16> to vector<256x16xbf16>
    %27 = vector.shape_cast %24 : vector<256x16xbf16> to vector<1x256x16xbf16>
    tpu.vector_store %arg4[%c0_19, %c0_20, %c0_21], %27 {strides = array<i32>} : memref<1x256x16xbf16, #tpu.memory_space<vmem>>, vector<1x256x16xbf16>,
    return
  }
  func.func @transform_0(%arg0: i32) -> (i32, i32, i32) {
    %c0_i32 = arith.constant 0 : i32
    %c0_i32_0 = arith.constant 0 : i32
    %c0_i32_1 = arith.constant 0 : i32
    return %arg0, %c0_i32, %c0_i32_0 : i32, i32, i32
  }
  func.func @transform_1(%arg0: i32) -> (i32, i32, i32) {
    %c0_i32 = arith.constant 0 : i32
    %c0_i32_0 = arith.constant 0 : i32
    %c0_i32_1 = arith.constant 0 : i32
    %c0_i32_2 = arith.constant 0 : i32
    return %c0_i32, %c0_i32_0, %c0_i32_1 : i32, i32, i32
  }
  func.func @transform_2(%arg0: i32) -> (i32, i32) {
    %c0_i32 = arith.constant 0 : i32
    %c0_i32_0 = arith.constant 0 : i32
    %c0_i32_1 = arith.constant 0 : i32
    return %c0_i32, %c0_i32_0 : i32, i32
  }
  func.func @transform_3(%arg0: i32) -> (i32, i32, i32) {
    %c0_i32 = arith.constant 0 : i32
    %c0_i32_0 = arith.constant 0 : i32
    %c0_i32_1 = arith.constant 0 : i32
    return %arg0, %c0_i32, %c0_i32_0 : i32, i32, i32
  }
}

module attributes {stable_mosaic.version = 11 : i64} {
  func.func @_conv_kernel(%arg0: i32, %arg1: memref<1x288x48xbf16, #tpu.memory_space<vmem>>, %arg2: memref<3x48x16xbf16, #tpu.memory_space<vmem>>, %arg3: memref<1x16xf32, #tpu.memory_space<vmem>>, %arg4: memref<1x256x16xbf16, #tpu.memory_space<vmem>>) attributes {dimension_semantics = [#tpu.dimension_semantics<parallel>], iteration_bounds = array<i64: 2>, scalar_prefetch = 0 : i64, scratch_operands = 0 : i64, tpu.core_type = #tpu.core_type<tc>, window_params = [{transform_indices = @transform_0, window_bounds = array<i64: 1, 288, 48>}, {pipeline_mode = #tpu.pipeline_mode<synchronous>, transform_indices = @transform_1, window_bounds = array<i64: 3, 48, 16>}, {pipeline_mode = #tpu.pipeline_mode<synchronous>, transform_indices = @transform_2, window_bounds = array<i64: 1, 16>}, {transform_indices = @transform_3, window_bounds = array<i64: 1, 256, 16>}]} {
    %cst = arith.constant 0.000000e+00 : f32
    %0 = vector.broadcast %cst : f32 to vector<256x16xf32>
    %c0 = arith.constant 0 : index
    %c0_0 = arith.constant 0 : index
    %c0_1 = arith.constant 0 : index
    %1 = vector.load %arg1[%c0, %c0_0, %c0_1] : memref<1x288x48xbf16, #tpu.memory_space<vmem>>, vector<1x256x48xbf16>
    %2 = vector.shape_cast %1 : vector<1x256x48xbf16> to vector<256x48xbf16>
    %c0_2 = arith.constant 0 : index
    %c0_3 = arith.constant 0 : index
    %c0_4 = arith.constant 0 : index
    %3 = vector.load %arg2[%c0_2, %c0_3, %c0_4] : memref<3x48x16xbf16, #tpu.memory_space<vmem>>, vector<1x48x16xbf16>
    %4 = vector.shape_cast %3 : vector<1x48x16xbf16> to vector<48x16xbf16>
    %cst_5 = arith.constant dense<0.000000e+00> : vector<256x16xf32>
    %5 = tpu.matmul %2, %4, %cst_5 {dimension_numbers = #tpu.dot_dimension_numbers<[1], [0], [0], [1], [0, 0, 1, 1], [], []>} : vector<256x48xbf16>, vector<48x16xbf16>, vector<256x16xf32> -> vector<256x16xf32>
    %6 = arith.addf %0, %5 : vector<256x16xf32>
    %c0_6 = arith.constant 0 : index
    %c16 = arith.constant 16 : index
    %c0_7 = arith.constant 0 : index
    %7 = vector.load %arg1[%c0_6, %c16, %c0_7] : memref<1x288x48xbf16, #tpu.memory_space<vmem>>, vector<1x256x48xbf16>
    %8 = vector.shape_cast %7 : vector<1x256x48xbf16> to vector<256x48xbf16>
    %c1 = arith.constant 1 : index
    %c0_8 = arith.constant 0 : index
    %c0_9 = arith.constant 0 : index
    %9 = vector.load %arg2[%c1, %c0_8, %c0_9] : memref<3x48x16xbf16, #tpu.memory_space<vmem>>, vector<1x48x16xbf16>
    %10 = vector.shape_cast %9 : vector<1x48x16xbf16> to vector<48x16xbf16>
    %cst_10 = arith.constant dense<0.000000e+00> : vector<256x16xf32>
    %11 = tpu.matmul %8, %10, %cst_10 {dimension_numbers = #tpu.dot_dimension_numbers<[1], [0], [0], [1], [0, 0, 1, 1], [], []>} : vector<256x48xbf16>, vector<48x16xbf16>, vector<256x16xf32> -> vector<256x16xf32>
    %12 = arith.addf %6, %11 : vector<256x16xf32>
    %c0_11 = arith.constant 0 : index
    %c32 = arith.constant 32 : index
    %c0_12 = arith.constant 0 : index
    %13 = vector.load %arg1[%c0_11, %c32, %c0_12] : memref<1x288x48xbf16, #tpu.memory_space<vmem>>, vector<1x256x48xbf16>
    %14 = vector.shape_cast %13 : vector<1x256x48xbf16> to vector<256x48xbf16>
    %c2 = arith.constant 2 : index
    %c0_13 = arith.constant 0 : index
    %c0_14 = arith.constant 0 : index
    %15 = vector.load %arg2[%c2, %c0_13, %c0_14] : memref<3x48x16xbf16, #tpu.memory_space<vmem>>, vector<1x48x16xbf16>
    %16 = vector.shape_cast %15 : vector<1x48x16xbf16> to vector<48x16xbf16>
    %cst_15 = arith.constant dense<0.000000e+00> : vector<256x16xf32>
    %17 = tpu.matmul %14, %16, %cst_15 {dimension_numbers = #tpu.dot_dimension_numbers<[1], [0], [0], [1], [0, 0, 1, 1], [], []>} : vector<256x48xbf16>, vector<48x16xbf16>, vector<256x16xf32> -> vector<256x16xf32>
    %18 = arith.addf %12, %17 : vector<256x16xf32>
    %c0_16 = arith.constant 0 : index
    %c0_17 = arith.constant 0 : index
    %19 = vector.load %arg3[%c0_16, %c0_17] : memref<1x16xf32, #tpu.memory_space<vmem>>, vector<1x16xf32>
    %20 = vector.broadcast %19 : vector<1x16xf32> to vector<256x16xf32>
    %21 = arith.addf %18, %20 : vector<256x16xf32>
    %cst_18 = arith.constant 0.000000e+00 : f32
    %22 = vector.broadcast %cst_18 : f32 to vector<256x16xf32>
    %23 = arith.maximumf %21, %22 : vector<256x16xf32>
    %24 = arith.truncf %23 : vector<256x16xf32> to vector<256x16xbf16>
    %c0_19 = arith.constant 0 : index
    %c0_20 = arith.constant 0 : index
    %c0_21 = arith.constant 0 : index
    %25 = vector.load %arg4[%c0_19, %c0_20, %c0_21] : memref<1x256x16xbf16, #tpu.memory_space<vmem>>, vector<1x256x16xbf16>
    %26 = vector.shape_cast %25 : vector<1x256x16xbf16> to vector<256x16xbf16>
    %27 = vector.shape_cast %24 : vector<256x16xbf16> to vector<1x256x16xbf16>
    tpu.vector_store %arg4[%c0_19, %c0_20, %c0_21], %27 {strides = array<i32>} : memref<1x256x16xbf16, #tpu.memory_space<vmem>>, vector<1x256x16xbf16>,
    return
  }
  func.func @transform_0(%arg0: i32) -> (i32, i32, i32) {
    %c0_i32 = arith.constant 0 : i32
    %c0_i32_0 = arith.constant 0 : i32
    %c0_i32_1 = arith.constant 0 : i32
    return %arg0, %c0_i32, %c0_i32_0 : i32, i32, i32
  }
  func.func @transform_1(%arg0: i32) -> (i32, i32, i32) {
    %c0_i32 = arith.constant 0 : i32
    %c0_i32_0 = arith.constant 0 : i32
    %c0_i32_1 = arith.constant 0 : i32
    %c0_i32_2 = arith.constant 0 : i32
    return %c0_i32, %c0_i32_0, %c0_i32_1 : i32, i32, i32
  }
  func.func @transform_2(%arg0: i32) -> (i32, i32) {
    %c0_i32 = arith.constant 0 : i32
    %c0_i32_0 = arith.constant 0 : i32
    %c0_i32_1 = arith.constant 0 : i32
    return %c0_i32, %c0_i32_0 : i32, i32
  }
  func.func @transform_3(%arg0: i32) -> (i32, i32, i32) {
    %c0_i32 = arith.constant 0 : i32
    %c0_i32_0 = arith.constant 0 : i32
    %c0_i32_1 = arith.constant 0 : i32
    return %arg0, %c0_i32, %c0_i32_0 : i32, i32, i32
  }
}

module attributes {stable_mosaic.version = 11 : i64} {
  func.func @_conv_kernel(%arg0: i32, %arg1: memref<1x288x48xbf16, #tpu.memory_space<vmem>>, %arg2: memref<3x48x16xbf16, #tpu.memory_space<vmem>>, %arg3: memref<1x16xf32, #tpu.memory_space<vmem>>, %arg4: memref<1x256x16xbf16, #tpu.memory_space<vmem>>, %arg5: memref<1x256x16xbf16, #tpu.memory_space<vmem>>) attributes {dimension_semantics = [#tpu.dimension_semantics<parallel>], iteration_bounds = array<i64: 2>, scalar_prefetch = 0 : i64, scratch_operands = 0 : i64, tpu.core_type = #tpu.core_type<tc>, window_params = [{transform_indices = @transform_0, window_bounds = array<i64: 1, 288, 48>}, {pipeline_mode = #tpu.pipeline_mode<synchronous>, transform_indices = @transform_1, window_bounds = array<i64: 3, 48, 16>}, {pipeline_mode = #tpu.pipeline_mode<synchronous>, transform_indices = @transform_2, window_bounds = array<i64: 1, 16>}, {transform_indices = @transform_3, window_bounds = array<i64: 1, 256, 16>}, {transform_indices = @transform_4, window_bounds = array<i64: 1, 256, 16>}]} {
    %cst = arith.constant 0.000000e+00 : f32
    %0 = vector.broadcast %cst : f32 to vector<256x16xf32>
    %c0 = arith.constant 0 : index
    %c0_0 = arith.constant 0 : index
    %c0_1 = arith.constant 0 : index
    %1 = vector.load %arg1[%c0, %c0_0, %c0_1] : memref<1x288x48xbf16, #tpu.memory_space<vmem>>, vector<1x256x48xbf16>
    %2 = vector.shape_cast %1 : vector<1x256x48xbf16> to vector<256x48xbf16>
    %c0_2 = arith.constant 0 : index
    %c0_3 = arith.constant 0 : index
    %c0_4 = arith.constant 0 : index
    %3 = vector.load %arg2[%c0_2, %c0_3, %c0_4] : memref<3x48x16xbf16, #tpu.memory_space<vmem>>, vector<1x48x16xbf16>
    %4 = vector.shape_cast %3 : vector<1x48x16xbf16> to vector<48x16xbf16>
    %cst_5 = arith.constant dense<0.000000e+00> : vector<256x16xf32>
    %5 = tpu.matmul %2, %4, %cst_5 {dimension_numbers = #tpu.dot_dimension_numbers<[1], [0], [0], [1], [0, 0, 1, 1], [], []>} : vector<256x48xbf16>, vector<48x16xbf16>, vector<256x16xf32> -> vector<256x16xf32>
    %6 = arith.addf %0, %5 : vector<256x16xf32>
    %c0_6 = arith.constant 0 : index
    %c16 = arith.constant 16 : index
    %c0_7 = arith.constant 0 : index
    %7 = vector.load %arg1[%c0_6, %c16, %c0_7] : memref<1x288x48xbf16, #tpu.memory_space<vmem>>, vector<1x256x48xbf16>
    %8 = vector.shape_cast %7 : vector<1x256x48xbf16> to vector<256x48xbf16>
    %c1 = arith.constant 1 : index
    %c0_8 = arith.constant 0 : index
    %c0_9 = arith.constant 0 : index
    %9 = vector.load %arg2[%c1, %c0_8, %c0_9] : memref<3x48x16xbf16, #tpu.memory_space<vmem>>, vector<1x48x16xbf16>
    %10 = vector.shape_cast %9 : vector<1x48x16xbf16> to vector<48x16xbf16>
    %cst_10 = arith.constant dense<0.000000e+00> : vector<256x16xf32>
    %11 = tpu.matmul %8, %10, %cst_10 {dimension_numbers = #tpu.dot_dimension_numbers<[1], [0], [0], [1], [0, 0, 1, 1], [], []>} : vector<256x48xbf16>, vector<48x16xbf16>, vector<256x16xf32> -> vector<256x16xf32>
    %12 = arith.addf %6, %11 : vector<256x16xf32>
    %c0_11 = arith.constant 0 : index
    %c32 = arith.constant 32 : index
    %c0_12 = arith.constant 0 : index
    %13 = vector.load %arg1[%c0_11, %c32, %c0_12] : memref<1x288x48xbf16, #tpu.memory_space<vmem>>, vector<1x256x48xbf16>
    %14 = vector.shape_cast %13 : vector<1x256x48xbf16> to vector<256x48xbf16>
    %c2 = arith.constant 2 : index
    %c0_13 = arith.constant 0 : index
    %c0_14 = arith.constant 0 : index
    %15 = vector.load %arg2[%c2, %c0_13, %c0_14] : memref<3x48x16xbf16, #tpu.memory_space<vmem>>, vector<1x48x16xbf16>
    %16 = vector.shape_cast %15 : vector<1x48x16xbf16> to vector<48x16xbf16>
    %cst_15 = arith.constant dense<0.000000e+00> : vector<256x16xf32>
    %17 = tpu.matmul %14, %16, %cst_15 {dimension_numbers = #tpu.dot_dimension_numbers<[1], [0], [0], [1], [0, 0, 1, 1], [], []>} : vector<256x48xbf16>, vector<48x16xbf16>, vector<256x16xf32> -> vector<256x16xf32>
    %18 = arith.addf %12, %17 : vector<256x16xf32>
    %c0_16 = arith.constant 0 : index
    %c0_17 = arith.constant 0 : index
    %19 = vector.load %arg3[%c0_16, %c0_17] : memref<1x16xf32, #tpu.memory_space<vmem>>, vector<1x16xf32>
    %20 = vector.broadcast %19 : vector<1x16xf32> to vector<256x16xf32>
    %21 = arith.addf %18, %20 : vector<256x16xf32>
    %c0_18 = arith.constant 0 : index
    %c0_19 = arith.constant 0 : index
    %c0_20 = arith.constant 0 : index
    %22 = vector.load %arg4[%c0_18, %c0_19, %c0_20] : memref<1x256x16xbf16, #tpu.memory_space<vmem>>, vector<1x256x16xbf16>
    %23 = vector.shape_cast %22 : vector<1x256x16xbf16> to vector<256x16xbf16>
    %24 = arith.extf %23 : vector<256x16xbf16> to vector<256x16xf32>
    %25 = arith.addf %21, %24 : vector<256x16xf32>
    %cst_21 = arith.constant 0.000000e+00 : f32
    %26 = vector.broadcast %cst_21 : f32 to vector<256x16xf32>
    %27 = arith.maximumf %25, %26 : vector<256x16xf32>
    %28 = arith.truncf %27 : vector<256x16xf32> to vector<256x16xbf16>
    %c0_22 = arith.constant 0 : index
    %c0_23 = arith.constant 0 : index
    %c0_24 = arith.constant 0 : index
    %29 = vector.load %arg5[%c0_22, %c0_23, %c0_24] : memref<1x256x16xbf16, #tpu.memory_space<vmem>>, vector<1x256x16xbf16>
    %30 = vector.shape_cast %29 : vector<1x256x16xbf16> to vector<256x16xbf16>
    %31 = vector.shape_cast %28 : vector<256x16xbf16> to vector<1x256x16xbf16>
    tpu.vector_store %arg5[%c0_22, %c0_23, %c0_24], %31 {strides = array<i32>} : memref<1x256x16xbf16, #tpu.memory_space<vmem>>, vector<1x256x16xbf16>,
    return
  }
  func.func @transform_0(%arg0: i32) -> (i32, i32, i32) {
    %c0_i32 = arith.constant 0 : i32
    %c0_i32_0 = arith.constant 0 : i32
    %c0_i32_1 = arith.constant 0 : i32
    return %arg0, %c0_i32, %c0_i32_0 : i32, i32, i32
  }
  func.func @transform_1(%arg0: i32) -> (i32, i32, i32) {
    %c0_i32 = arith.constant 0 : i32
    %c0_i32_0 = arith.constant 0 : i32
    %c0_i32_1 = arith.constant 0 : i32
    %c0_i32_2 = arith.constant 0 : i32
    return %c0_i32, %c0_i32_0, %c0_i32_1 : i32, i32, i32
  }
  func.func @transform_2(%arg0: i32) -> (i32, i32) {
    %c0_i32 = arith.constant 0 : i32
    %c0_i32_0 = arith.constant 0 : i32
    %c0_i32_1 = arith.constant 0 : i32
    return %c0_i32, %c0_i32_0 : i32, i32
  }
  func.func @transform_3(%arg0: i32) -> (i32, i32, i32) {
    %c0_i32 = arith.constant 0 : i32
    %c0_i32_0 = arith.constant 0 : i32
    %c0_i32_1 = arith.constant 0 : i32
    return %arg0, %c0_i32, %c0_i32_0 : i32, i32, i32
  }
  func.func @transform_4(%arg0: i32) -> (i32, i32, i32) {
    %c0_i32 = arith.constant 0 : i32
    %c0_i32_0 = arith.constant 0 : i32
    %c0_i32_1 = arith.constant 0 : i32
    return %arg0, %c0_i32, %c0_i32_0 : i32, i32, i32
  }
}

module attributes {stable_mosaic.version = 11 : i64} {
  func.func @_conv_kernel(%arg0: i32, %arg1: memref<1x64x16xbf16, #tpu.memory_space<vmem>>, %arg2: memref<1x16x32xbf16, #tpu.memory_space<vmem>>, %arg3: memref<1x32xf32, #tpu.memory_space<vmem>>, %arg4: memref<1x64x32xbf16, #tpu.memory_space<vmem>>) attributes {dimension_semantics = [#tpu.dimension_semantics<parallel>], iteration_bounds = array<i64: 2>, scalar_prefetch = 0 : i64, scratch_operands = 0 : i64, tpu.core_type = #tpu.core_type<tc>, window_params = [{transform_indices = @transform_0, window_bounds = array<i64: 1, 64, 16>}, {pipeline_mode = #tpu.pipeline_mode<synchronous>, transform_indices = @transform_1, window_bounds = array<i64: 1, 16, 32>}, {pipeline_mode = #tpu.pipeline_mode<synchronous>, transform_indices = @transform_2, window_bounds = array<i64: 1, 32>}, {transform_indices = @transform_3, window_bounds = array<i64: 1, 64, 32>}]} {
    %cst = arith.constant 0.000000e+00 : f32
    %0 = vector.broadcast %cst : f32 to vector<64x32xf32>
    %c0 = arith.constant 0 : index
    %c0_0 = arith.constant 0 : index
    %c0_1 = arith.constant 0 : index
    %1 = vector.load %arg1[%c0, %c0_0, %c0_1] : memref<1x64x16xbf16, #tpu.memory_space<vmem>>, vector<1x64x16xbf16>
    %2 = vector.shape_cast %1 : vector<1x64x16xbf16> to vector<64x16xbf16>
    %c0_2 = arith.constant 0 : index
    %c0_3 = arith.constant 0 : index
    %c0_4 = arith.constant 0 : index
    %3 = vector.load %arg2[%c0_2, %c0_3, %c0_4] : memref<1x16x32xbf16, #tpu.memory_space<vmem>>, vector<1x16x32xbf16>
    %4 = vector.shape_cast %3 : vector<1x16x32xbf16> to vector<16x32xbf16>
    %cst_5 = arith.constant dense<0.000000e+00> : vector<64x32xf32>
    %5 = tpu.matmul %2, %4, %cst_5 {dimension_numbers = #tpu.dot_dimension_numbers<[1], [0], [0], [1], [0, 0, 1, 1], [], []>} : vector<64x16xbf16>, vector<16x32xbf16>, vector<64x32xf32> -> vector<64x32xf32>
    %6 = arith.addf %0, %5 : vector<64x32xf32>
    %c0_6 = arith.constant 0 : index
    %c0_7 = arith.constant 0 : index
    %7 = vector.load %arg3[%c0_6, %c0_7] : memref<1x32xf32, #tpu.memory_space<vmem>>, vector<1x32xf32>
    %8 = vector.broadcast %7 : vector<1x32xf32> to vector<64x32xf32>
    %9 = arith.addf %6, %8 : vector<64x32xf32>
    %10 = arith.truncf %9 : vector<64x32xf32> to vector<64x32xbf16>
    %c0_8 = arith.constant 0 : index
    %c0_9 = arith.constant 0 : index
    %c0_10 = arith.constant 0 : index
    %11 = vector.load %arg4[%c0_8, %c0_9, %c0_10] : memref<1x64x32xbf16, #tpu.memory_space<vmem>>, vector<1x64x32xbf16>
    %12 = vector.shape_cast %11 : vector<1x64x32xbf16> to vector<64x32xbf16>
    %13 = vector.shape_cast %10 : vector<64x32xbf16> to vector<1x64x32xbf16>
    tpu.vector_store %arg4[%c0_8, %c0_9, %c0_10], %13 {strides = array<i32>} : memref<1x64x32xbf16, #tpu.memory_space<vmem>>, vector<1x64x32xbf16>,
    return
  }
  func.func @transform_0(%arg0: i32) -> (i32, i32, i32) {
    %c0_i32 = arith.constant 0 : i32
    %c0_i32_0 = arith.constant 0 : i32
    %c0_i32_1 = arith.constant 0 : i32
    return %arg0, %c0_i32, %c0_i32_0 : i32, i32, i32
  }
  func.func @transform_1(%arg0: i32) -> (i32, i32, i32) {
    %c0_i32 = arith.constant 0 : i32
    %c0_i32_0 = arith.constant 0 : i32
    %c0_i32_1 = arith.constant 0 : i32
    %c0_i32_2 = arith.constant 0 : i32
    return %c0_i32, %c0_i32_0, %c0_i32_1 : i32, i32, i32
  }
  func.func @transform_2(%arg0: i32) -> (i32, i32) {
    %c0_i32 = arith.constant 0 : i32
    %c0_i32_0 = arith.constant 0 : i32
    %c0_i32_1 = arith.constant 0 : i32
    return %c0_i32, %c0_i32_0 : i32, i32
  }
  func.func @transform_3(%arg0: i32) -> (i32, i32, i32) {
    %c0_i32 = arith.constant 0 : i32
    %c0_i32_0 = arith.constant 0 : i32
    %c0_i32_1 = arith.constant 0 : i32
    return %arg0, %c0_i32, %c0_i32_0 : i32, i32, i32
  }
}

module attributes {stable_mosaic.version = 11 : i64} {
  func.func @_conv_kernel(%arg0: i32, %arg1: memref<1x64x144xbf16, #tpu.memory_space<vmem>>, %arg2: memref<1x144x32xbf16, #tpu.memory_space<vmem>>, %arg3: memref<1x32xf32, #tpu.memory_space<vmem>>, %arg4: memref<1x64x32xbf16, #tpu.memory_space<vmem>>) attributes {dimension_semantics = [#tpu.dimension_semantics<parallel>], iteration_bounds = array<i64: 2>, scalar_prefetch = 0 : i64, scratch_operands = 0 : i64, tpu.core_type = #tpu.core_type<tc>, window_params = [{transform_indices = @transform_0, window_bounds = array<i64: 1, 64, 144>}, {pipeline_mode = #tpu.pipeline_mode<synchronous>, transform_indices = @transform_1, window_bounds = array<i64: 1, 144, 32>}, {pipeline_mode = #tpu.pipeline_mode<synchronous>, transform_indices = @transform_2, window_bounds = array<i64: 1, 32>}, {transform_indices = @transform_3, window_bounds = array<i64: 1, 64, 32>}]} {
    %cst = arith.constant 0.000000e+00 : f32
    %0 = vector.broadcast %cst : f32 to vector<64x32xf32>
    %c0 = arith.constant 0 : index
    %c0_0 = arith.constant 0 : index
    %c0_1 = arith.constant 0 : index
    %1 = vector.load %arg1[%c0, %c0_0, %c0_1] : memref<1x64x144xbf16, #tpu.memory_space<vmem>>, vector<1x64x144xbf16>
    %2 = vector.shape_cast %1 : vector<1x64x144xbf16> to vector<64x144xbf16>
    %c0_2 = arith.constant 0 : index
    %c0_3 = arith.constant 0 : index
    %c0_4 = arith.constant 0 : index
    %3 = vector.load %arg2[%c0_2, %c0_3, %c0_4] : memref<1x144x32xbf16, #tpu.memory_space<vmem>>, vector<1x144x32xbf16>
    %4 = vector.shape_cast %3 : vector<1x144x32xbf16> to vector<144x32xbf16>
    %cst_5 = arith.constant dense<0.000000e+00> : vector<64x32xf32>
    %5 = tpu.matmul %2, %4, %cst_5 {dimension_numbers = #tpu.dot_dimension_numbers<[1], [0], [0], [1], [0, 0, 1, 1], [], []>} : vector<64x144xbf16>, vector<144x32xbf16>, vector<64x32xf32> -> vector<64x32xf32>
    %6 = arith.addf %0, %5 : vector<64x32xf32>
    %c0_6 = arith.constant 0 : index
    %c0_7 = arith.constant 0 : index
    %7 = vector.load %arg3[%c0_6, %c0_7] : memref<1x32xf32, #tpu.memory_space<vmem>>, vector<1x32xf32>
    %8 = vector.broadcast %7 : vector<1x32xf32> to vector<64x32xf32>
    %9 = arith.addf %6, %8 : vector<64x32xf32>
    %cst_8 = arith.constant 0.000000e+00 : f32
    %10 = vector.broadcast %cst_8 : f32 to vector<64x32xf32>
    %11 = arith.maximumf %9, %10 : vector<64x32xf32>
    %12 = arith.truncf %11 : vector<64x32xf32> to vector<64x32xbf16>
    %c0_9 = arith.constant 0 : index
    %c0_10 = arith.constant 0 : index
    %c0_11 = arith.constant 0 : index
    %13 = vector.load %arg4[%c0_9, %c0_10, %c0_11] : memref<1x64x32xbf16, #tpu.memory_space<vmem>>, vector<1x64x32xbf16>
    %14 = vector.shape_cast %13 : vector<1x64x32xbf16> to vector<64x32xbf16>
    %15 = vector.shape_cast %12 : vector<64x32xbf16> to vector<1x64x32xbf16>
    tpu.vector_store %arg4[%c0_9, %c0_10, %c0_11], %15 {strides = array<i32>} : memref<1x64x32xbf16, #tpu.memory_space<vmem>>, vector<1x64x32xbf16>,
    return
  }
  func.func @transform_0(%arg0: i32) -> (i32, i32, i32) {
    %c0_i32 = arith.constant 0 : i32
    %c0_i32_0 = arith.constant 0 : i32
    %c0_i32_1 = arith.constant 0 : i32
    return %arg0, %c0_i32, %c0_i32_0 : i32, i32, i32
  }
  func.func @transform_1(%arg0: i32) -> (i32, i32, i32) {
    %c0_i32 = arith.constant 0 : i32
    %c0_i32_0 = arith.constant 0 : i32
    %c0_i32_1 = arith.constant 0 : i32
    %c0_i32_2 = arith.constant 0 : i32
    return %c0_i32, %c0_i32_0, %c0_i32_1 : i32, i32, i32
  }
  func.func @transform_2(%arg0: i32) -> (i32, i32) {
    %c0_i32 = arith.constant 0 : i32
    %c0_i32_0 = arith.constant 0 : i32
    %c0_i32_1 = arith.constant 0 : i32
    return %c0_i32, %c0_i32_0 : i32, i32
  }
  func.func @transform_3(%arg0: i32) -> (i32, i32, i32) {
    %c0_i32 = arith.constant 0 : i32
    %c0_i32_0 = arith.constant 0 : i32
    %c0_i32_1 = arith.constant 0 : i32
    return %arg0, %c0_i32, %c0_i32_0 : i32, i32, i32
  }
}

module attributes {stable_mosaic.version = 11 : i64} {
  func.func @_conv_kernel(%arg0: i32, %arg1: memref<1x80x96xbf16, #tpu.memory_space<vmem>>, %arg2: memref<3x96x32xbf16, #tpu.memory_space<vmem>>, %arg3: memref<1x32xf32, #tpu.memory_space<vmem>>, %arg4: memref<1x64x32xbf16, #tpu.memory_space<vmem>>) attributes {dimension_semantics = [#tpu.dimension_semantics<parallel>], iteration_bounds = array<i64: 2>, scalar_prefetch = 0 : i64, scratch_operands = 0 : i64, tpu.core_type = #tpu.core_type<tc>, window_params = [{transform_indices = @transform_0, window_bounds = array<i64: 1, 80, 96>}, {pipeline_mode = #tpu.pipeline_mode<synchronous>, transform_indices = @transform_1, window_bounds = array<i64: 3, 96, 32>}, {pipeline_mode = #tpu.pipeline_mode<synchronous>, transform_indices = @transform_2, window_bounds = array<i64: 1, 32>}, {transform_indices = @transform_3, window_bounds = array<i64: 1, 64, 32>}]} {
    %cst = arith.constant 0.000000e+00 : f32
    %0 = vector.broadcast %cst : f32 to vector<64x32xf32>
    %c0 = arith.constant 0 : index
    %c0_0 = arith.constant 0 : index
    %c0_1 = arith.constant 0 : index
    %1 = vector.load %arg1[%c0, %c0_0, %c0_1] : memref<1x80x96xbf16, #tpu.memory_space<vmem>>, vector<1x64x96xbf16>
    %2 = vector.shape_cast %1 : vector<1x64x96xbf16> to vector<64x96xbf16>
    %c0_2 = arith.constant 0 : index
    %c0_3 = arith.constant 0 : index
    %c0_4 = arith.constant 0 : index
    %3 = vector.load %arg2[%c0_2, %c0_3, %c0_4] : memref<3x96x32xbf16, #tpu.memory_space<vmem>>, vector<1x96x32xbf16>
    %4 = vector.shape_cast %3 : vector<1x96x32xbf16> to vector<96x32xbf16>
    %cst_5 = arith.constant dense<0.000000e+00> : vector<64x32xf32>
    %5 = tpu.matmul %2, %4, %cst_5 {dimension_numbers = #tpu.dot_dimension_numbers<[1], [0], [0], [1], [0, 0, 1, 1], [], []>} : vector<64x96xbf16>, vector<96x32xbf16>, vector<64x32xf32> -> vector<64x32xf32>
    %6 = arith.addf %0, %5 : vector<64x32xf32>
    %c0_6 = arith.constant 0 : index
    %c8 = arith.constant 8 : index
    %c0_7 = arith.constant 0 : index
    %7 = vector.load %arg1[%c0_6, %c8, %c0_7] : memref<1x80x96xbf16, #tpu.memory_space<vmem>>, vector<1x64x96xbf16>
    %8 = vector.shape_cast %7 : vector<1x64x96xbf16> to vector<64x96xbf16>
    %c1 = arith.constant 1 : index
    %c0_8 = arith.constant 0 : index
    %c0_9 = arith.constant 0 : index
    %9 = vector.load %arg2[%c1, %c0_8, %c0_9] : memref<3x96x32xbf16, #tpu.memory_space<vmem>>, vector<1x96x32xbf16>
    %10 = vector.shape_cast %9 : vector<1x96x32xbf16> to vector<96x32xbf16>
    %cst_10 = arith.constant dense<0.000000e+00> : vector<64x32xf32>
    %11 = tpu.matmul %8, %10, %cst_10 {dimension_numbers = #tpu.dot_dimension_numbers<[1], [0], [0], [1], [0, 0, 1, 1], [], []>} : vector<64x96xbf16>, vector<96x32xbf16>, vector<64x32xf32> -> vector<64x32xf32>
    %12 = arith.addf %6, %11 : vector<64x32xf32>
    %c0_11 = arith.constant 0 : index
    %c16 = arith.constant 16 : index
    %c0_12 = arith.constant 0 : index
    %13 = vector.load %arg1[%c0_11, %c16, %c0_12] : memref<1x80x96xbf16, #tpu.memory_space<vmem>>, vector<1x64x96xbf16>
    %14 = vector.shape_cast %13 : vector<1x64x96xbf16> to vector<64x96xbf16>
    %c2 = arith.constant 2 : index
    %c0_13 = arith.constant 0 : index
    %c0_14 = arith.constant 0 : index
    %15 = vector.load %arg2[%c2, %c0_13, %c0_14] : memref<3x96x32xbf16, #tpu.memory_space<vmem>>, vector<1x96x32xbf16>
    %16 = vector.shape_cast %15 : vector<1x96x32xbf16> to vector<96x32xbf16>
    %cst_15 = arith.constant dense<0.000000e+00> : vector<64x32xf32>
    %17 = tpu.matmul %14, %16, %cst_15 {dimension_numbers = #tpu.dot_dimension_numbers<[1], [0], [0], [1], [0, 0, 1, 1], [], []>} : vector<64x96xbf16>, vector<96x32xbf16>, vector<64x32xf32> -> vector<64x32xf32>
    %18 = arith.addf %12, %17 : vector<64x32xf32>
    %c0_16 = arith.constant 0 : index
    %c0_17 = arith.constant 0 : index
    %19 = vector.load %arg3[%c0_16, %c0_17] : memref<1x32xf32, #tpu.memory_space<vmem>>, vector<1x32xf32>
    %20 = vector.broadcast %19 : vector<1x32xf32> to vector<64x32xf32>
    %21 = arith.addf %18, %20 : vector<64x32xf32>
    %cst_18 = arith.constant 0.000000e+00 : f32
    %22 = vector.broadcast %cst_18 : f32 to vector<64x32xf32>
    %23 = arith.maximumf %21, %22 : vector<64x32xf32>
    %24 = arith.truncf %23 : vector<64x32xf32> to vector<64x32xbf16>
    %c0_19 = arith.constant 0 : index
    %c0_20 = arith.constant 0 : index
    %c0_21 = arith.constant 0 : index
    %25 = vector.load %arg4[%c0_19, %c0_20, %c0_21] : memref<1x64x32xbf16, #tpu.memory_space<vmem>>, vector<1x64x32xbf16>
    %26 = vector.shape_cast %25 : vector<1x64x32xbf16> to vector<64x32xbf16>
    %27 = vector.shape_cast %24 : vector<64x32xbf16> to vector<1x64x32xbf16>
    tpu.vector_store %arg4[%c0_19, %c0_20, %c0_21], %27 {strides = array<i32>} : memref<1x64x32xbf16, #tpu.memory_space<vmem>>, vector<1x64x32xbf16>,
    return
  }
  func.func @transform_0(%arg0: i32) -> (i32, i32, i32) {
    %c0_i32 = arith.constant 0 : i32
    %c0_i32_0 = arith.constant 0 : i32
    %c0_i32_1 = arith.constant 0 : i32
    return %arg0, %c0_i32, %c0_i32_0 : i32, i32, i32
  }
  func.func @transform_1(%arg0: i32) -> (i32, i32, i32) {
    %c0_i32 = arith.constant 0 : i32
    %c0_i32_0 = arith.constant 0 : i32
    %c0_i32_1 = arith.constant 0 : i32
    %c0_i32_2 = arith.constant 0 : i32
    return %c0_i32, %c0_i32_0, %c0_i32_1 : i32, i32, i32
  }
  func.func @transform_2(%arg0: i32) -> (i32, i32) {
    %c0_i32 = arith.constant 0 : i32
    %c0_i32_0 = arith.constant 0 : i32
    %c0_i32_1 = arith.constant 0 : i32
    return %c0_i32, %c0_i32_0 : i32, i32
  }
  func.func @transform_3(%arg0: i32) -> (i32, i32, i32) {
    %c0_i32 = arith.constant 0 : i32
    %c0_i32_0 = arith.constant 0 : i32
    %c0_i32_1 = arith.constant 0 : i32
    return %arg0, %c0_i32, %c0_i32_0 : i32, i32, i32
  }
}

module attributes {stable_mosaic.version = 11 : i64} {
  func.func @_conv_kernel(%arg0: i32, %arg1: memref<1x80x96xbf16, #tpu.memory_space<vmem>>, %arg2: memref<3x96x32xbf16, #tpu.memory_space<vmem>>, %arg3: memref<1x32xf32, #tpu.memory_space<vmem>>, %arg4: memref<1x64x32xbf16, #tpu.memory_space<vmem>>, %arg5: memref<1x64x32xbf16, #tpu.memory_space<vmem>>) attributes {dimension_semantics = [#tpu.dimension_semantics<parallel>], iteration_bounds = array<i64: 2>, scalar_prefetch = 0 : i64, scratch_operands = 0 : i64, tpu.core_type = #tpu.core_type<tc>, window_params = [{transform_indices = @transform_0, window_bounds = array<i64: 1, 80, 96>}, {pipeline_mode = #tpu.pipeline_mode<synchronous>, transform_indices = @transform_1, window_bounds = array<i64: 3, 96, 32>}, {pipeline_mode = #tpu.pipeline_mode<synchronous>, transform_indices = @transform_2, window_bounds = array<i64: 1, 32>}, {transform_indices = @transform_3, window_bounds = array<i64: 1, 64, 32>}, {transform_indices = @transform_4, window_bounds = array<i64: 1, 64, 32>}]} {
    %cst = arith.constant 0.000000e+00 : f32
    %0 = vector.broadcast %cst : f32 to vector<64x32xf32>
    %c0 = arith.constant 0 : index
    %c0_0 = arith.constant 0 : index
    %c0_1 = arith.constant 0 : index
    %1 = vector.load %arg1[%c0, %c0_0, %c0_1] : memref<1x80x96xbf16, #tpu.memory_space<vmem>>, vector<1x64x96xbf16>
    %2 = vector.shape_cast %1 : vector<1x64x96xbf16> to vector<64x96xbf16>
    %c0_2 = arith.constant 0 : index
    %c0_3 = arith.constant 0 : index
    %c0_4 = arith.constant 0 : index
    %3 = vector.load %arg2[%c0_2, %c0_3, %c0_4] : memref<3x96x32xbf16, #tpu.memory_space<vmem>>, vector<1x96x32xbf16>
    %4 = vector.shape_cast %3 : vector<1x96x32xbf16> to vector<96x32xbf16>
    %cst_5 = arith.constant dense<0.000000e+00> : vector<64x32xf32>
    %5 = tpu.matmul %2, %4, %cst_5 {dimension_numbers = #tpu.dot_dimension_numbers<[1], [0], [0], [1], [0, 0, 1, 1], [], []>} : vector<64x96xbf16>, vector<96x32xbf16>, vector<64x32xf32> -> vector<64x32xf32>
    %6 = arith.addf %0, %5 : vector<64x32xf32>
    %c0_6 = arith.constant 0 : index
    %c8 = arith.constant 8 : index
    %c0_7 = arith.constant 0 : index
    %7 = vector.load %arg1[%c0_6, %c8, %c0_7] : memref<1x80x96xbf16, #tpu.memory_space<vmem>>, vector<1x64x96xbf16>
    %8 = vector.shape_cast %7 : vector<1x64x96xbf16> to vector<64x96xbf16>
    %c1 = arith.constant 1 : index
    %c0_8 = arith.constant 0 : index
    %c0_9 = arith.constant 0 : index
    %9 = vector.load %arg2[%c1, %c0_8, %c0_9] : memref<3x96x32xbf16, #tpu.memory_space<vmem>>, vector<1x96x32xbf16>
    %10 = vector.shape_cast %9 : vector<1x96x32xbf16> to vector<96x32xbf16>
    %cst_10 = arith.constant dense<0.000000e+00> : vector<64x32xf32>
    %11 = tpu.matmul %8, %10, %cst_10 {dimension_numbers = #tpu.dot_dimension_numbers<[1], [0], [0], [1], [0, 0, 1, 1], [], []>} : vector<64x96xbf16>, vector<96x32xbf16>, vector<64x32xf32> -> vector<64x32xf32>
    %12 = arith.addf %6, %11 : vector<64x32xf32>
    %c0_11 = arith.constant 0 : index
    %c16 = arith.constant 16 : index
    %c0_12 = arith.constant 0 : index
    %13 = vector.load %arg1[%c0_11, %c16, %c0_12] : memref<1x80x96xbf16, #tpu.memory_space<vmem>>, vector<1x64x96xbf16>
    %14 = vector.shape_cast %13 : vector<1x64x96xbf16> to vector<64x96xbf16>
    %c2 = arith.constant 2 : index
    %c0_13 = arith.constant 0 : index
    %c0_14 = arith.constant 0 : index
    %15 = vector.load %arg2[%c2, %c0_13, %c0_14] : memref<3x96x32xbf16, #tpu.memory_space<vmem>>, vector<1x96x32xbf16>
    %16 = vector.shape_cast %15 : vector<1x96x32xbf16> to vector<96x32xbf16>
    %cst_15 = arith.constant dense<0.000000e+00> : vector<64x32xf32>
    %17 = tpu.matmul %14, %16, %cst_15 {dimension_numbers = #tpu.dot_dimension_numbers<[1], [0], [0], [1], [0, 0, 1, 1], [], []>} : vector<64x96xbf16>, vector<96x32xbf16>, vector<64x32xf32> -> vector<64x32xf32>
    %18 = arith.addf %12, %17 : vector<64x32xf32>
    %c0_16 = arith.constant 0 : index
    %c0_17 = arith.constant 0 : index
    %19 = vector.load %arg3[%c0_16, %c0_17] : memref<1x32xf32, #tpu.memory_space<vmem>>, vector<1x32xf32>
    %20 = vector.broadcast %19 : vector<1x32xf32> to vector<64x32xf32>
    %21 = arith.addf %18, %20 : vector<64x32xf32>
    %c0_18 = arith.constant 0 : index
    %c0_19 = arith.constant 0 : index
    %c0_20 = arith.constant 0 : index
    %22 = vector.load %arg4[%c0_18, %c0_19, %c0_20] : memref<1x64x32xbf16, #tpu.memory_space<vmem>>, vector<1x64x32xbf16>
    %23 = vector.shape_cast %22 : vector<1x64x32xbf16> to vector<64x32xbf16>
    %24 = arith.extf %23 : vector<64x32xbf16> to vector<64x32xf32>
    %25 = arith.addf %21, %24 : vector<64x32xf32>
    %cst_21 = arith.constant 0.000000e+00 : f32
    %26 = vector.broadcast %cst_21 : f32 to vector<64x32xf32>
    %27 = arith.maximumf %25, %26 : vector<64x32xf32>
    %28 = arith.truncf %27 : vector<64x32xf32> to vector<64x32xbf16>
    %c0_22 = arith.constant 0 : index
    %c0_23 = arith.constant 0 : index
    %c0_24 = arith.constant 0 : index
    %29 = vector.load %arg5[%c0_22, %c0_23, %c0_24] : memref<1x64x32xbf16, #tpu.memory_space<vmem>>, vector<1x64x32xbf16>
    %30 = vector.shape_cast %29 : vector<1x64x32xbf16> to vector<64x32xbf16>
    %31 = vector.shape_cast %28 : vector<64x32xbf16> to vector<1x64x32xbf16>
    tpu.vector_store %arg5[%c0_22, %c0_23, %c0_24], %31 {strides = array<i32>} : memref<1x64x32xbf16, #tpu.memory_space<vmem>>, vector<1x64x32xbf16>,
    return
  }
  func.func @transform_0(%arg0: i32) -> (i32, i32, i32) {
    %c0_i32 = arith.constant 0 : i32
    %c0_i32_0 = arith.constant 0 : i32
    %c0_i32_1 = arith.constant 0 : i32
    return %arg0, %c0_i32, %c0_i32_0 : i32, i32, i32
  }
  func.func @transform_1(%arg0: i32) -> (i32, i32, i32) {
    %c0_i32 = arith.constant 0 : i32
    %c0_i32_0 = arith.constant 0 : i32
    %c0_i32_1 = arith.constant 0 : i32
    %c0_i32_2 = arith.constant 0 : i32
    return %c0_i32, %c0_i32_0, %c0_i32_1 : i32, i32, i32
  }
  func.func @transform_2(%arg0: i32) -> (i32, i32) {
    %c0_i32 = arith.constant 0 : i32
    %c0_i32_0 = arith.constant 0 : i32
    %c0_i32_1 = arith.constant 0 : i32
    return %c0_i32, %c0_i32_0 : i32, i32
  }
  func.func @transform_3(%arg0: i32) -> (i32, i32, i32) {
    %c0_i32 = arith.constant 0 : i32
    %c0_i32_0 = arith.constant 0 : i32
    %c0_i32_1 = arith.constant 0 : i32
    return %arg0, %c0_i32, %c0_i32_0 : i32, i32, i32
  }
  func.func @transform_4(%arg0: i32) -> (i32, i32, i32) {
    %c0_i32 = arith.constant 0 : i32
    %c0_i32_0 = arith.constant 0 : i32
    %c0_i32_1 = arith.constant 0 : i32
    return %arg0, %c0_i32, %c0_i32_0 : i32, i32, i32
  }
}

module attributes {stable_mosaic.version = 11 : i64} {
  func.func @_conv_kernel(%arg0: i32, %arg1: memref<1x16x32xbf16, #tpu.memory_space<vmem>>, %arg2: memref<1x32x64xbf16, #tpu.memory_space<vmem>>, %arg3: memref<1x64xf32, #tpu.memory_space<vmem>>, %arg4: memref<1x16x64xbf16, #tpu.memory_space<vmem>>) attributes {dimension_semantics = [#tpu.dimension_semantics<parallel>], iteration_bounds = array<i64: 2>, scalar_prefetch = 0 : i64, scratch_operands = 0 : i64, tpu.core_type = #tpu.core_type<tc>, window_params = [{transform_indices = @transform_0, window_bounds = array<i64: 1, 16, 32>}, {pipeline_mode = #tpu.pipeline_mode<synchronous>, transform_indices = @transform_1, window_bounds = array<i64: 1, 32, 64>}, {pipeline_mode = #tpu.pipeline_mode<synchronous>, transform_indices = @transform_2, window_bounds = array<i64: 1, 64>}, {transform_indices = @transform_3, window_bounds = array<i64: 1, 16, 64>}]} {
    %cst = arith.constant 0.000000e+00 : f32
    %0 = vector.broadcast %cst : f32 to vector<16x64xf32>
    %c0 = arith.constant 0 : index
    %c0_0 = arith.constant 0 : index
    %c0_1 = arith.constant 0 : index
    %1 = vector.load %arg1[%c0, %c0_0, %c0_1] : memref<1x16x32xbf16, #tpu.memory_space<vmem>>, vector<1x16x32xbf16>
    %2 = vector.shape_cast %1 : vector<1x16x32xbf16> to vector<16x32xbf16>
    %c0_2 = arith.constant 0 : index
    %c0_3 = arith.constant 0 : index
    %c0_4 = arith.constant 0 : index
    %3 = vector.load %arg2[%c0_2, %c0_3, %c0_4] : memref<1x32x64xbf16, #tpu.memory_space<vmem>>, vector<1x32x64xbf16>
    %4 = vector.shape_cast %3 : vector<1x32x64xbf16> to vector<32x64xbf16>
    %cst_5 = arith.constant dense<0.000000e+00> : vector<16x64xf32>
    %5 = tpu.matmul %2, %4, %cst_5 {dimension_numbers = #tpu.dot_dimension_numbers<[1], [0], [0], [1], [0, 0, 1, 1], [], []>} : vector<16x32xbf16>, vector<32x64xbf16>, vector<16x64xf32> -> vector<16x64xf32>
    %6 = arith.addf %0, %5 : vector<16x64xf32>
    %c0_6 = arith.constant 0 : index
    %c0_7 = arith.constant 0 : index
    %7 = vector.load %arg3[%c0_6, %c0_7] : memref<1x64xf32, #tpu.memory_space<vmem>>, vector<1x64xf32>
    %8 = vector.broadcast %7 : vector<1x64xf32> to vector<16x64xf32>
    %9 = arith.addf %6, %8 : vector<16x64xf32>
    %10 = arith.truncf %9 : vector<16x64xf32> to vector<16x64xbf16>
    %c0_8 = arith.constant 0 : index
    %c0_9 = arith.constant 0 : index
    %c0_10 = arith.constant 0 : index
    %11 = vector.load %arg4[%c0_8, %c0_9, %c0_10] : memref<1x16x64xbf16, #tpu.memory_space<vmem>>, vector<1x16x64xbf16>
    %12 = vector.shape_cast %11 : vector<1x16x64xbf16> to vector<16x64xbf16>
    %13 = vector.shape_cast %10 : vector<16x64xbf16> to vector<1x16x64xbf16>
    tpu.vector_store %arg4[%c0_8, %c0_9, %c0_10], %13 {strides = array<i32>} : memref<1x16x64xbf16, #tpu.memory_space<vmem>>, vector<1x16x64xbf16>,
    return
  }
  func.func @transform_0(%arg0: i32) -> (i32, i32, i32) {
    %c0_i32 = arith.constant 0 : i32
    %c0_i32_0 = arith.constant 0 : i32
    %c0_i32_1 = arith.constant 0 : i32
    return %arg0, %c0_i32, %c0_i32_0 : i32, i32, i32
  }
  func.func @transform_1(%arg0: i32) -> (i32, i32, i32) {
    %c0_i32 = arith.constant 0 : i32
    %c0_i32_0 = arith.constant 0 : i32
    %c0_i32_1 = arith.constant 0 : i32
    %c0_i32_2 = arith.constant 0 : i32
    return %c0_i32, %c0_i32_0, %c0_i32_1 : i32, i32, i32
  }
  func.func @transform_2(%arg0: i32) -> (i32, i32) {
    %c0_i32 = arith.constant 0 : i32
    %c0_i32_0 = arith.constant 0 : i32
    %c0_i32_1 = arith.constant 0 : i32
    return %c0_i32, %c0_i32_0 : i32, i32
  }
  func.func @transform_3(%arg0: i32) -> (i32, i32, i32) {
    %c0_i32 = arith.constant 0 : i32
    %c0_i32_0 = arith.constant 0 : i32
    %c0_i32_1 = arith.constant 0 : i32
    return %arg0, %c0_i32, %c0_i32_0 : i32, i32, i32
  }
}

module attributes {stable_mosaic.version = 11 : i64} {
  func.func @_conv_kernel(%arg0: i32, %arg1: memref<1x16x288xbf16, #tpu.memory_space<vmem>>, %arg2: memref<1x288x64xbf16, #tpu.memory_space<vmem>>, %arg3: memref<1x64xf32, #tpu.memory_space<vmem>>, %arg4: memref<1x16x64xbf16, #tpu.memory_space<vmem>>) attributes {dimension_semantics = [#tpu.dimension_semantics<parallel>], iteration_bounds = array<i64: 2>, scalar_prefetch = 0 : i64, scratch_operands = 0 : i64, tpu.core_type = #tpu.core_type<tc>, window_params = [{transform_indices = @transform_0, window_bounds = array<i64: 1, 16, 288>}, {pipeline_mode = #tpu.pipeline_mode<synchronous>, transform_indices = @transform_1, window_bounds = array<i64: 1, 288, 64>}, {pipeline_mode = #tpu.pipeline_mode<synchronous>, transform_indices = @transform_2, window_bounds = array<i64: 1, 64>}, {transform_indices = @transform_3, window_bounds = array<i64: 1, 16, 64>}]} {
    %cst = arith.constant 0.000000e+00 : f32
    %0 = vector.broadcast %cst : f32 to vector<16x64xf32>
    %c0 = arith.constant 0 : index
    %c0_0 = arith.constant 0 : index
    %c0_1 = arith.constant 0 : index
    %1 = vector.load %arg1[%c0, %c0_0, %c0_1] : memref<1x16x288xbf16, #tpu.memory_space<vmem>>, vector<1x16x288xbf16>
    %2 = vector.shape_cast %1 : vector<1x16x288xbf16> to vector<16x288xbf16>
    %c0_2 = arith.constant 0 : index
    %c0_3 = arith.constant 0 : index
    %c0_4 = arith.constant 0 : index
    %3 = vector.load %arg2[%c0_2, %c0_3, %c0_4] : memref<1x288x64xbf16, #tpu.memory_space<vmem>>, vector<1x288x64xbf16>
    %4 = vector.shape_cast %3 : vector<1x288x64xbf16> to vector<288x64xbf16>
    %cst_5 = arith.constant dense<0.000000e+00> : vector<16x64xf32>
    %5 = tpu.matmul %2, %4, %cst_5 {dimension_numbers = #tpu.dot_dimension_numbers<[1], [0], [0], [1], [0, 0, 1, 1], [], []>} : vector<16x288xbf16>, vector<288x64xbf16>, vector<16x64xf32> -> vector<16x64xf32>
    %6 = arith.addf %0, %5 : vector<16x64xf32>
    %c0_6 = arith.constant 0 : index
    %c0_7 = arith.constant 0 : index
    %7 = vector.load %arg3[%c0_6, %c0_7] : memref<1x64xf32, #tpu.memory_space<vmem>>, vector<1x64xf32>
    %8 = vector.broadcast %7 : vector<1x64xf32> to vector<16x64xf32>
    %9 = arith.addf %6, %8 : vector<16x64xf32>
    %cst_8 = arith.constant 0.000000e+00 : f32
    %10 = vector.broadcast %cst_8 : f32 to vector<16x64xf32>
    %11 = arith.maximumf %9, %10 : vector<16x64xf32>
    %12 = arith.truncf %11 : vector<16x64xf32> to vector<16x64xbf16>
    %c0_9 = arith.constant 0 : index
    %c0_10 = arith.constant 0 : index
    %c0_11 = arith.constant 0 : index
    %13 = vector.load %arg4[%c0_9, %c0_10, %c0_11] : memref<1x16x64xbf16, #tpu.memory_space<vmem>>, vector<1x16x64xbf16>
    %14 = vector.shape_cast %13 : vector<1x16x64xbf16> to vector<16x64xbf16>
    %15 = vector.shape_cast %12 : vector<16x64xbf16> to vector<1x16x64xbf16>
    tpu.vector_store %arg4[%c0_9, %c0_10, %c0_11], %15 {strides = array<i32>} : memref<1x16x64xbf16, #tpu.memory_space<vmem>>, vector<1x16x64xbf16>,
    return
  }
  func.func @transform_0(%arg0: i32) -> (i32, i32, i32) {
    %c0_i32 = arith.constant 0 : i32
    %c0_i32_0 = arith.constant 0 : i32
    %c0_i32_1 = arith.constant 0 : i32
    return %arg0, %c0_i32, %c0_i32_0 : i32, i32, i32
  }
  func.func @transform_1(%arg0: i32) -> (i32, i32, i32) {
    %c0_i32 = arith.constant 0 : i32
    %c0_i32_0 = arith.constant 0 : i32
    %c0_i32_1 = arith.constant 0 : i32
    %c0_i32_2 = arith.constant 0 : i32
    return %c0_i32, %c0_i32_0, %c0_i32_1 : i32, i32, i32
  }
  func.func @transform_2(%arg0: i32) -> (i32, i32) {
    %c0_i32 = arith.constant 0 : i32
    %c0_i32_0 = arith.constant 0 : i32
    %c0_i32_1 = arith.constant 0 : i32
    return %c0_i32, %c0_i32_0 : i32, i32
  }
  func.func @transform_3(%arg0: i32) -> (i32, i32, i32) {
    %c0_i32 = arith.constant 0 : i32
    %c0_i32_0 = arith.constant 0 : i32
    %c0_i32_1 = arith.constant 0 : i32
    return %arg0, %c0_i32, %c0_i32_0 : i32, i32, i32
  }
}

module attributes {stable_mosaic.version = 11 : i64} {
  func.func @_conv_kernel(%arg0: i32, %arg1: memref<1x24x192xbf16, #tpu.memory_space<vmem>>, %arg2: memref<3x192x64xbf16, #tpu.memory_space<vmem>>, %arg3: memref<1x64xf32, #tpu.memory_space<vmem>>, %arg4: memref<1x16x64xbf16, #tpu.memory_space<vmem>>, %arg5: memref<1x16x64xbf16, #tpu.memory_space<vmem>>) attributes {dimension_semantics = [#tpu.dimension_semantics<parallel>], iteration_bounds = array<i64: 2>, scalar_prefetch = 0 : i64, scratch_operands = 0 : i64, tpu.core_type = #tpu.core_type<tc>, window_params = [{transform_indices = @transform_0, window_bounds = array<i64: 1, 24, 192>}, {pipeline_mode = #tpu.pipeline_mode<synchronous>, transform_indices = @transform_1, window_bounds = array<i64: 3, 192, 64>}, {pipeline_mode = #tpu.pipeline_mode<synchronous>, transform_indices = @transform_2, window_bounds = array<i64: 1, 64>}, {transform_indices = @transform_3, window_bounds = array<i64: 1, 16, 64>}, {transform_indices = @transform_4, window_bounds = array<i64: 1, 16, 64>}]} {
    %cst = arith.constant 0.000000e+00 : f32
    %0 = vector.broadcast %cst : f32 to vector<16x64xf32>
    %c0 = arith.constant 0 : index
    %c0_0 = arith.constant 0 : index
    %c0_1 = arith.constant 0 : index
    %1 = vector.load %arg1[%c0, %c0_0, %c0_1] : memref<1x24x192xbf16, #tpu.memory_space<vmem>>, vector<1x16x192xbf16>
    %2 = vector.shape_cast %1 : vector<1x16x192xbf16> to vector<16x192xbf16>
    %c0_2 = arith.constant 0 : index
    %c0_3 = arith.constant 0 : index
    %c0_4 = arith.constant 0 : index
    %3 = vector.load %arg2[%c0_2, %c0_3, %c0_4] : memref<3x192x64xbf16, #tpu.memory_space<vmem>>, vector<1x192x64xbf16>
    %4 = vector.shape_cast %3 : vector<1x192x64xbf16> to vector<192x64xbf16>
    %cst_5 = arith.constant dense<0.000000e+00> : vector<16x64xf32>
    %5 = tpu.matmul %2, %4, %cst_5 {dimension_numbers = #tpu.dot_dimension_numbers<[1], [0], [0], [1], [0, 0, 1, 1], [], []>} : vector<16x192xbf16>, vector<192x64xbf16>, vector<16x64xf32> -> vector<16x64xf32>
    %6 = arith.addf %0, %5 : vector<16x64xf32>
    %c0_6 = arith.constant 0 : index
    %c4 = arith.constant 4 : index
    %c0_7 = arith.constant 0 : index
    %7 = vector.load %arg1[%c0_6, %c4, %c0_7] : memref<1x24x192xbf16, #tpu.memory_space<vmem>>, vector<1x16x192xbf16>
    %8 = vector.shape_cast %7 : vector<1x16x192xbf16> to vector<16x192xbf16>
    %c1 = arith.constant 1 : index
    %c0_8 = arith.constant 0 : index
    %c0_9 = arith.constant 0 : index
    %9 = vector.load %arg2[%c1, %c0_8, %c0_9] : memref<3x192x64xbf16, #tpu.memory_space<vmem>>, vector<1x192x64xbf16>
    %10 = vector.shape_cast %9 : vector<1x192x64xbf16> to vector<192x64xbf16>
    %cst_10 = arith.constant dense<0.000000e+00> : vector<16x64xf32>
    %11 = tpu.matmul %8, %10, %cst_10 {dimension_numbers = #tpu.dot_dimension_numbers<[1], [0], [0], [1], [0, 0, 1, 1], [], []>} : vector<16x192xbf16>, vector<192x64xbf16>, vector<16x64xf32> -> vector<16x64xf32>
    %12 = arith.addf %6, %11 : vector<16x64xf32>
    %c0_11 = arith.constant 0 : index
    %c8 = arith.constant 8 : index
    %c0_12 = arith.constant 0 : index
    %13 = vector.load %arg1[%c0_11, %c8, %c0_12] : memref<1x24x192xbf16, #tpu.memory_space<vmem>>, vector<1x16x192xbf16>
    %14 = vector.shape_cast %13 : vector<1x16x192xbf16> to vector<16x192xbf16>
    %c2 = arith.constant 2 : index
    %c0_13 = arith.constant 0 : index
    %c0_14 = arith.constant 0 : index
    %15 = vector.load %arg2[%c2, %c0_13, %c0_14] : memref<3x192x64xbf16, #tpu.memory_space<vmem>>, vector<1x192x64xbf16>
    %16 = vector.shape_cast %15 : vector<1x192x64xbf16> to vector<192x64xbf16>
    %cst_15 = arith.constant dense<0.000000e+00> : vector<16x64xf32>
    %17 = tpu.matmul %14, %16, %cst_15 {dimension_numbers = #tpu.dot_dimension_numbers<[1], [0], [0], [1], [0, 0, 1, 1], [], []>} : vector<16x192xbf16>, vector<192x64xbf16>, vector<16x64xf32> -> vector<16x64xf32>
    %18 = arith.addf %12, %17 : vector<16x64xf32>
    %c0_16 = arith.constant 0 : index
    %c0_17 = arith.constant 0 : index
    %19 = vector.load %arg3[%c0_16, %c0_17] : memref<1x64xf32, #tpu.memory_space<vmem>>, vector<1x64xf32>
    %20 = vector.broadcast %19 : vector<1x64xf32> to vector<16x64xf32>
    %21 = arith.addf %18, %20 : vector<16x64xf32>
    %c0_18 = arith.constant 0 : index
    %c0_19 = arith.constant 0 : index
    %c0_20 = arith.constant 0 : index
    %22 = vector.load %arg4[%c0_18, %c0_19, %c0_20] : memref<1x16x64xbf16, #tpu.memory_space<vmem>>, vector<1x16x64xbf16>
    %23 = vector.shape_cast %22 : vector<1x16x64xbf16> to vector<16x64xbf16>
    %24 = arith.extf %23 : vector<16x64xbf16> to vector<16x64xf32>
    %25 = arith.addf %21, %24 : vector<16x64xf32>
    %cst_21 = arith.constant 0.000000e+00 : f32
    %26 = vector.broadcast %cst_21 : f32 to vector<16x64xf32>
    %27 = arith.maximumf %25, %26 : vector<16x64xf32>
    %28 = arith.truncf %27 : vector<16x64xf32> to vector<16x64xbf16>
    %c0_22 = arith.constant 0 : index
    %c0_23 = arith.constant 0 : index
    %c0_24 = arith.constant 0 : index
    %29 = vector.load %arg5[%c0_22, %c0_23, %c0_24] : memref<1x16x64xbf16, #tpu.memory_space<vmem>>, vector<1x16x64xbf16>
    %30 = vector.shape_cast %29 : vector<1x16x64xbf16> to vector<16x64xbf16>
    %31 = vector.shape_cast %28 : vector<16x64xbf16> to vector<1x16x64xbf16>
    tpu.vector_store %arg5[%c0_22, %c0_23, %c0_24], %31 {strides = array<i32>} : memref<1x16x64xbf16, #tpu.memory_space<vmem>>, vector<1x16x64xbf16>,
    return
  }
  func.func @transform_0(%arg0: i32) -> (i32, i32, i32) {
    %c0_i32 = arith.constant 0 : i32
    %c0_i32_0 = arith.constant 0 : i32
    %c0_i32_1 = arith.constant 0 : i32
    return %arg0, %c0_i32, %c0_i32_0 : i32, i32, i32
  }
  func.func @transform_1(%arg0: i32) -> (i32, i32, i32) {
    %c0_i32 = arith.constant 0 : i32
    %c0_i32_0 = arith.constant 0 : i32
    %c0_i32_1 = arith.constant 0 : i32
    %c0_i32_2 = arith.constant 0 : i32
    return %c0_i32, %c0_i32_0, %c0_i32_1 : i32, i32, i32
  }
  func.func @transform_2(%arg0: i32) -> (i32, i32) {
    %c0_i32 = arith.constant 0 : i32
    %c0_i32_0 = arith.constant 0 : i32
    %c0_i32_1 = arith.constant 0 : i32
    return %c0_i32, %c0_i32_0 : i32, i32
  }
  func.func @transform_3(%arg0: i32) -> (i32, i32, i32) {
    %c0_i32 = arith.constant 0 : i32
    %c0_i32_0 = arith.constant 0 : i32
    %c0_i32_1 = arith.constant 0 : i32
    return %arg0, %c0_i32, %c0_i32_0 : i32, i32, i32
  }
  func.func @transform_4(%arg0: i32) -> (i32, i32, i32) {
    %c0_i32 = arith.constant 0 : i32
    %c0_i32_0 = arith.constant 0 : i32
    %c0_i32_1 = arith.constant 0 : i32
    return %arg0, %c0_i32, %c0_i32_0 : i32, i32, i32
  }
}

module attributes {stable_mosaic.version = 11 : i64} {
  func.func @_conv_kernel(%arg0: i32, %arg1: memref<1x24x192xbf16, #tpu.memory_space<vmem>>, %arg2: memref<3x192x64xbf16, #tpu.memory_space<vmem>>, %arg3: memref<1x64xf32, #tpu.memory_space<vmem>>, %arg4: memref<1x16x64xbf16, #tpu.memory_space<vmem>>) attributes {dimension_semantics = [#tpu.dimension_semantics<parallel>], iteration_bounds = array<i64: 2>, scalar_prefetch = 0 : i64, scratch_operands = 0 : i64, tpu.core_type = #tpu.core_type<tc>, window_params = [{transform_indices = @transform_0, window_bounds = array<i64: 1, 24, 192>}, {pipeline_mode = #tpu.pipeline_mode<synchronous>, transform_indices = @transform_1, window_bounds = array<i64: 3, 192, 64>}, {pipeline_mode = #tpu.pipeline_mode<synchronous>, transform_indices = @transform_2, window_bounds = array<i64: 1, 64>}, {transform_indices = @transform_3, window_bounds = array<i64: 1, 16, 64>}]} {
    %cst = arith.constant 0.000000e+00 : f32
    %0 = vector.broadcast %cst : f32 to vector<16x64xf32>
    %c0 = arith.constant 0 : index
    %c0_0 = arith.constant 0 : index
    %c0_1 = arith.constant 0 : index
    %1 = vector.load %arg1[%c0, %c0_0, %c0_1] : memref<1x24x192xbf16, #tpu.memory_space<vmem>>, vector<1x16x192xbf16>
    %2 = vector.shape_cast %1 : vector<1x16x192xbf16> to vector<16x192xbf16>
    %c0_2 = arith.constant 0 : index
    %c0_3 = arith.constant 0 : index
    %c0_4 = arith.constant 0 : index
    %3 = vector.load %arg2[%c0_2, %c0_3, %c0_4] : memref<3x192x64xbf16, #tpu.memory_space<vmem>>, vector<1x192x64xbf16>
    %4 = vector.shape_cast %3 : vector<1x192x64xbf16> to vector<192x64xbf16>
    %cst_5 = arith.constant dense<0.000000e+00> : vector<16x64xf32>
    %5 = tpu.matmul %2, %4, %cst_5 {dimension_numbers = #tpu.dot_dimension_numbers<[1], [0], [0], [1], [0, 0, 1, 1], [], []>} : vector<16x192xbf16>, vector<192x64xbf16>, vector<16x64xf32> -> vector<16x64xf32>
    %6 = arith.addf %0, %5 : vector<16x64xf32>
    %c0_6 = arith.constant 0 : index
    %c4 = arith.constant 4 : index
    %c0_7 = arith.constant 0 : index
    %7 = vector.load %arg1[%c0_6, %c4, %c0_7] : memref<1x24x192xbf16, #tpu.memory_space<vmem>>, vector<1x16x192xbf16>
    %8 = vector.shape_cast %7 : vector<1x16x192xbf16> to vector<16x192xbf16>
    %c1 = arith.constant 1 : index
    %c0_8 = arith.constant 0 : index
    %c0_9 = arith.constant 0 : index
    %9 = vector.load %arg2[%c1, %c0_8, %c0_9] : memref<3x192x64xbf16, #tpu.memory_space<vmem>>, vector<1x192x64xbf16>
    %10 = vector.shape_cast %9 : vector<1x192x64xbf16> to vector<192x64xbf16>
    %cst_10 = arith.constant dense<0.000000e+00> : vector<16x64xf32>
    %11 = tpu.matmul %8, %10, %cst_10 {dimension_numbers = #tpu.dot_dimension_numbers<[1], [0], [0], [1], [0, 0, 1, 1], [], []>} : vector<16x192xbf16>, vector<192x64xbf16>, vector<16x64xf32> -> vector<16x64xf32>
    %12 = arith.addf %6, %11 : vector<16x64xf32>
    %c0_11 = arith.constant 0 : index
    %c8 = arith.constant 8 : index
    %c0_12 = arith.constant 0 : index
    %13 = vector.load %arg1[%c0_11, %c8, %c0_12] : memref<1x24x192xbf16, #tpu.memory_space<vmem>>, vector<1x16x192xbf16>
    %14 = vector.shape_cast %13 : vector<1x16x192xbf16> to vector<16x192xbf16>
    %c2 = arith.constant 2 : index
    %c0_13 = arith.constant 0 : index
    %c0_14 = arith.constant 0 : index
    %15 = vector.load %arg2[%c2, %c0_13, %c0_14] : memref<3x192x64xbf16, #tpu.memory_space<vmem>>, vector<1x192x64xbf16>
    %16 = vector.shape_cast %15 : vector<1x192x64xbf16> to vector<192x64xbf16>
    %cst_15 = arith.constant dense<0.000000e+00> : vector<16x64xf32>
    %17 = tpu.matmul %14, %16, %cst_15 {dimension_numbers = #tpu.dot_dimension_numbers<[1], [0], [0], [1], [0, 0, 1, 1], [], []>} : vector<16x192xbf16>, vector<192x64xbf16>, vector<16x64xf32> -> vector<16x64xf32>
    %18 = arith.addf %12, %17 : vector<16x64xf32>
    %c0_16 = arith.constant 0 : index
    %c0_17 = arith.constant 0 : index
    %19 = vector.load %arg3[%c0_16, %c0_17] : memref<1x64xf32, #tpu.memory_space<vmem>>, vector<1x64xf32>
    %20 = vector.broadcast %19 : vector<1x64xf32> to vector<16x64xf32>
    %21 = arith.addf %18, %20 : vector<16x64xf32>
    %cst_18 = arith.constant 0.000000e+00 : f32
    %22 = vector.broadcast %cst_18 : f32 to vector<16x64xf32>
    %23 = arith.maximumf %21, %22 : vector<16x64xf32>
    %24 = arith.truncf %23 : vector<16x64xf32> to vector<16x64xbf16>
    %c0_19 = arith.constant 0 : index
    %c0_20 = arith.constant 0 : index
    %c0_21 = arith.constant 0 : index
    %25 = vector.load %arg4[%c0_19, %c0_20, %c0_21] : memref<1x16x64xbf16, #tpu.memory_space<vmem>>, vector<1x16x64xbf16>
    %26 = vector.shape_cast %25 : vector<1x16x64xbf16> to vector<16x64xbf16>
    %27 = vector.shape_cast %24 : vector<16x64xbf16> to vector<1x16x64xbf16>
    tpu.vector_store %arg4[%c0_19, %c0_20, %c0_21], %27 {strides = array<i32>} : memref<1x16x64xbf16, #tpu.memory_space<vmem>>, vector<1x16x64xbf16>,
    return
  }
  func.func @transform_0(%arg0: i32) -> (i32, i32, i32) {
    %c0_i32 = arith.constant 0 : i32
    %c0_i32_0 = arith.constant 0 : i32
    %c0_i32_1 = arith.constant 0 : i32
    return %arg0, %c0_i32, %c0_i32_0 : i32, i32, i32
  }
  func.func @transform_1(%arg0: i32) -> (i32, i32, i32) {
    %c0_i32 = arith.constant 0 : i32
    %c0_i32_0 = arith.constant 0 : i32
    %c0_i32_1 = arith.constant 0 : i32
    %c0_i32_2 = arith.constant 0 : i32
    return %c0_i32, %c0_i32_0, %c0_i32_1 : i32, i32, i32
  }
  func.func @transform_2(%arg0: i32) -> (i32, i32) {
    %c0_i32 = arith.constant 0 : i32
    %c0_i32_0 = arith.constant 0 : i32
    %c0_i32_1 = arith.constant 0 : i32
    return %c0_i32, %c0_i32_0 : i32, i32
  }
  func.func @transform_3(%arg0: i32) -> (i32, i32, i32) {
    %c0_i32 = arith.constant 0 : i32
    %c0_i32_0 = arith.constant 0 : i32
    %c0_i32_1 = arith.constant 0 : i32
    return %arg0, %c0_i32, %c0_i32_0 : i32, i32, i32
  }
}

</mosaic_0001>

<llo_original>
// kernel: _lambda_.21
$region0: #{_lambda_.21}
  #allocation0 [shape = 'u32[]', space=smem, size = 0x4, offset = 0x4, fixed_abs, tag = 'smem constant byte address 0x4 - core index']
  #allocation1 [shape = 'u32[144,128]{1,0:T(1,128)}', space=vmem, size = 0x12000, scoped, tag = 'internal scratch']
  %s0 = inlined_call_operand.vmem [shape: bf16[2,288,9], index: 0, kind: input, shape index: {}]
  %s1 = inlined_call_operand.vmem [shape: bf16[3,9,16], index: 1, kind: input, shape index: {}]
  %s2 = inlined_call_operand.vmem [shape: f32[1,16], index: 2, kind: input, shape index: {}]
  %s3 = inlined_call_operand.vmem [shape: bf16[2,256,16], index: 3, kind: output, shape index: {}]
  %s4 = sld [smem:[#allocation0]]
  $region45: #{_lambda_.21} parent=0
    _
  %s6 = ssub.s32 1, %s4
  %s7 = scalar_select 0, %s6, %s4
  loop: start=0, step=1, limit=4
  $region2: #{_lambda_.21} parent=0 // loop_pre_header
    _
  $region3: #{_lambda_.21} parent=0 // loop_header
    %s9 = sphi 0, %s13
    %p10 = scmp.ge.s32.totalorder %s9, 4
    %s19 = sphi 0, %s21
    %s22 = sphi 0, %s19
    %s23 = sphi 0, %s22
    %s39 = sphi 0, %s23
    %s43 = sphi 0, %s43
    %s45 = sphi 0, %s43
    %s46 = sphi 0, %s45
    %s60 = sphi 0, %s46
    %s64 = sphi 0, %s64
    %s66 = sphi 0, %s64
    %s67 = sphi 0, %s66
    %s81 = sphi 0, %s67
    %s87 = sphi 0, %s89
    %s90 = sphi 0, %s87
    %s91 = sphi 0, %s90
    %s107 = sphi 0, %s91
  $region4: #{_lambda_.21} parent=0 // loop_header_branch
    %12 = sbr.rel (%p10) target = $region8
  $region5: #{_lambda_.21} parent=0 // loop_body
    %s14 = ssub.s32 %s9, 1
    %s15 = ssub.s32 %s9, 2
    %s16 = sadd.s32 %s9, 1
    %s17 = ssub.s32 %s9, %s16
    %p18 = scmp.eq.s32.totalorder %s17, 0
    %s20 = sadd.s32 %s19, 1
    %s21 = scalar_select %p18, %s19, %s20
    %p24 = pneg %p18
    %p25 = scmp.eq.s32.totalorder %s9, 1
    %p26 = por %p24, %p25
    %p27 = scmp.ne.s32.totalorder %s19, %s22
    %p28 = scmp.eq.s32.totalorder %s9, 0
    %p29 = por %p27, %p28
    %p30 = scmp.ne.s32.totalorder %s19, %s22
    %p31 = scmp.eq.s32.totalorder %s14, 1
    %p32 = por %p30, %p31
    %p33 = scmp.ne.s32.totalorder %s22, %s23
    %p34 = scmp.eq.s32.totalorder %s14, 0
    %p35 = por %p33, %p34
    %p36 = scmp.ne.s32.totalorder %s22, %s23
    %p37 = scmp.eq.s32.totalorder %s15, 1
    %p38 = por %p36, %p37
    %p40 = scmp.ne.s32.totalorder %s23, %s39
    %p41 = scmp.eq.s32.totalorder %s15, 0
    %p42 = por %p40, %p41
    %s44 = sadd.s32 %s43, 1
    %p47 = scmp.eq.s32.totalorder %s9, 1
    %p48 = scmp.ne.s32.totalorder %s43, %s45
    %p49 = scmp.eq.s32.totalorder %s9, 0
    %p50 = por %p48, %p49
    %p51 = scmp.ne.s32.totalorder %s43, %s45
    %p52 = scmp.eq.s32.totalorder %s14, 1
    %p53 = por %p51, %p52
    %p54 = scmp.ne.s32.totalorder %s45, %s46
    %p55 = scmp.eq.s32.totalorder %s14, 0
    %p56 = por %p54, %p55
    %p57 = scmp.ne.s32.totalorder %s45, %s46
    %p58 = scmp.eq.s32.totalorder %s15, 1
    %p59 = por %p57, %p58
    %p61 = scmp.ne.s32.totalorder %s46, %s60
    %p62 = scmp.eq.s32.totalorder %s15, 0
    %p63 = por %p61, %p62
    %s65 = sadd.s32 %s64, 1
    %p68 = scmp.eq.s32.totalorder %s9, 1
    %p69 = scmp.ne.s32.totalorder %s64, %s66
    %p70 = scmp.eq.s32.totalorder %s9, 0
    %p71 = por %p69, %p70
    %p72 = scmp.ne.s32.totalorder %s64, %s66
    %p73 = scmp.eq.s32.totalorder %s14, 1
    %p74 = por %p72, %p73
    %p75 = scmp.ne.s32.totalorder %s66, %s67
    %p76 = scmp.eq.s32.totalorder %s14, 0
    %p77 = por %p75, %p76
    %p78 = scmp.ne.s32.totalorder %s66, %s67
    %p79 = scmp.eq.s32.totalorder %s15, 1
    %p80 = por %p78, %p79
    %p82 = scmp.ne.s32.totalorder %s67, %s81
    %p83 = scmp.eq.s32.totalorder %s15, 0
    %p84 = por %p82, %p83
    %s85 = ssub.s32 %s9, %s16
    %p86 = scmp.eq.s32.totalorder %s85, 0
    %s88 = sadd.s32 %s87, 1
    %s89 = scalar_select %p86, %s87, %s88
    %p92 = pneg %p86
    %p93 = scmp.eq.s32.totalorder %s9, 1
    %p94 = por %p92, %p93
    %p95 = scmp.ne.s32.totalorder %s87, %s90
    %p96 = scmp.eq.s32.totalorder %s9, 0
    %p97 = por %p95, %p96
    %p98 = scmp.ne.s32.totalorder %s87, %s90
    %p99 = scmp.eq.s32.totalorder %s14, 1
    %p100 = por %p98, %p99
    %p101 = scmp.ne.s32.totalorder %s90, %s91
    %p102 = scmp.eq.s32.totalorder %s14, 0
    %p103 = por %p101, %p102
    %p104 = scmp.ne.s32.totalorder %s90, %s91
    %p105 = scmp.eq.s32.totalorder %s15, 1
    %p106 = por %p104, %p105
    %p108 = scmp.ne.s32.totalorder %s91, %s107
    %p109 = scmp.eq.s32.totalorder %s15, 0
    %p110 = por %p108, %p109
    %p111 = scmp.le.s32.totalorder 1, %s9
    %p112 = scmp.lt.s32.totalorder %s9, 3
    %p113 = pnand %p111, %p112
    %p114 = pneg %p113
    // Predicated region
    $region9: #{_lambda_.21} parent=5 // pred_check
      _
    $region10: #{_lambda_.21} parent=5 // pred_check_branch
      %116 = sbr.rel (%p113) target = $region12
    $region11: #{_lambda_.21} parent=5 // pred_region
      %s117 = ssub.s32 %s9, 1
      // Predicated region
      $region13: #{_lambda_.21} parent=11 // pred_check
        %p118 = pneg %p56
      $region14: #{_lambda_.21} parent=11 // pred_check_branch
        %120 = sbr.rel (%p118) target = $region16
      $region15: #{_lambda_.21} parent=11 // pred_region
        _
      $region16: #{_lambda_.21} parent=11 // pred_fallthru
        _
      // Predicated region
      $region17: #{_lambda_.21} parent=11 // pred_check
        %p121 = pneg %p77
      $region18: #{_lambda_.21} parent=11 // pred_check_branch
        %123 = sbr.rel (%p121) target = $region20
      $region19: #{_lambda_.21} parent=11 // pred_region
        _
      $region20: #{_lambda_.21} parent=11 // pred_fallthru
        _
    $region12: #{_lambda_.21} parent=5 // pred_fallthru
      _
    %p124 = scmp.lt.s32.totalorder %s9, 2
    // Predicated region
    $region21: #{_lambda_.21} parent=5 // pred_check
      %p125 = pneg %p124
    $region22: #{_lambda_.21} parent=5 // pred_check_branch
      %127 = sbr.rel (%p125) target = $region24
    $region23: #{_lambda_.21} parent=5 // pred_region
      // Predicated region
      $region25: #{_lambda_.21} parent=23 // pred_check
        %p128 = pneg %p29
      $region26: #{_lambda_.21} parent=23 // pred_check_branch
        %130 = sbr.rel (%p128) target = $region28
      $region27: #{_lambda_.21} parent=23 // pred_region
        %p131 = scmp.lt.s32.totalorder %s9, 1
        %s132 = scalar_select %p131, %s9, 1
        %s133 = smul.addr %s132, 36
        %s134 = smul.addr %s133, 4
        %s135 = scalar_lea.vmem %s0, %s134
      $region28: #{_lambda_.21} parent=23 // pred_fallthru
        _
    $region24: #{_lambda_.21} parent=5 // pred_fallthru
      _
    %p136 = scmp.le.s32.totalorder 1, %s9
    %p137 = scmp.lt.s32.totalorder %s9, 3
    %p138 = pnand %p136, %p137
    %p139 = pneg %p138
    // Predicated region
    $region29: #{_lambda_.21} parent=5 // pred_check
      _
    $region30: #{_lambda_.21} parent=5 // pred_check_branch
      %141 = sbr.rel (%p138) target = $region32
    $region31: #{_lambda_.21} parent=5 // pred_region
      %s142 = ssub.s32 %s9, 1
      %p143 = scmp.lt.s32.totalorder %s14, 1
      %s144 = scalar_select %p143, %s14, 1
      %s145 = smul.addr %s144, 36
      %s146 = smul.addr %s145, 4
      %s147 = scalar_lea.vmem %s0, %s146
      %p148 = pneg %p35
      %p149 = pneg %p32
      %p150 = pneg %p56
      %p151 = pneg %p53
      %p152 = pneg %p77
      %p153 = pneg %p74
      %p154 = pneg %p103
      %p155 = pneg %p100
      %p156 = scmp.lt.s32.totalorder %s14, 1
      %s157 = scalar_select %p156, %s14, 1
      %s158 = smul.addr %s157, 32
      %s159 = smul.addr %s158, 4
      %s160 = scalar_lea.vmem %s3, %s159
      %p161 = scmp.lt.s32.totalorder %s14, 1
      %s162 = scalar_select %p161, %s14, 1
      %s163 = smul.addr %s162, 36
      %s164 = smul.addr %s163, 4
      %s165 = scalar_lea.vmem %s0, %s164
      %p166 = scmp.lt.s32.totalorder %s14, 1
      %s167 = scalar_select %p166, %s14, 1
      %s168 = smul.addr %s167, 32
      %s169 = smul.addr %s168, 4
      %s170 = scalar_lea.vmem %s3, %s169
      %v172 = vld [vmem:[%s165] sm:$0xf]
      %v173 = vld [vmem:[%s165 + $0x4] sm:$0xf]
      %v174 = vld [vmem:[%s165 + $0x8] sm:$0xf]
      %v175 = vld [vmem:[%s165 + $0xc] sm:$0xf]
      %v176 = vld [vmem:[%s165 + $0x10] sm:$0xf]
      %v177 = vld [vmem:[%s165 + $0x14] sm:$0xf]
      %v178 = vld [vmem:[%s165 + $0x18] sm:$0xf]
      %v179 = vld [vmem:[%s165 + $0x1c] sm:$0xf]
      %v180 = vld [vmem:[%s165 + $0x20] sm:$0xf]
      %v181 = vld [vmem:[%s165 + $0x24] sm:$0xf]
      %v182 = vld [vmem:[%s165 + $0x28] sm:$0xf]
      %v183 = vld [vmem:[%s165 + $0x2c] sm:$0xf]
      %v184 = vld [vmem:[%s165 + $0x30] sm:$0xf]
      %v185 = vld [vmem:[%s165 + $0x34] sm:$0xf]
      %v186 = vld [vmem:[%s165 + $0x38] sm:$0xf]
      %v187 = vld [vmem:[%s165 + $0x3c] sm:$0xf]
      %v188 = vld [vmem:[%s165 + $0x40] sm:$0xf]
      %v189 = vld [vmem:[%s165 + $0x44] sm:$0xf]
      %v190 = vld [vmem:[%s165 + $0x48] sm:$0xf]
      %v191 = vld [vmem:[%s165 + $0x4c] sm:$0xf]
      %v192 = vld [vmem:[%s165 + $0x50] sm:$0xf]
      %v193 = vld [vmem:[%s165 + $0x54] sm:$0xf]
      %v194 = vld [vmem:[%s165 + $0x58] sm:$0xf]
      %v195 = vld [vmem:[%s165 + $0x5c] sm:$0xf]
      %v196 = vld [vmem:[%s165 + $0x60] sm:$0xf]
      %v197 = vld [vmem:[%s165 + $0x64] sm:$0xf]
      %v198 = vld [vmem:[%s165 + $0x68] sm:$0xf]
      %v199 = vld [vmem:[%s165 + $0x6c] sm:$0xf]
      %v200 = vld [vmem:[%s165 + $0x70] sm:$0xf]
      %v201 = vld [vmem:[%s165 + $0x74] sm:$0xf]
      %v202 = vld [vmem:[%s165 + $0x78] sm:$0xf]
      %v203 = vld [vmem:[%s165 + $0x7c] sm:$0xf]
      %v204 = vld [vmem:[%s1] sm:$0xf]
      %v205 = vld [vmem:[%s1 + $0x4] sm:$0x1]
      %v206 = vld [vmem:[%s165 + $0x80] sm:$0xf]
      %v207 = vld [vmem:[%s165 + $0x84] sm:$0xf]
      %s208 = scalar_lea.vmem %s1, 8
      %v209 = vld [vmem:[%s208] sm:$0xf]
      %v210 = vld [vmem:[%s208 + $0x4] sm:$0x1]
      %v243 = vunpack.c.l.b16 %v174
      %v244 = vunpack.c.l.b16 %v175
      %v245 = vunpack.c.l.b16 %v176
      %v246 = vunpack.c.l.b16 %v177
      %v247 = vunpack.c.l.b16 %v178
      %v248 = vunpack.c.l.b16 %v179
      %v249 = vunpack.c.l.b16 %v180
      %v250 = vunpack.c.l.b16 %v181
      %v251 = vunpack.c.l.b16 %v182
      %v252 = vunpack.c.l.b16 %v183
      %v253 = vunpack.c.l.b16 %v184
      %v254 = vunpack.c.l.b16 %v185
      %v255 = vunpack.c.l.b16 %v186
      %v256 = vunpack.c.l.b16 %v187
      %v257 = vunpack.c.l.b16 %v188
      %v258 = vunpack.c.l.b16 %v189
      %v259 = vunpack.c.l.b16 %v190
      %v260 = vunpack.c.l.b16 %v191
      %v261 = vunpack.c.l.b16 %v192
      %v262 = vunpack.c.l.b16 %v193
      %v263 = vunpack.c.l.b16 %v194
      %v264 = vunpack.c.l.b16 %v195
      %v265 = vunpack.c.l.b16 %v196
      %v266 = vunpack.c.l.b16 %v197
      %v267 = vunpack.c.l.b16 %v198
      %v268 = vunpack.c.l.b16 %v199
      %v269 = vunpack.c.l.b16 %v200
      %v270 = vunpack.c.l.b16 %v201
      %v271 = vunpack.c.l.b16 %v202
      %v272 = vunpack.c.l.b16 %v203
      %v273 = vunpack.c.l.b16 %v206
      %v274 = vunpack.c.l.b16 %v207
      %v275 = vpack.c.b16 %v244, %v243
      %v276 = vpack.c.b16 %v246, %v245
      %v277 = vpack.c.b16 %v248, %v247
      %v278 = vpack.c.b16 %v250, %v249
      %v279 = vpack.c.b16 %v252, %v251
      %v280 = vpack.c.b16 %v254, %v253
      %v281 = vpack.c.b16 %v256, %v255
      %v282 = vpack.c.b16 %v258, %v257
      %v283 = vpack.c.b16 %v260, %v259
      %v284 = vpack.c.b16 %v262, %v261
      %v285 = vpack.c.b16 %v264, %v263
      %v286 = vpack.c.b16 %v266, %v265
      %v287 = vpack.c.b16 %v268, %v267
      %v288 = vpack.c.b16 %v270, %v269
      %v289 = vpack.c.b16 %v272, %v271
      %v290 = vpack.c.b16 %v274, %v273
      %v293 = vunpack.c.l.b16 %v209
      %v294 = vunpack.c.l.b16 %v210
      %v295 = vpack.c.b16 %v294, %v293
      %vm296 = vcmask 72704
      %v298 = vsel %vm296, %v275, 0
      %v301 = vsel %vm296, %v276, 0
      %v304 = vsel %vm296, %v277, 0
      %v307 = vsel %vm296, %v278, 0
      %v310 = vsel %vm296, %v279, 0
      %v313 = vsel %vm296, %v280, 0
      %v316 = vsel %vm296, %v281, 0
      %v319 = vsel %vm296, %v282, 0
      %v322 = vsel %vm296, %v283, 0
      %v325 = vsel %vm296, %v284, 0
      %v328 = vsel %vm296, %v285, 0
      %v331 = vsel %vm296, %v286, 0
      %v334 = vsel %vm296, %v287, 0
      %v337 = vsel %vm296, %v288, 0
      %v340 = vsel %vm296, %v289, 0
      %v343 = vsel %vm296, %v290, 0
      %vm345 = vcmask 1043456
      %vm346 = vcmask 1044480
      %v347 = vsel %vm345, 4294967295, 65535
      %v348 = vsel %vm346, %v347, 0
      %v350 = vand.u32 %v295, %v348
      %352 = vmatprep.subr.bf16.mxu0 0
      %353 = vmatpush1.bf16.msra.mxu0 0
      %354 = vmatprep.subr.bf16.mxu0 0
      %355 = vmatpush1.bf16.msra.mxu0 0
      %356 = vmatprep.subr.bf16.mxu0 0
      %357 = vmatpush1.bf16.msra.mxu0 0
      %358 = vmatprep.subr.bf16.mxu0 0
      %359 = vmatpush1.bf16.msra.mxu0 0
      %360 = vmatprep.subr.bf16.mxu0 0
      %361 = vmatpush1.bf16.msra.mxu0 0
      %362 = vmatprep.subr.bf16.mxu0 0
      %363 = vmatpush1.bf16.msra.mxu0 0
      %364 = vmatprep.subr.bf16.mxu0 0
      %365 = vmatpush1.bf16.msra.mxu0 0
      %366 = vmatprep.subr.bf16.mxu0 0
      %367 = vmatpush1.bf16.msra.mxu0 %v350
      %368 = vmatprep.subr.bf16.mxu0 0
      %369 = vmatpush2.bf16.msra.mxu0 0
      %370 = vmatprep.subr.bf16.mxu0 0
      %371 = vmatpush2.bf16.msra.mxu0 0
      %372 = vmatprep.subr.bf16.mxu0 0
      %373 = vmatpush2.bf16.msra.mxu0 0
      %374 = vmatprep.subr.bf16.mxu0 0
      %375 = vmatpush2.bf16.msra.mxu0 0
      %376 = vmatprep.subr.bf16.mxu0 0
      %377 = vmatpush2.bf16.msra.mxu0 0
      %378 = vmatprep.subr.bf16.mxu0 0
      %379 = vmatpush2.bf16.msra.mxu0 0
      %380 = vmatprep.subr.bf16.mxu0 0
      %381 = vmatpush2.bf16.msra.mxu0 0
      %382 = vmatprep.subr.bf16.mxu0 0
      %383 = vmatpush2.bf16.msra.mxu0 0
      %384 = vmatprep.mubr.bf16.mxu0 0
      %385 = vmatmul.mubr.bf16.gmra.mxu0 %v298
      %v386 = vpop.f32.mrf.mxu0
      %v387 = vadd.f32 0.0, %v386
      %v388 = vpop.f32.mrf.mxu0
      %v389 = vpop.f32.mrf.mxu0
      %v390 = vadd.f32 0.0, %v389
      %v391 = vpop.f32.mrf.mxu0
      %392 = vmatprep.mubr.bf16.mxu0 0
      %393 = vmatmul.mubr.bf16.gmra.mxu0 %v301
      %v394 = vpop.f32.mrf.mxu0
      %v395 = vadd.f32 0.0, %v394
      %v396 = vpop.f32.mrf.mxu0
      %v397 = vpop.f32.mrf.mxu0
      %v398 = vadd.f32 0.0, %v397
      %v399 = vpop.f32.mrf.mxu0
      %400 = vmatprep.mubr.bf16.mxu0 0
      %401 = vmatmul.mubr.bf16.gmra.mxu0 %v304
      %v402 = vpop.f32.mrf.mxu0
      %v403 = vadd.f32 0.0, %v402
      %v404 = vpop.f32.mrf.mxu0
      %v405 = vpop.f32.mrf.mxu0
      %v406 = vadd.f32 0.0, %v405
      %v407 = vpop.f32.mrf.mxu0
      %408 = vmatprep.mubr.bf16.mxu0 0
      %409 = vmatmul.mubr.bf16.gmra.mxu0 %v307
      %v410 = vpop.f32.mrf.mxu0
      %v411 = vadd.f32 0.0, %v410
      %v412 = vpop.f32.mrf.mxu0
      %v413 = vpop.f32.mrf.mxu0
      %v414 = vadd.f32 0.0, %v413
      %v415 = vpop.f32.mrf.mxu0
      %416 = vmatprep.mubr.bf16.mxu0 0
      %417 = vmatmul.mubr.bf16.gmra.mxu0 %v310
      %v418 = vpop.f32.mrf.mxu0
      %v419 = vadd.f32 0.0, %v418
      %v420 = vpop.f32.mrf.mxu0
      %v421 = vpop.f32.mrf.mxu0
      %v422 = vadd.f32 0.0, %v421
      %v423 = vpop.f32.mrf.mxu0
      %424 = vmatprep.mubr.bf16.mxu0 0
      %425 = vmatmul.mubr.bf16.gmra.mxu0 %v313
      %v426 = vpop.f32.mrf.mxu0
      %v427 = vadd.f32 0.0, %v426
      %v428 = vpop.f32.mrf.mxu0
      %v429 = vpop.f32.mrf.mxu0
      %v430 = vadd.f32 0.0, %v429
      %v431 = vpop.f32.mrf.mxu0
      %432 = vmatprep.mubr.bf16.mxu0 0
      %433 = vmatmul.mubr.bf16.gmra.mxu0 %v316
      %v434 = vpop.f32.mrf.mxu0
      %v435 = vadd.f32 0.0, %v434
      %v436 = vpop.f32.mrf.mxu0
      %v437 = vpop.f32.mrf.mxu0
      %v438 = vadd.f32 0.0, %v437
      %v439 = vpop.f32.mrf.mxu0
      %440 = vmatprep.mubr.bf16.mxu0 0
      %441 = vmatmul.mubr.bf16.gmra.mxu0 %v319
      %v442 = vpop.f32.mrf.mxu0
      %v443 = vadd.f32 0.0, %v442
      %v444 = vpop.f32.mrf.mxu0
      %v445 = vpop.f32.mrf.mxu0
      %v446 = vadd.f32 0.0, %v445
      %v447 = vpop.f32.mrf.mxu0
      %448 = vmatprep.mubr.bf16.mxu0 0
      %449 = vmatmul.mubr.bf16.gmra.mxu0 %v322
      %v450 = vpop.f32.mrf.mxu0
      %v451 = vadd.f32 0.0, %v450
      %v452 = vpop.f32.mrf.mxu0
      %v453 = vpop.f32.mrf.mxu0
      %v454 = vadd.f32 0.0, %v453
      %v455 = vpop.f32.mrf.mxu0
      %456 = vmatprep.mubr.bf16.mxu0 0
      %457 = vmatmul.mubr.bf16.gmra.mxu0 %v325
      %v458 = vpop.f32.mrf.mxu0
      %v459 = vadd.f32 0.0, %v458
      %v460 = vpop.f32.mrf.mxu0
      %v461 = vpop.f32.mrf.mxu0
      %v462 = vadd.f32 0.0, %v461
      %v463 = vpop.f32.mrf.mxu0
      %464 = vmatprep.mubr.bf16.mxu0 0
      %465 = vmatmul.mubr.bf16.gmra.mxu0 %v328
      %v466 = vpop.f32.mrf.mxu0
      %v467 = vadd.f32 0.0, %v466
      %v468 = vpop.f32.mrf.mxu0
      %v469 = vpop.f32.mrf.mxu0
      %v470 = vadd.f32 0.0, %v469
      %v471 = vpop.f32.mrf.mxu0
      %472 = vmatprep.mubr.bf16.mxu0 0
      %473 = vmatmul.mubr.bf16.gmra.mxu0 %v331
      %v474 = vpop.f32.mrf.mxu0
      %v475 = vadd.f32 0.0, %v474
      %v476 = vpop.f32.mrf.mxu0
      %v477 = vpop.f32.mrf.mxu0
      %v478 = vadd.f32 0.0, %v477
      %v479 = vpop.f32.mrf.mxu0
      %480 = vmatprep.mubr.bf16.mxu0 0
      %481 = vmatmul.mubr.bf16.gmra.mxu0 %v334
      %v482 = vpop.f32.mrf.mxu0
      %v483 = vadd.f32 0.0, %v482
      %v484 = vpop.f32.mrf.mxu0
      %v485 = vpop.f32.mrf.mxu0
      %v486 = vadd.f32 0.0, %v485
      %v487 = vpop.f32.mrf.mxu0
      %488 = vmatprep.mubr.bf16.mxu0 0
      %489 = vmatmul.mubr.bf16.gmra.mxu0 %v337
      %v490 = vpop.f32.mrf.mxu0
      %v491 = vadd.f32 0.0, %v490
      %v492 = vpop.f32.mrf.mxu0
      %v493 = vpop.f32.mrf.mxu0
      %v494 = vadd.f32 0.0, %v493
      %v495 = vpop.f32.mrf.mxu0
      %496 = vmatprep.mubr.bf16.mxu0 0
      %497 = vmatmul.mubr.bf16.gmra.mxu0 %v340
      %v498 = vpop.f32.mrf.mxu0
      %v499 = vadd.f32 0.0, %v498
      %v500 = vpop.f32.mrf.mxu0
      %v501 = vpop.f32.mrf.mxu0
      %v502 = vadd.f32 0.0, %v501
      %v503 = vpop.f32.mrf.mxu0
      %504 = vmatprep.mubr.bf16.mxu0 0
      %505 = vmatmul.mubr.bf16.gmra.mxu0 %v343
      %v506 = vpop.f32.mrf.mxu0
      %v507 = vadd.f32 0.0, %v506
      %v508 = vpop.f32.mrf.mxu0
      %v509 = vpop.f32.mrf.mxu0
      %v510 = vadd.f32 0.0, %v509
      %v511 = vpop.f32.mrf.mxu0
      %512 = vdwg.mxu0
      %v515 = vunpack.c.l.b16 %v172
      %v516 = vunpack.c.l.b16 %v173
      %v517 = vpack.c.b16 %v516, %v515
      %v520 = vunpack.c.l.b16 %v204
      %v521 = vunpack.c.l.b16 %v205
      %v522 = vpack.c.b16 %v521, %v520
      %v524 = vsel %vm296, %v517, 0
      %v527 = vand.u32 %v522, %v348
      %529 = vmatprep.subr.bf16.mxu0 0
      %530 = vmatpush1.bf16.msra.mxu0 0
      %531 = vmatprep.subr.bf16.mxu0 0
      %532 = vmatpush1.bf16.msra.mxu0 0
      %533 = vmatprep.subr.bf16.mxu0 0
      %534 = vmatpush1.bf16.msra.mxu0 0
      %535 = vmatprep.subr.bf16.mxu0 0
      %536 = vmatpush1.bf16.msra.mxu0 0
      %537 = vmatprep.subr.bf16.mxu0 0
      %538 = vmatpush1.bf16.msra.mxu0 0
      %539 = vmatprep.subr.bf16.mxu0 0
      %540 = vmatpush1.bf16.msra.mxu0 0
      %541 = vmatprep.subr.bf16.mxu0 0
      %542 = vmatpush1.bf16.msra.mxu0 0
      %543 = vmatprep.subr.bf16.mxu0 0
      %544 = vmatpush1.bf16.msra.mxu0 %v527
      %545 = vmatprep.subr.bf16.mxu0 0
      %546 = vmatpush2.bf16.msra.mxu0 0
      %547 = vmatprep.subr.bf16.mxu0 0
      %548 = vmatpush2.bf16.msra.mxu0 0
      %549 = vmatprep.subr.bf16.mxu0 0
      %550 = vmatpush2.bf16.msra.mxu0 0
      %551 = vmatprep.subr.bf16.mxu0 0
      %552 = vmatpush2.bf16.msra.mxu0 0
      %553 = vmatprep.subr.bf16.mxu0 0
      %554 = vmatpush2.bf16.msra.mxu0 0
      %555 = vmatprep.subr.bf16.mxu0 0
      %556 = vmatpush2.bf16.msra.mxu0 0
      %557 = vmatprep.subr.bf16.mxu0 0
      %558 = vmatpush2.bf16.msra.mxu0 0
      %559 = vmatprep.subr.bf16.mxu0 0
      %560 = vmatpush2.bf16.msra.mxu0 0
      %561 = vmatprep.mubr.bf16.mxu0 0
      %562 = vmatmul.mubr.bf16.gmra.mxu0 %v524
      %v563 = vpop.f32.mrf.mxu0
      %v564 = vadd.f32 %v387, %v563
      %v565 = vpop.f32.mrf.mxu0
      %v566 = vpop.f32.mrf.mxu0
      %v567 = vadd.f32 %v390, %v566
      %v568 = vpop.f32.mrf.mxu0
      %569 = vmatprep.mubr.bf16.mxu0 0
      %570 = vmatmul.mubr.bf16.gmra.mxu0 %v298
      %v571 = vpop.f32.mrf.mxu0
      %v572 = vadd.f32 %v395, %v571
      %v573 = vpop.f32.mrf.mxu0
      %v574 = vpop.f32.mrf.mxu0
      %v575 = vadd.f32 %v398, %v574
      %v576 = vpop.f32.mrf.mxu0
      %577 = vmatprep.mubr.bf16.mxu0 0
      %578 = vmatmul.mubr.bf16.gmra.mxu0 %v301
      %v579 = vpop.f32.mrf.mxu0
      %v580 = vadd.f32 %v403, %v579
      %v581 = vpop.f32.mrf.mxu0
      %v582 = vpop.f32.mrf.mxu0
      %v583 = vadd.f32 %v406, %v582
      %v584 = vpop.f32.mrf.mxu0
      %585 = vmatprep.mubr.bf16.mxu0 0
      %586 = vmatmul.mubr.bf16.gmra.mxu0 %v304
      %v587 = vpop.f32.mrf.mxu0
      %v588 = vadd.f32 %v411, %v587
      %v589 = vpop.f32.mrf.mxu0
      %v590 = vpop.f32.mrf.mxu0
      %v591 = vadd.f32 %v414, %v590
      %v592 = vpop.f32.mrf.mxu0
      %593 = vmatprep.mubr.bf16.mxu0 0
      %594 = vmatmul.mubr.bf16.gmra.mxu0 %v307
      %v595 = vpop.f32.mrf.mxu0
      %v596 = vadd.f32 %v419, %v595
      %v597 = vpop.f32.mrf.mxu0
      %v598 = vpop.f32.mrf.mxu0
      %v599 = vadd.f32 %v422, %v598
      %v600 = vpop.f32.mrf.mxu0
      %601 = vmatprep.mubr.bf16.mxu0 0
      %602 = vmatmul.mubr.bf16.gmra.mxu0 %v310
      %v603 = vpop.f32.mrf.mxu0
      %v604 = vadd.f32 %v427, %v603
      %v605 = vpop.f32.mrf.mxu0
      %v606 = vpop.f32.mrf.mxu0
      %v607 = vadd.f32 %v430, %v606
      %v608 = vpop.f32.mrf.mxu0
      %609 = vmatprep.mubr.bf16.mxu0 0
      %610 = vmatmul.mubr.bf16.gmra.mxu0 %v313
      %v611 = vpop.f32.mrf.mxu0
      %v612 = vadd.f32 %v435, %v611
      %v613 = vpop.f32.mrf.mxu0
      %v614 = vpop.f32.mrf.mxu0
      %v615 = vadd.f32 %v438, %v614
      %v616 = vpop.f32.mrf.mxu0
      %617 = vmatprep.mubr.bf16.mxu0 0
      %618 = vmatmul.mubr.bf16.gmra.mxu0 %v316
      %v619 = vpop.f32.mrf.mxu0
      %v620 = vadd.f32 %v443, %v619
      %v621 = vpop.f32.mrf.mxu0
      %v622 = vpop.f32.mrf.mxu0
      %v623 = vadd.f32 %v446, %v622
      %v624 = vpop.f32.mrf.mxu0
      %625 = vmatprep.mubr.bf16.mxu0 0
      %626 = vmatmul.mubr.bf16.gmra.mxu0 %v319
      %v627 = vpop.f32.mrf.mxu0
      %v628 = vadd.f32 %v451, %v627
      %v629 = vpop.f32.mrf.mxu0
      %v630 = vpop.f32.mrf.mxu0
      %v631 = vadd.f32 %v454, %v630
      %v632 = vpop.f32.mrf.mxu0
      %633 = vmatprep.mubr.bf16.mxu0 0
      %634 = vmatmul.mubr.bf16.gmra.mxu0 %v322
      %v635 = vpop.f32.mrf.mxu0
      %v636 = vadd.f32 %v459, %v635
      %v637 = vpop.f32.mrf.mxu0
      %v638 = vpop.f32.mrf.mxu0
      %v639 = vadd.f32 %v462, %v638
      %v640 = vpop.f32.mrf.mxu0
      %641 = vmatprep.mubr.bf16.mxu0 0
      %642 = vmatmul.mubr.bf16.gmra.mxu0 %v325
      %v643 = vpop.f32.mrf.mxu0
      %v644 = vadd.f32 %v467, %v643
      %v645 = vpop.f32.mrf.mxu0
      %v646 = vpop.f32.mrf.mxu0
      %v647 = vadd.f32 %v470, %v646
      %v648 = vpop.f32.mrf.mxu0
      %649 = vmatprep.mubr.bf16.mxu0 0
      %650 = vmatmul.mubr.bf16.gmra.mxu0 %v328
      %v651 = vpop.f32.mrf.mxu0
      %v652 = vadd.f32 %v475, %v651
      %v653 = vpop.f32.mrf.mxu0
      %v654 = vpop.f32.mrf.mxu0
      %v655 = vadd.f32 %v478, %v654
      %v656 = vpop.f32.mrf.mxu0
      %657 = vmatprep.mubr.bf16.mxu0 0
      %658 = vmatmul.mubr.bf16.gmra.mxu0 %v331
      %v659 = vpop.f32.mrf.mxu0
      %v660 = vadd.f32 %v483, %v659
      %v661 = vpop.f32.mrf.mxu0
      %v662 = vpop.f32.mrf.mxu0
      %v663 = vadd.f32 %v486, %v662
      %v664 = vpop.f32.mrf.mxu0
      %665 = vmatprep.mubr.bf16.mxu0 0
      %666 = vmatmul.mubr.bf16.gmra.mxu0 %v334
      %v667 = vpop.f32.mrf.mxu0
      %v668 = vadd.f32 %v491, %v667
      %v669 = vpop.f32.mrf.mxu0
      %v670 = vpop.f32.mrf.mxu0
      %v671 = vadd.f32 %v494, %v670
      %v672 = vpop.f32.mrf.mxu0
      %673 = vmatprep.mubr.bf16.mxu0 0
      %674 = vmatmul.mubr.bf16.gmra.mxu0 %v337
      %v675 = vpop.f32.mrf.mxu0
      %v676 = vadd.f32 %v499, %v675
      %v677 = vpop.f32.mrf.mxu0
      %v678 = vpop.f32.mrf.mxu0
      %v679 = vadd.f32 %v502, %v678
      %v680 = vpop.f32.mrf.mxu0
      %681 = vmatprep.mubr.bf16.mxu0 0
      %682 = vmatmul.mubr.bf16.gmra.mxu0 %v340
      %v683 = vpop.f32.mrf.mxu0
      %v684 = vadd.f32 %v507, %v683
      %v685 = vpop.f32.mrf.mxu0
      %v686 = vpop.f32.mrf.mxu0
      %v687 = vadd.f32 %v510, %v686
      %v688 = vpop.f32.mrf.mxu0
      %689 = vdwg.mxu0
      %v690 = vld [vmem:[%s165 + $0x10] sm:$0xf]
      %v691 = vld [vmem:[%s165 + $0x14] sm:$0xf]
      %v692 = vld [vmem:[%s165 + $0x18] sm:$0xf]
      %v693 = vld [vmem:[%s165 + $0x1c] sm:$0xf]
      %v694 = vld [vmem:[%s165 + $0x20] sm:$0xf]
      %v695 = vld [vmem:[%s165 + $0x24] sm:$0xf]
      %v696 = vld [vmem:[%s165 + $0x28] sm:$0xf]
      %v697 = vld [vmem:[%s165 + $0x2c] sm:$0xf]
      %v698 = vld [vmem:[%s165 + $0x30] sm:$0xf]
      %v699 = vld [vmem:[%s165 + $0x34] sm:$0xf]
      %v700 = vld [vmem:[%s165 + $0x38] sm:$0xf]
      %v701 = vld [vmem:[%s165 + $0x3c] sm:$0xf]
      %v702 = vld [vmem:[%s165 + $0x40] sm:$0xf]
      %v703 = vld [vmem:[%s165 + $0x44] sm:$0xf]
      %v704 = vld [vmem:[%s165 + $0x48] sm:$0xf]
      %v705 = vld [vmem:[%s165 + $0x4c] sm:$0xf]
      %v706 = vld [vmem:[%s165 + $0x50] sm:$0xf]
      %v707 = vld [vmem:[%s165 + $0x54] sm:$0xf]
      %v708 = vld [vmem:[%s165 + $0x58] sm:$0xf]
      %v709 = vld [vmem:[%s165 + $0x5c] sm:$0xf]
      %v710 = vld [vmem:[%s165 + $0x60] sm:$0xf]
      %v711 = vld [vmem:[%s165 + $0x64] sm:$0xf]
      %v712 = vld [vmem:[%s165 + $0x68] sm:$0xf]
      %v713 = vld [vmem:[%s165 + $0x6c] sm:$0xf]
      %v714 = vld [vmem:[%s165 + $0x70] sm:$0xf]
      %v715 = vld [vmem:[%s165 + $0x74] sm:$0xf]
      %v716 = vld [vmem:[%s165 + $0x78] sm:$0xf]
      %v717 = vld [vmem:[%s165 + $0x7c] sm:$0xf]
      %v718 = vld [vmem:[%s165 + $0x80] sm:$0xf]
      %v719 = vld [vmem:[%s165 + $0x84] sm:$0xf]
      %v720 = vld [vmem:[%s165 + $0x88] sm:$0xf]
      %v721 = vld [vmem:[%s165 + $0x8c] sm:$0xf]
      %s722 = scalar_lea.vmem %s1, 16
      %v723 = vld [vmem:[%s722] sm:$0xf]
      %v724 = vld [vmem:[%s722 + $0x4] sm:$0x1]
      %v757 = vunpack.c.l.b16 %v690
      %v758 = vunpack.c.l.b16 %v691
      %v759 = vunpack.c.l.b16 %v692
      %v760 = vunpack.c.l.b16 %v693
      %v761 = vunpack.c.l.b16 %v694
      %v762 = vunpack.c.l.b16 %v695
      %v763 = vunpack.c.l.b16 %v696
      %v764 = vunpack.c.l.b16 %v697
      %v765 = vunpack.c.l.b16 %v698
      %v766 = vunpack.c.l.b16 %v699
      %v767 = vunpack.c.l.b16 %v700
      %v768 = vunpack.c.l.b16 %v701
      %v769 = vunpack.c.l.b16 %v702
      %v770 = vunpack.c.l.b16 %v703
      %v771 = vunpack.c.l.b16 %v704
      %v772 = vunpack.c.l.b16 %v705
      %v773 = vunpack.c.l.b16 %v706
      %v774 = vunpack.c.l.b16 %v707
      %v775 = vunpack.c.l.b16 %v708
      %v776 = vunpack.c.l.b16 %v709
      %v777 = vunpack.c.l.b16 %v710
      %v778 = vunpack.c.l.b16 %v711
      %v779 = vunpack.c.l.b16 %v712
      %v780 = vunpack.c.l.b16 %v713
      %v781 = vunpack.c.l.b16 %v714
      %v782 = vunpack.c.l.b16 %v715
      %v783 = vunpack.c.l.b16 %v716
      %v784 = vunpack.c.l.b16 %v717
      %v785 = vunpack.c.l.b16 %v718
      %v786 = vunpack.c.l.b16 %v719
      %v787 = vunpack.c.l.b16 %v720
      %v788 = vunpack.c.l.b16 %v721
      %v789 = vpack.c.b16 %v758, %v757
      %v790 = vpack.c.b16 %v760, %v759
      %v791 = vpack.c.b16 %v762, %v761
      %v792 = vpack.c.b16 %v764, %v763
      %v793 = vpack.c.b16 %v766, %v765
      %v794 = vpack.c.b16 %v768, %v767
      %v795 = vpack.c.b16 %v770, %v769
      %v796 = vpack.c.b16 %v772, %v771
      %v797 = vpack.c.b16 %v774, %v773
      %v798 = vpack.c.b16 %v776, %v775
      %v799 = vpack.c.b16 %v778, %v777
      %v800 = vpack.c.b16 %v780, %v779
      %v801 = vpack.c.b16 %v782, %v781
      %v802 = vpack.c.b16 %v784, %v783
      %v803 = vpack.c.b16 %v786, %v785
      %v804 = vpack.c.b16 %v788, %v787
      %v807 = vunpack.c.l.b16 %v723
      %v808 = vunpack.c.l.b16 %v724
      %v809 = vpack.c.b16 %v808, %v807
      %v811 = vsel %vm296, %v789, 0
      %v814 = vsel %vm296, %v790, 0
      %v817 = vsel %vm296, %v791, 0
      %v820 = vsel %vm296, %v792, 0
      %v823 = vsel %vm296, %v793, 0
      %v826 = vsel %vm296, %v794, 0
      %v829 = vsel %vm296, %v795, 0
      %v832 = vsel %vm296, %v796, 0
      %v835 = vsel %vm296, %v797, 0
      %v838 = vsel %vm296, %v798, 0
      %v841 = vsel %vm296, %v799, 0
      %v844 = vsel %vm296, %v800, 0
      %v847 = vsel %vm296, %v801, 0
      %v850 = vsel %vm296, %v802, 0
      %v853 = vsel %vm296, %v803, 0
      %v856 = vsel %vm296, %v804, 0
      %v859 = vand.u32 %v809, %v348
      %861 = vmatprep.subr.bf16.mxu0 0
      %862 = vmatpush1.bf16.msra.mxu0 0
      %863 = vmatprep.subr.bf16.mxu0 0
      %864 = vmatpush1.bf16.msra.mxu0 0
      %865 = vmatprep.subr.bf16.mxu0 0
      %866 = vmatpush1.bf16.msra.mxu0 0
      %867 = vmatprep.subr.bf16.mxu0 0
      %868 = vmatpush1.bf16.msra.mxu0 0
      %869 = vmatprep.subr.bf16.mxu0 0
      %870 = vmatpush1.bf16.msra.mxu0 0
      %871 = vmatprep.subr.bf16.mxu0 0
      %872 = vmatpush1.bf16.msra.mxu0 0
      %873 = vmatprep.subr.bf16.mxu0 0
      %874 = vmatpush1.bf16.msra.mxu0 0
      %875 = vmatprep.subr.bf16.mxu0 0
      %876 = vmatpush1.bf16.msra.mxu0 %v859
      %877 = vmatprep.subr.bf16.mxu0 0
      %878 = vmatpush2.bf16.msra.mxu0 0
      %879 = vmatprep.subr.bf16.mxu0 0
      %880 = vmatpush2.bf16.msra.mxu0 0
      %881 = vmatprep.subr.bf16.mxu0 0
      %882 = vmatpush2.bf16.msra.mxu0 0
      %883 = vmatprep.subr.bf16.mxu0 0
      %884 = vmatpush2.bf16.msra.mxu0 0
      %885 = vmatprep.subr.bf16.mxu0 0
      %886 = vmatpush2.bf16.msra.mxu0 0
      %887 = vmatprep.subr.bf16.mxu0 0
      %888 = vmatpush2.bf16.msra.mxu0 0
      %889 = vmatprep.subr.bf16.mxu0 0
      %890 = vmatpush2.bf16.msra.mxu0 0
      %891 = vmatprep.subr.bf16.mxu0 0
      %892 = vmatpush2.bf16.msra.mxu0 0
      %893 = vmatprep.mubr.bf16.mxu0 0
      %894 = vmatmul.mubr.bf16.gmra.mxu0 %v811
      %v895 = vpop.f32.mrf.mxu0
      %v896 = vadd.f32 0.0, %v895
      %v897 = vpop.f32.mrf.mxu0
      %v898 = vpop.f32.mrf.mxu0
      %v899 = vadd.f32 0.0, %v898
      %v900 = vpop.f32.mrf.mxu0
      %901 = vmatprep.mubr.bf16.mxu0 0
      %902 = vmatmul.mubr.bf16.gmra.mxu0 %v814
      %v903 = vpop.f32.mrf.mxu0
      %v904 = vadd.f32 0.0, %v903
      %v905 = vpop.f32.mrf.mxu0
      %v906 = vpop.f32.mrf.mxu0
      %v907 = vadd.f32 0.0, %v906
      %v908 = vpop.f32.mrf.mxu0
      %909 = vmatprep.mubr.bf16.mxu0 0
      %910 = vmatmul.mubr.bf16.gmra.mxu0 %v817
      %v911 = vpop.f32.mrf.mxu0
      %v912 = vadd.f32 0.0, %v911
      %v913 = vpop.f32.mrf.mxu0
      %v914 = vpop.f32.mrf.mxu0
      %v915 = vadd.f32 0.0, %v914
      %v916 = vpop.f32.mrf.mxu0
      %917 = vmatprep.mubr.bf16.mxu0 0
      %918 = vmatmul.mubr.bf16.gmra.mxu0 %v820
      %v919 = vpop.f32.mrf.mxu0
      %v920 = vadd.f32 0.0, %v919
      %v921 = vpop.f32.mrf.mxu0
      %v922 = vpop.f32.mrf.mxu0
      %v923 = vadd.f32 0.0, %v922
      %v924 = vpop.f32.mrf.mxu0
      %925 = vmatprep.mubr.bf16.mxu0 0
      %926 = vmatmul.mubr.bf16.gmra.mxu0 %v823
      %v927 = vpop.f32.mrf.mxu0
      %v928 = vadd.f32 0.0, %v927
      %v929 = vpop.f32.mrf.mxu0
      %v930 = vpop.f32.mrf.mxu0
      %v931 = vadd.f32 0.0, %v930
      %v932 = vpop.f32.mrf.mxu0
      %933 = vmatprep.mubr.bf16.mxu0 0
      %934 = vmatmul.mubr.bf16.gmra.mxu0 %v826
      %v935 = vpop.f32.mrf.mxu0
      %v936 = vadd.f32 0.0, %v935
      %v937 = vpop.f32.mrf.mxu0
      %v938 = vpop.f32.mrf.mxu0
      %v939 = vadd.f32 0.0, %v938
      %v940 = vpop.f32.mrf.mxu0
      %941 = vmatprep.mubr.bf16.mxu0 0
      %942 = vmatmul.mubr.bf16.gmra.mxu0 %v829
      %v943 = vpop.f32.mrf.mxu0
      %v944 = vadd.f32 0.0, %v943
      %v945 = vpop.f32.mrf.mxu0
      %v946 = vpop.f32.mrf.mxu0
      %v947 = vadd.f32 0.0, %v946
      %v948 = vpop.f32.mrf.mxu0
      %949 = vmatprep.mubr.bf16.mxu0 0
      %950 = vmatmul.mubr.bf16.gmra.mxu0 %v832
      %v951 = vpop.f32.mrf.mxu0
      %v952 = vadd.f32 0.0, %v951
      %v953 = vpop.f32.mrf.mxu0
      %v954 = vpop.f32.mrf.mxu0
      %v955 = vadd.f32 0.0, %v954
      %v956 = vpop.f32.mrf.mxu0
      %957 = vmatprep.mubr.bf16.mxu0 0
      %958 = vmatmul.mubr.bf16.gmra.mxu0 %v835
      %v959 = vpop.f32.mrf.mxu0
      %v960 = vadd.f32 0.0, %v959
      %v961 = vpop.f32.mrf.mxu0
      %v962 = vpop.f32.mrf.mxu0
      %v963 = vadd.f32 0.0, %v962
      %v964 = vpop.f32.mrf.mxu0
      %965 = vmatprep.mubr.bf16.mxu0 0
      %966 = vmatmul.mubr.bf16.gmra.mxu0 %v838
      %v967 = vpop.f32.mrf.mxu0
      %v968 = vadd.f32 0.0, %v967
      %v969 = vpop.f32.mrf.mxu0
      %v970 = vpop.f32.mrf.mxu0
      %v971 = vadd.f32 0.0, %v970
      %v972 = vpop.f32.mrf.mxu0
      %973 = vmatprep.mubr.bf16.mxu0 0
      %974 = vmatmul.mubr.bf16.gmra.mxu0 %v841
      %v975 = vpop.f32.mrf.mxu0
      %v976 = vadd.f32 0.0, %v975
      %v977 = vpop.f32.mrf.mxu0
      %v978 = vpop.f32.mrf.mxu0
      %v979 = vadd.f32 0.0, %v978
      %v980 = vpop.f32.mrf.mxu0
      %981 = vmatprep.mubr.bf16.mxu0 0
      %982 = vmatmul.mubr.bf16.gmra.mxu0 %v844
      %v983 = vpop.f32.mrf.mxu0
      %v984 = vadd.f32 0.0, %v983
      %v985 = vpop.f32.mrf.mxu0
      %v986 = vpop.f32.mrf.mxu0
      %v987 = vadd.f32 0.0, %v986
      %v988 = vpop.f32.mrf.mxu0
      %989 = vmatprep.mubr.bf16.mxu0 0
      %990 = vmatmul.mubr.bf16.gmra.mxu0 %v847
      %v991 = vpop.f32.mrf.mxu0
      %v992 = vadd.f32 0.0, %v991
      %v993 = vpop.f32.mrf.mxu0
      %v994 = vpop.f32.mrf.mxu0
      %v995 = vadd.f32 0.0, %v994
      %v996 = vpop.f32.mrf.mxu0
      %997 = vmatprep.mubr.bf16.mxu0 0
      %998 = vmatmul.mubr.bf16.gmra.mxu0 %v850
      %v999 = vpop.f32.mrf.mxu0
      %v1000 = vadd.f32 0.0, %v999
      %v1001 = vpop.f32.mrf.mxu0
      %v1002 = vpop.f32.mrf.mxu0
      %v1003 = vadd.f32 0.0, %v1002
      %v1004 = vpop.f32.mrf.mxu0
      %1005 = vmatprep.mubr.bf16.mxu0 0
      %1006 = vmatmul.mubr.bf16.gmra.mxu0 %v853
      %v1007 = vpop.f32.mrf.mxu0
      %v1008 = vadd.f32 0.0, %v1007
      %v1009 = vpop.f32.mrf.mxu0
      %v1010 = vpop.f32.mrf.mxu0
      %v1011 = vadd.f32 0.0, %v1010
      %v1012 = vpop.f32.mrf.mxu0
      %1013 = vmatprep.mubr.bf16.mxu0 0
      %1014 = vmatmul.mubr.bf16.gmra.mxu0 %v856
      %v1015 = vpop.f32.mrf.mxu0
      %v1016 = vadd.f32 0.0, %v1015
      %v1017 = vpop.f32.mrf.mxu0
      %v1018 = vpop.f32.mrf.mxu0
      %v1019 = vadd.f32 0.0, %v1018
      %v1020 = vpop.f32.mrf.mxu0
      %1021 = vdwg.mxu0
      %v1022 = vadd.f32 %v564, %v896
      %v1023 = vadd.f32 %v567, %v899
      %v1024 = vadd.f32 %v572, %v904
      %v1025 = vadd.f32 %v575, %v907
      %v1026 = vadd.f32 %v580, %v912
      %v1027 = vadd.f32 %v583, %v915
      %v1028 = vadd.f32 %v588, %v920
      %v1029 = vadd.f32 %v591, %v923
      %v1030 = vadd.f32 %v596, %v928
      %v1031 = vadd.f32 %v599, %v931
      %v1032 = vadd.f32 %v604, %v936
      %v1033 = vadd.f32 %v607, %v939
      %v1034 = vadd.f32 %v612, %v944
      %v1035 = vadd.f32 %v615, %v947
      %v1036 = vadd.f32 %v620, %v952
      %v1037 = vadd.f32 %v623, %v955
      %v1038 = vadd.f32 %v628, %v960
      %v1039 = vadd.f32 %v631, %v963
      %v1040 = vadd.f32 %v636, %v968
      %v1041 = vadd.f32 %v639, %v971
      %v1042 = vadd.f32 %v644, %v976
      %v1043 = vadd.f32 %v647, %v979
      %v1044 = vadd.f32 %v652, %v984
      %v1045 = vadd.f32 %v655, %v987
      %v1046 = vadd.f32 %v660, %v992
      %v1047 = vadd.f32 %v663, %v995
      %v1048 = vadd.f32 %v668, %v1000
      %v1049 = vadd.f32 %v671, %v1003
      %v1050 = vadd.f32 %v676, %v1008
      %v1051 = vadd.f32 %v679, %v1011
      %v1052 = vadd.f32 %v684, %v1016
      %v1053 = vadd.f32 %v687, %v1019
      %v1054 = vld [vmem:[%s2] sm:$0x1]
      %v1056 = vlaneseq
      %v1057 = vshrl.u32 %v1056, 7
      %v1058 = vsub.s32 0, %v1057
      %v1059 = vrot.slane %v1054, %v1058
      %v1061 = vadd.f32 %v1022, %v1059
      %v1062 = vadd.f32 %v1023, %v1059
      %v1063 = vadd.f32 %v1024, %v1059
      %v1064 = vadd.f32 %v1025, %v1059
      %v1065 = vadd.f32 %v1026, %v1059
      %v1066 = vadd.f32 %v1027, %v1059
      %v1067 = vadd.f32 %v1028, %v1059
      %v1068 = vadd.f32 %v1029, %v1059
      %v1069 = vadd.f32 %v1030, %v1059
      %v1070 = vadd.f32 %v1031, %v1059
      %v1071 = vadd.f32 %v1032, %v1059
      %v1072 = vadd.f32 %v1033, %v1059
      %v1073 = vadd.f32 %v1034, %v1059
      %v1074 = vadd.f32 %v1035, %v1059
      %v1075 = vadd.f32 %v1036, %v1059
      %v1076 = vadd.f32 %v1037, %v1059
      %v1077 = vadd.f32 %v1038, %v1059
      %v1078 = vadd.f32 %v1039, %v1059
      %v1079 = vadd.f32 %v1040, %v1059
      %v1080 = vadd.f32 %v1041, %v1059
      %v1081 = vadd.f32 %v1042, %v1059
      %v1082 = vadd.f32 %v1043, %v1059
      %v1083 = vadd.f32 %v1044, %v1059
      %v1084 = vadd.f32 %v1045, %v1059
      %v1085 = vadd.f32 %v1046, %v1059
      %v1086 = vadd.f32 %v1047, %v1059
      %v1087 = vadd.f32 %v1048, %v1059
      %v1088 = vadd.f32 %v1049, %v1059
      %v1089 = vadd.f32 %v1050, %v1059
      %v1090 = vadd.f32 %v1051, %v1059
      %v1091 = vadd.f32 %v1052, %v1059
      %v1092 = vadd.f32 %v1053, %v1059
      %v1093 = vmax.f32 %v1061, 0.0
      %v1094 = vmax.f32 %v1062, 0.0
      %v1095 = vmax.f32 %v1063, 0.0
      %v1096 = vmax.f32 %v1064, 0.0
      %v1097 = vmax.f32 %v1065, 0.0
      %v1098 = vmax.f32 %v1066, 0.0
      %v1099 = vmax.f32 %v1067, 0.0
      %v1100 = vmax.f32 %v1068, 0.0
      %v1101 = vmax.f32 %v1069, 0.0
      %v1102 = vmax.f32 %v1070, 0.0
      %v1103 = vmax.f32 %v1071, 0.0
      %v1104 = vmax.f32 %v1072, 0.0
      %v1105 = vmax.f32 %v1073, 0.0
      %v1106 = vmax.f32 %v1074, 0.0
      %v1107 = vmax.f32 %v1075, 0.0
      %v1108 = vmax.f32 %v1076, 0.0
      %v1109 = vmax.f32 %v1077, 0.0
      %v1110 = vmax.f32 %v1078, 0.0
      %v1111 = vmax.f32 %v1079, 0.0
      %v1112 = vmax.f32 %v1080, 0.0
      %v1113 = vmax.f32 %v1081, 0.0
      %v1114 = vmax.f32 %v1082, 0.0
      %v1115 = vmax.f32 %v1083, 0.0
      %v1116 = vmax.f32 %v1084, 0.0
      %v1117 = vmax.f32 %v1085, 0.0
      %v1118 = vmax.f32 %v1086, 0.0
      %v1119 = vmax.f32 %v1087, 0.0
      %v1120 = vmax.f32 %v1088, 0.0
      %v1121 = vmax.f32 %v1089, 0.0
      %v1122 = vmax.f32 %v1090, 0.0
      %v1123 = vmax.f32 %v1091, 0.0
      %v1124 = vmax.f32 %v1092, 0.0
      %v1125 = vpack.c.bf16 %v1094, %v1093
      %v1126 = vpack.c.bf16 %v1096, %v1095
      %v1127 = vpack.c.bf16 %v1098, %v1097
      %v1128 = vpack.c.bf16 %v1100, %v1099
      %v1129 = vpack.c.bf16 %v1102, %v1101
      %v1130 = vpack.c.bf16 %v1104, %v1103
      %v1131 = vpack.c.bf16 %v1106, %v1105
      %v1132 = vpack.c.bf16 %v1108, %v1107
      %v1133 = vpack.c.bf16 %v1110, %v1109
      %v1134 = vpack.c.bf16 %v1112, %v1111
      %v1135 = vpack.c.bf16 %v1114, %v1113
      %v1136 = vpack.c.bf16 %v1116, %v1115
      %v1137 = vpack.c.bf16 %v1118, %v1117
      %v1138 = vpack.c.bf16 %v1120, %v1119
      %v1139 = vpack.c.bf16 %v1122, %v1121
      %v1140 = vpack.c.bf16 %v1124, %v1123
      %v1157 = vunpack.c.l.b16 %v1125
      %v1158 = vunpack.c.h.b16 %v1125
      %v1159 = vunpack.c.l.b16 %v1126
      %v1160 = vunpack.c.h.b16 %v1126
      %v1161 = vunpack.c.l.b16 %v1127
      %v1162 = vunpack.c.h.b16 %v1127
      %v1163 = vunpack.c.l.b16 %v1128
      %v1164 = vunpack.c.h.b16 %v1128
      %v1165 = vunpack.c.l.b16 %v1129
      %v1166 = vunpack.c.h.b16 %v1129
      %v1167 = vunpack.c.l.b16 %v1130
      %v1168 = vunpack.c.h.b16 %v1130
      %v1169 = vunpack.c.l.b16 %v1131
      %v1170 = vunpack.c.h.b16 %v1131
      %v1171 = vunpack.c.l.b16 %v1132
      %v1172 = vunpack.c.h.b16 %v1132
      %v1173 = vunpack.c.l.b16 %v1133
      %v1174 = vunpack.c.h.b16 %v1133
      %v1175 = vunpack.c.l.b16 %v1134
      %v1176 = vunpack.c.h.b16 %v1134
      %v1177 = vunpack.c.l.b16 %v1135
      %v1178 = vunpack.c.h.b16 %v1135
      %v1179 = vunpack.c.l.b16 %v1136
      %v1180 = vunpack.c.h.b16 %v1136
      %v1181 = vunpack.c.l.b16 %v1137
      %v1182 = vunpack.c.h.b16 %v1137
      %v1183 = vunpack.c.l.b16 %v1138
      %v1184 = vunpack.c.h.b16 %v1138
      %v1185 = vunpack.c.l.b16 %v1139
      %v1186 = vunpack.c.h.b16 %v1139
      %v1187 = vunpack.c.l.b16 %v1140
      %v1188 = vunpack.c.h.b16 %v1140
      %v1189 = vpack.c.b16 %v1157, %v1157
      %v1190 = vpack.c.b16 %v1158, %v1158
      %v1191 = vpack.c.b16 %v1159, %v1159
      %v1192 = vpack.c.b16 %v1160, %v1160
      %v1193 = vpack.c.b16 %v1161, %v1161
      %v1194 = vpack.c.b16 %v1162, %v1162
      %v1195 = vpack.c.b16 %v1163, %v1163
      %v1196 = vpack.c.b16 %v1164, %v1164
      %v1197 = vpack.c.b16 %v1165, %v1165
      %v1198 = vpack.c.b16 %v1166, %v1166
      %v1199 = vpack.c.b16 %v1167, %v1167
      %v1200 = vpack.c.b16 %v1168, %v1168
      %v1201 = vpack.c.b16 %v1169, %v1169
      %v1202 = vpack.c.b16 %v1170, %v1170
      %v1203 = vpack.c.b16 %v1171, %v1171
      %v1204 = vpack.c.b16 %v1172, %v1172
      %v1205 = vpack.c.b16 %v1173, %v1173
      %v1206 = vpack.c.b16 %v1174, %v1174
      %v1207 = vpack.c.b16 %v1175, %v1175
      %v1208 = vpack.c.b16 %v1176, %v1176
      %v1209 = vpack.c.b16 %v1177, %v1177
      %v1210 = vpack.c.b16 %v1178, %v1178
      %v1211 = vpack.c.b16 %v1179, %v1179
      %v1212 = vpack.c.b16 %v1180, %v1180
      %v1213 = vpack.c.b16 %v1181, %v1181
      %v1214 = vpack.c.b16 %v1182, %v1182
      %v1215 = vpack.c.b16 %v1183, %v1183
      %v1216 = vpack.c.b16 %v1184, %v1184
      %v1217 = vpack.c.b16 %v1185, %v1185
      %v1218 = vpack.c.b16 %v1186, %v1186
      %v1219 = vpack.c.b16 %v1187, %v1187
      %v1220 = vpack.c.b16 %v1188, %v1188
      %vm1253 = vcmask 125952
      %1254 = vst.msk [vmem:[%s170] sm:$0xf] %vm1253, %v1189
      %1255 = vst.msk [vmem:[%s170 + $0x4] sm:$0xf] %vm1253, %v1190
      %1256 = vst.msk [vmem:[%s170 + $0x8] sm:$0xf] %vm1253, %v1191
      %1257 = vst.msk [vmem:[%s170 + $0xc] sm:$0xf] %vm1253, %v1192
      %1258 = vst.msk [vmem:[%s170 + $0x10] sm:$0xf] %vm1253, %v1193
      %1259 = vst.msk [vmem:[%s170 + $0x14] sm:$0xf] %vm1253, %v1194
      %1260 = vst.msk [vmem:[%s170 + $0x18] sm:$0xf] %vm1253, %v1195
      %1261 = vst.msk [vmem:[%s170 + $0x1c] sm:$0xf] %vm1253, %v1196
      %1262 = vst.msk [vmem:[%s170 + $0x20] sm:$0xf] %vm1253, %v1197
      %1263 = vst.msk [vmem:[%s170 + $0x24] sm:$0xf] %vm1253, %v1198
      %1264 = vst.msk [vmem:[%s170 + $0x28] sm:$0xf] %vm1253, %v1199
      %1265 = vst.msk [vmem:[%s170 + $0x2c] sm:$0xf] %vm1253, %v1200
      %1266 = vst.msk [vmem:[%s170 + $0x30] sm:$0xf] %vm1253, %v1201
      %1267 = vst.msk [vmem:[%s170 + $0x34] sm:$0xf] %vm1253, %v1202
      %1268 = vst.msk [vmem:[%s170 + $0x38] sm:$0xf] %vm1253, %v1203
      %1269 = vst.msk [vmem:[%s170 + $0x3c] sm:$0xf] %vm1253, %v1204
      %1270 = vst.msk [vmem:[%s170 + $0x40] sm:$0xf] %vm1253, %v1205
      %1271 = vst.msk [vmem:[%s170 + $0x44] sm:$0xf] %vm1253, %v1206
      %1272 = vst.msk [vmem:[%s170 + $0x48] sm:$0xf] %vm1253, %v1207
      %1273 = vst.msk [vmem:[%s170 + $0x4c] sm:$0xf] %vm1253, %v1208
      %1274 = vst.msk [vmem:[%s170 + $0x50] sm:$0xf] %vm1253, %v1209
      %1275 = vst.msk [vmem:[%s170 + $0x54] sm:$0xf] %vm1253, %v1210
      %1276 = vst.msk [vmem:[%s170 + $0x58] sm:$0xf] %vm1253, %v1211
      %1277 = vst.msk [vmem:[%s170 + $0x5c] sm:$0xf] %vm1253, %v1212
      %1278 = vst.msk [vmem:[%s170 + $0x60] sm:$0xf] %vm1253, %v1213
      %1279 = vst.msk [vmem:[%s170 + $0x64] sm:$0xf] %vm1253, %v1214
      %1280 = vst.msk [vmem:[%s170 + $0x68] sm:$0xf] %vm1253, %v1215
      %1281 = vst.msk [vmem:[%s170 + $0x6c] sm:$0xf] %vm1253, %v1216
      %1282 = vst.msk [vmem:[%s170 + $0x70] sm:$0xf] %vm1253, %v1217
      %1283 = vst.msk [vmem:[%s170 + $0x74] sm:$0xf] %vm1253, %v1218
      %1284 = vst.msk [vmem:[%s170 + $0x78] sm:$0xf] %vm1253, %v1219
      %1285 = vst.msk [vmem:[%s170 + $0x7c] sm:$0xf] %vm1253, %v1220
      %p1286 = scmp.lt.s32.totalorder %s14, 1
      %s1287 = scalar_select %p1286, %s14, 1
      %s1288 = smul.addr %s1287, 32
      %s1289 = smul.addr %s1288, 4
      %s1290 = scalar_lea.vmem %s3, %s1289
      // Predicated region
      $region33: #{_lambda_.21} parent=31 // pred_check
        %p1291 = pneg %p100
      $region34: #{_lambda_.21} parent=31 // pred_check_branch
        %1293 = sbr.rel (%p1291) target = $region36
      $region35: #{_lambda_.21} parent=31 // pred_region
        _
      $region36: #{_lambda_.21} parent=31 // pred_fallthru
        _
    $region32: #{_lambda_.21} parent=5 // pred_fallthru
      _
    %p1294 = scmp.le.s32.totalorder 2, %s9
    // Predicated region
    $region37: #{_lambda_.21} parent=5 // pred_check
      %p1295 = pneg %p1294
    $region38: #{_lambda_.21} parent=5 // pred_check_branch
      %1297 = sbr.rel (%p1295) target = $region40
    $region39: #{_lambda_.21} parent=5 // pred_region
      %s1298 = ssub.s32 %s9, 2
      // Predicated region
      $region41: #{_lambda_.21} parent=39 // pred_check
        %p1299 = pneg %p106
      $region42: #{_lambda_.21} parent=39 // pred_check_branch
        %1301 = sbr.rel (%p1299) target = $region44
      $region43: #{_lambda_.21} parent=39 // pred_region
        %p1302 = scmp.lt.s32.totalorder %s15, 1
        %s1303 = scalar_select %p1302, %s15, 1
        %s1304 = smul.addr %s1303, 32
        %s1305 = smul.addr %s1304, 4
        %s1306 = scalar_lea.vmem %s3, %s1305
      $region44: #{_lambda_.21} parent=39 // pred_fallthru
        _
    $region40: #{_lambda_.21} parent=5 // pred_fallthru
      _
  $region6: #{_lambda_.21} parent=0 // loop_footer
    %s13 = sadd.s32 1, %s9
  $region7: #{_lambda_.21} parent=0 // loop_footer_branch
    %8 = sbr.rel target = $region3
  $region8: #{_lambda_.21} parent=0 // loop_exit
    _

// kernel: _lambda_.22
$region0: #{_lambda_.22}
  #allocation0 [shape = 'u32[]', space=smem, size = 0x4, offset = 0x4, fixed_abs, tag = 'smem constant byte address 0x4 - core index']
  #allocation1 [shape = 'u32[144,128]{1,0:T(1,128)}', space=vmem, size = 0x12000, scoped, tag = 'internal scratch']
  %s0 = inlined_call_operand.vmem [shape: bf16[2,288,48], index: 0, kind: input, shape index: {}]
  %s1 = inlined_call_operand.vmem [shape: bf16[3,48,16], index: 1, kind: input, shape index: {}]
  %s2 = inlined_call_operand.vmem [shape: f32[1,16], index: 2, kind: input, shape index: {}]
  %s3 = inlined_call_operand.vmem [shape: bf16[2,256,16], index: 3, kind: output, shape index: {}]
  %s4 = sld [smem:[#allocation0]]
  $region45: #{_lambda_.22} parent=0
    _
  %s6 = ssub.s32 1, %s4
  %s7 = scalar_select 0, %s6, %s4
  loop: start=0, step=1, limit=4
  $region2: #{_lambda_.22} parent=0 // loop_pre_header
    _
  $region3: #{_lambda_.22} parent=0 // loop_header
    %s9 = sphi 0, %s13
    %p10 = scmp.ge.s32.totalorder %s9, 4
    %s19 = sphi 0, %s21
    %s22 = sphi 0, %s19
    %s23 = sphi 0, %s22
    %s39 = sphi 0, %s23
    %s43 = sphi 0, %s43
    %s45 = sphi 0, %s43
    %s46 = sphi 0, %s45
    %s60 = sphi 0, %s46
    %s64 = sphi 0, %s64
    %s66 = sphi 0, %s64
    %s67 = sphi 0, %s66
    %s81 = sphi 0, %s67
    %s87 = sphi 0, %s89
    %s90 = sphi 0, %s87
    %s91 = sphi 0, %s90
    %s107 = sphi 0, %s91
  $region4: #{_lambda_.22} parent=0 // loop_header_branch
    %12 = sbr.rel (%p10) target = $region8
  $region5: #{_lambda_.22} parent=0 // loop_body
    %s14 = ssub.s32 %s9, 1
    %s15 = ssub.s32 %s9, 2
    %s16 = sadd.s32 %s9, 1
    %s17 = ssub.s32 %s9, %s16
    %p18 = scmp.eq.s32.totalorder %s17, 0
    %s20 = sadd.s32 %s19, 1
    %s21 = scalar_select %p18, %s19, %s20
    %p24 = pneg %p18
    %p25 = scmp.eq.s32.totalorder %s9, 1
    %p26 = por %p24, %p25
    %p27 = scmp.ne.s32.totalorder %s19, %s22
    %p28 = scmp.eq.s32.totalorder %s9, 0
    %p29 = por %p27, %p28
    %p30 = scmp.ne.s32.totalorder %s19, %s22
    %p31 = scmp.eq.s32.totalorder %s14, 1
    %p32 = por %p30, %p31
    %p33 = scmp.ne.s32.totalorder %s22, %s23
    %p34 = scmp.eq.s32.totalorder %s14, 0
    %p35 = por %p33, %p34
    %p36 = scmp.ne.s32.totalorder %s22, %s23
    %p37 = scmp.eq.s32.totalorder %s15, 1
    %p38 = por %p36, %p37
    %p40 = scmp.ne.s32.totalorder %s23, %s39
    %p41 = scmp.eq.s32.totalorder %s15, 0
    %p42 = por %p40, %p41
    %s44 = sadd.s32 %s43, 1
    %p47 = scmp.eq.s32.totalorder %s9, 1
    %p48 = scmp.ne.s32.totalorder %s43, %s45
    %p49 = scmp.eq.s32.totalorder %s9, 0
    %p50 = por %p48, %p49
    %p51 = scmp.ne.s32.totalorder %s43, %s45
    %p52 = scmp.eq.s32.totalorder %s14, 1
    %p53 = por %p51, %p52
    %p54 = scmp.ne.s32.totalorder %s45, %s46
    %p55 = scmp.eq.s32.totalorder %s14, 0
    %p56 = por %p54, %p55
    %p57 = scmp.ne.s32.totalorder %s45, %s46
    %p58 = scmp.eq.s32.totalorder %s15, 1
    %p59 = por %p57, %p58
    %p61 = scmp.ne.s32.totalorder %s46, %s60
    %p62 = scmp.eq.s32.totalorder %s15, 0
    %p63 = por %p61, %p62
    %s65 = sadd.s32 %s64, 1
    %p68 = scmp.eq.s32.totalorder %s9, 1
    %p69 = scmp.ne.s32.totalorder %s64, %s66
    %p70 = scmp.eq.s32.totalorder %s9, 0
    %p71 = por %p69, %p70
    %p72 = scmp.ne.s32.totalorder %s64, %s66
    %p73 = scmp.eq.s32.totalorder %s14, 1
    %p74 = por %p72, %p73
    %p75 = scmp.ne.s32.totalorder %s66, %s67
    %p76 = scmp.eq.s32.totalorder %s14, 0
    %p77 = por %p75, %p76
    %p78 = scmp.ne.s32.totalorder %s66, %s67
    %p79 = scmp.eq.s32.totalorder %s15, 1
    %p80 = por %p78, %p79
    %p82 = scmp.ne.s32.totalorder %s67, %s81
    %p83 = scmp.eq.s32.totalorder %s15, 0
    %p84 = por %p82, %p83
    %s85 = ssub.s32 %s9, %s16
    %p86 = scmp.eq.s32.totalorder %s85, 0
    %s88 = sadd.s32 %s87, 1
    %s89 = scalar_select %p86, %s87, %s88
    %p92 = pneg %p86
    %p93 = scmp.eq.s32.totalorder %s9, 1
    %p94 = por %p92, %p93
    %p95 = scmp.ne.s32.totalorder %s87, %s90
    %p96 = scmp.eq.s32.totalorder %s9, 0
    %p97 = por %p95, %p96
    %p98 = scmp.ne.s32.totalorder %s87, %s90
    %p99 = scmp.eq.s32.totalorder %s14, 1
    %p100 = por %p98, %p99
    %p101 = scmp.ne.s32.totalorder %s90, %s91
    %p102 = scmp.eq.s32.totalorder %s14, 0
    %p103 = por %p101, %p102
    %p104 = scmp.ne.s32.totalorder %s90, %s91
    %p105 = scmp.eq.s32.totalorder %s15, 1
    %p106 = por %p104, %p105
    %p108 = scmp.ne.s32.totalorder %s91, %s107
    %p109 = scmp.eq.s32.totalorder %s15, 0
    %p110 = por %p108, %p109
    %p111 = scmp.le.s32.totalorder 1, %s9
    %p112 = scmp.lt.s32.totalorder %s9, 3
    %p113 = pnand %p111, %p112
    %p114 = pneg %p113
    // Predicated region
    $region9: #{_lambda_.22} parent=5 // pred_check
      _
    $region10: #{_lambda_.22} parent=5 // pred_check_branch
      %116 = sbr.rel (%p113) target = $region12
    $region11: #{_lambda_.22} parent=5 // pred_region
      %s117 = ssub.s32 %s9, 1
      // Predicated region
      $region13: #{_lambda_.22} parent=11 // pred_check
        %p118 = pneg %p56
      $region14: #{_lambda_.22} parent=11 // pred_check_branch
        %120 = sbr.rel (%p118) target = $region16
      $region15: #{_lambda_.22} parent=11 // pred_region
        _
      $region16: #{_lambda_.22} parent=11 // pred_fallthru
        _
      // Predicated region
      $region17: #{_lambda_.22} parent=11 // pred_check
        %p121 = pneg %p77
      $region18: #{_lambda_.22} parent=11 // pred_check_branch
        %123 = sbr.rel (%p121) target = $region20
      $region19: #{_lambda_.22} parent=11 // pred_region
        _
      $region20: #{_lambda_.22} parent=11 // pred_fallthru
        _
    $region12: #{_lambda_.22} parent=5 // pred_fallthru
      _
    %p124 = scmp.lt.s32.totalorder %s9, 2
    // Predicated region
    $region21: #{_lambda_.22} parent=5 // pred_check
      %p125 = pneg %p124
    $region22: #{_lambda_.22} parent=5 // pred_check_branch
      %127 = sbr.rel (%p125) target = $region24
    $region23: #{_lambda_.22} parent=5 // pred_region
      // Predicated region
      $region25: #{_lambda_.22} parent=23 // pred_check
        %p128 = pneg %p29
      $region26: #{_lambda_.22} parent=23 // pred_check_branch
        %130 = sbr.rel (%p128) target = $region28
      $region27: #{_lambda_.22} parent=23 // pred_region
        %p131 = scmp.lt.s32.totalorder %s9, 1
        %s132 = scalar_select %p131, %s9, 1
        %s133 = smul.addr %s132, 36
        %s134 = smul.addr %s133, 4
        %s135 = scalar_lea.vmem %s0, %s134
      $region28: #{_lambda_.22} parent=23 // pred_fallthru
        _
    $region24: #{_lambda_.22} parent=5 // pred_fallthru
      _
    %p136 = scmp.le.s32.totalorder 1, %s9
    %p137 = scmp.lt.s32.totalorder %s9, 3
    %p138 = pnand %p136, %p137
    %p139 = pneg %p138
    // Predicated region
    $region29: #{_lambda_.22} parent=5 // pred_check
      _
    $region30: #{_lambda_.22} parent=5 // pred_check_branch
      %141 = sbr.rel (%p138) target = $region32
    $region31: #{_lambda_.22} parent=5 // pred_region
      %s142 = ssub.s32 %s9, 1
      %p143 = scmp.lt.s32.totalorder %s14, 1
      %s144 = scalar_select %p143, %s14, 1
      %s145 = smul.addr %s144, 36
      %s146 = smul.addr %s145, 4
      %s147 = scalar_lea.vmem %s0, %s146
      %p148 = pneg %p35
      %p149 = pneg %p32
      %p150 = pneg %p56
      %p151 = pneg %p53
      %p152 = pneg %p77
      %p153 = pneg %p74
      %p154 = pneg %p103
      %p155 = pneg %p100
      %p156 = scmp.lt.s32.totalorder %s14, 1
      %s157 = scalar_select %p156, %s14, 1
      %s158 = smul.addr %s157, 32
      %s159 = smul.addr %s158, 4
      %s160 = scalar_lea.vmem %s3, %s159
      %p161 = scmp.lt.s32.totalorder %s14, 1
      %s162 = scalar_select %p161, %s14, 1
      %s163 = smul.addr %s162, 36
      %s164 = smul.addr %s163, 4
      %s165 = scalar_lea.vmem %s0, %s164
      %p166 = scmp.lt.s32.totalorder %s14, 1
      %s167 = scalar_select %p166, %s14, 1
      %s168 = smul.addr %s167, 32
      %s169 = smul.addr %s168, 4
      %s170 = scalar_lea.vmem %s3, %s169
      %v172 = vld [vmem:[%s165] sm:$0xf]
      %v173 = vld [vmem:[%s165 + $0x4] sm:$0xf]
      %v174 = vld [vmem:[%s165 + $0x8] sm:$0xf]
      %v175 = vld [vmem:[%s165 + $0xc] sm:$0xf]
      %v176 = vld [vmem:[%s165 + $0x10] sm:$0xf]
      %v177 = vld [vmem:[%s165 + $0x14] sm:$0xf]
      %v178 = vld [vmem:[%s165 + $0x18] sm:$0xf]
      %v179 = vld [vmem:[%s165 + $0x1c] sm:$0xf]
      %v180 = vld [vmem:[%s165 + $0x20] sm:$0xf]
      %v181 = vld [vmem:[%s165 + $0x24] sm:$0xf]
      %v182 = vld [vmem:[%s165 + $0x28] sm:$0xf]
      %v183 = vld [vmem:[%s165 + $0x2c] sm:$0xf]
      %v184 = vld [vmem:[%s165 + $0x30] sm:$0xf]
      %v185 = vld [vmem:[%s165 + $0x34] sm:$0xf]
      %v186 = vld [vmem:[%s165 + $0x38] sm:$0xf]
      %v187 = vld [vmem:[%s165 + $0x3c] sm:$0xf]
      %v188 = vld [vmem:[%s165 + $0x40] sm:$0xf]
      %v189 = vld [vmem:[%s165 + $0x44] sm:$0xf]
      %v190 = vld [vmem:[%s165 + $0x48] sm:$0xf]
      %v191 = vld [vmem:[%s165 + $0x4c] sm:$0xf]
      %v192 = vld [vmem:[%s165 + $0x50] sm:$0xf]
      %v193 = vld [vmem:[%s165 + $0x54] sm:$0xf]
      %v194 = vld [vmem:[%s165 + $0x58] sm:$0xf]
      %v195 = vld [vmem:[%s165 + $0x5c] sm:$0xf]
      %v196 = vld [vmem:[%s165 + $0x60] sm:$0xf]
      %v197 = vld [vmem:[%s165 + $0x64] sm:$0xf]
      %v198 = vld [vmem:[%s165 + $0x68] sm:$0xf]
      %v199 = vld [vmem:[%s165 + $0x6c] sm:$0xf]
      %v200 = vld [vmem:[%s165 + $0x70] sm:$0xf]
      %v201 = vld [vmem:[%s165 + $0x74] sm:$0xf]
      %v202 = vld [vmem:[%s165 + $0x78] sm:$0xf]
      %v203 = vld [vmem:[%s165 + $0x7c] sm:$0xf]
      %v204 = vld [vmem:[%s1] sm:$0xf]
      %v205 = vld [vmem:[%s1 + $0x4] sm:$0xf]
      %v206 = vld [vmem:[%s1 + $0x8] sm:$0xf]
      %v207 = vld [vmem:[%s1 + $0xc] sm:$0xf]
      %v208 = vld [vmem:[%s1 + $0x10] sm:$0xf]
      %v209 = vld [vmem:[%s1 + $0x14] sm:$0xf]
      %v210 = vld [vmem:[%s165 + $0x80] sm:$0xf]
      %v211 = vld [vmem:[%s165 + $0x84] sm:$0xf]
      %s212 = scalar_lea.vmem %s1, 24
      %v213 = vld [vmem:[%s212] sm:$0xf]
      %v214 = vld [vmem:[%s212 + $0x4] sm:$0xf]
      %v215 = vld [vmem:[%s212 + $0x8] sm:$0xf]
      %v216 = vld [vmem:[%s212 + $0xc] sm:$0xf]
      %v217 = vld [vmem:[%s212 + $0x10] sm:$0xf]
      %v218 = vld [vmem:[%s212 + $0x14] sm:$0xf]
      %v251 = vunpack.c.l.b16 %v174
      %v252 = vunpack.c.l.b16 %v175
      %v253 = vunpack.c.l.b16 %v176
      %v254 = vunpack.c.l.b16 %v177
      %v255 = vunpack.c.l.b16 %v178
      %v256 = vunpack.c.l.b16 %v179
      %v257 = vunpack.c.l.b16 %v180
      %v258 = vunpack.c.l.b16 %v181
      %v259 = vunpack.c.l.b16 %v182
      %v260 = vunpack.c.l.b16 %v183
      %v261 = vunpack.c.l.b16 %v184
      %v262 = vunpack.c.l.b16 %v185
      %v263 = vunpack.c.l.b16 %v186
      %v264 = vunpack.c.l.b16 %v187
      %v265 = vunpack.c.l.b16 %v188
      %v266 = vunpack.c.l.b16 %v189
      %v267 = vunpack.c.l.b16 %v190
      %v268 = vunpack.c.l.b16 %v191
      %v269 = vunpack.c.l.b16 %v192
      %v270 = vunpack.c.l.b16 %v193
      %v271 = vunpack.c.l.b16 %v194
      %v272 = vunpack.c.l.b16 %v195
      %v273 = vunpack.c.l.b16 %v196
      %v274 = vunpack.c.l.b16 %v197
      %v275 = vunpack.c.l.b16 %v198
      %v276 = vunpack.c.l.b16 %v199
      %v277 = vunpack.c.l.b16 %v200
      %v278 = vunpack.c.l.b16 %v201
      %v279 = vunpack.c.l.b16 %v202
      %v280 = vunpack.c.l.b16 %v203
      %v281 = vunpack.c.l.b16 %v210
      %v282 = vunpack.c.l.b16 %v211
      %v283 = vpack.c.b16 %v252, %v251
      %v284 = vpack.c.b16 %v254, %v253
      %v285 = vpack.c.b16 %v256, %v255
      %v286 = vpack.c.b16 %v258, %v257
      %v287 = vpack.c.b16 %v260, %v259
      %v288 = vpack.c.b16 %v262, %v261
      %v289 = vpack.c.b16 %v264, %v263
      %v290 = vpack.c.b16 %v266, %v265
      %v291 = vpack.c.b16 %v268, %v267
      %v292 = vpack.c.b16 %v270, %v269
      %v293 = vpack.c.b16 %v272, %v271
      %v294 = vpack.c.b16 %v274, %v273
      %v295 = vpack.c.b16 %v276, %v275
      %v296 = vpack.c.b16 %v278, %v277
      %v297 = vpack.c.b16 %v280, %v279
      %v298 = vpack.c.b16 %v282, %v281
      %v305 = vunpack.c.l.b16 %v213
      %v306 = vunpack.c.l.b16 %v214
      %v307 = vunpack.c.l.b16 %v215
      %v308 = vunpack.c.l.b16 %v216
      %v309 = vunpack.c.l.b16 %v217
      %v310 = vunpack.c.l.b16 %v218
      %v311 = vpack.c.b16 %v306, %v305
      %v312 = vpack.c.b16 %v308, %v307
      %v313 = vpack.c.b16 %v310, %v309
      %vm317 = vcmask 392192
      %v319 = vsel %vm317, %v283, 0
      %v322 = vsel %vm317, %v284, 0
      %v325 = vsel %vm317, %v285, 0
      %v328 = vsel %vm317, %v286, 0
      %v331 = vsel %vm317, %v287, 0
      %v334 = vsel %vm317, %v288, 0
      %v337 = vsel %vm317, %v289, 0
      %v340 = vsel %vm317, %v290, 0
      %v343 = vsel %vm317, %v291, 0
      %v346 = vsel %vm317, %v292, 0
      %v349 = vsel %vm317, %v293, 0
      %v352 = vsel %vm317, %v294, 0
      %v355 = vsel %vm317, %v295, 0
      %v358 = vsel %vm317, %v296, 0
      %v361 = vsel %vm317, %v297, 0
      %v364 = vsel %vm317, %v298, 0
      %366 = vmatprep.subr.bf16.mxu0 0
      %367 = vmatpush1.bf16.msra.mxu0 0
      %368 = vmatprep.subr.bf16.mxu0 0
      %369 = vmatpush1.bf16.msra.mxu0 0
      %370 = vmatprep.subr.bf16.mxu0 0
      %371 = vmatpush1.bf16.msra.mxu0 0
      %372 = vmatprep.subr.bf16.mxu0 0
      %373 = vmatpush1.bf16.msra.mxu0 0
      %374 = vmatprep.subr.bf16.mxu0 0
      %375 = vmatpush1.bf16.msra.mxu0 0
      %376 = vmatprep.subr.bf16.mxu0 0
      %377 = vmatpush1.bf16.msra.mxu0 %v313
      %378 = vmatprep.subr.bf16.mxu0 0
      %379 = vmatpush1.bf16.msra.mxu0 %v312
      %380 = vmatprep.subr.bf16.mxu0 0
      %381 = vmatpush1.bf16.msra.mxu0 %v311
      %382 = vmatprep.subr.bf16.mxu0 0
      %383 = vmatpush2.bf16.msra.mxu0 0
      %384 = vmatprep.subr.bf16.mxu0 0
      %385 = vmatpush2.bf16.msra.mxu0 0
      %386 = vmatprep.subr.bf16.mxu0 0
      %387 = vmatpush2.bf16.msra.mxu0 0
      %388 = vmatprep.subr.bf16.mxu0 0
      %389 = vmatpush2.bf16.msra.mxu0 0
      %390 = vmatprep.subr.bf16.mxu0 0
      %391 = vmatpush2.bf16.msra.mxu0 0
      %392 = vmatprep.subr.bf16.mxu0 0
      %393 = vmatpush2.bf16.msra.mxu0 0
      %394 = vmatprep.subr.bf16.mxu0 0
      %395 = vmatpush2.bf16.msra.mxu0 0
      %396 = vmatprep.subr.bf16.mxu0 0
      %397 = vmatpush2.bf16.msra.mxu0 0
      %398 = vmatprep.mubr.bf16.mxu0 0
      %399 = vmatmul.mubr.bf16.gmra.mxu0 %v319
      %v400 = vpop.f32.mrf.mxu0
      %v401 = vadd.f32 0.0, %v400
      %v402 = vpop.f32.mrf.mxu0
      %v403 = vpop.f32.mrf.mxu0
      %v404 = vadd.f32 0.0, %v403
      %v405 = vpop.f32.mrf.mxu0
      %406 = vmatprep.mubr.bf16.mxu0 0
      %407 = vmatmul.mubr.bf16.gmra.mxu0 %v322
      %v408 = vpop.f32.mrf.mxu0
      %v409 = vadd.f32 0.0, %v408
      %v410 = vpop.f32.mrf.mxu0
      %v411 = vpop.f32.mrf.mxu0
      %v412 = vadd.f32 0.0, %v411
      %v413 = vpop.f32.mrf.mxu0
      %414 = vmatprep.mubr.bf16.mxu0 0
      %415 = vmatmul.mubr.bf16.gmra.mxu0 %v325
      %v416 = vpop.f32.mrf.mxu0
      %v417 = vadd.f32 0.0, %v416
      %v418 = vpop.f32.mrf.mxu0
      %v419 = vpop.f32.mrf.mxu0
      %v420 = vadd.f32 0.0, %v419
      %v421 = vpop.f32.mrf.mxu0
      %422 = vmatprep.mubr.bf16.mxu0 0
      %423 = vmatmul.mubr.bf16.gmra.mxu0 %v328
      %v424 = vpop.f32.mrf.mxu0
      %v425 = vadd.f32 0.0, %v424
      %v426 = vpop.f32.mrf.mxu0
      %v427 = vpop.f32.mrf.mxu0
      %v428 = vadd.f32 0.0, %v427
      %v429 = vpop.f32.mrf.mxu0
      %430 = vmatprep.mubr.bf16.mxu0 0
      %431 = vmatmul.mubr.bf16.gmra.mxu0 %v331
      %v432 = vpop.f32.mrf.mxu0
      %v433 = vadd.f32 0.0, %v432
      %v434 = vpop.f32.mrf.mxu0
      %v435 = vpop.f32.mrf.mxu0
      %v436 = vadd.f32 0.0, %v435
      %v437 = vpop.f32.mrf.mxu0
      %438 = vmatprep.mubr.bf16.mxu0 0
      %439 = vmatmul.mubr.bf16.gmra.mxu0 %v334
      %v440 = vpop.f32.mrf.mxu0
      %v441 = vadd.f32 0.0, %v440
      %v442 = vpop.f32.mrf.mxu0
      %v443 = vpop.f32.mrf.mxu0
      %v444 = vadd.f32 0.0, %v443
      %v445 = vpop.f32.mrf.mxu0
      %446 = vmatprep.mubr.bf16.mxu0 0
      %447 = vmatmul.mubr.bf16.gmra.mxu0 %v337
      %v448 = vpop.f32.mrf.mxu0
      %v449 = vadd.f32 0.0, %v448
      %v450 = vpop.f32.mrf.mxu0
      %v451 = vpop.f32.mrf.mxu0
      %v452 = vadd.f32 0.0, %v451
      %v453 = vpop.f32.mrf.mxu0
      %454 = vmatprep.mubr.bf16.mxu0 0
      %455 = vmatmul.mubr.bf16.gmra.mxu0 %v340
      %v456 = vpop.f32.mrf.mxu0
      %v457 = vadd.f32 0.0, %v456
      %v458 = vpop.f32.mrf.mxu0
      %v459 = vpop.f32.mrf.mxu0
      %v460 = vadd.f32 0.0, %v459
      %v461 = vpop.f32.mrf.mxu0
      %462 = vmatprep.mubr.bf16.mxu0 0
      %463 = vmatmul.mubr.bf16.gmra.mxu0 %v343
      %v464 = vpop.f32.mrf.mxu0
      %v465 = vadd.f32 0.0, %v464
      %v466 = vpop.f32.mrf.mxu0
      %v467 = vpop.f32.mrf.mxu0
      %v468 = vadd.f32 0.0, %v467
      %v469 = vpop.f32.mrf.mxu0
      %470 = vmatprep.mubr.bf16.mxu0 0
      %471 = vmatmul.mubr.bf16.gmra.mxu0 %v346
      %v472 = vpop.f32.mrf.mxu0
      %v473 = vadd.f32 0.0, %v472
      %v474 = vpop.f32.mrf.mxu0
      %v475 = vpop.f32.mrf.mxu0
      %v476 = vadd.f32 0.0, %v475
      %v477 = vpop.f32.mrf.mxu0
      %478 = vmatprep.mubr.bf16.mxu0 0
      %479 = vmatmul.mubr.bf16.gmra.mxu0 %v349
      %v480 = vpop.f32.mrf.mxu0
      %v481 = vadd.f32 0.0, %v480
      %v482 = vpop.f32.mrf.mxu0
      %v483 = vpop.f32.mrf.mxu0
      %v484 = vadd.f32 0.0, %v483
      %v485 = vpop.f32.mrf.mxu0
      %486 = vmatprep.mubr.bf16.mxu0 0
      %487 = vmatmul.mubr.bf16.gmra.mxu0 %v352
      %v488 = vpop.f32.mrf.mxu0
      %v489 = vadd.f32 0.0, %v488
      %v490 = vpop.f32.mrf.mxu0
      %v491 = vpop.f32.mrf.mxu0
      %v492 = vadd.f32 0.0, %v491
      %v493 = vpop.f32.mrf.mxu0
      %494 = vmatprep.mubr.bf16.mxu0 0
      %495 = vmatmul.mubr.bf16.gmra.mxu0 %v355
      %v496 = vpop.f32.mrf.mxu0
      %v497 = vadd.f32 0.0, %v496
      %v498 = vpop.f32.mrf.mxu0
      %v499 = vpop.f32.mrf.mxu0
      %v500 = vadd.f32 0.0, %v499
      %v501 = vpop.f32.mrf.mxu0
      %502 = vmatprep.mubr.bf16.mxu0 0
      %503 = vmatmul.mubr.bf16.gmra.mxu0 %v358
      %v504 = vpop.f32.mrf.mxu0
      %v505 = vadd.f32 0.0, %v504
      %v506 = vpop.f32.mrf.mxu0
      %v507 = vpop.f32.mrf.mxu0
      %v508 = vadd.f32 0.0, %v507
      %v509 = vpop.f32.mrf.mxu0
      %510 = vmatprep.mubr.bf16.mxu0 0
      %511 = vmatmul.mubr.bf16.gmra.mxu0 %v361
      %v512 = vpop.f32.mrf.mxu0
      %v513 = vadd.f32 0.0, %v512
      %v514 = vpop.f32.mrf.mxu0
      %v515 = vpop.f32.mrf.mxu0
      %v516 = vadd.f32 0.0, %v515
      %v517 = vpop.f32.mrf.mxu0
      %518 = vmatprep.mubr.bf16.mxu0 0
      %519 = vmatmul.mubr.bf16.gmra.mxu0 %v364
      %v520 = vpop.f32.mrf.mxu0
      %v521 = vadd.f32 0.0, %v520
      %v522 = vpop.f32.mrf.mxu0
      %v523 = vpop.f32.mrf.mxu0
      %v524 = vadd.f32 0.0, %v523
      %v525 = vpop.f32.mrf.mxu0
      %526 = vdwg.mxu0
      %v529 = vunpack.c.l.b16 %v172
      %v530 = vunpack.c.l.b16 %v173
      %v531 = vpack.c.b16 %v530, %v529
      %v538 = vunpack.c.l.b16 %v204
      %v539 = vunpack.c.l.b16 %v205
      %v540 = vunpack.c.l.b16 %v206
      %v541 = vunpack.c.l.b16 %v207
      %v542 = vunpack.c.l.b16 %v208
      %v543 = vunpack.c.l.b16 %v209
      %v544 = vpack.c.b16 %v539, %v538
      %v545 = vpack.c.b16 %v541, %v540
      %v546 = vpack.c.b16 %v543, %v542
      %v551 = vsel %vm317, %v531, 0
      %553 = vmatprep.subr.bf16.mxu0 0
      %554 = vmatpush1.bf16.msra.mxu0 0
      %555 = vmatprep.subr.bf16.mxu0 0
      %556 = vmatpush1.bf16.msra.mxu0 0
      %557 = vmatprep.subr.bf16.mxu0 0
      %558 = vmatpush1.bf16.msra.mxu0 0
      %559 = vmatprep.subr.bf16.mxu0 0
      %560 = vmatpush1.bf16.msra.mxu0 0
      %561 = vmatprep.subr.bf16.mxu0 0
      %562 = vmatpush1.bf16.msra.mxu0 0
      %563 = vmatprep.subr.bf16.mxu0 0
      %564 = vmatpush1.bf16.msra.mxu0 %v546
      %565 = vmatprep.subr.bf16.mxu0 0
      %566 = vmatpush1.bf16.msra.mxu0 %v545
      %567 = vmatprep.subr.bf16.mxu0 0
      %568 = vmatpush1.bf16.msra.mxu0 %v544
      %569 = vmatprep.subr.bf16.mxu0 0
      %570 = vmatpush2.bf16.msra.mxu0 0
      %571 = vmatprep.subr.bf16.mxu0 0
      %572 = vmatpush2.bf16.msra.mxu0 0
      %573 = vmatprep.subr.bf16.mxu0 0
      %574 = vmatpush2.bf16.msra.mxu0 0
      %575 = vmatprep.subr.bf16.mxu0 0
      %576 = vmatpush2.bf16.msra.mxu0 0
      %577 = vmatprep.subr.bf16.mxu0 0
      %578 = vmatpush2.bf16.msra.mxu0 0
      %579 = vmatprep.subr.bf16.mxu0 0
      %580 = vmatpush2.bf16.msra.mxu0 0
      %581 = vmatprep.subr.bf16.mxu0 0
      %582 = vmatpush2.bf16.msra.mxu0 0
      %583 = vmatprep.subr.bf16.mxu0 0
      %584 = vmatpush2.bf16.msra.mxu0 0
      %585 = vmatprep.mubr.bf16.mxu0 0
      %586 = vmatmul.mubr.bf16.gmra.mxu0 %v551
      %v587 = vpop.f32.mrf.mxu0
      %v588 = vadd.f32 %v401, %v587
      %v589 = vpop.f32.mrf.mxu0
      %v590 = vpop.f32.mrf.mxu0
      %v591 = vadd.f32 %v404, %v590
      %v592 = vpop.f32.mrf.mxu0
      %593 = vmatprep.mubr.bf16.mxu0 0
      %594 = vmatmul.mubr.bf16.gmra.mxu0 %v319
      %v595 = vpop.f32.mrf.mxu0
      %v596 = vadd.f32 %v409, %v595
      %v597 = vpop.f32.mrf.mxu0
      %v598 = vpop.f32.mrf.mxu0
      %v599 = vadd.f32 %v412, %v598
      %v600 = vpop.f32.mrf.mxu0
      %601 = vmatprep.mubr.bf16.mxu0 0
      %602 = vmatmul.mubr.bf16.gmra.mxu0 %v322
      %v603 = vpop.f32.mrf.mxu0
      %v604 = vadd.f32 %v417, %v603
      %v605 = vpop.f32.mrf.mxu0
      %v606 = vpop.f32.mrf.mxu0
      %v607 = vadd.f32 %v420, %v606
      %v608 = vpop.f32.mrf.mxu0
      %609 = vmatprep.mubr.bf16.mxu0 0
      %610 = vmatmul.mubr.bf16.gmra.mxu0 %v325
      %v611 = vpop.f32.mrf.mxu0
      %v612 = vadd.f32 %v425, %v611
      %v613 = vpop.f32.mrf.mxu0
      %v614 = vpop.f32.mrf.mxu0
      %v615 = vadd.f32 %v428, %v614
      %v616 = vpop.f32.mrf.mxu0
      %617 = vmatprep.mubr.bf16.mxu0 0
      %618 = vmatmul.mubr.bf16.gmra.mxu0 %v328
      %v619 = vpop.f32.mrf.mxu0
      %v620 = vadd.f32 %v433, %v619
      %v621 = vpop.f32.mrf.mxu0
      %v622 = vpop.f32.mrf.mxu0
      %v623 = vadd.f32 %v436, %v622
      %v624 = vpop.f32.mrf.mxu0
      %625 = vmatprep.mubr.bf16.mxu0 0
      %626 = vmatmul.mubr.bf16.gmra.mxu0 %v331
      %v627 = vpop.f32.mrf.mxu0
      %v628 = vadd.f32 %v441, %v627
      %v629 = vpop.f32.mrf.mxu0
      %v630 = vpop.f32.mrf.mxu0
      %v631 = vadd.f32 %v444, %v630
      %v632 = vpop.f32.mrf.mxu0
      %633 = vmatprep.mubr.bf16.mxu0 0
      %634 = vmatmul.mubr.bf16.gmra.mxu0 %v334
      %v635 = vpop.f32.mrf.mxu0
      %v636 = vadd.f32 %v449, %v635
      %v637 = vpop.f32.mrf.mxu0
      %v638 = vpop.f32.mrf.mxu0
      %v639 = vadd.f32 %v452, %v638
      %v640 = vpop.f32.mrf.mxu0
      %641 = vmatprep.mubr.bf16.mxu0 0
      %642 = vmatmul.mubr.bf16.gmra.mxu0 %v337
      %v643 = vpop.f32.mrf.mxu0
      %v644 = vadd.f32 %v457, %v643
      %v645 = vpop.f32.mrf.mxu0
      %v646 = vpop.f32.mrf.mxu0
      %v647 = vadd.f32 %v460, %v646
      %v648 = vpop.f32.mrf.mxu0
      %649 = vmatprep.mubr.bf16.mxu0 0
      %650 = vmatmul.mubr.bf16.gmra.mxu0 %v340
      %v651 = vpop.f32.mrf.mxu0
      %v652 = vadd.f32 %v465, %v651
      %v653 = vpop.f32.mrf.mxu0
      %v654 = vpop.f32.mrf.mxu0
      %v655 = vadd.f32 %v468, %v654
      %v656 = vpop.f32.mrf.mxu0
      %657 = vmatprep.mubr.bf16.mxu0 0
      %658 = vmatmul.mubr.bf16.gmra.mxu0 %v343
      %v659 = vpop.f32.mrf.mxu0
      %v660 = vadd.f32 %v473, %v659
      %v661 = vpop.f32.mrf.mxu0
      %v662 = vpop.f32.mrf.mxu0
      %v663 = vadd.f32 %v476, %v662
      %v664 = vpop.f32.mrf.mxu0
      %665 = vmatprep.mubr.bf16.mxu0 0
      %666 = vmatmul.mubr.bf16.gmra.mxu0 %v346
      %v667 = vpop.f32.mrf.mxu0
      %v668 = vadd.f32 %v481, %v667
      %v669 = vpop.f32.mrf.mxu0
      %v670 = vpop.f32.mrf.mxu0
      %v671 = vadd.f32 %v484, %v670
      %v672 = vpop.f32.mrf.mxu0
      %673 = vmatprep.mubr.bf16.mxu0 0
      %674 = vmatmul.mubr.bf16.gmra.mxu0 %v349
      %v675 = vpop.f32.mrf.mxu0
      %v676 = vadd.f32 %v489, %v675
      %v677 = vpop.f32.mrf.mxu0
      %v678 = vpop.f32.mrf.mxu0
      %v679 = vadd.f32 %v492, %v678
      %v680 = vpop.f32.mrf.mxu0
      %681 = vmatprep.mubr.bf16.mxu0 0
      %682 = vmatmul.mubr.bf16.gmra.mxu0 %v352
      %v683 = vpop.f32.mrf.mxu0
      %v684 = vadd.f32 %v497, %v683
      %v685 = vpop.f32.mrf.mxu0
      %v686 = vpop.f32.mrf.mxu0
      %v687 = vadd.f32 %v500, %v686
      %v688 = vpop.f32.mrf.mxu0
      %689 = vmatprep.mubr.bf16.mxu0 0
      %690 = vmatmul.mubr.bf16.gmra.mxu0 %v355
      %v691 = vpop.f32.mrf.mxu0
      %v692 = vadd.f32 %v505, %v691
      %v693 = vpop.f32.mrf.mxu0
      %v694 = vpop.f32.mrf.mxu0
      %v695 = vadd.f32 %v508, %v694
      %v696 = vpop.f32.mrf.mxu0
      %697 = vmatprep.mubr.bf16.mxu0 0
      %698 = vmatmul.mubr.bf16.gmra.mxu0 %v358
      %v699 = vpop.f32.mrf.mxu0
      %v700 = vadd.f32 %v513, %v699
      %v701 = vpop.f32.mrf.mxu0
      %v702 = vpop.f32.mrf.mxu0
      %v703 = vadd.f32 %v516, %v702
      %v704 = vpop.f32.mrf.mxu0
      %705 = vmatprep.mubr.bf16.mxu0 0
      %706 = vmatmul.mubr.bf16.gmra.mxu0 %v361
      %v707 = vpop.f32.mrf.mxu0
      %v708 = vadd.f32 %v521, %v707
      %v709 = vpop.f32.mrf.mxu0
      %v710 = vpop.f32.mrf.mxu0
      %v711 = vadd.f32 %v524, %v710
      %v712 = vpop.f32.mrf.mxu0
      %713 = vdwg.mxu0
      %v714 = vld [vmem:[%s165 + $0x10] sm:$0xf]
      %v715 = vld [vmem:[%s165 + $0x14] sm:$0xf]
      %v716 = vld [vmem:[%s165 + $0x18] sm:$0xf]
      %v717 = vld [vmem:[%s165 + $0x1c] sm:$0xf]
      %v718 = vld [vmem:[%s165 + $0x20] sm:$0xf]
      %v719 = vld [vmem:[%s165 + $0x24] sm:$0xf]
      %v720 = vld [vmem:[%s165 + $0x28] sm:$0xf]
      %v721 = vld [vmem:[%s165 + $0x2c] sm:$0xf]
      %v722 = vld [vmem:[%s165 + $0x30] sm:$0xf]
      %v723 = vld [vmem:[%s165 + $0x34] sm:$0xf]
      %v724 = vld [vmem:[%s165 + $0x38] sm:$0xf]
      %v725 = vld [vmem:[%s165 + $0x3c] sm:$0xf]
      %v726 = vld [vmem:[%s165 + $0x40] sm:$0xf]
      %v727 = vld [vmem:[%s165 + $0x44] sm:$0xf]
      %v728 = vld [vmem:[%s165 + $0x48] sm:$0xf]
      %v729 = vld [vmem:[%s165 + $0x4c] sm:$0xf]
      %v730 = vld [vmem:[%s165 + $0x50] sm:$0xf]
      %v731 = vld [vmem:[%s165 + $0x54] sm:$0xf]
      %v732 = vld [vmem:[%s165 + $0x58] sm:$0xf]
      %v733 = vld [vmem:[%s165 + $0x5c] sm:$0xf]
      %v734 = vld [vmem:[%s165 + $0x60] sm:$0xf]
      %v735 = vld [vmem:[%s165 + $0x64] sm:$0xf]
      %v736 = vld [vmem:[%s165 + $0x68] sm:$0xf]
      %v737 = vld [vmem:[%s165 + $0x6c] sm:$0xf]
      %v738 = vld [vmem:[%s165 + $0x70] sm:$0xf]
      %v739 = vld [vmem:[%s165 + $0x74] sm:$0xf]
      %v740 = vld [vmem:[%s165 + $0x78] sm:$0xf]
      %v741 = vld [vmem:[%s165 + $0x7c] sm:$0xf]
      %v742 = vld [vmem:[%s165 + $0x80] sm:$0xf]
      %v743 = vld [vmem:[%s165 + $0x84] sm:$0xf]
      %v744 = vld [vmem:[%s165 + $0x88] sm:$0xf]
      %v745 = vld [vmem:[%s165 + $0x8c] sm:$0xf]
      %s746 = scalar_lea.vmem %s1, 48
      %v747 = vld [vmem:[%s746] sm:$0xf]
      %v748 = vld [vmem:[%s746 + $0x4] sm:$0xf]
      %v749 = vld [vmem:[%s746 + $0x8] sm:$0xf]
      %v750 = vld [vmem:[%s746 + $0xc] sm:$0xf]
      %v751 = vld [vmem:[%s746 + $0x10] sm:$0xf]
      %v752 = vld [vmem:[%s746 + $0x14] sm:$0xf]
      %v785 = vunpack.c.l.b16 %v714
      %v786 = vunpack.c.l.b16 %v715
      %v787 = vunpack.c.l.b16 %v716
      %v788 = vunpack.c.l.b16 %v717
      %v789 = vunpack.c.l.b16 %v718
      %v790 = vunpack.c.l.b16 %v719
      %v791 = vunpack.c.l.b16 %v720
      %v792 = vunpack.c.l.b16 %v721
      %v793 = vunpack.c.l.b16 %v722
      %v794 = vunpack.c.l.b16 %v723
      %v795 = vunpack.c.l.b16 %v724
      %v796 = vunpack.c.l.b16 %v725
      %v797 = vunpack.c.l.b16 %v726
      %v798 = vunpack.c.l.b16 %v727
      %v799 = vunpack.c.l.b16 %v728
      %v800 = vunpack.c.l.b16 %v729
      %v801 = vunpack.c.l.b16 %v730
      %v802 = vunpack.c.l.b16 %v731
      %v803 = vunpack.c.l.b16 %v732
      %v804 = vunpack.c.l.b16 %v733
      %v805 = vunpack.c.l.b16 %v734
      %v806 = vunpack.c.l.b16 %v735
      %v807 = vunpack.c.l.b16 %v736
      %v808 = vunpack.c.l.b16 %v737
      %v809 = vunpack.c.l.b16 %v738
      %v810 = vunpack.c.l.b16 %v739
      %v811 = vunpack.c.l.b16 %v740
      %v812 = vunpack.c.l.b16 %v741
      %v813 = vunpack.c.l.b16 %v742
      %v814 = vunpack.c.l.b16 %v743
      %v815 = vunpack.c.l.b16 %v744
      %v816 = vunpack.c.l.b16 %v745
      %v817 = vpack.c.b16 %v786, %v785
      %v818 = vpack.c.b16 %v788, %v787
      %v819 = vpack.c.b16 %v790, %v789
      %v820 = vpack.c.b16 %v792, %v791
      %v821 = vpack.c.b16 %v794, %v793
      %v822 = vpack.c.b16 %v796, %v795
      %v823 = vpack.c.b16 %v798, %v797
      %v824 = vpack.c.b16 %v800, %v799
      %v825 = vpack.c.b16 %v802, %v801
      %v826 = vpack.c.b16 %v804, %v803
      %v827 = vpack.c.b16 %v806, %v805
      %v828 = vpack.c.b16 %v808, %v807
      %v829 = vpack.c.b16 %v810, %v809
      %v830 = vpack.c.b16 %v812, %v811
      %v831 = vpack.c.b16 %v814, %v813
      %v832 = vpack.c.b16 %v816, %v815
      %v839 = vunpack.c.l.b16 %v747
      %v840 = vunpack.c.l.b16 %v748
      %v841 = vunpack.c.l.b16 %v749
      %v842 = vunpack.c.l.b16 %v750
      %v843 = vunpack.c.l.b16 %v751
      %v844 = vunpack.c.l.b16 %v752
      %v845 = vpack.c.b16 %v840, %v839
      %v846 = vpack.c.b16 %v842, %v841
      %v847 = vpack.c.b16 %v844, %v843
      %v852 = vsel %vm317, %v817, 0
      %v855 = vsel %vm317, %v818, 0
      %v858 = vsel %vm317, %v819, 0
      %v861 = vsel %vm317, %v820, 0
      %v864 = vsel %vm317, %v821, 0
      %v867 = vsel %vm317, %v822, 0
      %v870 = vsel %vm317, %v823, 0
      %v873 = vsel %vm317, %v824, 0
      %v876 = vsel %vm317, %v825, 0
      %v879 = vsel %vm317, %v826, 0
      %v882 = vsel %vm317, %v827, 0
      %v885 = vsel %vm317, %v828, 0
      %v888 = vsel %vm317, %v829, 0
      %v891 = vsel %vm317, %v830, 0
      %v894 = vsel %vm317, %v831, 0
      %v897 = vsel %vm317, %v832, 0
      %899 = vmatprep.subr.bf16.mxu0 0
      %900 = vmatpush1.bf16.msra.mxu0 0
      %901 = vmatprep.subr.bf16.mxu0 0
      %902 = vmatpush1.bf16.msra.mxu0 0
      %903 = vmatprep.subr.bf16.mxu0 0
      %904 = vmatpush1.bf16.msra.mxu0 0
      %905 = vmatprep.subr.bf16.mxu0 0
      %906 = vmatpush1.bf16.msra.mxu0 0
      %907 = vmatprep.subr.bf16.mxu0 0
      %908 = vmatpush1.bf16.msra.mxu0 0
      %909 = vmatprep.subr.bf16.mxu0 0
      %910 = vmatpush1.bf16.msra.mxu0 %v847
      %911 = vmatprep.subr.bf16.mxu0 0
      %912 = vmatpush1.bf16.msra.mxu0 %v846
      %913 = vmatprep.subr.bf16.mxu0 0
      %914 = vmatpush1.bf16.msra.mxu0 %v845
      %915 = vmatprep.subr.bf16.mxu0 0
      %916 = vmatpush2.bf16.msra.mxu0 0
      %917 = vmatprep.subr.bf16.mxu0 0
      %918 = vmatpush2.bf16.msra.mxu0 0
      %919 = vmatprep.subr.bf16.mxu0 0
      %920 = vmatpush2.bf16.msra.mxu0 0
      %921 = vmatprep.subr.bf16.mxu0 0
      %922 = vmatpush2.bf16.msra.mxu0 0
      %923 = vmatprep.subr.bf16.mxu0 0
      %924 = vmatpush2.bf16.msra.mxu0 0
      %925 = vmatprep.subr.bf16.mxu0 0
      %926 = vmatpush2.bf16.msra.mxu0 0
      %927 = vmatprep.subr.bf16.mxu0 0
      %928 = vmatpush2.bf16.msra.mxu0 0
      %929 = vmatprep.subr.bf16.mxu0 0
      %930 = vmatpush2.bf16.msra.mxu0 0
      %931 = vmatprep.mubr.bf16.mxu0 0
      %932 = vmatmul.mubr.bf16.gmra.mxu0 %v852
      %v933 = vpop.f32.mrf.mxu0
      %v934 = vadd.f32 0.0, %v933
      %v935 = vpop.f32.mrf.mxu0
      %v936 = vpop.f32.mrf.mxu0
      %v937 = vadd.f32 0.0, %v936
      %v938 = vpop.f32.mrf.mxu0
      %939 = vmatprep.mubr.bf16.mxu0 0
      %940 = vmatmul.mubr.bf16.gmra.mxu0 %v855
      %v941 = vpop.f32.mrf.mxu0
      %v942 = vadd.f32 0.0, %v941
      %v943 = vpop.f32.mrf.mxu0
      %v944 = vpop.f32.mrf.mxu0
      %v945 = vadd.f32 0.0, %v944
      %v946 = vpop.f32.mrf.mxu0
      %947 = vmatprep.mubr.bf16.mxu0 0
      %948 = vmatmul.mubr.bf16.gmra.mxu0 %v858
      %v949 = vpop.f32.mrf.mxu0
      %v950 = vadd.f32 0.0, %v949
      %v951 = vpop.f32.mrf.mxu0
      %v952 = vpop.f32.mrf.mxu0
      %v953 = vadd.f32 0.0, %v952
      %v954 = vpop.f32.mrf.mxu0
      %955 = vmatprep.mubr.bf16.mxu0 0
      %956 = vmatmul.mubr.bf16.gmra.mxu0 %v861
      %v957 = vpop.f32.mrf.mxu0
      %v958 = vadd.f32 0.0, %v957
      %v959 = vpop.f32.mrf.mxu0
      %v960 = vpop.f32.mrf.mxu0
      %v961 = vadd.f32 0.0, %v960
      %v962 = vpop.f32.mrf.mxu0
      %963 = vmatprep.mubr.bf16.mxu0 0
      %964 = vmatmul.mubr.bf16.gmra.mxu0 %v864
      %v965 = vpop.f32.mrf.mxu0
      %v966 = vadd.f32 0.0, %v965
      %v967 = vpop.f32.mrf.mxu0
      %v968 = vpop.f32.mrf.mxu0
      %v969 = vadd.f32 0.0, %v968
      %v970 = vpop.f32.mrf.mxu0
      %971 = vmatprep.mubr.bf16.mxu0 0
      %972 = vmatmul.mubr.bf16.gmra.mxu0 %v867
      %v973 = vpop.f32.mrf.mxu0
      %v974 = vadd.f32 0.0, %v973
      %v975 = vpop.f32.mrf.mxu0
      %v976 = vpop.f32.mrf.mxu0
      %v977 = vadd.f32 0.0, %v976
      %v978 = vpop.f32.mrf.mxu0
      %979 = vmatprep.mubr.bf16.mxu0 0
      %980 = vmatmul.mubr.bf16.gmra.mxu0 %v870
      %v981 = vpop.f32.mrf.mxu0
      %v982 = vadd.f32 0.0, %v981
      %v983 = vpop.f32.mrf.mxu0
      %v984 = vpop.f32.mrf.mxu0
      %v985 = vadd.f32 0.0, %v984
      %v986 = vpop.f32.mrf.mxu0
      %987 = vmatprep.mubr.bf16.mxu0 0
      %988 = vmatmul.mubr.bf16.gmra.mxu0 %v873
      %v989 = vpop.f32.mrf.mxu0
      %v990 = vadd.f32 0.0, %v989
      %v991 = vpop.f32.mrf.mxu0
      %v992 = vpop.f32.mrf.mxu0
      %v993 = vadd.f32 0.0, %v992
      %v994 = vpop.f32.mrf.mxu0
      %995 = vmatprep.mubr.bf16.mxu0 0
      %996 = vmatmul.mubr.bf16.gmra.mxu0 %v876
      %v997 = vpop.f32.mrf.mxu0
      %v998 = vadd.f32 0.0, %v997
      %v999 = vpop.f32.mrf.mxu0
      %v1000 = vpop.f32.mrf.mxu0
      %v1001 = vadd.f32 0.0, %v1000
      %v1002 = vpop.f32.mrf.mxu0
      %1003 = vmatprep.mubr.bf16.mxu0 0
      %1004 = vmatmul.mubr.bf16.gmra.mxu0 %v879
      %v1005 = vpop.f32.mrf.mxu0
      %v1006 = vadd.f32 0.0, %v1005
      %v1007 = vpop.f32.mrf.mxu0
      %v1008 = vpop.f32.mrf.mxu0
      %v1009 = vadd.f32 0.0, %v1008
      %v1010 = vpop.f32.mrf.mxu0
      %1011 = vmatprep.mubr.bf16.mxu0 0
      %1012 = vmatmul.mubr.bf16.gmra.mxu0 %v882
      %v1013 = vpop.f32.mrf.mxu0
      %v1014 = vadd.f32 0.0, %v1013
      %v1015 = vpop.f32.mrf.mxu0
      %v1016 = vpop.f32.mrf.mxu0
      %v1017 = vadd.f32 0.0, %v1016
      %v1018 = vpop.f32.mrf.mxu0
      %1019 = vmatprep.mubr.bf16.mxu0 0
      %1020 = vmatmul.mubr.bf16.gmra.mxu0 %v885
      %v1021 = vpop.f32.mrf.mxu0
      %v1022 = vadd.f32 0.0, %v1021
      %v1023 = vpop.f32.mrf.mxu0
      %v1024 = vpop.f32.mrf.mxu0
      %v1025 = vadd.f32 0.0, %v1024
      %v1026 = vpop.f32.mrf.mxu0
      %1027 = vmatprep.mubr.bf16.mxu0 0
      %1028 = vmatmul.mubr.bf16.gmra.mxu0 %v888
      %v1029 = vpop.f32.mrf.mxu0
      %v1030 = vadd.f32 0.0, %v1029
      %v1031 = vpop.f32.mrf.mxu0
      %v1032 = vpop.f32.mrf.mxu0
      %v1033 = vadd.f32 0.0, %v1032
      %v1034 = vpop.f32.mrf.mxu0
      %1035 = vmatprep.mubr.bf16.mxu0 0
      %1036 = vmatmul.mubr.bf16.gmra.mxu0 %v891
      %v1037 = vpop.f32.mrf.mxu0
      %v1038 = vadd.f32 0.0, %v1037
      %v1039 = vpop.f32.mrf.mxu0
      %v1040 = vpop.f32.mrf.mxu0
      %v1041 = vadd.f32 0.0, %v1040
      %v1042 = vpop.f32.mrf.mxu0
      %1043 = vmatprep.mubr.bf16.mxu0 0
      %1044 = vmatmul.mubr.bf16.gmra.mxu0 %v894
      %v1045 = vpop.f32.mrf.mxu0
      %v1046 = vadd.f32 0.0, %v1045
      %v1047 = vpop.f32.mrf.mxu0
      %v1048 = vpop.f32.mrf.mxu0
      %v1049 = vadd.f32 0.0, %v1048
      %v1050 = vpop.f32.mrf.mxu0
      %1051 = vmatprep.mubr.bf16.mxu0 0
      %1052 = vmatmul.mubr.bf16.gmra.mxu0 %v897
      %v1053 = vpop.f32.mrf.mxu0
      %v1054 = vadd.f32 0.0, %v1053
      %v1055 = vpop.f32.mrf.mxu0
      %v1056 = vpop.f32.mrf.mxu0
      %v1057 = vadd.f32 0.0, %v1056
      %v1058 = vpop.f32.mrf.mxu0
      %1059 = vdwg.mxu0
      %v1060 = vadd.f32 %v588, %v934
      %v1061 = vadd.f32 %v591, %v937
      %v1062 = vadd.f32 %v596, %v942
      %v1063 = vadd.f32 %v599, %v945
      %v1064 = vadd.f32 %v604, %v950
      %v1065 = vadd.f32 %v607, %v953
      %v1066 = vadd.f32 %v612, %v958
      %v1067 = vadd.f32 %v615, %v961
      %v1068 = vadd.f32 %v620, %v966
      %v1069 = vadd.f32 %v623, %v969
      %v1070 = vadd.f32 %v628, %v974
      %v1071 = vadd.f32 %v631, %v977
      %v1072 = vadd.f32 %v636, %v982
      %v1073 = vadd.f32 %v639, %v985
      %v1074 = vadd.f32 %v644, %v990
      %v1075 = vadd.f32 %v647, %v993
      %v1076 = vadd.f32 %v652, %v998
      %v1077 = vadd.f32 %v655, %v1001
      %v1078 = vadd.f32 %v660, %v1006
      %v1079 = vadd.f32 %v663, %v1009
      %v1080 = vadd.f32 %v668, %v1014
      %v1081 = vadd.f32 %v671, %v1017
      %v1082 = vadd.f32 %v676, %v1022
      %v1083 = vadd.f32 %v679, %v1025
      %v1084 = vadd.f32 %v684, %v1030
      %v1085 = vadd.f32 %v687, %v1033
      %v1086 = vadd.f32 %v692, %v1038
      %v1087 = vadd.f32 %v695, %v1041
      %v1088 = vadd.f32 %v700, %v1046
      %v1089 = vadd.f32 %v703, %v1049
      %v1090 = vadd.f32 %v708, %v1054
      %v1091 = vadd.f32 %v711, %v1057
      %v1092 = vld [vmem:[%s2] sm:$0x1]
      %v1094 = vlaneseq
      %v1095 = vshrl.u32 %v1094, 7
      %v1096 = vsub.s32 0, %v1095
      %v1097 = vrot.slane %v1092, %v1096
      %v1099 = vadd.f32 %v1060, %v1097
      %v1100 = vadd.f32 %v1061, %v1097
      %v1101 = vadd.f32 %v1062, %v1097
      %v1102 = vadd.f32 %v1063, %v1097
      %v1103 = vadd.f32 %v1064, %v1097
      %v1104 = vadd.f32 %v1065, %v1097
      %v1105 = vadd.f32 %v1066, %v1097
      %v1106 = vadd.f32 %v1067, %v1097
      %v1107 = vadd.f32 %v1068, %v1097
      %v1108 = vadd.f32 %v1069, %v1097
      %v1109 = vadd.f32 %v1070, %v1097
      %v1110 = vadd.f32 %v1071, %v1097
      %v1111 = vadd.f32 %v1072, %v1097
      %v1112 = vadd.f32 %v1073, %v1097
      %v1113 = vadd.f32 %v1074, %v1097
      %v1114 = vadd.f32 %v1075, %v1097
      %v1115 = vadd.f32 %v1076, %v1097
      %v1116 = vadd.f32 %v1077, %v1097
      %v1117 = vadd.f32 %v1078, %v1097
      %v1118 = vadd.f32 %v1079, %v1097
      %v1119 = vadd.f32 %v1080, %v1097
      %v1120 = vadd.f32 %v1081, %v1097
      %v1121 = vadd.f32 %v1082, %v1097
      %v1122 = vadd.f32 %v1083, %v1097
      %v1123 = vadd.f32 %v1084, %v1097
      %v1124 = vadd.f32 %v1085, %v1097
      %v1125 = vadd.f32 %v1086, %v1097
      %v1126 = vadd.f32 %v1087, %v1097
      %v1127 = vadd.f32 %v1088, %v1097
      %v1128 = vadd.f32 %v1089, %v1097
      %v1129 = vadd.f32 %v1090, %v1097
      %v1130 = vadd.f32 %v1091, %v1097
      %v1131 = vmax.f32 %v1099, 0.0
      %v1132 = vmax.f32 %v1100, 0.0
      %v1133 = vmax.f32 %v1101, 0.0
      %v1134 = vmax.f32 %v1102, 0.0
      %v1135 = vmax.f32 %v1103, 0.0
      %v1136 = vmax.f32 %v1104, 0.0
      %v1137 = vmax.f32 %v1105, 0.0
      %v1138 = vmax.f32 %v1106, 0.0
      %v1139 = vmax.f32 %v1107, 0.0
      %v1140 = vmax.f32 %v1108, 0.0
      %v1141 = vmax.f32 %v1109, 0.0
      %v1142 = vmax.f32 %v1110, 0.0
      %v1143 = vmax.f32 %v1111, 0.0
      %v1144 = vmax.f32 %v1112, 0.0
      %v1145 = vmax.f32 %v1113, 0.0
      %v1146 = vmax.f32 %v1114, 0.0
      %v1147 = vmax.f32 %v1115, 0.0
      %v1148 = vmax.f32 %v1116, 0.0
      %v1149 = vmax.f32 %v1117, 0.0
      %v1150 = vmax.f32 %v1118, 0.0
      %v1151 = vmax.f32 %v1119, 0.0
      %v1152 = vmax.f32 %v1120, 0.0
      %v1153 = vmax.f32 %v1121, 0.0
      %v1154 = vmax.f32 %v1122, 0.0
      %v1155 = vmax.f32 %v1123, 0.0
      %v1156 = vmax.f32 %v1124, 0.0
      %v1157 = vmax.f32 %v1125, 0.0
      %v1158 = vmax.f32 %v1126, 0.0
      %v1159 = vmax.f32 %v1127, 0.0
      %v1160 = vmax.f32 %v1128, 0.0
      %v1161 = vmax.f32 %v1129, 0.0
      %v1162 = vmax.f32 %v1130, 0.0
      %v1163 = vpack.c.bf16 %v1132, %v1131
      %v1164 = vpack.c.bf16 %v1134, %v1133
      %v1165 = vpack.c.bf16 %v1136, %v1135
      %v1166 = vpack.c.bf16 %v1138, %v1137
      %v1167 = vpack.c.bf16 %v1140, %v1139
      %v1168 = vpack.c.bf16 %v1142, %v1141
      %v1169 = vpack.c.bf16 %v1144, %v1143
      %v1170 = vpack.c.bf16 %v1146, %v1145
      %v1171 = vpack.c.bf16 %v1148, %v1147
      %v1172 = vpack.c.bf16 %v1150, %v1149
      %v1173 = vpack.c.bf16 %v1152, %v1151
      %v1174 = vpack.c.bf16 %v1154, %v1153
      %v1175 = vpack.c.bf16 %v1156, %v1155
      %v1176 = vpack.c.bf16 %v1158, %v1157
      %v1177 = vpack.c.bf16 %v1160, %v1159
      %v1178 = vpack.c.bf16 %v1162, %v1161
      %v1195 = vunpack.c.l.b16 %v1163
      %v1196 = vunpack.c.h.b16 %v1163
      %v1197 = vunpack.c.l.b16 %v1164
      %v1198 = vunpack.c.h.b16 %v1164
      %v1199 = vunpack.c.l.b16 %v1165
      %v1200 = vunpack.c.h.b16 %v1165
      %v1201 = vunpack.c.l.b16 %v1166
      %v1202 = vunpack.c.h.b16 %v1166
      %v1203 = vunpack.c.l.b16 %v1167
      %v1204 = vunpack.c.h.b16 %v1167
      %v1205 = vunpack.c.l.b16 %v1168
      %v1206 = vunpack.c.h.b16 %v1168
      %v1207 = vunpack.c.l.b16 %v1169
      %v1208 = vunpack.c.h.b16 %v1169
      %v1209 = vunpack.c.l.b16 %v1170
      %v1210 = vunpack.c.h.b16 %v1170
      %v1211 = vunpack.c.l.b16 %v1171
      %v1212 = vunpack.c.h.b16 %v1171
      %v1213 = vunpack.c.l.b16 %v1172
      %v1214 = vunpack.c.h.b16 %v1172
      %v1215 = vunpack.c.l.b16 %v1173
      %v1216 = vunpack.c.h.b16 %v1173
      %v1217 = vunpack.c.l.b16 %v1174
      %v1218 = vunpack.c.h.b16 %v1174
      %v1219 = vunpack.c.l.b16 %v1175
      %v1220 = vunpack.c.h.b16 %v1175
      %v1221 = vunpack.c.l.b16 %v1176
      %v1222 = vunpack.c.h.b16 %v1176
      %v1223 = vunpack.c.l.b16 %v1177
      %v1224 = vunpack.c.h.b16 %v1177
      %v1225 = vunpack.c.l.b16 %v1178
      %v1226 = vunpack.c.h.b16 %v1178
      %v1227 = vpack.c.b16 %v1195, %v1195
      %v1228 = vpack.c.b16 %v1196, %v1196
      %v1229 = vpack.c.b16 %v1197, %v1197
      %v1230 = vpack.c.b16 %v1198, %v1198
      %v1231 = vpack.c.b16 %v1199, %v1199
      %v1232 = vpack.c.b16 %v1200, %v1200
      %v1233 = vpack.c.b16 %v1201, %v1201
      %v1234 = vpack.c.b16 %v1202, %v1202
      %v1235 = vpack.c.b16 %v1203, %v1203
      %v1236 = vpack.c.b16 %v1204, %v1204
      %v1237 = vpack.c.b16 %v1205, %v1205
      %v1238 = vpack.c.b16 %v1206, %v1206
      %v1239 = vpack.c.b16 %v1207, %v1207
      %v1240 = vpack.c.b16 %v1208, %v1208
      %v1241 = vpack.c.b16 %v1209, %v1209
      %v1242 = vpack.c.b16 %v1210, %v1210
      %v1243 = vpack.c.b16 %v1211, %v1211
      %v1244 = vpack.c.b16 %v1212, %v1212
      %v1245 = vpack.c.b16 %v1213, %v1213
      %v1246 = vpack.c.b16 %v1214, %v1214
      %v1247 = vpack.c.b16 %v1215, %v1215
      %v1248 = vpack.c.b16 %v1216, %v1216
      %v1249 = vpack.c.b16 %v1217, %v1217
      %v1250 = vpack.c.b16 %v1218, %v1218
      %v1251 = vpack.c.b16 %v1219, %v1219
      %v1252 = vpack.c.b16 %v1220, %v1220
      %v1253 = vpack.c.b16 %v1221, %v1221
      %v1254 = vpack.c.b16 %v1222, %v1222
      %v1255 = vpack.c.b16 %v1223, %v1223
      %v1256 = vpack.c.b16 %v1224, %v1224
      %v1257 = vpack.c.b16 %v1225, %v1225
      %v1258 = vpack.c.b16 %v1226, %v1226
      %vm1291 = vcmask 125952
      %1292 = vst.msk [vmem:[%s170] sm:$0xf] %vm1291, %v1227
      %1293 = vst.msk [vmem:[%s170 + $0x4] sm:$0xf] %vm1291, %v1228
      %1294 = vst.msk [vmem:[%s170 + $0x8] sm:$0xf] %vm1291, %v1229
      %1295 = vst.msk [vmem:[%s170 + $0xc] sm:$0xf] %vm1291, %v1230
      %1296 = vst.msk [vmem:[%s170 + $0x10] sm:$0xf] %vm1291, %v1231
      %1297 = vst.msk [vmem:[%s170 + $0x14] sm:$0xf] %vm1291, %v1232
      %1298 = vst.msk [vmem:[%s170 + $0x18] sm:$0xf] %vm1291, %v1233
      %1299 = vst.msk [vmem:[%s170 + $0x1c] sm:$0xf] %vm1291, %v1234
      %1300 = vst.msk [vmem:[%s170 + $0x20] sm:$0xf] %vm1291, %v1235
      %1301 = vst.msk [vmem:[%s170 + $0x24] sm:$0xf] %vm1291, %v1236
      %1302 = vst.msk [vmem:[%s170 + $0x28] sm:$0xf] %vm1291, %v1237
      %1303 = vst.msk [vmem:[%s170 + $0x2c] sm:$0xf] %vm1291, %v1238
      %1304 = vst.msk [vmem:[%s170 + $0x30] sm:$0xf] %vm1291, %v1239
      %1305 = vst.msk [vmem:[%s170 + $0x34] sm:$0xf] %vm1291, %v1240
      %1306 = vst.msk [vmem:[%s170 + $0x38] sm:$0xf] %vm1291, %v1241
      %1307 = vst.msk [vmem:[%s170 + $0x3c] sm:$0xf] %vm1291, %v1242
      %1308 = vst.msk [vmem:[%s170 + $0x40] sm:$0xf] %vm1291, %v1243
      %1309 = vst.msk [vmem:[%s170 + $0x44] sm:$0xf] %vm1291, %v1244
      %1310 = vst.msk [vmem:[%s170 + $0x48] sm:$0xf] %vm1291, %v1245
      %1311 = vst.msk [vmem:[%s170 + $0x4c] sm:$0xf] %vm1291, %v1246
      %1312 = vst.msk [vmem:[%s170 + $0x50] sm:$0xf] %vm1291, %v1247
      %1313 = vst.msk [vmem:[%s170 + $0x54] sm:$0xf] %vm1291, %v1248
      %1314 = vst.msk [vmem:[%s170 + $0x58] sm:$0xf] %vm1291, %v1249
      %1315 = vst.msk [vmem:[%s170 + $0x5c] sm:$0xf] %vm1291, %v1250
      %1316 = vst.msk [vmem:[%s170 + $0x60] sm:$0xf] %vm1291, %v1251
      %1317 = vst.msk [vmem:[%s170 + $0x64] sm:$0xf] %vm1291, %v1252
      %1318 = vst.msk [vmem:[%s170 + $0x68] sm:$0xf] %vm1291, %v1253
      %1319 = vst.msk [vmem:[%s170 + $0x6c] sm:$0xf] %vm1291, %v1254
      %1320 = vst.msk [vmem:[%s170 + $0x70] sm:$0xf] %vm1291, %v1255
      %1321 = vst.msk [vmem:[%s170 + $0x74] sm:$0xf] %vm1291, %v1256
      %1322 = vst.msk [vmem:[%s170 + $0x78] sm:$0xf] %vm1291, %v1257
      %1323 = vst.msk [vmem:[%s170 + $0x7c] sm:$0xf] %vm1291, %v1258
      %p1324 = scmp.lt.s32.totalorder %s14, 1
      %s1325 = scalar_select %p1324, %s14, 1
      %s1326 = smul.addr %s1325, 32
      %s1327 = smul.addr %s1326, 4
      %s1328 = scalar_lea.vmem %s3, %s1327
      // Predicated region
      $region33: #{_lambda_.22} parent=31 // pred_check
        %p1329 = pneg %p100
      $region34: #{_lambda_.22} parent=31 // pred_check_branch
        %1331 = sbr.rel (%p1329) target = $region36
      $region35: #{_lambda_.22} parent=31 // pred_region
        _
      $region36: #{_lambda_.22} parent=31 // pred_fallthru
        _
    $region32: #{_lambda_.22} parent=5 // pred_fallthru
      _
    %p1332 = scmp.le.s32.totalorder 2, %s9
    // Predicated region
    $region37: #{_lambda_.22} parent=5 // pred_check
      %p1333 = pneg %p1332
    $region38: #{_lambda_.22} parent=5 // pred_check_branch
      %1335 = sbr.rel (%p1333) target = $region40
    $region39: #{_lambda_.22} parent=5 // pred_region
      %s1336 = ssub.s32 %s9, 2
      // Predicated region
      $region41: #{_lambda_.22} parent=39 // pred_check
        %p1337 = pneg %p106
      $region42: #{_lambda_.22} parent=39 // pred_check_branch
        %1339 = sbr.rel (%p1337) target = $region44
      $region43: #{_lambda_.22} parent=39 // pred_region
        %p1340 = scmp.lt.s32.totalorder %s15, 1
        %s1341 = scalar_select %p1340, %s15, 1
        %s1342 = smul.addr %s1341, 32
        %s1343 = smul.addr %s1342, 4
        %s1344 = scalar_lea.vmem %s3, %s1343
      $region44: #{_lambda_.22} parent=39 // pred_fallthru
        _
    $region40: #{_lambda_.22} parent=5 // pred_fallthru
      _
  $region6: #{_lambda_.22} parent=0 // loop_footer
    %s13 = sadd.s32 1, %s9
  $region7: #{_lambda_.22} parent=0 // loop_footer_branch
    %8 = sbr.rel target = $region3
  $region8: #{_lambda_.22} parent=0 // loop_exit
    _

// kernel: _lambda_.29
$region0: #{_lambda_.29}
  #allocation0 [shape = 'u32[]', space=smem, size = 0x4, offset = 0x4, fixed_abs, tag = 'smem constant byte address 0x4 - core index']
  #allocation1 [shape = 'u32[144,128]{1,0:T(1,128)}', space=vmem, size = 0x12000, scoped, tag = 'internal scratch']
  %s0 = inlined_call_operand.vmem [shape: bf16[2,64,16], index: 0, kind: input, shape index: {}]
  %s1 = inlined_call_operand.vmem [shape: bf16[1,16,32], index: 1, kind: input, shape index: {}]
  %s2 = inlined_call_operand.vmem [shape: f32[1,32], index: 2, kind: input, shape index: {}]
  %s3 = inlined_call_operand.vmem [shape: bf16[2,64,32], index: 3, kind: output, shape index: {}]
  %s4 = sld [smem:[#allocation0]]
  $region45: #{_lambda_.29} parent=0
    _
  %s6 = ssub.s32 1, %s4
  %s7 = scalar_select 0, %s6, %s4
  loop: start=0, step=1, limit=4
  $region2: #{_lambda_.29} parent=0 // loop_pre_header
    _
  $region3: #{_lambda_.29} parent=0 // loop_header
    %s9 = sphi 0, %s13
    %p10 = scmp.ge.s32.totalorder %s9, 4
    %s19 = sphi 0, %s21
    %s22 = sphi 0, %s19
    %s23 = sphi 0, %s22
    %s39 = sphi 0, %s23
    %s43 = sphi 0, %s43
    %s45 = sphi 0, %s43
    %s46 = sphi 0, %s45
    %s60 = sphi 0, %s46
    %s64 = sphi 0, %s64
    %s66 = sphi 0, %s64
    %s67 = sphi 0, %s66
    %s81 = sphi 0, %s67
    %s87 = sphi 0, %s89
    %s90 = sphi 0, %s87
    %s91 = sphi 0, %s90
    %s107 = sphi 0, %s91
  $region4: #{_lambda_.29} parent=0 // loop_header_branch
    %12 = sbr.rel (%p10) target = $region8
  $region5: #{_lambda_.29} parent=0 // loop_body
    %s14 = ssub.s32 %s9, 1
    %s15 = ssub.s32 %s9, 2
    %s16 = sadd.s32 %s9, 1
    %s17 = ssub.s32 %s9, %s16
    %p18 = scmp.eq.s32.totalorder %s17, 0
    %s20 = sadd.s32 %s19, 1
    %s21 = scalar_select %p18, %s19, %s20
    %p24 = pneg %p18
    %p25 = scmp.eq.s32.totalorder %s9, 1
    %p26 = por %p24, %p25
    %p27 = scmp.ne.s32.totalorder %s19, %s22
    %p28 = scmp.eq.s32.totalorder %s9, 0
    %p29 = por %p27, %p28
    %p30 = scmp.ne.s32.totalorder %s19, %s22
    %p31 = scmp.eq.s32.totalorder %s14, 1
    %p32 = por %p30, %p31
    %p33 = scmp.ne.s32.totalorder %s22, %s23
    %p34 = scmp.eq.s32.totalorder %s14, 0
    %p35 = por %p33, %p34
    %p36 = scmp.ne.s32.totalorder %s22, %s23
    %p37 = scmp.eq.s32.totalorder %s15, 1
    %p38 = por %p36, %p37
    %p40 = scmp.ne.s32.totalorder %s23, %s39
    %p41 = scmp.eq.s32.totalorder %s15, 0
    %p42 = por %p40, %p41
    %s44 = sadd.s32 %s43, 1
    %p47 = scmp.eq.s32.totalorder %s9, 1
    %p48 = scmp.ne.s32.totalorder %s43, %s45
    %p49 = scmp.eq.s32.totalorder %s9, 0
    %p50 = por %p48, %p49
    %p51 = scmp.ne.s32.totalorder %s43, %s45
    %p52 = scmp.eq.s32.totalorder %s14, 1
    %p53 = por %p51, %p52
    %p54 = scmp.ne.s32.totalorder %s45, %s46
    %p55 = scmp.eq.s32.totalorder %s14, 0
    %p56 = por %p54, %p55
    %p57 = scmp.ne.s32.totalorder %s45, %s46
    %p58 = scmp.eq.s32.totalorder %s15, 1
    %p59 = por %p57, %p58
    %p61 = scmp.ne.s32.totalorder %s46, %s60
    %p62 = scmp.eq.s32.totalorder %s15, 0
    %p63 = por %p61, %p62
    %s65 = sadd.s32 %s64, 1
    %p68 = scmp.eq.s32.totalorder %s9, 1
    %p69 = scmp.ne.s32.totalorder %s64, %s66
    %p70 = scmp.eq.s32.totalorder %s9, 0
    %p71 = por %p69, %p70
    %p72 = scmp.ne.s32.totalorder %s64, %s66
    %p73 = scmp.eq.s32.totalorder %s14, 1
    %p74 = por %p72, %p73
    %p75 = scmp.ne.s32.totalorder %s66, %s67
    %p76 = scmp.eq.s32.totalorder %s14, 0
    %p77 = por %p75, %p76
    %p78 = scmp.ne.s32.totalorder %s66, %s67
    %p79 = scmp.eq.s32.totalorder %s15, 1
    %p80 = por %p78, %p79
    %p82 = scmp.ne.s32.totalorder %s67, %s81
    %p83 = scmp.eq.s32.totalorder %s15, 0
    %p84 = por %p82, %p83
    %s85 = ssub.s32 %s9, %s16
    %p86 = scmp.eq.s32.totalorder %s85, 0
    %s88 = sadd.s32 %s87, 1
    %s89 = scalar_select %p86, %s87, %s88
    %p92 = pneg %p86
    %p93 = scmp.eq.s32.totalorder %s9, 1
    %p94 = por %p92, %p93
    %p95 = scmp.ne.s32.totalorder %s87, %s90
    %p96 = scmp.eq.s32.totalorder %s9, 0
    %p97 = por %p95, %p96
    %p98 = scmp.ne.s32.totalorder %s87, %s90
    %p99 = scmp.eq.s32.totalorder %s14, 1
    %p100 = por %p98, %p99
    %p101 = scmp.ne.s32.totalorder %s90, %s91
    %p102 = scmp.eq.s32.totalorder %s14, 0
    %p103 = por %p101, %p102
    %p104 = scmp.ne.s32.totalorder %s90, %s91
    %p105 = scmp.eq.s32.totalorder %s15, 1
    %p106 = por %p104, %p105
    %p108 = scmp.ne.s32.totalorder %s91, %s107
    %p109 = scmp.eq.s32.totalorder %s15, 0
    %p110 = por %p108, %p109
    %p111 = scmp.le.s32.totalorder 1, %s9
    %p112 = scmp.lt.s32.totalorder %s9, 3
    %p113 = pnand %p111, %p112
    %p114 = pneg %p113
    // Predicated region
    $region9: #{_lambda_.29} parent=5 // pred_check
      _
    $region10: #{_lambda_.29} parent=5 // pred_check_branch
      %116 = sbr.rel (%p113) target = $region12
    $region11: #{_lambda_.29} parent=5 // pred_region
      %s117 = ssub.s32 %s9, 1
      // Predicated region
      $region13: #{_lambda_.29} parent=11 // pred_check
        %p118 = pneg %p56
      $region14: #{_lambda_.29} parent=11 // pred_check_branch
        %120 = sbr.rel (%p118) target = $region16
      $region15: #{_lambda_.29} parent=11 // pred_region
        _
      $region16: #{_lambda_.29} parent=11 // pred_fallthru
        _
      // Predicated region
      $region17: #{_lambda_.29} parent=11 // pred_check
        %p121 = pneg %p77
      $region18: #{_lambda_.29} parent=11 // pred_check_branch
        %123 = sbr.rel (%p121) target = $region20
      $region19: #{_lambda_.29} parent=11 // pred_region
        _
      $region20: #{_lambda_.29} parent=11 // pred_fallthru
        _
    $region12: #{_lambda_.29} parent=5 // pred_fallthru
      _
    %p124 = scmp.lt.s32.totalorder %s9, 2
    // Predicated region
    $region21: #{_lambda_.29} parent=5 // pred_check
      %p125 = pneg %p124
    $region22: #{_lambda_.29} parent=5 // pred_check_branch
      %127 = sbr.rel (%p125) target = $region24
    $region23: #{_lambda_.29} parent=5 // pred_region
      // Predicated region
      $region25: #{_lambda_.29} parent=23 // pred_check
        %p128 = pneg %p29
      $region26: #{_lambda_.29} parent=23 // pred_check_branch
        %130 = sbr.rel (%p128) target = $region28
      $region27: #{_lambda_.29} parent=23 // pred_region
        %p131 = scmp.lt.s32.totalorder %s9, 1
        %s132 = scalar_select %p131, %s9, 1
        %s133 = smul.addr %s132, 8
        %s134 = smul.addr %s133, 4
        %s135 = scalar_lea.vmem %s0, %s134
      $region28: #{_lambda_.29} parent=23 // pred_fallthru
        _
    $region24: #{_lambda_.29} parent=5 // pred_fallthru
      _
    %p136 = scmp.le.s32.totalorder 1, %s9
    %p137 = scmp.lt.s32.totalorder %s9, 3
    %p138 = pnand %p136, %p137
    %p139 = pneg %p138
    // Predicated region
    $region29: #{_lambda_.29} parent=5 // pred_check
      _
    $region30: #{_lambda_.29} parent=5 // pred_check_branch
      %141 = sbr.rel (%p138) target = $region32
    $region31: #{_lambda_.29} parent=5 // pred_region
      %s142 = ssub.s32 %s9, 1
      %p143 = scmp.lt.s32.totalorder %s14, 1
      %s144 = scalar_select %p143, %s14, 1
      %s145 = smul.addr %s144, 8
      %s146 = smul.addr %s145, 4
      %s147 = scalar_lea.vmem %s0, %s146
      %p148 = pneg %p35
      %p149 = pneg %p32
      %p150 = pneg %p56
      %p151 = pneg %p53
      %p152 = pneg %p77
      %p153 = pneg %p74
      %p154 = pneg %p103
      %p155 = pneg %p100
      %p156 = scmp.lt.s32.totalorder %s14, 1
      %s157 = scalar_select %p156, %s14, 1
      %s158 = smul.addr %s157, 8
      %s159 = smul.addr %s158, 4
      %s160 = scalar_lea.vmem %s3, %s159
      %p161 = scmp.lt.s32.totalorder %s14, 1
      %s162 = scalar_select %p161, %s14, 1
      %s163 = smul.addr %s162, 8
      %s164 = smul.addr %s163, 4
      %s165 = scalar_lea.vmem %s0, %s164
      %p166 = scmp.lt.s32.totalorder %s14, 1
      %s167 = scalar_select %p166, %s14, 1
      %s168 = smul.addr %s167, 8
      %s169 = smul.addr %s168, 4
      %s170 = scalar_lea.vmem %s3, %s169
      %v172 = vld [vmem:[%s165] sm:$0xf]
      %v173 = vld [vmem:[%s165 + $0x4] sm:$0xf]
      %v174 = vld [vmem:[%s165 + $0x8] sm:$0xf]
      %v175 = vld [vmem:[%s165 + $0xc] sm:$0xf]
      %v176 = vld [vmem:[%s165 + $0x10] sm:$0xf]
      %v177 = vld [vmem:[%s165 + $0x14] sm:$0xf]
      %v178 = vld [vmem:[%s165 + $0x18] sm:$0xf]
      %v179 = vld [vmem:[%s165 + $0x1c] sm:$0xf]
      %v180 = vld [vmem:[%s1] sm:$0xf]
      %v181 = vld [vmem:[%s1 + $0x4] sm:$0xf]
      %v182 = vld [vmem:[%s2] sm:$0x1]
      %v184 = vlaneseq
      %v185 = vshrl.u32 %v184, 7
      %v186 = vsub.s32 0, %v185
      %v187 = vrot.slane %v182, %v186
      %v197 = vunpack.c.l.b16 %v172
      %v198 = vunpack.c.l.b16 %v173
      %v199 = vunpack.c.l.b16 %v174
      %v200 = vunpack.c.l.b16 %v175
      %v201 = vunpack.c.l.b16 %v176
      %v202 = vunpack.c.l.b16 %v177
      %v203 = vunpack.c.l.b16 %v178
      %v204 = vunpack.c.l.b16 %v179
      %v205 = vpack.c.b16 %v198, %v197
      %v206 = vpack.c.b16 %v200, %v199
      %v207 = vpack.c.b16 %v202, %v201
      %v208 = vpack.c.b16 %v204, %v203
      %v211 = vunpack.c.l.b16 %v180
      %v212 = vunpack.c.l.b16 %v181
      %v213 = vpack.c.b16 %v212, %v211
      %vm215 = vcmask 130048
      %v217 = vsel %vm215, %v205, 0
      %v220 = vsel %vm215, %v206, 0
      %v223 = vsel %vm215, %v207, 0
      %v226 = vsel %vm215, %v208, 0
      %228 = vmatprep.subr.bf16.mxu0 0
      %229 = vmatpush1.bf16.msra.mxu0 0
      %230 = vmatprep.subr.bf16.mxu0 0
      %231 = vmatpush1.bf16.msra.mxu0 0
      %232 = vmatprep.subr.bf16.mxu0 0
      %233 = vmatpush1.bf16.msra.mxu0 0
      %234 = vmatprep.subr.bf16.mxu0 0
      %235 = vmatpush1.bf16.msra.mxu0 0
      %236 = vmatprep.subr.bf16.mxu0 0
      %237 = vmatpush1.bf16.msra.mxu0 0
      %238 = vmatprep.subr.bf16.mxu0 0
      %239 = vmatpush1.bf16.msra.mxu0 0
      %240 = vmatprep.subr.bf16.mxu0 0
      %241 = vmatpush1.bf16.msra.mxu0 0
      %242 = vmatprep.subr.bf16.mxu0 0
      %243 = vmatpush1.bf16.msra.mxu0 %v213
      %244 = vmatprep.subr.bf16.mxu0 0
      %245 = vmatpush2.bf16.msra.mxu0 0
      %246 = vmatprep.subr.bf16.mxu0 0
      %247 = vmatpush2.bf16.msra.mxu0 0
      %248 = vmatprep.subr.bf16.mxu0 0
      %249 = vmatpush2.bf16.msra.mxu0 0
      %250 = vmatprep.subr.bf16.mxu0 0
      %251 = vmatpush2.bf16.msra.mxu0 0
      %252 = vmatprep.subr.bf16.mxu0 0
      %253 = vmatpush2.bf16.msra.mxu0 0
      %254 = vmatprep.subr.bf16.mxu0 0
      %255 = vmatpush2.bf16.msra.mxu0 0
      %256 = vmatprep.subr.bf16.mxu0 0
      %257 = vmatpush2.bf16.msra.mxu0 0
      %258 = vmatprep.subr.bf16.mxu0 0
      %259 = vmatpush2.bf16.msra.mxu0 0
      %260 = vmatprep.mubr.bf16.mxu0 0
      %261 = vmatmul.mubr.bf16.gmra.mxu0 %v217
      %v262 = vpop.f32.mrf.mxu0
      %v263 = vadd.f32 %v187, %v262
      %v264 = vpop.f32.mrf.mxu0
      %v265 = vpop.f32.mrf.mxu0
      %v266 = vadd.f32 %v187, %v265
      %v267 = vpop.f32.mrf.mxu0
      %268 = vmatprep.mubr.bf16.mxu0 0
      %269 = vmatmul.mubr.bf16.gmra.mxu0 %v220
      %v270 = vpop.f32.mrf.mxu0
      %v271 = vadd.f32 %v187, %v270
      %v272 = vpop.f32.mrf.mxu0
      %v273 = vpop.f32.mrf.mxu0
      %v274 = vadd.f32 %v187, %v273
      %v275 = vpop.f32.mrf.mxu0
      %276 = vmatprep.mubr.bf16.mxu0 0
      %277 = vmatmul.mubr.bf16.gmra.mxu0 %v223
      %v278 = vpop.f32.mrf.mxu0
      %v279 = vadd.f32 %v187, %v278
      %v280 = vpop.f32.mrf.mxu0
      %v281 = vpop.f32.mrf.mxu0
      %v282 = vadd.f32 %v187, %v281
      %v283 = vpop.f32.mrf.mxu0
      %284 = vmatprep.mubr.bf16.mxu0 0
      %285 = vmatmul.mubr.bf16.gmra.mxu0 %v226
      %v286 = vpop.f32.mrf.mxu0
      %v287 = vadd.f32 %v187, %v286
      %v288 = vpop.f32.mrf.mxu0
      %v289 = vpop.f32.mrf.mxu0
      %v290 = vadd.f32 %v187, %v289
      %v291 = vpop.f32.mrf.mxu0
      %292 = vdwg.mxu0
      %v293 = vpack.c.bf16 %v266, %v263
      %v294 = vpack.c.bf16 %v274, %v271
      %v295 = vpack.c.bf16 %v282, %v279
      %v296 = vpack.c.bf16 %v290, %v287
      %v301 = vunpack.c.l.b16 %v293
      %v302 = vunpack.c.h.b16 %v293
      %v303 = vunpack.c.l.b16 %v294
      %v304 = vunpack.c.h.b16 %v294
      %v305 = vunpack.c.l.b16 %v295
      %v306 = vunpack.c.h.b16 %v295
      %v307 = vunpack.c.l.b16 %v296
      %v308 = vunpack.c.h.b16 %v296
      %v309 = vpack.c.b16 %v301, %v301
      %v310 = vpack.c.b16 %v302, %v302
      %v311 = vpack.c.b16 %v303, %v303
      %v312 = vpack.c.b16 %v304, %v304
      %v313 = vpack.c.b16 %v305, %v305
      %v314 = vpack.c.b16 %v306, %v306
      %v315 = vpack.c.b16 %v307, %v307
      %v316 = vpack.c.b16 %v308, %v308
      %vm325 = vcmask 257024
      %326 = vst.msk [vmem:[%s170] sm:$0xf] %vm325, %v309
      %327 = vst.msk [vmem:[%s170 + $0x4] sm:$0xf] %vm325, %v310
      %328 = vst.msk [vmem:[%s170 + $0x8] sm:$0xf] %vm325, %v311
      %329 = vst.msk [vmem:[%s170 + $0xc] sm:$0xf] %vm325, %v312
      %330 = vst.msk [vmem:[%s170 + $0x10] sm:$0xf] %vm325, %v313
      %331 = vst.msk [vmem:[%s170 + $0x14] sm:$0xf] %vm325, %v314
      %332 = vst.msk [vmem:[%s170 + $0x18] sm:$0xf] %vm325, %v315
      %333 = vst.msk [vmem:[%s170 + $0x1c] sm:$0xf] %vm325, %v316
      %p334 = scmp.lt.s32.totalorder %s14, 1
      %s335 = scalar_select %p334, %s14, 1
      %s336 = smul.addr %s335, 8
      %s337 = smul.addr %s336, 4
      %s338 = scalar_lea.vmem %s3, %s337
      // Predicated region
      $region33: #{_lambda_.29} parent=31 // pred_check
        %p339 = pneg %p100
      $region34: #{_lambda_.29} parent=31 // pred_check_branch
        %341 = sbr.rel (%p339) target = $region36
      $region35: #{_lambda_.29} parent=31 // pred_region
        _
      $region36: #{_lambda_.29} parent=31 // pred_fallthru
        _
    $region32: #{_lambda_.29} parent=5 // pred_fallthru
      _
    %p342 = scmp.le.s32.totalorder 2, %s9
    // Predicated region
    $region37: #{_lambda_.29} parent=5 // pred_check
      %p343 = pneg %p342
    $region38: #{_lambda_.29} parent=5 // pred_check_branch
      %345 = sbr.rel (%p343) target = $region40
    $region39: #{_lambda_.29} parent=5 // pred_region
      %s346 = ssub.s32 %s9, 2
      // Predicated region
      $region41: #{_lambda_.29} parent=39 // pred_check
        %p347 = pneg %p106
      $region42: #{_lambda_.29} parent=39 // pred_check_branch
        %349 = sbr.rel (%p347) target = $region44
      $region43: #{_lambda_.29} parent=39 // pred_region
        %p350 = scmp.lt.s32.totalorder %s15, 1
        %s351 = scalar_select %p350, %s15, 1
        %s352 = smul.addr %s351, 8
        %s353 = smul.addr %s352, 4
        %s354 = scalar_lea.vmem %s3, %s353
      $region44: #{_lambda_.29} parent=39 // pred_fallthru
        _
    $region40: #{_lambda_.29} parent=5 // pred_fallthru
      _
  $region6: #{_lambda_.29} parent=0 // loop_footer
    %s13 = sadd.s32 1, %s9
  $region7: #{_lambda_.29} parent=0 // loop_footer_branch
    %8 = sbr.rel target = $region3
  $region8: #{_lambda_.29} parent=0 // loop_exit
    _

// kernel: _lambda_.23
$region0: #{_lambda_.23}
  #allocation0 [shape = 'u32[]', space=smem, size = 0x4, offset = 0x4, fixed_abs, tag = 'smem constant byte address 0x4 - core index']
  #allocation1 [shape = 'u32[144,128]{1,0:T(1,128)}', space=vmem, size = 0x12000, scoped, tag = 'internal scratch']
  %s0 = inlined_call_operand.vmem [shape: bf16[2,288,48], index: 0, kind: input, shape index: {}]
  %s1 = inlined_call_operand.vmem [shape: bf16[3,48,16], index: 1, kind: input, shape index: {}]
  %s2 = inlined_call_operand.vmem [shape: f32[1,16], index: 2, kind: input, shape index: {}]
  %s3 = inlined_call_operand.vmem [shape: bf16[2,256,16], index: 3, kind: input, shape index: {}]
  %s4 = inlined_call_operand.vmem [shape: bf16[2,256,16], index: 4, kind: output, shape index: {}]
  %s5 = sld [smem:[#allocation0]]
  $region49: #{_lambda_.23} parent=0
    _
  %s7 = ssub.s32 1, %s5
  %s8 = scalar_select 0, %s7, %s5
  loop: start=0, step=1, limit=4
  $region2: #{_lambda_.23} parent=0 // loop_pre_header
    _
  $region3: #{_lambda_.23} parent=0 // loop_header
    %s10 = sphi 0, %s14
    %p11 = scmp.ge.s32.totalorder %s10, 4
    %s20 = sphi 0, %s22
    %s23 = sphi 0, %s20
    %s24 = sphi 0, %s23
    %s40 = sphi 0, %s24
    %s44 = sphi 0, %s44
    %s46 = sphi 0, %s44
    %s47 = sphi 0, %s46
    %s61 = sphi 0, %s47
    %s65 = sphi 0, %s65
    %s67 = sphi 0, %s65
    %s68 = sphi 0, %s67
    %s82 = sphi 0, %s68
    %s88 = sphi 0, %s90
    %s91 = sphi 0, %s88
    %s92 = sphi 0, %s91
    %s108 = sphi 0, %s92
    %s114 = sphi 0, %s116
    %s117 = sphi 0, %s114
    %s118 = sphi 0, %s117
    %s134 = sphi 0, %s118
  $region4: #{_lambda_.23} parent=0 // loop_header_branch
    %13 = sbr.rel (%p11) target = $region8
  $region5: #{_lambda_.23} parent=0 // loop_body
    %s15 = ssub.s32 %s10, 1
    %s16 = ssub.s32 %s10, 2
    %s17 = sadd.s32 %s10, 1
    %s18 = ssub.s32 %s10, %s17
    %p19 = scmp.eq.s32.totalorder %s18, 0
    %s21 = sadd.s32 %s20, 1
    %s22 = scalar_select %p19, %s20, %s21
    %p25 = pneg %p19
    %p26 = scmp.eq.s32.totalorder %s10, 1
    %p27 = por %p25, %p26
    %p28 = scmp.ne.s32.totalorder %s20, %s23
    %p29 = scmp.eq.s32.totalorder %s10, 0
    %p30 = por %p28, %p29
    %p31 = scmp.ne.s32.totalorder %s20, %s23
    %p32 = scmp.eq.s32.totalorder %s15, 1
    %p33 = por %p31, %p32
    %p34 = scmp.ne.s32.totalorder %s23, %s24
    %p35 = scmp.eq.s32.totalorder %s15, 0
    %p36 = por %p34, %p35
    %p37 = scmp.ne.s32.totalorder %s23, %s24
    %p38 = scmp.eq.s32.totalorder %s16, 1
    %p39 = por %p37, %p38
    %p41 = scmp.ne.s32.totalorder %s24, %s40
    %p42 = scmp.eq.s32.totalorder %s16, 0
    %p43 = por %p41, %p42
    %s45 = sadd.s32 %s44, 1
    %p48 = scmp.eq.s32.totalorder %s10, 1
    %p49 = scmp.ne.s32.totalorder %s44, %s46
    %p50 = scmp.eq.s32.totalorder %s10, 0
    %p51 = por %p49, %p50
    %p52 = scmp.ne.s32.totalorder %s44, %s46
    %p53 = scmp.eq.s32.totalorder %s15, 1
    %p54 = por %p52, %p53
    %p55 = scmp.ne.s32.totalorder %s46, %s47
    %p56 = scmp.eq.s32.totalorder %s15, 0
    %p57 = por %p55, %p56
    %p58 = scmp.ne.s32.totalorder %s46, %s47
    %p59 = scmp.eq.s32.totalorder %s16, 1
    %p60 = por %p58, %p59
    %p62 = scmp.ne.s32.totalorder %s47, %s61
    %p63 = scmp.eq.s32.totalorder %s16, 0
    %p64 = por %p62, %p63
    %s66 = sadd.s32 %s65, 1
    %p69 = scmp.eq.s32.totalorder %s10, 1
    %p70 = scmp.ne.s32.totalorder %s65, %s67
    %p71 = scmp.eq.s32.totalorder %s10, 0
    %p72 = por %p70, %p71
    %p73 = scmp.ne.s32.totalorder %s65, %s67
    %p74 = scmp.eq.s32.totalorder %s15, 1
    %p75 = por %p73, %p74
    %p76 = scmp.ne.s32.totalorder %s67, %s68
    %p77 = scmp.eq.s32.totalorder %s15, 0
    %p78 = por %p76, %p77
    %p79 = scmp.ne.s32.totalorder %s67, %s68
    %p80 = scmp.eq.s32.totalorder %s16, 1
    %p81 = por %p79, %p80
    %p83 = scmp.ne.s32.totalorder %s68, %s82
    %p84 = scmp.eq.s32.totalorder %s16, 0
    %p85 = por %p83, %p84
    %s86 = ssub.s32 %s10, %s17
    %p87 = scmp.eq.s32.totalorder %s86, 0
    %s89 = sadd.s32 %s88, 1
    %s90 = scalar_select %p87, %s88, %s89
    %p93 = pneg %p87
    %p94 = scmp.eq.s32.totalorder %s10, 1
    %p95 = por %p93, %p94
    %p96 = scmp.ne.s32.totalorder %s88, %s91
    %p97 = scmp.eq.s32.totalorder %s10, 0
    %p98 = por %p96, %p97
    %p99 = scmp.ne.s32.totalorder %s88, %s91
    %p100 = scmp.eq.s32.totalorder %s15, 1
    %p101 = por %p99, %p100
    %p102 = scmp.ne.s32.totalorder %s91, %s92
    %p103 = scmp.eq.s32.totalorder %s15, 0
    %p104 = por %p102, %p103
    %p105 = scmp.ne.s32.totalorder %s91, %s92
    %p106 = scmp.eq.s32.totalorder %s16, 1
    %p107 = por %p105, %p106
    %p109 = scmp.ne.s32.totalorder %s92, %s108
    %p110 = scmp.eq.s32.totalorder %s16, 0
    %p111 = por %p109, %p110
    %s112 = ssub.s32 %s10, %s17
    %p113 = scmp.eq.s32.totalorder %s112, 0
    %s115 = sadd.s32 %s114, 1
    %s116 = scalar_select %p113, %s114, %s115
    %p119 = pneg %p113
    %p120 = scmp.eq.s32.totalorder %s10, 1
    %p121 = por %p119, %p120
    %p122 = scmp.ne.s32.totalorder %s114, %s117
    %p123 = scmp.eq.s32.totalorder %s10, 0
    %p124 = por %p122, %p123
    %p125 = scmp.ne.s32.totalorder %s114, %s117
    %p126 = scmp.eq.s32.totalorder %s15, 1
    %p127 = por %p125, %p126
    %p128 = scmp.ne.s32.totalorder %s117, %s118
    %p129 = scmp.eq.s32.totalorder %s15, 0
    %p130 = por %p128, %p129
    %p131 = scmp.ne.s32.totalorder %s117, %s118
    %p132 = scmp.eq.s32.totalorder %s16, 1
    %p133 = por %p131, %p132
    %p135 = scmp.ne.s32.totalorder %s118, %s134
    %p136 = scmp.eq.s32.totalorder %s16, 0
    %p137 = por %p135, %p136
    %p138 = scmp.le.s32.totalorder 1, %s10
    %p139 = scmp.lt.s32.totalorder %s10, 3
    %p140 = pnand %p138, %p139
    %p141 = pneg %p140
    // Predicated region
    $region9: #{_lambda_.23} parent=5 // pred_check
      _
    $region10: #{_lambda_.23} parent=5 // pred_check_branch
      %143 = sbr.rel (%p140) target = $region12
    $region11: #{_lambda_.23} parent=5 // pred_region
      %s144 = ssub.s32 %s10, 1
      // Predicated region
      $region13: #{_lambda_.23} parent=11 // pred_check
        %p145 = pneg %p57
      $region14: #{_lambda_.23} parent=11 // pred_check_branch
        %147 = sbr.rel (%p145) target = $region16
      $region15: #{_lambda_.23} parent=11 // pred_region
        _
      $region16: #{_lambda_.23} parent=11 // pred_fallthru
        _
      // Predicated region
      $region17: #{_lambda_.23} parent=11 // pred_check
        %p148 = pneg %p78
      $region18: #{_lambda_.23} parent=11 // pred_check_branch
        %150 = sbr.rel (%p148) target = $region20
      $region19: #{_lambda_.23} parent=11 // pred_region
        _
      $region20: #{_lambda_.23} parent=11 // pred_fallthru
        _
    $region12: #{_lambda_.23} parent=5 // pred_fallthru
      _
    %p151 = scmp.lt.s32.totalorder %s10, 2
    // Predicated region
    $region21: #{_lambda_.23} parent=5 // pred_check
      %p152 = pneg %p151
    $region22: #{_lambda_.23} parent=5 // pred_check_branch
      %154 = sbr.rel (%p152) target = $region24
    $region23: #{_lambda_.23} parent=5 // pred_region
      // Predicated region
      $region25: #{_lambda_.23} parent=23 // pred_check
        %p155 = pneg %p30
      $region26: #{_lambda_.23} parent=23 // pred_check_branch
        %157 = sbr.rel (%p155) target = $region28
      $region27: #{_lambda_.23} parent=23 // pred_region
        %p158 = scmp.lt.s32.totalorder %s10, 1
        %s159 = scalar_select %p158, %s10, 1
        %s160 = smul.addr %s159, 36
        %s161 = smul.addr %s160, 4
        %s162 = scalar_lea.vmem %s0, %s161
      $region28: #{_lambda_.23} parent=23 // pred_fallthru
        _
      // Predicated region
      $region29: #{_lambda_.23} parent=23 // pred_check
        %p163 = pneg %p98
      $region30: #{_lambda_.23} parent=23 // pred_check_branch
        %165 = sbr.rel (%p163) target = $region32
      $region31: #{_lambda_.23} parent=23 // pred_region
        %p166 = scmp.lt.s32.totalorder %s10, 1
        %s167 = scalar_select %p166, %s10, 1
        %s168 = smul.addr %s167, 32
        %s169 = smul.addr %s168, 4
        %s170 = scalar_lea.vmem %s3, %s169
      $region32: #{_lambda_.23} parent=23 // pred_fallthru
        _
    $region24: #{_lambda_.23} parent=5 // pred_fallthru
      _
    %p171 = scmp.le.s32.totalorder 1, %s10
    %p172 = scmp.lt.s32.totalorder %s10, 3
    %p173 = pnand %p171, %p172
    %p174 = pneg %p173
    // Predicated region
    $region33: #{_lambda_.23} parent=5 // pred_check
      _
    $region34: #{_lambda_.23} parent=5 // pred_check_branch
      %176 = sbr.rel (%p173) target = $region36
    $region35: #{_lambda_.23} parent=5 // pred_region
      %s177 = ssub.s32 %s10, 1
      %p178 = scmp.lt.s32.totalorder %s15, 1
      %s179 = scalar_select %p178, %s15, 1
      %s180 = smul.addr %s179, 36
      %s181 = smul.addr %s180, 4
      %s182 = scalar_lea.vmem %s0, %s181
      %p183 = pneg %p36
      %p184 = pneg %p33
      %p185 = pneg %p57
      %p186 = pneg %p54
      %p187 = pneg %p78
      %p188 = pneg %p75
      %p189 = scmp.lt.s32.totalorder %s15, 1
      %s190 = scalar_select %p189, %s15, 1
      %s191 = smul.addr %s190, 32
      %s192 = smul.addr %s191, 4
      %s193 = scalar_lea.vmem %s3, %s192
      %p194 = pneg %p104
      %p195 = pneg %p101
      %p196 = pneg %p130
      %p197 = pneg %p127
      %p198 = scmp.lt.s32.totalorder %s15, 1
      %s199 = scalar_select %p198, %s15, 1
      %s200 = smul.addr %s199, 32
      %s201 = smul.addr %s200, 4
      %s202 = scalar_lea.vmem %s4, %s201
      %p203 = scmp.lt.s32.totalorder %s15, 1
      %s204 = scalar_select %p203, %s15, 1
      %s205 = smul.addr %s204, 36
      %s206 = smul.addr %s205, 4
      %s207 = scalar_lea.vmem %s0, %s206
      %p208 = scmp.lt.s32.totalorder %s15, 1
      %s209 = scalar_select %p208, %s15, 1
      %s210 = smul.addr %s209, 32
      %s211 = smul.addr %s210, 4
      %s212 = scalar_lea.vmem %s3, %s211
      %p213 = scmp.lt.s32.totalorder %s15, 1
      %s214 = scalar_select %p213, %s15, 1
      %s215 = smul.addr %s214, 32
      %s216 = smul.addr %s215, 4
      %s217 = scalar_lea.vmem %s4, %s216
      %v219 = vld [vmem:[%s207] sm:$0xf]
      %v220 = vld [vmem:[%s207 + $0x4] sm:$0xf]
      %v221 = vld [vmem:[%s207 + $0x8] sm:$0xf]
      %v222 = vld [vmem:[%s207 + $0xc] sm:$0xf]
      %v223 = vld [vmem:[%s207 + $0x10] sm:$0xf]
      %v224 = vld [vmem:[%s207 + $0x14] sm:$0xf]
      %v225 = vld [vmem:[%s207 + $0x18] sm:$0xf]
      %v226 = vld [vmem:[%s207 + $0x1c] sm:$0xf]
      %v227 = vld [vmem:[%s207 + $0x20] sm:$0xf]
      %v228 = vld [vmem:[%s207 + $0x24] sm:$0xf]
      %v229 = vld [vmem:[%s207 + $0x28] sm:$0xf]
      %v230 = vld [vmem:[%s207 + $0x2c] sm:$0xf]
      %v231 = vld [vmem:[%s207 + $0x30] sm:$0xf]
      %v232 = vld [vmem:[%s207 + $0x34] sm:$0xf]
      %v233 = vld [vmem:[%s207 + $0x38] sm:$0xf]
      %v234 = vld [vmem:[%s207 + $0x3c] sm:$0xf]
      %v235 = vld [vmem:[%s207 + $0x40] sm:$0xf]
      %v236 = vld [vmem:[%s207 + $0x44] sm:$0xf]
      %v237 = vld [vmem:[%s207 + $0x48] sm:$0xf]
      %v238 = vld [vmem:[%s207 + $0x4c] sm:$0xf]
      %v239 = vld [vmem:[%s207 + $0x50] sm:$0xf]
      %v240 = vld [vmem:[%s207 + $0x54] sm:$0xf]
      %v241 = vld [vmem:[%s207 + $0x58] sm:$0xf]
      %v242 = vld [vmem:[%s207 + $0x5c] sm:$0xf]
      %v243 = vld [vmem:[%s207 + $0x60] sm:$0xf]
      %v244 = vld [vmem:[%s207 + $0x64] sm:$0xf]
      %v245 = vld [vmem:[%s207 + $0x68] sm:$0xf]
      %v246 = vld [vmem:[%s207 + $0x6c] sm:$0xf]
      %v247 = vld [vmem:[%s207 + $0x70] sm:$0xf]
      %v248 = vld [vmem:[%s207 + $0x74] sm:$0xf]
      %v249 = vld [vmem:[%s207 + $0x78] sm:$0xf]
      %v250 = vld [vmem:[%s207 + $0x7c] sm:$0xf]
      %v251 = vld [vmem:[%s1] sm:$0xf]
      %v252 = vld [vmem:[%s1 + $0x4] sm:$0xf]
      %v253 = vld [vmem:[%s1 + $0x8] sm:$0xf]
      %v254 = vld [vmem:[%s1 + $0xc] sm:$0xf]
      %v255 = vld [vmem:[%s1 + $0x10] sm:$0xf]
      %v256 = vld [vmem:[%s1 + $0x14] sm:$0xf]
      %v257 = vld [vmem:[%s207 + $0x80] sm:$0xf]
      %v258 = vld [vmem:[%s207 + $0x84] sm:$0xf]
      %s259 = scalar_lea.vmem %s1, 24
      %v260 = vld [vmem:[%s259] sm:$0xf]
      %v261 = vld [vmem:[%s259 + $0x4] sm:$0xf]
      %v262 = vld [vmem:[%s259 + $0x8] sm:$0xf]
      %v263 = vld [vmem:[%s259 + $0xc] sm:$0xf]
      %v264 = vld [vmem:[%s259 + $0x10] sm:$0xf]
      %v265 = vld [vmem:[%s259 + $0x14] sm:$0xf]
      %v298 = vunpack.c.l.b16 %v221
      %v299 = vunpack.c.l.b16 %v222
      %v300 = vunpack.c.l.b16 %v223
      %v301 = vunpack.c.l.b16 %v224
      %v302 = vunpack.c.l.b16 %v225
      %v303 = vunpack.c.l.b16 %v226
      %v304 = vunpack.c.l.b16 %v227
      %v305 = vunpack.c.l.b16 %v228
      %v306 = vunpack.c.l.b16 %v229
      %v307 = vunpack.c.l.b16 %v230
      %v308 = vunpack.c.l.b16 %v231
      %v309 = vunpack.c.l.b16 %v232
      %v310 = vunpack.c.l.b16 %v233
      %v311 = vunpack.c.l.b16 %v234
      %v312 = vunpack.c.l.b16 %v235
      %v313 = vunpack.c.l.b16 %v236
      %v314 = vunpack.c.l.b16 %v237
      %v315 = vunpack.c.l.b16 %v238
      %v316 = vunpack.c.l.b16 %v239
      %v317 = vunpack.c.l.b16 %v240
      %v318 = vunpack.c.l.b16 %v241
      %v319 = vunpack.c.l.b16 %v242
      %v320 = vunpack.c.l.b16 %v243
      %v321 = vunpack.c.l.b16 %v244
      %v322 = vunpack.c.l.b16 %v245
      %v323 = vunpack.c.l.b16 %v246
      %v324 = vunpack.c.l.b16 %v247
      %v325 = vunpack.c.l.b16 %v248
      %v326 = vunpack.c.l.b16 %v249
      %v327 = vunpack.c.l.b16 %v250
      %v328 = vunpack.c.l.b16 %v257
      %v329 = vunpack.c.l.b16 %v258
      %v330 = vpack.c.b16 %v299, %v298
      %v331 = vpack.c.b16 %v301, %v300
      %v332 = vpack.c.b16 %v303, %v302
      %v333 = vpack.c.b16 %v305, %v304
      %v334 = vpack.c.b16 %v307, %v306
      %v335 = vpack.c.b16 %v309, %v308
      %v336 = vpack.c.b16 %v311, %v310
      %v337 = vpack.c.b16 %v313, %v312
      %v338 = vpack.c.b16 %v315, %v314
      %v339 = vpack.c.b16 %v317, %v316
      %v340 = vpack.c.b16 %v319, %v318
      %v341 = vpack.c.b16 %v321, %v320
      %v342 = vpack.c.b16 %v323, %v322
      %v343 = vpack.c.b16 %v325, %v324
      %v344 = vpack.c.b16 %v327, %v326
      %v345 = vpack.c.b16 %v329, %v328
      %v352 = vunpack.c.l.b16 %v260
      %v353 = vunpack.c.l.b16 %v261
      %v354 = vunpack.c.l.b16 %v262
      %v355 = vunpack.c.l.b16 %v263
      %v356 = vunpack.c.l.b16 %v264
      %v357 = vunpack.c.l.b16 %v265
      %v358 = vpack.c.b16 %v353, %v352
      %v359 = vpack.c.b16 %v355, %v354
      %v360 = vpack.c.b16 %v357, %v356
      %vm364 = vcmask 392192
      %v366 = vsel %vm364, %v330, 0
      %v369 = vsel %vm364, %v331, 0
      %v372 = vsel %vm364, %v332, 0
      %v375 = vsel %vm364, %v333, 0
      %v378 = vsel %vm364, %v334, 0
      %v381 = vsel %vm364, %v335, 0
      %v384 = vsel %vm364, %v336, 0
      %v387 = vsel %vm364, %v337, 0
      %v390 = vsel %vm364, %v338, 0
      %v393 = vsel %vm364, %v339, 0
      %v396 = vsel %vm364, %v340, 0
      %v399 = vsel %vm364, %v341, 0
      %v402 = vsel %vm364, %v342, 0
      %v405 = vsel %vm364, %v343, 0
      %v408 = vsel %vm364, %v344, 0
      %v411 = vsel %vm364, %v345, 0
      %413 = vmatprep.subr.bf16.mxu0 0
      %414 = vmatpush1.bf16.msra.mxu0 0
      %415 = vmatprep.subr.bf16.mxu0 0
      %416 = vmatpush1.bf16.msra.mxu0 0
      %417 = vmatprep.subr.bf16.mxu0 0
      %418 = vmatpush1.bf16.msra.mxu0 0
      %419 = vmatprep.subr.bf16.mxu0 0
      %420 = vmatpush1.bf16.msra.mxu0 0
      %421 = vmatprep.subr.bf16.mxu0 0
      %422 = vmatpush1.bf16.msra.mxu0 0
      %423 = vmatprep.subr.bf16.mxu0 0
      %424 = vmatpush1.bf16.msra.mxu0 %v360
      %425 = vmatprep.subr.bf16.mxu0 0
      %426 = vmatpush1.bf16.msra.mxu0 %v359
      %427 = vmatprep.subr.bf16.mxu0 0
      %428 = vmatpush1.bf16.msra.mxu0 %v358
      %429 = vmatprep.subr.bf16.mxu0 0
      %430 = vmatpush2.bf16.msra.mxu0 0
      %431 = vmatprep.subr.bf16.mxu0 0
      %432 = vmatpush2.bf16.msra.mxu0 0
      %433 = vmatprep.subr.bf16.mxu0 0
      %434 = vmatpush2.bf16.msra.mxu0 0
      %435 = vmatprep.subr.bf16.mxu0 0
      %436 = vmatpush2.bf16.msra.mxu0 0
      %437 = vmatprep.subr.bf16.mxu0 0
      %438 = vmatpush2.bf16.msra.mxu0 0
      %439 = vmatprep.subr.bf16.mxu0 0
      %440 = vmatpush2.bf16.msra.mxu0 0
      %441 = vmatprep.subr.bf16.mxu0 0
      %442 = vmatpush2.bf16.msra.mxu0 0
      %443 = vmatprep.subr.bf16.mxu0 0
      %444 = vmatpush2.bf16.msra.mxu0 0
      %445 = vmatprep.mubr.bf16.mxu0 0
      %446 = vmatmul.mubr.bf16.gmra.mxu0 %v366
      %v447 = vpop.f32.mrf.mxu0
      %v448 = vadd.f32 0.0, %v447
      %v449 = vpop.f32.mrf.mxu0
      %v450 = vpop.f32.mrf.mxu0
      %v451 = vadd.f32 0.0, %v450
      %v452 = vpop.f32.mrf.mxu0
      %453 = vmatprep.mubr.bf16.mxu0 0
      %454 = vmatmul.mubr.bf16.gmra.mxu0 %v369
      %v455 = vpop.f32.mrf.mxu0
      %v456 = vadd.f32 0.0, %v455
      %v457 = vpop.f32.mrf.mxu0
      %v458 = vpop.f32.mrf.mxu0
      %v459 = vadd.f32 0.0, %v458
      %v460 = vpop.f32.mrf.mxu0
      %461 = vmatprep.mubr.bf16.mxu0 0
      %462 = vmatmul.mubr.bf16.gmra.mxu0 %v372
      %v463 = vpop.f32.mrf.mxu0
      %v464 = vadd.f32 0.0, %v463
      %v465 = vpop.f32.mrf.mxu0
      %v466 = vpop.f32.mrf.mxu0
      %v467 = vadd.f32 0.0, %v466
      %v468 = vpop.f32.mrf.mxu0
      %469 = vmatprep.mubr.bf16.mxu0 0
      %470 = vmatmul.mubr.bf16.gmra.mxu0 %v375
      %v471 = vpop.f32.mrf.mxu0
      %v472 = vadd.f32 0.0, %v471
      %v473 = vpop.f32.mrf.mxu0
      %v474 = vpop.f32.mrf.mxu0
      %v475 = vadd.f32 0.0, %v474
      %v476 = vpop.f32.mrf.mxu0
      %477 = vmatprep.mubr.bf16.mxu0 0
      %478 = vmatmul.mubr.bf16.gmra.mxu0 %v378
      %v479 = vpop.f32.mrf.mxu0
      %v480 = vadd.f32 0.0, %v479
      %v481 = vpop.f32.mrf.mxu0
      %v482 = vpop.f32.mrf.mxu0
      %v483 = vadd.f32 0.0, %v482
      %v484 = vpop.f32.mrf.mxu0
      %485 = vmatprep.mubr.bf16.mxu0 0
      %486 = vmatmul.mubr.bf16.gmra.mxu0 %v381
      %v487 = vpop.f32.mrf.mxu0
      %v488 = vadd.f32 0.0, %v487
      %v489 = vpop.f32.mrf.mxu0
      %v490 = vpop.f32.mrf.mxu0
      %v491 = vadd.f32 0.0, %v490
      %v492 = vpop.f32.mrf.mxu0
      %493 = vmatprep.mubr.bf16.mxu0 0
      %494 = vmatmul.mubr.bf16.gmra.mxu0 %v384
      %v495 = vpop.f32.mrf.mxu0
      %v496 = vadd.f32 0.0, %v495
      %v497 = vpop.f32.mrf.mxu0
      %v498 = vpop.f32.mrf.mxu0
      %v499 = vadd.f32 0.0, %v498
      %v500 = vpop.f32.mrf.mxu0
      %501 = vmatprep.mubr.bf16.mxu0 0
      %502 = vmatmul.mubr.bf16.gmra.mxu0 %v387
      %v503 = vpop.f32.mrf.mxu0
      %v504 = vadd.f32 0.0, %v503
      %v505 = vpop.f32.mrf.mxu0
      %v506 = vpop.f32.mrf.mxu0
      %v507 = vadd.f32 0.0, %v506
      %v508 = vpop.f32.mrf.mxu0
      %509 = vmatprep.mubr.bf16.mxu0 0
      %510 = vmatmul.mubr.bf16.gmra.mxu0 %v390
      %v511 = vpop.f32.mrf.mxu0
      %v512 = vadd.f32 0.0, %v511
      %v513 = vpop.f32.mrf.mxu0
      %v514 = vpop.f32.mrf.mxu0
      %v515 = vadd.f32 0.0, %v514
      %v516 = vpop.f32.mrf.mxu0
      %517 = vmatprep.mubr.bf16.mxu0 0
      %518 = vmatmul.mubr.bf16.gmra.mxu0 %v393
      %v519 = vpop.f32.mrf.mxu0
      %v520 = vadd.f32 0.0, %v519
      %v521 = vpop.f32.mrf.mxu0
      %v522 = vpop.f32.mrf.mxu0
      %v523 = vadd.f32 0.0, %v522
      %v524 = vpop.f32.mrf.mxu0
      %525 = vmatprep.mubr.bf16.mxu0 0
      %526 = vmatmul.mubr.bf16.gmra.mxu0 %v396
      %v527 = vpop.f32.mrf.mxu0
      %v528 = vadd.f32 0.0, %v527
      %v529 = vpop.f32.mrf.mxu0
      %v530 = vpop.f32.mrf.mxu0
      %v531 = vadd.f32 0.0, %v530
      %v532 = vpop.f32.mrf.mxu0
      %533 = vmatprep.mubr.bf16.mxu0 0
      %534 = vmatmul.mubr.bf16.gmra.mxu0 %v399
      %v535 = vpop.f32.mrf.mxu0
      %v536 = vadd.f32 0.0, %v535
      %v537 = vpop.f32.mrf.mxu0
      %v538 = vpop.f32.mrf.mxu0
      %v539 = vadd.f32 0.0, %v538
      %v540 = vpop.f32.mrf.mxu0
      %541 = vmatprep.mubr.bf16.mxu0 0
      %542 = vmatmul.mubr.bf16.gmra.mxu0 %v402
      %v543 = vpop.f32.mrf.mxu0
      %v544 = vadd.f32 0.0, %v543
      %v545 = vpop.f32.mrf.mxu0
      %v546 = vpop.f32.mrf.mxu0
      %v547 = vadd.f32 0.0, %v546
      %v548 = vpop.f32.mrf.mxu0
      %549 = vmatprep.mubr.bf16.mxu0 0
      %550 = vmatmul.mubr.bf16.gmra.mxu0 %v405
      %v551 = vpop.f32.mrf.mxu0
      %v552 = vadd.f32 0.0, %v551
      %v553 = vpop.f32.mrf.mxu0
      %v554 = vpop.f32.mrf.mxu0
      %v555 = vadd.f32 0.0, %v554
      %v556 = vpop.f32.mrf.mxu0
      %557 = vmatprep.mubr.bf16.mxu0 0
      %558 = vmatmul.mubr.bf16.gmra.mxu0 %v408
      %v559 = vpop.f32.mrf.mxu0
      %v560 = vadd.f32 0.0, %v559
      %v561 = vpop.f32.mrf.mxu0
      %v562 = vpop.f32.mrf.mxu0
      %v563 = vadd.f32 0.0, %v562
      %v564 = vpop.f32.mrf.mxu0
      %565 = vmatprep.mubr.bf16.mxu0 0
      %566 = vmatmul.mubr.bf16.gmra.mxu0 %v411
      %v567 = vpop.f32.mrf.mxu0
      %v568 = vadd.f32 0.0, %v567
      %v569 = vpop.f32.mrf.mxu0
      %v570 = vpop.f32.mrf.mxu0
      %v571 = vadd.f32 0.0, %v570
      %v572 = vpop.f32.mrf.mxu0
      %573 = vdwg.mxu0
      %v576 = vunpack.c.l.b16 %v219
      %v577 = vunpack.c.l.b16 %v220
      %v578 = vpack.c.b16 %v577, %v576
      %v585 = vunpack.c.l.b16 %v251
      %v586 = vunpack.c.l.b16 %v252
      %v587 = vunpack.c.l.b16 %v253
      %v588 = vunpack.c.l.b16 %v254
      %v589 = vunpack.c.l.b16 %v255
      %v590 = vunpack.c.l.b16 %v256
      %v591 = vpack.c.b16 %v586, %v585
      %v592 = vpack.c.b16 %v588, %v587
      %v593 = vpack.c.b16 %v590, %v589
      %v598 = vsel %vm364, %v578, 0
      %600 = vmatprep.subr.bf16.mxu0 0
      %601 = vmatpush1.bf16.msra.mxu0 0
      %602 = vmatprep.subr.bf16.mxu0 0
      %603 = vmatpush1.bf16.msra.mxu0 0
      %604 = vmatprep.subr.bf16.mxu0 0
      %605 = vmatpush1.bf16.msra.mxu0 0
      %606 = vmatprep.subr.bf16.mxu0 0
      %607 = vmatpush1.bf16.msra.mxu0 0
      %608 = vmatprep.subr.bf16.mxu0 0
      %609 = vmatpush1.bf16.msra.mxu0 0
      %610 = vmatprep.subr.bf16.mxu0 0
      %611 = vmatpush1.bf16.msra.mxu0 %v593
      %612 = vmatprep.subr.bf16.mxu0 0
      %613 = vmatpush1.bf16.msra.mxu0 %v592
      %614 = vmatprep.subr.bf16.mxu0 0
      %615 = vmatpush1.bf16.msra.mxu0 %v591
      %616 = vmatprep.subr.bf16.mxu0 0
      %617 = vmatpush2.bf16.msra.mxu0 0
      %618 = vmatprep.subr.bf16.mxu0 0
      %619 = vmatpush2.bf16.msra.mxu0 0
      %620 = vmatprep.subr.bf16.mxu0 0
      %621 = vmatpush2.bf16.msra.mxu0 0
      %622 = vmatprep.subr.bf16.mxu0 0
      %623 = vmatpush2.bf16.msra.mxu0 0
      %624 = vmatprep.subr.bf16.mxu0 0
      %625 = vmatpush2.bf16.msra.mxu0 0
      %626 = vmatprep.subr.bf16.mxu0 0
      %627 = vmatpush2.bf16.msra.mxu0 0
      %628 = vmatprep.subr.bf16.mxu0 0
      %629 = vmatpush2.bf16.msra.mxu0 0
      %630 = vmatprep.subr.bf16.mxu0 0
      %631 = vmatpush2.bf16.msra.mxu0 0
      %632 = vmatprep.mubr.bf16.mxu0 0
      %633 = vmatmul.mubr.bf16.gmra.mxu0 %v598
      %v634 = vpop.f32.mrf.mxu0
      %v635 = vadd.f32 %v448, %v634
      %v636 = vpop.f32.mrf.mxu0
      %v637 = vpop.f32.mrf.mxu0
      %v638 = vadd.f32 %v451, %v637
      %v639 = vpop.f32.mrf.mxu0
      %640 = vmatprep.mubr.bf16.mxu0 0
      %641 = vmatmul.mubr.bf16.gmra.mxu0 %v366
      %v642 = vpop.f32.mrf.mxu0
      %v643 = vadd.f32 %v456, %v642
      %v644 = vpop.f32.mrf.mxu0
      %v645 = vpop.f32.mrf.mxu0
      %v646 = vadd.f32 %v459, %v645
      %v647 = vpop.f32.mrf.mxu0
      %648 = vmatprep.mubr.bf16.mxu0 0
      %649 = vmatmul.mubr.bf16.gmra.mxu0 %v369
      %v650 = vpop.f32.mrf.mxu0
      %v651 = vadd.f32 %v464, %v650
      %v652 = vpop.f32.mrf.mxu0
      %v653 = vpop.f32.mrf.mxu0
      %v654 = vadd.f32 %v467, %v653
      %v655 = vpop.f32.mrf.mxu0
      %656 = vmatprep.mubr.bf16.mxu0 0
      %657 = vmatmul.mubr.bf16.gmra.mxu0 %v372
      %v658 = vpop.f32.mrf.mxu0
      %v659 = vadd.f32 %v472, %v658
      %v660 = vpop.f32.mrf.mxu0
      %v661 = vpop.f32.mrf.mxu0
      %v662 = vadd.f32 %v475, %v661
      %v663 = vpop.f32.mrf.mxu0
      %664 = vmatprep.mubr.bf16.mxu0 0
      %665 = vmatmul.mubr.bf16.gmra.mxu0 %v375
      %v666 = vpop.f32.mrf.mxu0
      %v667 = vadd.f32 %v480, %v666
      %v668 = vpop.f32.mrf.mxu0
      %v669 = vpop.f32.mrf.mxu0
      %v670 = vadd.f32 %v483, %v669
      %v671 = vpop.f32.mrf.mxu0
      %672 = vmatprep.mubr.bf16.mxu0 0
      %673 = vmatmul.mubr.bf16.gmra.mxu0 %v378
      %v674 = vpop.f32.mrf.mxu0
      %v675 = vadd.f32 %v488, %v674
      %v676 = vpop.f32.mrf.mxu0
      %v677 = vpop.f32.mrf.mxu0
      %v678 = vadd.f32 %v491, %v677
      %v679 = vpop.f32.mrf.mxu0
      %680 = vmatprep.mubr.bf16.mxu0 0
      %681 = vmatmul.mubr.bf16.gmra.mxu0 %v381
      %v682 = vpop.f32.mrf.mxu0
      %v683 = vadd.f32 %v496, %v682
      %v684 = vpop.f32.mrf.mxu0
      %v685 = vpop.f32.mrf.mxu0
      %v686 = vadd.f32 %v499, %v685
      %v687 = vpop.f32.mrf.mxu0
      %688 = vmatprep.mubr.bf16.mxu0 0
      %689 = vmatmul.mubr.bf16.gmra.mxu0 %v384
      %v690 = vpop.f32.mrf.mxu0
      %v691 = vadd.f32 %v504, %v690
      %v692 = vpop.f32.mrf.mxu0
      %v693 = vpop.f32.mrf.mxu0
      %v694 = vadd.f32 %v507, %v693
      %v695 = vpop.f32.mrf.mxu0
      %696 = vmatprep.mubr.bf16.mxu0 0
      %697 = vmatmul.mubr.bf16.gmra.mxu0 %v387
      %v698 = vpop.f32.mrf.mxu0
      %v699 = vadd.f32 %v512, %v698
      %v700 = vpop.f32.mrf.mxu0
      %v701 = vpop.f32.mrf.mxu0
      %v702 = vadd.f32 %v515, %v701
      %v703 = vpop.f32.mrf.mxu0
      %704 = vmatprep.mubr.bf16.mxu0 0
      %705 = vmatmul.mubr.bf16.gmra.mxu0 %v390
      %v706 = vpop.f32.mrf.mxu0
      %v707 = vadd.f32 %v520, %v706
      %v708 = vpop.f32.mrf.mxu0
      %v709 = vpop.f32.mrf.mxu0
      %v710 = vadd.f32 %v523, %v709
      %v711 = vpop.f32.mrf.mxu0
      %712 = vmatprep.mubr.bf16.mxu0 0
      %713 = vmatmul.mubr.bf16.gmra.mxu0 %v393
      %v714 = vpop.f32.mrf.mxu0
      %v715 = vadd.f32 %v528, %v714
      %v716 = vpop.f32.mrf.mxu0
      %v717 = vpop.f32.mrf.mxu0
      %v718 = vadd.f32 %v531, %v717
      %v719 = vpop.f32.mrf.mxu0
      %720 = vmatprep.mubr.bf16.mxu0 0
      %721 = vmatmul.mubr.bf16.gmra.mxu0 %v396
      %v722 = vpop.f32.mrf.mxu0
      %v723 = vadd.f32 %v536, %v722
      %v724 = vpop.f32.mrf.mxu0
      %v725 = vpop.f32.mrf.mxu0
      %v726 = vadd.f32 %v539, %v725
      %v727 = vpop.f32.mrf.mxu0
      %728 = vmatprep.mubr.bf16.mxu0 0
      %729 = vmatmul.mubr.bf16.gmra.mxu0 %v399
      %v730 = vpop.f32.mrf.mxu0
      %v731 = vadd.f32 %v544, %v730
      %v732 = vpop.f32.mrf.mxu0
      %v733 = vpop.f32.mrf.mxu0
      %v734 = vadd.f32 %v547, %v733
      %v735 = vpop.f32.mrf.mxu0
      %736 = vmatprep.mubr.bf16.mxu0 0
      %737 = vmatmul.mubr.bf16.gmra.mxu0 %v402
      %v738 = vpop.f32.mrf.mxu0
      %v739 = vadd.f32 %v552, %v738
      %v740 = vpop.f32.mrf.mxu0
      %v741 = vpop.f32.mrf.mxu0
      %v742 = vadd.f32 %v555, %v741
      %v743 = vpop.f32.mrf.mxu0
      %744 = vmatprep.mubr.bf16.mxu0 0
      %745 = vmatmul.mubr.bf16.gmra.mxu0 %v405
      %v746 = vpop.f32.mrf.mxu0
      %v747 = vadd.f32 %v560, %v746
      %v748 = vpop.f32.mrf.mxu0
      %v749 = vpop.f32.mrf.mxu0
      %v750 = vadd.f32 %v563, %v749
      %v751 = vpop.f32.mrf.mxu0
      %752 = vmatprep.mubr.bf16.mxu0 0
      %753 = vmatmul.mubr.bf16.gmra.mxu0 %v408
      %v754 = vpop.f32.mrf.mxu0
      %v755 = vadd.f32 %v568, %v754
      %v756 = vpop.f32.mrf.mxu0
      %v757 = vpop.f32.mrf.mxu0
      %v758 = vadd.f32 %v571, %v757
      %v759 = vpop.f32.mrf.mxu0
      %760 = vdwg.mxu0
      %v761 = vld [vmem:[%s207 + $0x10] sm:$0xf]
      %v762 = vld [vmem:[%s207 + $0x14] sm:$0xf]
      %v763 = vld [vmem:[%s207 + $0x18] sm:$0xf]
      %v764 = vld [vmem:[%s207 + $0x1c] sm:$0xf]
      %v765 = vld [vmem:[%s207 + $0x20] sm:$0xf]
      %v766 = vld [vmem:[%s207 + $0x24] sm:$0xf]
      %v767 = vld [vmem:[%s207 + $0x28] sm:$0xf]
      %v768 = vld [vmem:[%s207 + $0x2c] sm:$0xf]
      %v769 = vld [vmem:[%s207 + $0x30] sm:$0xf]
      %v770 = vld [vmem:[%s207 + $0x34] sm:$0xf]
      %v771 = vld [vmem:[%s207 + $0x38] sm:$0xf]
      %v772 = vld [vmem:[%s207 + $0x3c] sm:$0xf]
      %v773 = vld [vmem:[%s207 + $0x40] sm:$0xf]
      %v774 = vld [vmem:[%s207 + $0x44] sm:$0xf]
      %v775 = vld [vmem:[%s207 + $0x48] sm:$0xf]
      %v776 = vld [vmem:[%s207 + $0x4c] sm:$0xf]
      %v777 = vld [vmem:[%s207 + $0x50] sm:$0xf]
      %v778 = vld [vmem:[%s207 + $0x54] sm:$0xf]
      %v779 = vld [vmem:[%s207 + $0x58] sm:$0xf]
      %v780 = vld [vmem:[%s207 + $0x5c] sm:$0xf]
      %v781 = vld [vmem:[%s207 + $0x60] sm:$0xf]
      %v782 = vld [vmem:[%s207 + $0x64] sm:$0xf]
      %v783 = vld [vmem:[%s207 + $0x68] sm:$0xf]
      %v784 = vld [vmem:[%s207 + $0x6c] sm:$0xf]
      %v785 = vld [vmem:[%s207 + $0x70] sm:$0xf]
      %v786 = vld [vmem:[%s207 + $0x74] sm:$0xf]
      %v787 = vld [vmem:[%s207 + $0x78] sm:$0xf]
      %v788 = vld [vmem:[%s207 + $0x7c] sm:$0xf]
      %v789 = vld [vmem:[%s207 + $0x80] sm:$0xf]
      %v790 = vld [vmem:[%s207 + $0x84] sm:$0xf]
      %v791 = vld [vmem:[%s207 + $0x88] sm:$0xf]
      %v792 = vld [vmem:[%s207 + $0x8c] sm:$0xf]
      %s793 = scalar_lea.vmem %s1, 48
      %v794 = vld [vmem:[%s793] sm:$0xf]
      %v795 = vld [vmem:[%s793 + $0x4] sm:$0xf]
      %v796 = vld [vmem:[%s793 + $0x8] sm:$0xf]
      %v797 = vld [vmem:[%s793 + $0xc] sm:$0xf]
      %v798 = vld [vmem:[%s793 + $0x10] sm:$0xf]
      %v799 = vld [vmem:[%s793 + $0x14] sm:$0xf]
      %v832 = vunpack.c.l.b16 %v761
      %v833 = vunpack.c.l.b16 %v762
      %v834 = vunpack.c.l.b16 %v763
      %v835 = vunpack.c.l.b16 %v764
      %v836 = vunpack.c.l.b16 %v765
      %v837 = vunpack.c.l.b16 %v766
      %v838 = vunpack.c.l.b16 %v767
      %v839 = vunpack.c.l.b16 %v768
      %v840 = vunpack.c.l.b16 %v769
      %v841 = vunpack.c.l.b16 %v770
      %v842 = vunpack.c.l.b16 %v771
      %v843 = vunpack.c.l.b16 %v772
      %v844 = vunpack.c.l.b16 %v773
      %v845 = vunpack.c.l.b16 %v774
      %v846 = vunpack.c.l.b16 %v775
      %v847 = vunpack.c.l.b16 %v776
      %v848 = vunpack.c.l.b16 %v777
      %v849 = vunpack.c.l.b16 %v778
      %v850 = vunpack.c.l.b16 %v779
      %v851 = vunpack.c.l.b16 %v780
      %v852 = vunpack.c.l.b16 %v781
      %v853 = vunpack.c.l.b16 %v782
      %v854 = vunpack.c.l.b16 %v783
      %v855 = vunpack.c.l.b16 %v784
      %v856 = vunpack.c.l.b16 %v785
      %v857 = vunpack.c.l.b16 %v786
      %v858 = vunpack.c.l.b16 %v787
      %v859 = vunpack.c.l.b16 %v788
      %v860 = vunpack.c.l.b16 %v789
      %v861 = vunpack.c.l.b16 %v790
      %v862 = vunpack.c.l.b16 %v791
      %v863 = vunpack.c.l.b16 %v792
      %v864 = vpack.c.b16 %v833, %v832
      %v865 = vpack.c.b16 %v835, %v834
      %v866 = vpack.c.b16 %v837, %v836
      %v867 = vpack.c.b16 %v839, %v838
      %v868 = vpack.c.b16 %v841, %v840
      %v869 = vpack.c.b16 %v843, %v842
      %v870 = vpack.c.b16 %v845, %v844
      %v871 = vpack.c.b16 %v847, %v846
      %v872 = vpack.c.b16 %v849, %v848
      %v873 = vpack.c.b16 %v851, %v850
      %v874 = vpack.c.b16 %v853, %v852
      %v875 = vpack.c.b16 %v855, %v854
      %v876 = vpack.c.b16 %v857, %v856
      %v877 = vpack.c.b16 %v859, %v858
      %v878 = vpack.c.b16 %v861, %v860
      %v879 = vpack.c.b16 %v863, %v862
      %v886 = vunpack.c.l.b16 %v794
      %v887 = vunpack.c.l.b16 %v795
      %v888 = vunpack.c.l.b16 %v796
      %v889 = vunpack.c.l.b16 %v797
      %v890 = vunpack.c.l.b16 %v798
      %v891 = vunpack.c.l.b16 %v799
      %v892 = vpack.c.b16 %v887, %v886
      %v893 = vpack.c.b16 %v889, %v888
      %v894 = vpack.c.b16 %v891, %v890
      %v899 = vsel %vm364, %v864, 0
      %v902 = vsel %vm364, %v865, 0
      %v905 = vsel %vm364, %v866, 0
      %v908 = vsel %vm364, %v867, 0
      %v911 = vsel %vm364, %v868, 0
      %v914 = vsel %vm364, %v869, 0
      %v917 = vsel %vm364, %v870, 0
      %v920 = vsel %vm364, %v871, 0
      %v923 = vsel %vm364, %v872, 0
      %v926 = vsel %vm364, %v873, 0
      %v929 = vsel %vm364, %v874, 0
      %v932 = vsel %vm364, %v875, 0
      %v935 = vsel %vm364, %v876, 0
      %v938 = vsel %vm364, %v877, 0
      %v941 = vsel %vm364, %v878, 0
      %v944 = vsel %vm364, %v879, 0
      %946 = vmatprep.subr.bf16.mxu0 0
      %947 = vmatpush1.bf16.msra.mxu0 0
      %948 = vmatprep.subr.bf16.mxu0 0
      %949 = vmatpush1.bf16.msra.mxu0 0
      %950 = vmatprep.subr.bf16.mxu0 0
      %951 = vmatpush1.bf16.msra.mxu0 0
      %952 = vmatprep.subr.bf16.mxu0 0
      %953 = vmatpush1.bf16.msra.mxu0 0
      %954 = vmatprep.subr.bf16.mxu0 0
      %955 = vmatpush1.bf16.msra.mxu0 0
      %956 = vmatprep.subr.bf16.mxu0 0
      %957 = vmatpush1.bf16.msra.mxu0 %v894
      %958 = vmatprep.subr.bf16.mxu0 0
      %959 = vmatpush1.bf16.msra.mxu0 %v893
      %960 = vmatprep.subr.bf16.mxu0 0
      %961 = vmatpush1.bf16.msra.mxu0 %v892
      %962 = vmatprep.subr.bf16.mxu0 0
      %963 = vmatpush2.bf16.msra.mxu0 0
      %964 = vmatprep.subr.bf16.mxu0 0
      %965 = vmatpush2.bf16.msra.mxu0 0
      %966 = vmatprep.subr.bf16.mxu0 0
      %967 = vmatpush2.bf16.msra.mxu0 0
      %968 = vmatprep.subr.bf16.mxu0 0
      %969 = vmatpush2.bf16.msra.mxu0 0
      %970 = vmatprep.subr.bf16.mxu0 0
      %971 = vmatpush2.bf16.msra.mxu0 0
      %972 = vmatprep.subr.bf16.mxu0 0
      %973 = vmatpush2.bf16.msra.mxu0 0
      %974 = vmatprep.subr.bf16.mxu0 0
      %975 = vmatpush2.bf16.msra.mxu0 0
      %976 = vmatprep.subr.bf16.mxu0 0
      %977 = vmatpush2.bf16.msra.mxu0 0
      %978 = vmatprep.mubr.bf16.mxu0 0
      %979 = vmatmul.mubr.bf16.gmra.mxu0 %v899
      %v980 = vpop.f32.mrf.mxu0
      %v981 = vadd.f32 0.0, %v980
      %v982 = vpop.f32.mrf.mxu0
      %v983 = vpop.f32.mrf.mxu0
      %v984 = vadd.f32 0.0, %v983
      %v985 = vpop.f32.mrf.mxu0
      %986 = vmatprep.mubr.bf16.mxu0 0
      %987 = vmatmul.mubr.bf16.gmra.mxu0 %v902
      %v988 = vpop.f32.mrf.mxu0
      %v989 = vadd.f32 0.0, %v988
      %v990 = vpop.f32.mrf.mxu0
      %v991 = vpop.f32.mrf.mxu0
      %v992 = vadd.f32 0.0, %v991
      %v993 = vpop.f32.mrf.mxu0
      %994 = vmatprep.mubr.bf16.mxu0 0
      %995 = vmatmul.mubr.bf16.gmra.mxu0 %v905
      %v996 = vpop.f32.mrf.mxu0
      %v997 = vadd.f32 0.0, %v996
      %v998 = vpop.f32.mrf.mxu0
      %v999 = vpop.f32.mrf.mxu0
      %v1000 = vadd.f32 0.0, %v999
      %v1001 = vpop.f32.mrf.mxu0
      %1002 = vmatprep.mubr.bf16.mxu0 0
      %1003 = vmatmul.mubr.bf16.gmra.mxu0 %v908
      %v1004 = vpop.f32.mrf.mxu0
      %v1005 = vadd.f32 0.0, %v1004
      %v1006 = vpop.f32.mrf.mxu0
      %v1007 = vpop.f32.mrf.mxu0
      %v1008 = vadd.f32 0.0, %v1007
      %v1009 = vpop.f32.mrf.mxu0
      %1010 = vmatprep.mubr.bf16.mxu0 0
      %1011 = vmatmul.mubr.bf16.gmra.mxu0 %v911
      %v1012 = vpop.f32.mrf.mxu0
      %v1013 = vadd.f32 0.0, %v1012
      %v1014 = vpop.f32.mrf.mxu0
      %v1015 = vpop.f32.mrf.mxu0
      %v1016 = vadd.f32 0.0, %v1015
      %v1017 = vpop.f32.mrf.mxu0
      %1018 = vmatprep.mubr.bf16.mxu0 0
      %1019 = vmatmul.mubr.bf16.gmra.mxu0 %v914
      %v1020 = vpop.f32.mrf.mxu0
      %v1021 = vadd.f32 0.0, %v1020
      %v1022 = vpop.f32.mrf.mxu0
      %v1023 = vpop.f32.mrf.mxu0
      %v1024 = vadd.f32 0.0, %v1023
      %v1025 = vpop.f32.mrf.mxu0
      %1026 = vmatprep.mubr.bf16.mxu0 0
      %1027 = vmatmul.mubr.bf16.gmra.mxu0 %v917
      %v1028 = vpop.f32.mrf.mxu0
      %v1029 = vadd.f32 0.0, %v1028
      %v1030 = vpop.f32.mrf.mxu0
      %v1031 = vpop.f32.mrf.mxu0
      %v1032 = vadd.f32 0.0, %v1031
      %v1033 = vpop.f32.mrf.mxu0
      %1034 = vmatprep.mubr.bf16.mxu0 0
      %1035 = vmatmul.mubr.bf16.gmra.mxu0 %v920
      %v1036 = vpop.f32.mrf.mxu0
      %v1037 = vadd.f32 0.0, %v1036
      %v1038 = vpop.f32.mrf.mxu0
      %v1039 = vpop.f32.mrf.mxu0
      %v1040 = vadd.f32 0.0, %v1039
      %v1041 = vpop.f32.mrf.mxu0
      %1042 = vmatprep.mubr.bf16.mxu0 0
      %1043 = vmatmul.mubr.bf16.gmra.mxu0 %v923
      %v1044 = vpop.f32.mrf.mxu0
      %v1045 = vadd.f32 0.0, %v1044
      %v1046 = vpop.f32.mrf.mxu0
      %v1047 = vpop.f32.mrf.mxu0
      %v1048 = vadd.f32 0.0, %v1047
      %v1049 = vpop.f32.mrf.mxu0
      %1050 = vmatprep.mubr.bf16.mxu0 0
      %1051 = vmatmul.mubr.bf16.gmra.mxu0 %v926
      %v1052 = vpop.f32.mrf.mxu0
      %v1053 = vadd.f32 0.0, %v1052
      %v1054 = vpop.f32.mrf.mxu0
      %v1055 = vpop.f32.mrf.mxu0
      %v1056 = vadd.f32 0.0, %v1055
      %v1057 = vpop.f32.mrf.mxu0
      %1058 = vmatprep.mubr.bf16.mxu0 0
      %1059 = vmatmul.mubr.bf16.gmra.mxu0 %v929
      %v1060 = vpop.f32.mrf.mxu0
      %v1061 = vadd.f32 0.0, %v1060
      %v1062 = vpop.f32.mrf.mxu0
      %v1063 = vpop.f32.mrf.mxu0
      %v1064 = vadd.f32 0.0, %v1063
      %v1065 = vpop.f32.mrf.mxu0
      %1066 = vmatprep.mubr.bf16.mxu0 0
      %1067 = vmatmul.mubr.bf16.gmra.mxu0 %v932
      %v1068 = vpop.f32.mrf.mxu0
      %v1069 = vadd.f32 0.0, %v1068
      %v1070 = vpop.f32.mrf.mxu0
      %v1071 = vpop.f32.mrf.mxu0
      %v1072 = vadd.f32 0.0, %v1071
      %v1073 = vpop.f32.mrf.mxu0
      %1074 = vmatprep.mubr.bf16.mxu0 0
      %1075 = vmatmul.mubr.bf16.gmra.mxu0 %v935
      %v1076 = vpop.f32.mrf.mxu0
      %v1077 = vadd.f32 0.0, %v1076
      %v1078 = vpop.f32.mrf.mxu0
      %v1079 = vpop.f32.mrf.mxu0
      %v1080 = vadd.f32 0.0, %v1079
      %v1081 = vpop.f32.mrf.mxu0
      %1082 = vmatprep.mubr.bf16.mxu0 0
      %1083 = vmatmul.mubr.bf16.gmra.mxu0 %v938
      %v1084 = vpop.f32.mrf.mxu0
      %v1085 = vadd.f32 0.0, %v1084
      %v1086 = vpop.f32.mrf.mxu0
      %v1087 = vpop.f32.mrf.mxu0
      %v1088 = vadd.f32 0.0, %v1087
      %v1089 = vpop.f32.mrf.mxu0
      %1090 = vmatprep.mubr.bf16.mxu0 0
      %1091 = vmatmul.mubr.bf16.gmra.mxu0 %v941
      %v1092 = vpop.f32.mrf.mxu0
      %v1093 = vadd.f32 0.0, %v1092
      %v1094 = vpop.f32.mrf.mxu0
      %v1095 = vpop.f32.mrf.mxu0
      %v1096 = vadd.f32 0.0, %v1095
      %v1097 = vpop.f32.mrf.mxu0
      %1098 = vmatprep.mubr.bf16.mxu0 0
      %1099 = vmatmul.mubr.bf16.gmra.mxu0 %v944
      %v1100 = vpop.f32.mrf.mxu0
      %v1101 = vadd.f32 0.0, %v1100
      %v1102 = vpop.f32.mrf.mxu0
      %v1103 = vpop.f32.mrf.mxu0
      %v1104 = vadd.f32 0.0, %v1103
      %v1105 = vpop.f32.mrf.mxu0
      %1106 = vdwg.mxu0
      %v1107 = vadd.f32 %v635, %v981
      %v1108 = vadd.f32 %v638, %v984
      %v1109 = vadd.f32 %v643, %v989
      %v1110 = vadd.f32 %v646, %v992
      %v1111 = vadd.f32 %v651, %v997
      %v1112 = vadd.f32 %v654, %v1000
      %v1113 = vadd.f32 %v659, %v1005
      %v1114 = vadd.f32 %v662, %v1008
      %v1115 = vadd.f32 %v667, %v1013
      %v1116 = vadd.f32 %v670, %v1016
      %v1117 = vadd.f32 %v675, %v1021
      %v1118 = vadd.f32 %v678, %v1024
      %v1119 = vadd.f32 %v683, %v1029
      %v1120 = vadd.f32 %v686, %v1032
      %v1121 = vadd.f32 %v691, %v1037
      %v1122 = vadd.f32 %v694, %v1040
      %v1123 = vadd.f32 %v699, %v1045
      %v1124 = vadd.f32 %v702, %v1048
      %v1125 = vadd.f32 %v707, %v1053
      %v1126 = vadd.f32 %v710, %v1056
      %v1127 = vadd.f32 %v715, %v1061
      %v1128 = vadd.f32 %v718, %v1064
      %v1129 = vadd.f32 %v723, %v1069
      %v1130 = vadd.f32 %v726, %v1072
      %v1131 = vadd.f32 %v731, %v1077
      %v1132 = vadd.f32 %v734, %v1080
      %v1133 = vadd.f32 %v739, %v1085
      %v1134 = vadd.f32 %v742, %v1088
      %v1135 = vadd.f32 %v747, %v1093
      %v1136 = vadd.f32 %v750, %v1096
      %v1137 = vadd.f32 %v755, %v1101
      %v1138 = vadd.f32 %v758, %v1104
      %v1139 = vld [vmem:[%s2] sm:$0x1]
      %v1141 = vlaneseq
      %v1142 = vshrl.u32 %v1141, 7
      %v1143 = vsub.s32 0, %v1142
      %v1144 = vrot.slane %v1139, %v1143
      %v1146 = vadd.f32 %v1107, %v1144
      %v1147 = vadd.f32 %v1108, %v1144
      %v1148 = vadd.f32 %v1109, %v1144
      %v1149 = vadd.f32 %v1110, %v1144
      %v1150 = vadd.f32 %v1111, %v1144
      %v1151 = vadd.f32 %v1112, %v1144
      %v1152 = vadd.f32 %v1113, %v1144
      %v1153 = vadd.f32 %v1114, %v1144
      %v1154 = vadd.f32 %v1115, %v1144
      %v1155 = vadd.f32 %v1116, %v1144
      %v1156 = vadd.f32 %v1117, %v1144
      %v1157 = vadd.f32 %v1118, %v1144
      %v1158 = vadd.f32 %v1119, %v1144
      %v1159 = vadd.f32 %v1120, %v1144
      %v1160 = vadd.f32 %v1121, %v1144
      %v1161 = vadd.f32 %v1122, %v1144
      %v1162 = vadd.f32 %v1123, %v1144
      %v1163 = vadd.f32 %v1124, %v1144
      %v1164 = vadd.f32 %v1125, %v1144
      %v1165 = vadd.f32 %v1126, %v1144
      %v1166 = vadd.f32 %v1127, %v1144
      %v1167 = vadd.f32 %v1128, %v1144
      %v1168 = vadd.f32 %v1129, %v1144
      %v1169 = vadd.f32 %v1130, %v1144
      %v1170 = vadd.f32 %v1131, %v1144
      %v1171 = vadd.f32 %v1132, %v1144
      %v1172 = vadd.f32 %v1133, %v1144
      %v1173 = vadd.f32 %v1134, %v1144
      %v1174 = vadd.f32 %v1135, %v1144
      %v1175 = vadd.f32 %v1136, %v1144
      %v1176 = vadd.f32 %v1137, %v1144
      %v1177 = vadd.f32 %v1138, %v1144
      %v1178 = vld [vmem:[%s212] sm:$0xf]
      %v1179 = vld [vmem:[%s212 + $0x4] sm:$0xf]
      %v1180 = vld [vmem:[%s212 + $0x8] sm:$0xf]
      %v1181 = vld [vmem:[%s212 + $0xc] sm:$0xf]
      %v1182 = vld [vmem:[%s212 + $0x10] sm:$0xf]
      %v1183 = vld [vmem:[%s212 + $0x14] sm:$0xf]
      %v1184 = vld [vmem:[%s212 + $0x18] sm:$0xf]
      %v1185 = vld [vmem:[%s212 + $0x1c] sm:$0xf]
      %v1186 = vld [vmem:[%s212 + $0x20] sm:$0xf]
      %v1187 = vld [vmem:[%s212 + $0x24] sm:$0xf]
      %v1188 = vld [vmem:[%s212 + $0x28] sm:$0xf]
      %v1189 = vld [vmem:[%s212 + $0x2c] sm:$0xf]
      %v1190 = vld [vmem:[%s212 + $0x30] sm:$0xf]
      %v1191 = vld [vmem:[%s212 + $0x34] sm:$0xf]
      %v1192 = vld [vmem:[%s212 + $0x38] sm:$0xf]
      %v1193 = vld [vmem:[%s212 + $0x3c] sm:$0xf]
      %v1194 = vld [vmem:[%s212 + $0x40] sm:$0xf]
      %v1195 = vld [vmem:[%s212 + $0x44] sm:$0xf]
      %v1196 = vld [vmem:[%s212 + $0x48] sm:$0xf]
      %v1197 = vld [vmem:[%s212 + $0x4c] sm:$0xf]
      %v1198 = vld [vmem:[%s212 + $0x50] sm:$0xf]
      %v1199 = vld [vmem:[%s212 + $0x54] sm:$0xf]
      %v1200 = vld [vmem:[%s212 + $0x58] sm:$0xf]
      %v1201 = vld [vmem:[%s212 + $0x5c] sm:$0xf]
      %v1202 = vld [vmem:[%s212 + $0x60] sm:$0xf]
      %v1203 = vld [vmem:[%s212 + $0x64] sm:$0xf]
      %v1204 = vld [vmem:[%s212 + $0x68] sm:$0xf]
      %v1205 = vld [vmem:[%s212 + $0x6c] sm:$0xf]
      %v1206 = vld [vmem:[%s212 + $0x70] sm:$0xf]
      %v1207 = vld [vmem:[%s212 + $0x74] sm:$0xf]
      %v1208 = vld [vmem:[%s212 + $0x78] sm:$0xf]
      %v1209 = vld [vmem:[%s212 + $0x7c] sm:$0xf]
      %v1210 = vunpack.c.l.bf16 %v1178
      %v1211 = vunpack.c.l.bf16 %v1179
      %v1212 = vunpack.c.l.bf16 %v1180
      %v1213 = vunpack.c.l.bf16 %v1181
      %v1214 = vunpack.c.l.bf16 %v1182
      %v1215 = vunpack.c.l.bf16 %v1183
      %v1216 = vunpack.c.l.bf16 %v1184
      %v1217 = vunpack.c.l.bf16 %v1185
      %v1218 = vunpack.c.l.bf16 %v1186
      %v1219 = vunpack.c.l.bf16 %v1187
      %v1220 = vunpack.c.l.bf16 %v1188
      %v1221 = vunpack.c.l.bf16 %v1189
      %v1222 = vunpack.c.l.bf16 %v1190
      %v1223 = vunpack.c.l.bf16 %v1191
      %v1224 = vunpack.c.l.bf16 %v1192
      %v1225 = vunpack.c.l.bf16 %v1193
      %v1226 = vunpack.c.l.bf16 %v1194
      %v1227 = vunpack.c.l.bf16 %v1195
      %v1228 = vunpack.c.l.bf16 %v1196
      %v1229 = vunpack.c.l.bf16 %v1197
      %v1230 = vunpack.c.l.bf16 %v1198
      %v1231 = vunpack.c.l.bf16 %v1199
      %v1232 = vunpack.c.l.bf16 %v1200
      %v1233 = vunpack.c.l.bf16 %v1201
      %v1234 = vunpack.c.l.bf16 %v1202
      %v1235 = vunpack.c.l.bf16 %v1203
      %v1236 = vunpack.c.l.bf16 %v1204
      %v1237 = vunpack.c.l.bf16 %v1205
      %v1238 = vunpack.c.l.bf16 %v1206
      %v1239 = vunpack.c.l.bf16 %v1207
      %v1240 = vunpack.c.l.bf16 %v1208
      %v1241 = vunpack.c.l.bf16 %v1209
      %v1242 = vadd.f32 %v1146, %v1210
      %v1243 = vadd.f32 %v1147, %v1211
      %v1244 = vadd.f32 %v1148, %v1212
      %v1245 = vadd.f32 %v1149, %v1213
      %v1246 = vadd.f32 %v1150, %v1214
      %v1247 = vadd.f32 %v1151, %v1215
      %v1248 = vadd.f32 %v1152, %v1216
      %v1249 = vadd.f32 %v1153, %v1217
      %v1250 = vadd.f32 %v1154, %v1218
      %v1251 = vadd.f32 %v1155, %v1219
      %v1252 = vadd.f32 %v1156, %v1220
      %v1253 = vadd.f32 %v1157, %v1221
      %v1254 = vadd.f32 %v1158, %v1222
      %v1255 = vadd.f32 %v1159, %v1223
      %v1256 = vadd.f32 %v1160, %v1224
      %v1257 = vadd.f32 %v1161, %v1225
      %v1258 = vadd.f32 %v1162, %v1226
      %v1259 = vadd.f32 %v1163, %v1227
      %v1260 = vadd.f32 %v1164, %v1228
      %v1261 = vadd.f32 %v1165, %v1229
      %v1262 = vadd.f32 %v1166, %v1230
      %v1263 = vadd.f32 %v1167, %v1231
      %v1264 = vadd.f32 %v1168, %v1232
      %v1265 = vadd.f32 %v1169, %v1233
      %v1266 = vadd.f32 %v1170, %v1234
      %v1267 = vadd.f32 %v1171, %v1235
      %v1268 = vadd.f32 %v1172, %v1236
      %v1269 = vadd.f32 %v1173, %v1237
      %v1270 = vadd.f32 %v1174, %v1238
      %v1271 = vadd.f32 %v1175, %v1239
      %v1272 = vadd.f32 %v1176, %v1240
      %v1273 = vadd.f32 %v1177, %v1241
      %v1274 = vmax.f32 %v1242, 0.0
      %v1275 = vmax.f32 %v1243, 0.0
      %v1276 = vmax.f32 %v1244, 0.0
      %v1277 = vmax.f32 %v1245, 0.0
      %v1278 = vmax.f32 %v1246, 0.0
      %v1279 = vmax.f32 %v1247, 0.0
      %v1280 = vmax.f32 %v1248, 0.0
      %v1281 = vmax.f32 %v1249, 0.0
      %v1282 = vmax.f32 %v1250, 0.0
      %v1283 = vmax.f32 %v1251, 0.0
      %v1284 = vmax.f32 %v1252, 0.0
      %v1285 = vmax.f32 %v1253, 0.0
      %v1286 = vmax.f32 %v1254, 0.0
      %v1287 = vmax.f32 %v1255, 0.0
      %v1288 = vmax.f32 %v1256, 0.0
      %v1289 = vmax.f32 %v1257, 0.0
      %v1290 = vmax.f32 %v1258, 0.0
      %v1291 = vmax.f32 %v1259, 0.0
      %v1292 = vmax.f32 %v1260, 0.0
      %v1293 = vmax.f32 %v1261, 0.0
      %v1294 = vmax.f32 %v1262, 0.0
      %v1295 = vmax.f32 %v1263, 0.0
      %v1296 = vmax.f32 %v1264, 0.0
      %v1297 = vmax.f32 %v1265, 0.0
      %v1298 = vmax.f32 %v1266, 0.0
      %v1299 = vmax.f32 %v1267, 0.0
      %v1300 = vmax.f32 %v1268, 0.0
      %v1301 = vmax.f32 %v1269, 0.0
      %v1302 = vmax.f32 %v1270, 0.0
      %v1303 = vmax.f32 %v1271, 0.0
      %v1304 = vmax.f32 %v1272, 0.0
      %v1305 = vmax.f32 %v1273, 0.0
      %v1306 = vpack.c.bf16 %v1275, %v1274
      %v1307 = vpack.c.bf16 %v1277, %v1276
      %v1308 = vpack.c.bf16 %v1279, %v1278
      %v1309 = vpack.c.bf16 %v1281, %v1280
      %v1310 = vpack.c.bf16 %v1283, %v1282
      %v1311 = vpack.c.bf16 %v1285, %v1284
      %v1312 = vpack.c.bf16 %v1287, %v1286
      %v1313 = vpack.c.bf16 %v1289, %v1288
      %v1314 = vpack.c.bf16 %v1291, %v1290
      %v1315 = vpack.c.bf16 %v1293, %v1292
      %v1316 = vpack.c.bf16 %v1295, %v1294
      %v1317 = vpack.c.bf16 %v1297, %v1296
      %v1318 = vpack.c.bf16 %v1299, %v1298
      %v1319 = vpack.c.bf16 %v1301, %v1300
      %v1320 = vpack.c.bf16 %v1303, %v1302
      %v1321 = vpack.c.bf16 %v1305, %v1304
      %v1338 = vunpack.c.l.b16 %v1306
      %v1339 = vunpack.c.h.b16 %v1306
      %v1340 = vunpack.c.l.b16 %v1307
      %v1341 = vunpack.c.h.b16 %v1307
      %v1342 = vunpack.c.l.b16 %v1308
      %v1343 = vunpack.c.h.b16 %v1308
      %v1344 = vunpack.c.l.b16 %v1309
      %v1345 = vunpack.c.h.b16 %v1309
      %v1346 = vunpack.c.l.b16 %v1310
      %v1347 = vunpack.c.h.b16 %v1310
      %v1348 = vunpack.c.l.b16 %v1311
      %v1349 = vunpack.c.h.b16 %v1311
      %v1350 = vunpack.c.l.b16 %v1312
      %v1351 = vunpack.c.h.b16 %v1312
      %v1352 = vunpack.c.l.b16 %v1313
      %v1353 = vunpack.c.h.b16 %v1313
      %v1354 = vunpack.c.l.b16 %v1314
      %v1355 = vunpack.c.h.b16 %v1314
      %v1356 = vunpack.c.l.b16 %v1315
      %v1357 = vunpack.c.h.b16 %v1315
      %v1358 = vunpack.c.l.b16 %v1316
      %v1359 = vunpack.c.h.b16 %v1316
      %v1360 = vunpack.c.l.b16 %v1317
      %v1361 = vunpack.c.h.b16 %v1317
      %v1362 = vunpack.c.l.b16 %v1318
      %v1363 = vunpack.c.h.b16 %v1318
      %v1364 = vunpack.c.l.b16 %v1319
      %v1365 = vunpack.c.h.b16 %v1319
      %v1366 = vunpack.c.l.b16 %v1320
      %v1367 = vunpack.c.h.b16 %v1320
      %v1368 = vunpack.c.l.b16 %v1321
      %v1369 = vunpack.c.h.b16 %v1321
      %v1370 = vpack.c.b16 %v1338, %v1338
      %v1371 = vpack.c.b16 %v1339, %v1339
      %v1372 = vpack.c.b16 %v1340, %v1340
      %v1373 = vpack.c.b16 %v1341, %v1341
      %v1374 = vpack.c.b16 %v1342, %v1342
      %v1375 = vpack.c.b16 %v1343, %v1343
      %v1376 = vpack.c.b16 %v1344, %v1344
      %v1377 = vpack.c.b16 %v1345, %v1345
      %v1378 = vpack.c.b16 %v1346, %v1346
      %v1379 = vpack.c.b16 %v1347, %v1347
      %v1380 = vpack.c.b16 %v1348, %v1348
      %v1381 = vpack.c.b16 %v1349, %v1349
      %v1382 = vpack.c.b16 %v1350, %v1350
      %v1383 = vpack.c.b16 %v1351, %v1351
      %v1384 = vpack.c.b16 %v1352, %v1352
      %v1385 = vpack.c.b16 %v1353, %v1353
      %v1386 = vpack.c.b16 %v1354, %v1354
      %v1387 = vpack.c.b16 %v1355, %v1355
      %v1388 = vpack.c.b16 %v1356, %v1356
      %v1389 = vpack.c.b16 %v1357, %v1357
      %v1390 = vpack.c.b16 %v1358, %v1358
      %v1391 = vpack.c.b16 %v1359, %v1359
      %v1392 = vpack.c.b16 %v1360, %v1360
      %v1393 = vpack.c.b16 %v1361, %v1361
      %v1394 = vpack.c.b16 %v1362, %v1362
      %v1395 = vpack.c.b16 %v1363, %v1363
      %v1396 = vpack.c.b16 %v1364, %v1364
      %v1397 = vpack.c.b16 %v1365, %v1365
      %v1398 = vpack.c.b16 %v1366, %v1366
      %v1399 = vpack.c.b16 %v1367, %v1367
      %v1400 = vpack.c.b16 %v1368, %v1368
      %v1401 = vpack.c.b16 %v1369, %v1369
      %vm1434 = vcmask 125952
      %1435 = vst.msk [vmem:[%s217] sm:$0xf] %vm1434, %v1370
      %1436 = vst.msk [vmem:[%s217 + $0x4] sm:$0xf] %vm1434, %v1371
      %1437 = vst.msk [vmem:[%s217 + $0x8] sm:$0xf] %vm1434, %v1372
      %1438 = vst.msk [vmem:[%s217 + $0xc] sm:$0xf] %vm1434, %v1373
      %1439 = vst.msk [vmem:[%s217 + $0x10] sm:$0xf] %vm1434, %v1374
      %1440 = vst.msk [vmem:[%s217 + $0x14] sm:$0xf] %vm1434, %v1375
      %1441 = vst.msk [vmem:[%s217 + $0x18] sm:$0xf] %vm1434, %v1376
      %1442 = vst.msk [vmem:[%s217 + $0x1c] sm:$0xf] %vm1434, %v1377
      %1443 = vst.msk [vmem:[%s217 + $0x20] sm:$0xf] %vm1434, %v1378
      %1444 = vst.msk [vmem:[%s217 + $0x24] sm:$0xf] %vm1434, %v1379
      %1445 = vst.msk [vmem:[%s217 + $0x28] sm:$0xf] %vm1434, %v1380
      %1446 = vst.msk [vmem:[%s217 + $0x2c] sm:$0xf] %vm1434, %v1381
      %1447 = vst.msk [vmem:[%s217 + $0x30] sm:$0xf] %vm1434, %v1382
      %1448 = vst.msk [vmem:[%s217 + $0x34] sm:$0xf] %vm1434, %v1383
      %1449 = vst.msk [vmem:[%s217 + $0x38] sm:$0xf] %vm1434, %v1384
      %1450 = vst.msk [vmem:[%s217 + $0x3c] sm:$0xf] %vm1434, %v1385
      %1451 = vst.msk [vmem:[%s217 + $0x40] sm:$0xf] %vm1434, %v1386
      %1452 = vst.msk [vmem:[%s217 + $0x44] sm:$0xf] %vm1434, %v1387
      %1453 = vst.msk [vmem:[%s217 + $0x48] sm:$0xf] %vm1434, %v1388
      %1454 = vst.msk [vmem:[%s217 + $0x4c] sm:$0xf] %vm1434, %v1389
      %1455 = vst.msk [vmem:[%s217 + $0x50] sm:$0xf] %vm1434, %v1390
      %1456 = vst.msk [vmem:[%s217 + $0x54] sm:$0xf] %vm1434, %v1391
      %1457 = vst.msk [vmem:[%s217 + $0x58] sm:$0xf] %vm1434, %v1392
      %1458 = vst.msk [vmem:[%s217 + $0x5c] sm:$0xf] %vm1434, %v1393
      %1459 = vst.msk [vmem:[%s217 + $0x60] sm:$0xf] %vm1434, %v1394
      %1460 = vst.msk [vmem:[%s217 + $0x64] sm:$0xf] %vm1434, %v1395
      %1461 = vst.msk [vmem:[%s217 + $0x68] sm:$0xf] %vm1434, %v1396
      %1462 = vst.msk [vmem:[%s217 + $0x6c] sm:$0xf] %vm1434, %v1397
      %1463 = vst.msk [vmem:[%s217 + $0x70] sm:$0xf] %vm1434, %v1398
      %1464 = vst.msk [vmem:[%s217 + $0x74] sm:$0xf] %vm1434, %v1399
      %1465 = vst.msk [vmem:[%s217 + $0x78] sm:$0xf] %vm1434, %v1400
      %1466 = vst.msk [vmem:[%s217 + $0x7c] sm:$0xf] %vm1434, %v1401
      %p1467 = scmp.lt.s32.totalorder %s15, 1
      %s1468 = scalar_select %p1467, %s15, 1
      %s1469 = smul.addr %s1468, 32
      %s1470 = smul.addr %s1469, 4
      %s1471 = scalar_lea.vmem %s4, %s1470
      // Predicated region
      $region37: #{_lambda_.23} parent=35 // pred_check
        %p1472 = pneg %p127
      $region38: #{_lambda_.23} parent=35 // pred_check_branch
        %1474 = sbr.rel (%p1472) target = $region40
      $region39: #{_lambda_.23} parent=35 // pred_region
        _
      $region40: #{_lambda_.23} parent=35 // pred_fallthru
        _
    $region36: #{_lambda_.23} parent=5 // pred_fallthru
      _
    %p1475 = scmp.le.s32.totalorder 2, %s10
    // Predicated region
    $region41: #{_lambda_.23} parent=5 // pred_check
      %p1476 = pneg %p1475
    $region42: #{_lambda_.23} parent=5 // pred_check_branch
      %1478 = sbr.rel (%p1476) target = $region44
    $region43: #{_lambda_.23} parent=5 // pred_region
      %s1479 = ssub.s32 %s10, 2
      // Predicated region
      $region45: #{_lambda_.23} parent=43 // pred_check
        %p1480 = pneg %p133
      $region46: #{_lambda_.23} parent=43 // pred_check_branch
        %1482 = sbr.rel (%p1480) target = $region48
      $region47: #{_lambda_.23} parent=43 // pred_region
        %p1483 = scmp.lt.s32.totalorder %s16, 1
        %s1484 = scalar_select %p1483, %s16, 1
        %s1485 = smul.addr %s1484, 32
        %s1486 = smul.addr %s1485, 4
        %s1487 = scalar_lea.vmem %s4, %s1486
      $region48: #{_lambda_.23} parent=43 // pred_fallthru
        _
    $region44: #{_lambda_.23} parent=5 // pred_fallthru
      _
  $region6: #{_lambda_.23} parent=0 // loop_footer
    %s14 = sadd.s32 1, %s10
  $region7: #{_lambda_.23} parent=0 // loop_footer_branch
    %9 = sbr.rel target = $region3
  $region8: #{_lambda_.23} parent=0 // loop_exit
    _

// kernel: _lambda_.28
$region0: #{_lambda_.28}
  #allocation0 [shape = 'u32[]', space=smem, size = 0x4, offset = 0x4, fixed_abs, tag = 'smem constant byte address 0x4 - core index']
  #allocation1 [shape = 'u32[144,128]{1,0:T(1,128)}', space=vmem, size = 0x12000, scoped, tag = 'internal scratch']
  %s0 = inlined_call_operand.vmem [shape: bf16[2,64,144], index: 0, kind: input, shape index: {}]
  %s1 = inlined_call_operand.vmem [shape: bf16[1,144,32], index: 1, kind: input, shape index: {}]
  %s2 = inlined_call_operand.vmem [shape: f32[1,32], index: 2, kind: input, shape index: {}]
  %s3 = inlined_call_operand.vmem [shape: bf16[2,64,32], index: 3, kind: output, shape index: {}]
  %s4 = sld [smem:[#allocation0]]
  $region45: #{_lambda_.28} parent=0
    _
  %s6 = ssub.s32 1, %s4
  %s7 = scalar_select 0, %s6, %s4
  loop: start=0, step=1, limit=4
  $region2: #{_lambda_.28} parent=0 // loop_pre_header
    _
  $region3: #{_lambda_.28} parent=0 // loop_header
    %s9 = sphi 0, %s13
    %p10 = scmp.ge.s32.totalorder %s9, 4
    %s19 = sphi 0, %s21
    %s22 = sphi 0, %s19
    %s23 = sphi 0, %s22
    %s39 = sphi 0, %s23
    %s43 = sphi 0, %s43
    %s45 = sphi 0, %s43
    %s46 = sphi 0, %s45
    %s60 = sphi 0, %s46
    %s64 = sphi 0, %s64
    %s66 = sphi 0, %s64
    %s67 = sphi 0, %s66
    %s81 = sphi 0, %s67
    %s87 = sphi 0, %s89
    %s90 = sphi 0, %s87
    %s91 = sphi 0, %s90
    %s107 = sphi 0, %s91
  $region4: #{_lambda_.28} parent=0 // loop_header_branch
    %12 = sbr.rel (%p10) target = $region8
  $region5: #{_lambda_.28} parent=0 // loop_body
    %s14 = ssub.s32 %s9, 1
    %s15 = ssub.s32 %s9, 2
    %s16 = sadd.s32 %s9, 1
    %s17 = ssub.s32 %s9, %s16
    %p18 = scmp.eq.s32.totalorder %s17, 0
    %s20 = sadd.s32 %s19, 1
    %s21 = scalar_select %p18, %s19, %s20
    %p24 = pneg %p18
    %p25 = scmp.eq.s32.totalorder %s9, 1
    %p26 = por %p24, %p25
    %p27 = scmp.ne.s32.totalorder %s19, %s22
    %p28 = scmp.eq.s32.totalorder %s9, 0
    %p29 = por %p27, %p28
    %p30 = scmp.ne.s32.totalorder %s19, %s22
    %p31 = scmp.eq.s32.totalorder %s14, 1
    %p32 = por %p30, %p31
    %p33 = scmp.ne.s32.totalorder %s22, %s23
    %p34 = scmp.eq.s32.totalorder %s14, 0
    %p35 = por %p33, %p34
    %p36 = scmp.ne.s32.totalorder %s22, %s23
    %p37 = scmp.eq.s32.totalorder %s15, 1
    %p38 = por %p36, %p37
    %p40 = scmp.ne.s32.totalorder %s23, %s39
    %p41 = scmp.eq.s32.totalorder %s15, 0
    %p42 = por %p40, %p41
    %s44 = sadd.s32 %s43, 1
    %p47 = scmp.eq.s32.totalorder %s9, 1
    %p48 = scmp.ne.s32.totalorder %s43, %s45
    %p49 = scmp.eq.s32.totalorder %s9, 0
    %p50 = por %p48, %p49
    %p51 = scmp.ne.s32.totalorder %s43, %s45
    %p52 = scmp.eq.s32.totalorder %s14, 1
    %p53 = por %p51, %p52
    %p54 = scmp.ne.s32.totalorder %s45, %s46
    %p55 = scmp.eq.s32.totalorder %s14, 0
    %p56 = por %p54, %p55
    %p57 = scmp.ne.s32.totalorder %s45, %s46
    %p58 = scmp.eq.s32.totalorder %s15, 1
    %p59 = por %p57, %p58
    %p61 = scmp.ne.s32.totalorder %s46, %s60
    %p62 = scmp.eq.s32.totalorder %s15, 0
    %p63 = por %p61, %p62
    %s65 = sadd.s32 %s64, 1
    %p68 = scmp.eq.s32.totalorder %s9, 1
    %p69 = scmp.ne.s32.totalorder %s64, %s66
    %p70 = scmp.eq.s32.totalorder %s9, 0
    %p71 = por %p69, %p70
    %p72 = scmp.ne.s32.totalorder %s64, %s66
    %p73 = scmp.eq.s32.totalorder %s14, 1
    %p74 = por %p72, %p73
    %p75 = scmp.ne.s32.totalorder %s66, %s67
    %p76 = scmp.eq.s32.totalorder %s14, 0
    %p77 = por %p75, %p76
    %p78 = scmp.ne.s32.totalorder %s66, %s67
    %p79 = scmp.eq.s32.totalorder %s15, 1
    %p80 = por %p78, %p79
    %p82 = scmp.ne.s32.totalorder %s67, %s81
    %p83 = scmp.eq.s32.totalorder %s15, 0
    %p84 = por %p82, %p83
    %s85 = ssub.s32 %s9, %s16
    %p86 = scmp.eq.s32.totalorder %s85, 0
    %s88 = sadd.s32 %s87, 1
    %s89 = scalar_select %p86, %s87, %s88
    %p92 = pneg %p86
    %p93 = scmp.eq.s32.totalorder %s9, 1
    %p94 = por %p92, %p93
    %p95 = scmp.ne.s32.totalorder %s87, %s90
    %p96 = scmp.eq.s32.totalorder %s9, 0
    %p97 = por %p95, %p96
    %p98 = scmp.ne.s32.totalorder %s87, %s90
    %p99 = scmp.eq.s32.totalorder %s14, 1
    %p100 = por %p98, %p99
    %p101 = scmp.ne.s32.totalorder %s90, %s91
    %p102 = scmp.eq.s32.totalorder %s14, 0
    %p103 = por %p101, %p102
    %p104 = scmp.ne.s32.totalorder %s90, %s91
    %p105 = scmp.eq.s32.totalorder %s15, 1
    %p106 = por %p104, %p105
    %p108 = scmp.ne.s32.totalorder %s91, %s107
    %p109 = scmp.eq.s32.totalorder %s15, 0
    %p110 = por %p108, %p109
    %p111 = scmp.le.s32.totalorder 1, %s9
    %p112 = scmp.lt.s32.totalorder %s9, 3
    %p113 = pnand %p111, %p112
    %p114 = pneg %p113
    // Predicated region
    $region9: #{_lambda_.28} parent=5 // pred_check
      _
    $region10: #{_lambda_.28} parent=5 // pred_check_branch
      %116 = sbr.rel (%p113) target = $region12
    $region11: #{_lambda_.28} parent=5 // pred_region
      %s117 = ssub.s32 %s9, 1
      // Predicated region
      $region13: #{_lambda_.28} parent=11 // pred_check
        %p118 = pneg %p56
      $region14: #{_lambda_.28} parent=11 // pred_check_branch
        %120 = sbr.rel (%p118) target = $region16
      $region15: #{_lambda_.28} parent=11 // pred_region
        _
      $region16: #{_lambda_.28} parent=11 // pred_fallthru
        _
      // Predicated region
      $region17: #{_lambda_.28} parent=11 // pred_check
        %p121 = pneg %p77
      $region18: #{_lambda_.28} parent=11 // pred_check_branch
        %123 = sbr.rel (%p121) target = $region20
      $region19: #{_lambda_.28} parent=11 // pred_region
        _
      $region20: #{_lambda_.28} parent=11 // pred_fallthru
        _
    $region12: #{_lambda_.28} parent=5 // pred_fallthru
      _
    %p124 = scmp.lt.s32.totalorder %s9, 2
    // Predicated region
    $region21: #{_lambda_.28} parent=5 // pred_check
      %p125 = pneg %p124
    $region22: #{_lambda_.28} parent=5 // pred_check_branch
      %127 = sbr.rel (%p125) target = $region24
    $region23: #{_lambda_.28} parent=5 // pred_region
      // Predicated region
      $region25: #{_lambda_.28} parent=23 // pred_check
        %p128 = pneg %p29
      $region26: #{_lambda_.28} parent=23 // pred_check_branch
        %130 = sbr.rel (%p128) target = $region28
      $region27: #{_lambda_.28} parent=23 // pred_region
        %p131 = scmp.lt.s32.totalorder %s9, 1
        %s132 = scalar_select %p131, %s9, 1
        %s133 = smul.addr %s132, 16
        %s134 = smul.addr %s133, 4
        %s135 = scalar_lea.vmem %s0, %s134
      $region28: #{_lambda_.28} parent=23 // pred_fallthru
        _
    $region24: #{_lambda_.28} parent=5 // pred_fallthru
      _
    %p136 = scmp.le.s32.totalorder 1, %s9
    %p137 = scmp.lt.s32.totalorder %s9, 3
    %p138 = pnand %p136, %p137
    %p139 = pneg %p138
    // Predicated region
    $region29: #{_lambda_.28} parent=5 // pred_check
      _
    $region30: #{_lambda_.28} parent=5 // pred_check_branch
      %141 = sbr.rel (%p138) target = $region32
    $region31: #{_lambda_.28} parent=5 // pred_region
      %s142 = ssub.s32 %s9, 1
      %p143 = scmp.lt.s32.totalorder %s14, 1
      %s144 = scalar_select %p143, %s14, 1
      %s145 = smul.addr %s144, 16
      %s146 = smul.addr %s145, 4
      %s147 = scalar_lea.vmem %s0, %s146
      %p148 = pneg %p35
      %p149 = pneg %p32
      %p150 = pneg %p56
      %p151 = pneg %p53
      %p152 = pneg %p77
      %p153 = pneg %p74
      %p154 = pneg %p103
      %p155 = pneg %p100
      %p156 = scmp.lt.s32.totalorder %s14, 1
      %s157 = scalar_select %p156, %s14, 1
      %s158 = smul.addr %s157, 8
      %s159 = smul.addr %s158, 4
      %s160 = scalar_lea.vmem %s3, %s159
      %p161 = scmp.lt.s32.totalorder %s14, 1
      %s162 = scalar_select %p161, %s14, 1
      %s163 = smul.addr %s162, 16
      %s164 = smul.addr %s163, 4
      %s165 = scalar_lea.vmem %s0, %s164
      %p166 = scmp.lt.s32.totalorder %s14, 1
      %s167 = scalar_select %p166, %s14, 1
      %s168 = smul.addr %s167, 8
      %s169 = smul.addr %s168, 4
      %s170 = scalar_lea.vmem %s3, %s169
      %v172 = vld [vmem:[%s165] sm:$0xff]
      %v173 = vld [vmem:[%s165 + $0x8] sm:$0xff]
      %v174 = vld [vmem:[%s165 + $0x10] sm:$0xff]
      %v175 = vld [vmem:[%s165 + $0x18] sm:$0xff]
      %v176 = vld [vmem:[%s165 + $0x20] sm:$0xff]
      %v177 = vld [vmem:[%s165 + $0x28] sm:$0xff]
      %v178 = vld [vmem:[%s165 + $0x30] sm:$0xff]
      %v179 = vld [vmem:[%s165 + $0x38] sm:$0xff]
      %v180 = vld [vmem:[%s1] sm:$0xf]
      %v181 = vld [vmem:[%s1 + $0x4] sm:$0xf]
      %v182 = vld [vmem:[%s1 + $0x8] sm:$0xf]
      %v183 = vld [vmem:[%s1 + $0xc] sm:$0xf]
      %v184 = vld [vmem:[%s1 + $0x10] sm:$0xf]
      %v185 = vld [vmem:[%s1 + $0x14] sm:$0xf]
      %v186 = vld [vmem:[%s1 + $0x18] sm:$0xf]
      %v187 = vld [vmem:[%s1 + $0x1c] sm:$0xf]
      %v188 = vld [vmem:[%s1 + $0x20] sm:$0xf]
      %v189 = vld [vmem:[%s1 + $0x24] sm:$0xf]
      %v190 = vld [vmem:[%s1 + $0x28] sm:$0xf]
      %v191 = vld [vmem:[%s1 + $0x2c] sm:$0xf]
      %v192 = vld [vmem:[%s1 + $0x30] sm:$0xf]
      %v193 = vld [vmem:[%s1 + $0x34] sm:$0xf]
      %v194 = vld [vmem:[%s1 + $0x38] sm:$0xf]
      %v195 = vld [vmem:[%s1 + $0x3c] sm:$0xf]
      %v196 = vld [vmem:[%s1 + $0x40] sm:$0xf]
      %v197 = vld [vmem:[%s1 + $0x44] sm:$0xf]
      %v198 = vld [vmem:[%s2] sm:$0x1]
      %v200 = vlaneseq
      %v201 = vshrl.u32 %v200, 7
      %v202 = vsub.s32 0, %v201
      %v203 = vrot.slane %v198, %v202
      %v213 = vunpack.c.l.b16 %v172
      %v214 = vunpack.c.h.b16 %v172
      %v215 = vunpack.c.l.b16 %v173
      %v216 = vunpack.c.h.b16 %v173
      %v217 = vunpack.c.l.b16 %v174
      %v218 = vunpack.c.h.b16 %v174
      %v219 = vunpack.c.l.b16 %v175
      %v220 = vunpack.c.h.b16 %v175
      %v221 = vunpack.c.l.b16 %v176
      %v222 = vunpack.c.h.b16 %v176
      %v223 = vunpack.c.l.b16 %v177
      %v224 = vunpack.c.h.b16 %v177
      %v225 = vunpack.c.l.b16 %v178
      %v226 = vunpack.c.h.b16 %v178
      %v227 = vunpack.c.l.b16 %v179
      %v228 = vunpack.c.h.b16 %v179
      %v229 = vpack.c.b16 %v215, %v213
      %v230 = vpack.c.b16 %v216, %v214
      %v231 = vpack.c.b16 %v219, %v217
      %v232 = vpack.c.b16 %v220, %v218
      %v233 = vpack.c.b16 %v223, %v221
      %v234 = vpack.c.b16 %v224, %v222
      %v235 = vpack.c.b16 %v227, %v225
      %v236 = vpack.c.b16 %v228, %v226
      %v259 = vunpack.c.l.b16 %v180
      %v260 = vunpack.c.l.b16 %v181
      %v261 = vunpack.c.l.b16 %v182
      %v262 = vunpack.c.l.b16 %v183
      %v263 = vunpack.c.l.b16 %v184
      %v264 = vunpack.c.l.b16 %v185
      %v265 = vunpack.c.l.b16 %v186
      %v266 = vunpack.c.l.b16 %v187
      %v267 = vunpack.c.l.b16 %v188
      %v268 = vunpack.c.l.b16 %v189
      %v269 = vunpack.c.l.b16 %v190
      %v270 = vunpack.c.l.b16 %v191
      %v271 = vunpack.c.l.b16 %v192
      %v272 = vunpack.c.l.b16 %v193
      %v273 = vunpack.c.l.b16 %v194
      %v274 = vunpack.c.l.b16 %v195
      %v275 = vunpack.c.l.b16 %v196
      %v276 = vunpack.c.l.b16 %v197
      %v277 = vpack.c.b16 %v260, %v259
      %v278 = vpack.c.b16 %v262, %v261
      %v279 = vpack.c.b16 %v264, %v263
      %v280 = vpack.c.b16 %v266, %v265
      %v281 = vpack.c.b16 %v268, %v267
      %v282 = vpack.c.b16 %v270, %v269
      %v283 = vpack.c.b16 %v272, %v271
      %v284 = vpack.c.b16 %v274, %v273
      %v285 = vpack.c.b16 %v276, %v275
      %vm295 = vcmask 130048
      %v297 = vsel %vm295, %v230, 0
      %v300 = vsel %vm295, %v232, 0
      %v303 = vsel %vm295, %v234, 0
      %v306 = vsel %vm295, %v236, 0
      %308 = vmatprep.subr.bf16.mxu0 0
      %309 = vmatpush1.bf16.msra.mxu0 %v284
      %310 = vmatprep.subr.bf16.mxu0 0
      %311 = vmatpush1.bf16.msra.mxu0 %v283
      %312 = vmatprep.subr.bf16.mxu0 0
      %313 = vmatpush1.bf16.msra.mxu0 %v282
      %314 = vmatprep.subr.bf16.mxu0 0
      %315 = vmatpush1.bf16.msra.mxu0 %v281
      %316 = vmatprep.subr.bf16.mxu0 0
      %317 = vmatpush1.bf16.msra.mxu0 %v280
      %318 = vmatprep.subr.bf16.mxu0 0
      %319 = vmatpush1.bf16.msra.mxu0 %v279
      %320 = vmatprep.subr.bf16.mxu0 0
      %321 = vmatpush1.bf16.msra.mxu0 %v278
      %322 = vmatprep.subr.bf16.mxu0 0
      %323 = vmatpush1.bf16.msra.mxu0 %v277
      %324 = vmatprep.subr.bf16.mxu0 0
      %325 = vmatpush2.bf16.msra.mxu0 0
      %326 = vmatprep.subr.bf16.mxu0 0
      %327 = vmatpush2.bf16.msra.mxu0 0
      %328 = vmatprep.subr.bf16.mxu0 0
      %329 = vmatpush2.bf16.msra.mxu0 0
      %330 = vmatprep.subr.bf16.mxu0 0
      %331 = vmatpush2.bf16.msra.mxu0 0
      %332 = vmatprep.subr.bf16.mxu0 0
      %333 = vmatpush2.bf16.msra.mxu0 0
      %334 = vmatprep.subr.bf16.mxu0 0
      %335 = vmatpush2.bf16.msra.mxu0 0
      %336 = vmatprep.subr.bf16.mxu0 0
      %337 = vmatpush2.bf16.msra.mxu0 0
      %338 = vmatprep.subr.bf16.mxu0 0
      %339 = vmatpush2.bf16.msra.mxu0 %v285
      %340 = vmatprep.mubr.bf16.mxu0 %v297
      %341 = vmatmul.mubr.bf16.gmra.mxu0 %v229
      %v342 = vpop.f32.mrf.mxu0
      %v343 = vadd.f32 %v203, %v342
      %v344 = vpop.f32.mrf.mxu0
      %v345 = vpop.f32.mrf.mxu0
      %v346 = vadd.f32 %v203, %v345
      %v347 = vpop.f32.mrf.mxu0
      %348 = vmatprep.mubr.bf16.mxu0 %v300
      %349 = vmatmul.mubr.bf16.gmra.mxu0 %v231
      %v350 = vpop.f32.mrf.mxu0
      %v351 = vadd.f32 %v203, %v350
      %v352 = vpop.f32.mrf.mxu0
      %v353 = vpop.f32.mrf.mxu0
      %v354 = vadd.f32 %v203, %v353
      %v355 = vpop.f32.mrf.mxu0
      %356 = vmatprep.mubr.bf16.mxu0 %v303
      %357 = vmatmul.mubr.bf16.gmra.mxu0 %v233
      %v358 = vpop.f32.mrf.mxu0
      %v359 = vadd.f32 %v203, %v358
      %v360 = vpop.f32.mrf.mxu0
      %v361 = vpop.f32.mrf.mxu0
      %v362 = vadd.f32 %v203, %v361
      %v363 = vpop.f32.mrf.mxu0
      %364 = vmatprep.mubr.bf16.mxu0 %v306
      %365 = vmatmul.mubr.bf16.gmra.mxu0 %v235
      %v366 = vpop.f32.mrf.mxu0
      %v367 = vadd.f32 %v203, %v366
      %v368 = vpop.f32.mrf.mxu0
      %v369 = vpop.f32.mrf.mxu0
      %v370 = vadd.f32 %v203, %v369
      %v371 = vpop.f32.mrf.mxu0
      %372 = vdwg.mxu0
      %v373 = vmax.f32 %v343, 0.0
      %v374 = vmax.f32 %v346, 0.0
      %v375 = vmax.f32 %v351, 0.0
      %v376 = vmax.f32 %v354, 0.0
      %v377 = vmax.f32 %v359, 0.0
      %v378 = vmax.f32 %v362, 0.0
      %v379 = vmax.f32 %v367, 0.0
      %v380 = vmax.f32 %v370, 0.0
      %v381 = vpack.c.bf16 %v374, %v373
      %v382 = vpack.c.bf16 %v376, %v375
      %v383 = vpack.c.bf16 %v378, %v377
      %v384 = vpack.c.bf16 %v380, %v379
      %v389 = vunpack.c.l.b16 %v381
      %v390 = vunpack.c.h.b16 %v381
      %v391 = vunpack.c.l.b16 %v382
      %v392 = vunpack.c.h.b16 %v382
      %v393 = vunpack.c.l.b16 %v383
      %v394 = vunpack.c.h.b16 %v383
      %v395 = vunpack.c.l.b16 %v384
      %v396 = vunpack.c.h.b16 %v384
      %v397 = vpack.c.b16 %v389, %v389
      %v398 = vpack.c.b16 %v390, %v390
      %v399 = vpack.c.b16 %v391, %v391
      %v400 = vpack.c.b16 %v392, %v392
      %v401 = vpack.c.b16 %v393, %v393
      %v402 = vpack.c.b16 %v394, %v394
      %v403 = vpack.c.b16 %v395, %v395
      %v404 = vpack.c.b16 %v396, %v396
      %vm413 = vcmask 257024
      %414 = vst.msk [vmem:[%s170] sm:$0xf] %vm413, %v397
      %415 = vst.msk [vmem:[%s170 + $0x4] sm:$0xf] %vm413, %v398
      %416 = vst.msk [vmem:[%s170 + $0x8] sm:$0xf] %vm413, %v399
      %417 = vst.msk [vmem:[%s170 + $0xc] sm:$0xf] %vm413, %v400
      %418 = vst.msk [vmem:[%s170 + $0x10] sm:$0xf] %vm413, %v401
      %419 = vst.msk [vmem:[%s170 + $0x14] sm:$0xf] %vm413, %v402
      %420 = vst.msk [vmem:[%s170 + $0x18] sm:$0xf] %vm413, %v403
      %421 = vst.msk [vmem:[%s170 + $0x1c] sm:$0xf] %vm413, %v404
      %p422 = scmp.lt.s32.totalorder %s14, 1
      %s423 = scalar_select %p422, %s14, 1
      %s424 = smul.addr %s423, 8
      %s425 = smul.addr %s424, 4
      %s426 = scalar_lea.vmem %s3, %s425
      // Predicated region
      $region33: #{_lambda_.28} parent=31 // pred_check
        %p427 = pneg %p100
      $region34: #{_lambda_.28} parent=31 // pred_check_branch
        %429 = sbr.rel (%p427) target = $region36
      $region35: #{_lambda_.28} parent=31 // pred_region
        _
      $region36: #{_lambda_.28} parent=31 // pred_fallthru
        _
    $region32: #{_lambda_.28} parent=5 // pred_fallthru
      _
    %p430 = scmp.le.s32.totalorder 2, %s9
    // Predicated region
    $region37: #{_lambda_.28} parent=5 // pred_check
      %p431 = pneg %p430
    $region38: #{_lambda_.28} parent=5 // pred_check_branch
      %433 = sbr.rel (%p431) target = $region40
    $region39: #{_lambda_.28} parent=5 // pred_region
      %s434 = ssub.s32 %s9, 2
      // Predicated region
      $region41: #{_lambda_.28} parent=39 // pred_check
        %p435 = pneg %p106
      $region42: #{_lambda_.28} parent=39 // pred_check_branch
        %437 = sbr.rel (%p435) target = $region44
      $region43: #{_lambda_.28} parent=39 // pred_region
        %p438 = scmp.lt.s32.totalorder %s15, 1
        %s439 = scalar_select %p438, %s15, 1
        %s440 = smul.addr %s439, 8
        %s441 = smul.addr %s440, 4
        %s442 = scalar_lea.vmem %s3, %s441
      $region44: #{_lambda_.28} parent=39 // pred_fallthru
        _
    $region40: #{_lambda_.28} parent=5 // pred_fallthru
      _
  $region6: #{_lambda_.28} parent=0 // loop_footer
    %s13 = sadd.s32 1, %s9
  $region7: #{_lambda_.28} parent=0 // loop_footer_branch
    %8 = sbr.rel target = $region3
  $region8: #{_lambda_.28} parent=0 // loop_exit
    _

// kernel: _lambda_.36
$region0: #{_lambda_.36}
  #allocation0 [shape = 'u32[]', space=smem, size = 0x4, offset = 0x4, fixed_abs, tag = 'smem constant byte address 0x4 - core index']
  #allocation1 [shape = 'u32[144,128]{1,0:T(1,128)}', space=vmem, size = 0x12000, scoped, tag = 'internal scratch']
  %s0 = inlined_call_operand.vmem [shape: bf16[2,16,32], index: 0, kind: input, shape index: {}]
  %s1 = inlined_call_operand.vmem [shape: bf16[1,32,64], index: 1, kind: input, shape index: {}]
  %s2 = inlined_call_operand.vmem [shape: f32[1,64], index: 2, kind: input, shape index: {}]
  %s3 = inlined_call_operand.vmem [shape: bf16[2,16,64], index: 3, kind: output, shape index: {}]
  %s4 = sld [smem:[#allocation0]]
  $region45: #{_lambda_.36} parent=0
    _
  %s6 = ssub.s32 1, %s4
  %s7 = scalar_select 0, %s6, %s4
  loop: start=0, step=1, limit=4
  $region2: #{_lambda_.36} parent=0 // loop_pre_header
    _
  $region3: #{_lambda_.36} parent=0 // loop_header
    %s9 = sphi 0, %s13
    %p10 = scmp.ge.s32.totalorder %s9, 4
    %s19 = sphi 0, %s21
    %s22 = sphi 0, %s19
    %s23 = sphi 0, %s22
    %s39 = sphi 0, %s23
    %s43 = sphi 0, %s43
    %s45 = sphi 0, %s43
    %s46 = sphi 0, %s45
    %s60 = sphi 0, %s46
    %s64 = sphi 0, %s64
    %s66 = sphi 0, %s64
    %s67 = sphi 0, %s66
    %s81 = sphi 0, %s67
    %s87 = sphi 0, %s89
    %s90 = sphi 0, %s87
    %s91 = sphi 0, %s90
    %s107 = sphi 0, %s91
  $region4: #{_lambda_.36} parent=0 // loop_header_branch
    %12 = sbr.rel (%p10) target = $region8
  $region5: #{_lambda_.36} parent=0 // loop_body
    %s14 = ssub.s32 %s9, 1
    %s15 = ssub.s32 %s9, 2
    %s16 = sadd.s32 %s9, 1
    %s17 = ssub.s32 %s9, %s16
    %p18 = scmp.eq.s32.totalorder %s17, 0
    %s20 = sadd.s32 %s19, 1
    %s21 = scalar_select %p18, %s19, %s20
    %p24 = pneg %p18
    %p25 = scmp.eq.s32.totalorder %s9, 1
    %p26 = por %p24, %p25
    %p27 = scmp.ne.s32.totalorder %s19, %s22
    %p28 = scmp.eq.s32.totalorder %s9, 0
    %p29 = por %p27, %p28
    %p30 = scmp.ne.s32.totalorder %s19, %s22
    %p31 = scmp.eq.s32.totalorder %s14, 1
    %p32 = por %p30, %p31
    %p33 = scmp.ne.s32.totalorder %s22, %s23
    %p34 = scmp.eq.s32.totalorder %s14, 0
    %p35 = por %p33, %p34
    %p36 = scmp.ne.s32.totalorder %s22, %s23
    %p37 = scmp.eq.s32.totalorder %s15, 1
    %p38 = por %p36, %p37
    %p40 = scmp.ne.s32.totalorder %s23, %s39
    %p41 = scmp.eq.s32.totalorder %s15, 0
    %p42 = por %p40, %p41
    %s44 = sadd.s32 %s43, 1
    %p47 = scmp.eq.s32.totalorder %s9, 1
    %p48 = scmp.ne.s32.totalorder %s43, %s45
    %p49 = scmp.eq.s32.totalorder %s9, 0
    %p50 = por %p48, %p49
    %p51 = scmp.ne.s32.totalorder %s43, %s45
    %p52 = scmp.eq.s32.totalorder %s14, 1
    %p53 = por %p51, %p52
    %p54 = scmp.ne.s32.totalorder %s45, %s46
    %p55 = scmp.eq.s32.totalorder %s14, 0
    %p56 = por %p54, %p55
    %p57 = scmp.ne.s32.totalorder %s45, %s46
    %p58 = scmp.eq.s32.totalorder %s15, 1
    %p59 = por %p57, %p58
    %p61 = scmp.ne.s32.totalorder %s46, %s60
    %p62 = scmp.eq.s32.totalorder %s15, 0
    %p63 = por %p61, %p62
    %s65 = sadd.s32 %s64, 1
    %p68 = scmp.eq.s32.totalorder %s9, 1
    %p69 = scmp.ne.s32.totalorder %s64, %s66
    %p70 = scmp.eq.s32.totalorder %s9, 0
    %p71 = por %p69, %p70
    %p72 = scmp.ne.s32.totalorder %s64, %s66
    %p73 = scmp.eq.s32.totalorder %s14, 1
    %p74 = por %p72, %p73
    %p75 = scmp.ne.s32.totalorder %s66, %s67
    %p76 = scmp.eq.s32.totalorder %s14, 0
    %p77 = por %p75, %p76
    %p78 = scmp.ne.s32.totalorder %s66, %s67
    %p79 = scmp.eq.s32.totalorder %s15, 1
    %p80 = por %p78, %p79
    %p82 = scmp.ne.s32.totalorder %s67, %s81
    %p83 = scmp.eq.s32.totalorder %s15, 0
    %p84 = por %p82, %p83
    %s85 = ssub.s32 %s9, %s16
    %p86 = scmp.eq.s32.totalorder %s85, 0
    %s88 = sadd.s32 %s87, 1
    %s89 = scalar_select %p86, %s87, %s88
    %p92 = pneg %p86
    %p93 = scmp.eq.s32.totalorder %s9, 1
    %p94 = por %p92, %p93
    %p95 = scmp.ne.s32.totalorder %s87, %s90
    %p96 = scmp.eq.s32.totalorder %s9, 0
    %p97 = por %p95, %p96
    %p98 = scmp.ne.s32.totalorder %s87, %s90
    %p99 = scmp.eq.s32.totalorder %s14, 1
    %p100 = por %p98, %p99
    %p101 = scmp.ne.s32.totalorder %s90, %s91
    %p102 = scmp.eq.s32.totalorder %s14, 0
    %p103 = por %p101, %p102
    %p104 = scmp.ne.s32.totalorder %s90, %s91
    %p105 = scmp.eq.s32.totalorder %s15, 1
    %p106 = por %p104, %p105
    %p108 = scmp.ne.s32.totalorder %s91, %s107
    %p109 = scmp.eq.s32.totalorder %s15, 0
    %p110 = por %p108, %p109
    %p111 = scmp.le.s32.totalorder 1, %s9
    %p112 = scmp.lt.s32.totalorder %s9, 3
    %p113 = pnand %p111, %p112
    %p114 = pneg %p113
    // Predicated region
    $region9: #{_lambda_.36} parent=5 // pred_check
      _
    $region10: #{_lambda_.36} parent=5 // pred_check_branch
      %116 = sbr.rel (%p113) target = $region12
    $region11: #{_lambda_.36} parent=5 // pred_region
      %s117 = ssub.s32 %s9, 1
      // Predicated region
      $region13: #{_lambda_.36} parent=11 // pred_check
        %p118 = pneg %p56
      $region14: #{_lambda_.36} parent=11 // pred_check_branch
        %120 = sbr.rel (%p118) target = $region16
      $region15: #{_lambda_.36} parent=11 // pred_region
        _
      $region16: #{_lambda_.36} parent=11 // pred_fallthru
        _
      // Predicated region
      $region17: #{_lambda_.36} parent=11 // pred_check
        %p121 = pneg %p77
      $region18: #{_lambda_.36} parent=11 // pred_check_branch
        %123 = sbr.rel (%p121) target = $region20
      $region19: #{_lambda_.36} parent=11 // pred_region
        _
      $region20: #{_lambda_.36} parent=11 // pred_fallthru
        _
    $region12: #{_lambda_.36} parent=5 // pred_fallthru
      _
    %p124 = scmp.lt.s32.totalorder %s9, 2
    // Predicated region
    $region21: #{_lambda_.36} parent=5 // pred_check
      %p125 = pneg %p124
    $region22: #{_lambda_.36} parent=5 // pred_check_branch
      %127 = sbr.rel (%p125) target = $region24
    $region23: #{_lambda_.36} parent=5 // pred_region
      // Predicated region
      $region25: #{_lambda_.36} parent=23 // pred_check
        %p128 = pneg %p29
      $region26: #{_lambda_.36} parent=23 // pred_check_branch
        %130 = sbr.rel (%p128) target = $region28
      $region27: #{_lambda_.36} parent=23 // pred_region
        %p131 = scmp.lt.s32.totalorder %s9, 1
        %s132 = scalar_select %p131, %s9, 1
        %s133 = smul.addr %s132, 2
        %s134 = smul.addr %s133, 4
        %s135 = scalar_lea.vmem %s0, %s134
      $region28: #{_lambda_.36} parent=23 // pred_fallthru
        _
    $region24: #{_lambda_.36} parent=5 // pred_fallthru
      _
    %p136 = scmp.le.s32.totalorder 1, %s9
    %p137 = scmp.lt.s32.totalorder %s9, 3
    %p138 = pnand %p136, %p137
    %p139 = pneg %p138
    // Predicated region
    $region29: #{_lambda_.36} parent=5 // pred_check
      _
    $region30: #{_lambda_.36} parent=5 // pred_check_branch
      %141 = sbr.rel (%p138) target = $region32
    $region31: #{_lambda_.36} parent=5 // pred_region
      %s142 = ssub.s32 %s9, 1
      %p143 = scmp.lt.s32.totalorder %s14, 1
      %s144 = scalar_select %p143, %s14, 1
      %s145 = smul.addr %s144, 2
      %s146 = smul.addr %s145, 4
      %s147 = scalar_lea.vmem %s0, %s146
      %p148 = pneg %p35
      %p149 = pneg %p32
      %p150 = pneg %p56
      %p151 = pneg %p53
      %p152 = pneg %p77
      %p153 = pneg %p74
      %p154 = pneg %p103
      %p155 = pneg %p100
      %p156 = scmp.lt.s32.totalorder %s14, 1
      %s157 = scalar_select %p156, %s14, 1
      %s158 = smul.addr %s157, 2
      %s159 = smul.addr %s158, 4
      %s160 = scalar_lea.vmem %s3, %s159
      %p161 = scmp.lt.s32.totalorder %s14, 1
      %s162 = scalar_select %p161, %s14, 1
      %s163 = smul.addr %s162, 2
      %s164 = smul.addr %s163, 4
      %s165 = scalar_lea.vmem %s0, %s164
      %p166 = scmp.lt.s32.totalorder %s14, 1
      %s167 = scalar_select %p166, %s14, 1
      %s168 = smul.addr %s167, 2
      %s169 = smul.addr %s168, 4
      %s170 = scalar_lea.vmem %s3, %s169
      %v172 = vld [vmem:[%s165] sm:$0xf]
      %v173 = vld [vmem:[%s165 + $0x4] sm:$0xf]
      %v174 = vld [vmem:[%s1] sm:$0xf]
      %v175 = vld [vmem:[%s1 + $0x4] sm:$0xf]
      %v176 = vld [vmem:[%s1 + $0x8] sm:$0xf]
      %v177 = vld [vmem:[%s1 + $0xc] sm:$0xf]
      %v178 = vld [vmem:[%s2] sm:$0x1]
      %v180 = vlaneseq
      %v181 = vshrl.u32 %v180, 7
      %v182 = vsub.s32 0, %v181
      %v183 = vrot.slane %v178, %v182
      %v187 = vunpack.c.l.b16 %v172
      %v188 = vunpack.c.l.b16 %v173
      %v189 = vpack.c.b16 %v188, %v187
      %v194 = vunpack.c.l.b16 %v174
      %v195 = vunpack.c.l.b16 %v175
      %v196 = vunpack.c.l.b16 %v176
      %v197 = vunpack.c.l.b16 %v177
      %v198 = vpack.c.b16 %v195, %v194
      %v199 = vpack.c.b16 %v197, %v196
      %vm202 = vcmask 261120
      %v204 = vsel %vm202, %v189, 0
      %206 = vmatprep.subr.bf16.mxu0 0
      %207 = vmatpush1.bf16.msra.mxu0 0
      %208 = vmatprep.subr.bf16.mxu0 0
      %209 = vmatpush1.bf16.msra.mxu0 0
      %210 = vmatprep.subr.bf16.mxu0 0
      %211 = vmatpush1.bf16.msra.mxu0 0
      %212 = vmatprep.subr.bf16.mxu0 0
      %213 = vmatpush1.bf16.msra.mxu0 0
      %214 = vmatprep.subr.bf16.mxu0 0
      %215 = vmatpush1.bf16.msra.mxu0 0
      %216 = vmatprep.subr.bf16.mxu0 0
      %217 = vmatpush1.bf16.msra.mxu0 0
      %218 = vmatprep.subr.bf16.mxu0 0
      %219 = vmatpush1.bf16.msra.mxu0 %v199
      %220 = vmatprep.subr.bf16.mxu0 0
      %221 = vmatpush1.bf16.msra.mxu0 %v198
      %222 = vmatprep.subr.bf16.mxu0 0
      %223 = vmatpush2.bf16.msra.mxu0 0
      %224 = vmatprep.subr.bf16.mxu0 0
      %225 = vmatpush2.bf16.msra.mxu0 0
      %226 = vmatprep.subr.bf16.mxu0 0
      %227 = vmatpush2.bf16.msra.mxu0 0
      %228 = vmatprep.subr.bf16.mxu0 0
      %229 = vmatpush2.bf16.msra.mxu0 0
      %230 = vmatprep.subr.bf16.mxu0 0
      %231 = vmatpush2.bf16.msra.mxu0 0
      %232 = vmatprep.subr.bf16.mxu0 0
      %233 = vmatpush2.bf16.msra.mxu0 0
      %234 = vmatprep.subr.bf16.mxu0 0
      %235 = vmatpush2.bf16.msra.mxu0 0
      %236 = vmatprep.subr.bf16.mxu0 0
      %237 = vmatpush2.bf16.msra.mxu0 0
      %238 = vmatprep.mubr.bf16.mxu0 0
      %239 = vmatmul.mubr.bf16.gmra.mxu0 %v204
      %v240 = vpop.f32.mrf.mxu0
      %v241 = vadd.f32 %v183, %v240
      %v242 = vpop.f32.mrf.mxu0
      %v243 = vpop.f32.mrf.mxu0
      %v244 = vadd.f32 %v183, %v243
      %v245 = vpop.f32.mrf.mxu0
      %246 = vdwg.mxu0
      %v247 = vpack.c.bf16 %v244, %v241
      %v249 = vunpack.c.l.b16 %v247
      %v250 = vunpack.c.h.b16 %v247
      %v251 = vpack.c.b16 %v249, %v249
      %v252 = vpack.c.b16 %v250, %v250
      %vm255 = vcmask 519168
      %256 = vst.msk [vmem:[%s170] sm:$0xf] %vm255, %v251
      %257 = vst.msk [vmem:[%s170 + $0x4] sm:$0xf] %vm255, %v252
      %p258 = scmp.lt.s32.totalorder %s14, 1
      %s259 = scalar_select %p258, %s14, 1
      %s260 = smul.addr %s259, 2
      %s261 = smul.addr %s260, 4
      %s262 = scalar_lea.vmem %s3, %s261
      // Predicated region
      $region33: #{_lambda_.36} parent=31 // pred_check
        %p263 = pneg %p100
      $region34: #{_lambda_.36} parent=31 // pred_check_branch
        %265 = sbr.rel (%p263) target = $region36
      $region35: #{_lambda_.36} parent=31 // pred_region
        _
      $region36: #{_lambda_.36} parent=31 // pred_fallthru
        _
    $region32: #{_lambda_.36} parent=5 // pred_fallthru
      _
    %p266 = scmp.le.s32.totalorder 2, %s9
    // Predicated region
    $region37: #{_lambda_.36} parent=5 // pred_check
      %p267 = pneg %p266
    $region38: #{_lambda_.36} parent=5 // pred_check_branch
      %269 = sbr.rel (%p267) target = $region40
    $region39: #{_lambda_.36} parent=5 // pred_region
      %s270 = ssub.s32 %s9, 2
      // Predicated region
      $region41: #{_lambda_.36} parent=39 // pred_check
        %p271 = pneg %p106
      $region42: #{_lambda_.36} parent=39 // pred_check_branch
        %273 = sbr.rel (%p271) target = $region44
      $region43: #{_lambda_.36} parent=39 // pred_region
        %p274 = scmp.lt.s32.totalorder %s15, 1
        %s275 = scalar_select %p274, %s15, 1
        %s276 = smul.addr %s275, 2
        %s277 = smul.addr %s276, 4
        %s278 = scalar_lea.vmem %s3, %s277
      $region44: #{_lambda_.36} parent=39 // pred_fallthru
        _
    $region40: #{_lambda_.36} parent=5 // pred_fallthru
      _
  $region6: #{_lambda_.36} parent=0 // loop_footer
    %s13 = sadd.s32 1, %s9
  $region7: #{_lambda_.36} parent=0 // loop_footer_branch
    %8 = sbr.rel target = $region3
  $region8: #{_lambda_.36} parent=0 // loop_exit
    _

// kernel: _lambda_.30
$region0: #{_lambda_.30}
  #allocation0 [shape = 'u32[]', space=smem, size = 0x4, offset = 0x4, fixed_abs, tag = 'smem constant byte address 0x4 - core index']
  #allocation1 [shape = 'u32[144,128]{1,0:T(1,128)}', space=vmem, size = 0x12000, scoped, tag = 'internal scratch']
  %s0 = inlined_call_operand.vmem [shape: bf16[2,80,96], index: 0, kind: input, shape index: {}]
  %s1 = inlined_call_operand.vmem [shape: bf16[3,96,32], index: 1, kind: input, shape index: {}]
  %s2 = inlined_call_operand.vmem [shape: f32[1,32], index: 2, kind: input, shape index: {}]
  %s3 = inlined_call_operand.vmem [shape: bf16[2,64,32], index: 3, kind: input, shape index: {}]
  %s4 = inlined_call_operand.vmem [shape: bf16[2,64,32], index: 4, kind: output, shape index: {}]
  %s5 = sld [smem:[#allocation0]]
  $region49: #{_lambda_.30} parent=0
    _
  %s7 = ssub.s32 1, %s5
  %s8 = scalar_select 0, %s7, %s5
  loop: start=0, step=1, limit=4
  $region2: #{_lambda_.30} parent=0 // loop_pre_header
    _
  $region3: #{_lambda_.30} parent=0 // loop_header
    %s10 = sphi 0, %s14
    %p11 = scmp.ge.s32.totalorder %s10, 4
    %s20 = sphi 0, %s22
    %s23 = sphi 0, %s20
    %s24 = sphi 0, %s23
    %s40 = sphi 0, %s24
    %s44 = sphi 0, %s44
    %s46 = sphi 0, %s44
    %s47 = sphi 0, %s46
    %s61 = sphi 0, %s47
    %s65 = sphi 0, %s65
    %s67 = sphi 0, %s65
    %s68 = sphi 0, %s67
    %s82 = sphi 0, %s68
    %s88 = sphi 0, %s90
    %s91 = sphi 0, %s88
    %s92 = sphi 0, %s91
    %s108 = sphi 0, %s92
    %s114 = sphi 0, %s116
    %s117 = sphi 0, %s114
    %s118 = sphi 0, %s117
    %s134 = sphi 0, %s118
  $region4: #{_lambda_.30} parent=0 // loop_header_branch
    %13 = sbr.rel (%p11) target = $region8
  $region5: #{_lambda_.30} parent=0 // loop_body
    %s15 = ssub.s32 %s10, 1
    %s16 = ssub.s32 %s10, 2
    %s17 = sadd.s32 %s10, 1
    %s18 = ssub.s32 %s10, %s17
    %p19 = scmp.eq.s32.totalorder %s18, 0
    %s21 = sadd.s32 %s20, 1
    %s22 = scalar_select %p19, %s20, %s21
    %p25 = pneg %p19
    %p26 = scmp.eq.s32.totalorder %s10, 1
    %p27 = por %p25, %p26
    %p28 = scmp.ne.s32.totalorder %s20, %s23
    %p29 = scmp.eq.s32.totalorder %s10, 0
    %p30 = por %p28, %p29
    %p31 = scmp.ne.s32.totalorder %s20, %s23
    %p32 = scmp.eq.s32.totalorder %s15, 1
    %p33 = por %p31, %p32
    %p34 = scmp.ne.s32.totalorder %s23, %s24
    %p35 = scmp.eq.s32.totalorder %s15, 0
    %p36 = por %p34, %p35
    %p37 = scmp.ne.s32.totalorder %s23, %s24
    %p38 = scmp.eq.s32.totalorder %s16, 1
    %p39 = por %p37, %p38
    %p41 = scmp.ne.s32.totalorder %s24, %s40
    %p42 = scmp.eq.s32.totalorder %s16, 0
    %p43 = por %p41, %p42
    %s45 = sadd.s32 %s44, 1
    %p48 = scmp.eq.s32.totalorder %s10, 1
    %p49 = scmp.ne.s32.totalorder %s44, %s46
    %p50 = scmp.eq.s32.totalorder %s10, 0
    %p51 = por %p49, %p50
    %p52 = scmp.ne.s32.totalorder %s44, %s46
    %p53 = scmp.eq.s32.totalorder %s15, 1
    %p54 = por %p52, %p53
    %p55 = scmp.ne.s32.totalorder %s46, %s47
    %p56 = scmp.eq.s32.totalorder %s15, 0
    %p57 = por %p55, %p56
    %p58 = scmp.ne.s32.totalorder %s46, %s47
    %p59 = scmp.eq.s32.totalorder %s16, 1
    %p60 = por %p58, %p59
    %p62 = scmp.ne.s32.totalorder %s47, %s61
    %p63 = scmp.eq.s32.totalorder %s16, 0
    %p64 = por %p62, %p63
    %s66 = sadd.s32 %s65, 1
    %p69 = scmp.eq.s32.totalorder %s10, 1
    %p70 = scmp.ne.s32.totalorder %s65, %s67
    %p71 = scmp.eq.s32.totalorder %s10, 0
    %p72 = por %p70, %p71
    %p73 = scmp.ne.s32.totalorder %s65, %s67
    %p74 = scmp.eq.s32.totalorder %s15, 1
    %p75 = por %p73, %p74
    %p76 = scmp.ne.s32.totalorder %s67, %s68
    %p77 = scmp.eq.s32.totalorder %s15, 0
    %p78 = por %p76, %p77
    %p79 = scmp.ne.s32.totalorder %s67, %s68
    %p80 = scmp.eq.s32.totalorder %s16, 1
    %p81 = por %p79, %p80
    %p83 = scmp.ne.s32.totalorder %s68, %s82
    %p84 = scmp.eq.s32.totalorder %s16, 0
    %p85 = por %p83, %p84
    %s86 = ssub.s32 %s10, %s17
    %p87 = scmp.eq.s32.totalorder %s86, 0
    %s89 = sadd.s32 %s88, 1
    %s90 = scalar_select %p87, %s88, %s89
    %p93 = pneg %p87
    %p94 = scmp.eq.s32.totalorder %s10, 1
    %p95 = por %p93, %p94
    %p96 = scmp.ne.s32.totalorder %s88, %s91
    %p97 = scmp.eq.s32.totalorder %s10, 0
    %p98 = por %p96, %p97
    %p99 = scmp.ne.s32.totalorder %s88, %s91
    %p100 = scmp.eq.s32.totalorder %s15, 1
    %p101 = por %p99, %p100
    %p102 = scmp.ne.s32.totalorder %s91, %s92
    %p103 = scmp.eq.s32.totalorder %s15, 0
    %p104 = por %p102, %p103
    %p105 = scmp.ne.s32.totalorder %s91, %s92
    %p106 = scmp.eq.s32.totalorder %s16, 1
    %p107 = por %p105, %p106
    %p109 = scmp.ne.s32.totalorder %s92, %s108
    %p110 = scmp.eq.s32.totalorder %s16, 0
    %p111 = por %p109, %p110
    %s112 = ssub.s32 %s10, %s17
    %p113 = scmp.eq.s32.totalorder %s112, 0
    %s115 = sadd.s32 %s114, 1
    %s116 = scalar_select %p113, %s114, %s115
    %p119 = pneg %p113
    %p120 = scmp.eq.s32.totalorder %s10, 1
    %p121 = por %p119, %p120
    %p122 = scmp.ne.s32.totalorder %s114, %s117
    %p123 = scmp.eq.s32.totalorder %s10, 0
    %p124 = por %p122, %p123
    %p125 = scmp.ne.s32.totalorder %s114, %s117
    %p126 = scmp.eq.s32.totalorder %s15, 1
    %p127 = por %p125, %p126
    %p128 = scmp.ne.s32.totalorder %s117, %s118
    %p129 = scmp.eq.s32.totalorder %s15, 0
    %p130 = por %p128, %p129
    %p131 = scmp.ne.s32.totalorder %s117, %s118
    %p132 = scmp.eq.s32.totalorder %s16, 1
    %p133 = por %p131, %p132
    %p135 = scmp.ne.s32.totalorder %s118, %s134
    %p136 = scmp.eq.s32.totalorder %s16, 0
    %p137 = por %p135, %p136
    %p138 = scmp.le.s32.totalorder 1, %s10
    %p139 = scmp.lt.s32.totalorder %s10, 3
    %p140 = pnand %p138, %p139
    %p141 = pneg %p140
    // Predicated region
    $region9: #{_lambda_.30} parent=5 // pred_check
      _
    $region10: #{_lambda_.30} parent=5 // pred_check_branch
      %143 = sbr.rel (%p140) target = $region12
    $region11: #{_lambda_.30} parent=5 // pred_region
      %s144 = ssub.s32 %s10, 1
      // Predicated region
      $region13: #{_lambda_.30} parent=11 // pred_check
        %p145 = pneg %p57
      $region14: #{_lambda_.30} parent=11 // pred_check_branch
        %147 = sbr.rel (%p145) target = $region16
      $region15: #{_lambda_.30} parent=11 // pred_region
        _
      $region16: #{_lambda_.30} parent=11 // pred_fallthru
        _
      // Predicated region
      $region17: #{_lambda_.30} parent=11 // pred_check
        %p148 = pneg %p78
      $region18: #{_lambda_.30} parent=11 // pred_check_branch
        %150 = sbr.rel (%p148) target = $region20
      $region19: #{_lambda_.30} parent=11 // pred_region
        _
      $region20: #{_lambda_.30} parent=11 // pred_fallthru
        _
    $region12: #{_lambda_.30} parent=5 // pred_fallthru
      _
    %p151 = scmp.lt.s32.totalorder %s10, 2
    // Predicated region
    $region21: #{_lambda_.30} parent=5 // pred_check
      %p152 = pneg %p151
    $region22: #{_lambda_.30} parent=5 // pred_check_branch
      %154 = sbr.rel (%p152) target = $region24
    $region23: #{_lambda_.30} parent=5 // pred_region
      // Predicated region
      $region25: #{_lambda_.30} parent=23 // pred_check
        %p155 = pneg %p30
      $region26: #{_lambda_.30} parent=23 // pred_check_branch
        %157 = sbr.rel (%p155) target = $region28
      $region27: #{_lambda_.30} parent=23 // pred_region
        %p158 = scmp.lt.s32.totalorder %s10, 1
        %s159 = scalar_select %p158, %s10, 1
        %s160 = smul.addr %s159, 10
        %s161 = smul.addr %s160, 4
        %s162 = scalar_lea.vmem %s0, %s161
      $region28: #{_lambda_.30} parent=23 // pred_fallthru
        _
      // Predicated region
      $region29: #{_lambda_.30} parent=23 // pred_check
        %p163 = pneg %p98
      $region30: #{_lambda_.30} parent=23 // pred_check_branch
        %165 = sbr.rel (%p163) target = $region32
      $region31: #{_lambda_.30} parent=23 // pred_region
        %p166 = scmp.lt.s32.totalorder %s10, 1
        %s167 = scalar_select %p166, %s10, 1
        %s168 = smul.addr %s167, 8
        %s169 = smul.addr %s168, 4
        %s170 = scalar_lea.vmem %s3, %s169
      $region32: #{_lambda_.30} parent=23 // pred_fallthru
        _
    $region24: #{_lambda_.30} parent=5 // pred_fallthru
      _
    %p171 = scmp.le.s32.totalorder 1, %s10
    %p172 = scmp.lt.s32.totalorder %s10, 3
    %p173 = pnand %p171, %p172
    %p174 = pneg %p173
    // Predicated region
    $region33: #{_lambda_.30} parent=5 // pred_check
      _
    $region34: #{_lambda_.30} parent=5 // pred_check_branch
      %176 = sbr.rel (%p173) target = $region36
    $region35: #{_lambda_.30} parent=5 // pred_region
      %s177 = ssub.s32 %s10, 1
      %p178 = scmp.lt.s32.totalorder %s15, 1
      %s179 = scalar_select %p178, %s15, 1
      %s180 = smul.addr %s179, 10
      %s181 = smul.addr %s180, 4
      %s182 = scalar_lea.vmem %s0, %s181
      %p183 = pneg %p36
      %p184 = pneg %p33
      %p185 = pneg %p57
      %p186 = pneg %p54
      %p187 = pneg %p78
      %p188 = pneg %p75
      %p189 = scmp.lt.s32.totalorder %s15, 1
      %s190 = scalar_select %p189, %s15, 1
      %s191 = smul.addr %s190, 8
      %s192 = smul.addr %s191, 4
      %s193 = scalar_lea.vmem %s3, %s192
      %p194 = pneg %p104
      %p195 = pneg %p101
      %p196 = pneg %p130
      %p197 = pneg %p127
      %p198 = scmp.lt.s32.totalorder %s15, 1
      %s199 = scalar_select %p198, %s15, 1
      %s200 = smul.addr %s199, 8
      %s201 = smul.addr %s200, 4
      %s202 = scalar_lea.vmem %s4, %s201
      %p203 = scmp.lt.s32.totalorder %s15, 1
      %s204 = scalar_select %p203, %s15, 1
      %s205 = smul.addr %s204, 10
      %s206 = smul.addr %s205, 4
      %s207 = scalar_lea.vmem %s0, %s206
      %p208 = scmp.lt.s32.totalorder %s15, 1
      %s209 = scalar_select %p208, %s15, 1
      %s210 = smul.addr %s209, 8
      %s211 = smul.addr %s210, 4
      %s212 = scalar_lea.vmem %s3, %s211
      %p213 = scmp.lt.s32.totalorder %s15, 1
      %s214 = scalar_select %p213, %s15, 1
      %s215 = smul.addr %s214, 8
      %s216 = smul.addr %s215, 4
      %s217 = scalar_lea.vmem %s4, %s216
      %v219 = vld [vmem:[%s207] sm:$0xf]
      %v220 = vld [vmem:[%s207 + $0x4] sm:$0xf]
      %v221 = vld [vmem:[%s207 + $0x8] sm:$0xf]
      %v222 = vld [vmem:[%s207 + $0xc] sm:$0xf]
      %v223 = vld [vmem:[%s207 + $0x10] sm:$0xf]
      %v224 = vld [vmem:[%s207 + $0x14] sm:$0xf]
      %v225 = vld [vmem:[%s207 + $0x18] sm:$0xf]
      %v226 = vld [vmem:[%s207 + $0x1c] sm:$0xf]
      %v227 = vld [vmem:[%s1] sm:$0xf]
      %v228 = vld [vmem:[%s1 + $0x4] sm:$0xf]
      %v229 = vld [vmem:[%s1 + $0x8] sm:$0xf]
      %v230 = vld [vmem:[%s1 + $0xc] sm:$0xf]
      %v231 = vld [vmem:[%s1 + $0x10] sm:$0xf]
      %v232 = vld [vmem:[%s1 + $0x14] sm:$0xf]
      %v233 = vld [vmem:[%s1 + $0x18] sm:$0xf]
      %v234 = vld [vmem:[%s1 + $0x1c] sm:$0xf]
      %v235 = vld [vmem:[%s1 + $0x20] sm:$0xf]
      %v236 = vld [vmem:[%s1 + $0x24] sm:$0xf]
      %v237 = vld [vmem:[%s1 + $0x28] sm:$0xf]
      %v238 = vld [vmem:[%s1 + $0x2c] sm:$0xf]
      %v239 = vld [vmem:[%s207 + $0x20] sm:$0xf]
      %s240 = scalar_lea.vmem %s1, 48
      %v241 = vld [vmem:[%s240] sm:$0xf]
      %v242 = vld [vmem:[%s240 + $0x4] sm:$0xf]
      %v243 = vld [vmem:[%s240 + $0x8] sm:$0xf]
      %v244 = vld [vmem:[%s240 + $0xc] sm:$0xf]
      %v245 = vld [vmem:[%s240 + $0x10] sm:$0xf]
      %v246 = vld [vmem:[%s240 + $0x14] sm:$0xf]
      %v247 = vld [vmem:[%s240 + $0x18] sm:$0xf]
      %v248 = vld [vmem:[%s240 + $0x1c] sm:$0xf]
      %v249 = vld [vmem:[%s240 + $0x20] sm:$0xf]
      %v250 = vld [vmem:[%s240 + $0x24] sm:$0xf]
      %v251 = vld [vmem:[%s240 + $0x28] sm:$0xf]
      %v252 = vld [vmem:[%s240 + $0x2c] sm:$0xf]
      %v261 = vunpack.c.l.b16 %v220
      %v262 = vunpack.c.l.b16 %v221
      %v263 = vunpack.c.l.b16 %v222
      %v264 = vunpack.c.l.b16 %v223
      %v265 = vunpack.c.l.b16 %v224
      %v266 = vunpack.c.l.b16 %v225
      %v267 = vunpack.c.l.b16 %v226
      %v268 = vunpack.c.l.b16 %v239
      %v269 = vpack.c.b16 %v262, %v261
      %v270 = vpack.c.b16 %v264, %v263
      %v271 = vpack.c.b16 %v266, %v265
      %v272 = vpack.c.b16 %v268, %v267
      %v285 = vunpack.c.l.b16 %v241
      %v286 = vunpack.c.l.b16 %v242
      %v287 = vunpack.c.l.b16 %v243
      %v288 = vunpack.c.l.b16 %v244
      %v289 = vunpack.c.l.b16 %v245
      %v290 = vunpack.c.l.b16 %v246
      %v291 = vunpack.c.l.b16 %v247
      %v292 = vunpack.c.l.b16 %v248
      %v293 = vunpack.c.l.b16 %v249
      %v294 = vunpack.c.l.b16 %v250
      %v295 = vunpack.c.l.b16 %v251
      %v296 = vunpack.c.l.b16 %v252
      %v297 = vpack.c.b16 %v286, %v285
      %v298 = vpack.c.b16 %v288, %v287
      %v299 = vpack.c.b16 %v290, %v289
      %v300 = vpack.c.b16 %v292, %v291
      %v301 = vpack.c.b16 %v294, %v293
      %v302 = vpack.c.b16 %v296, %v295
      %vm309 = vcmask 785408
      %v311 = vsel %vm309, %v269, 0
      %v314 = vsel %vm309, %v270, 0
      %v317 = vsel %vm309, %v271, 0
      %v320 = vsel %vm309, %v272, 0
      %322 = vmatprep.subr.bf16.mxu0 0
      %323 = vmatpush1.bf16.msra.mxu0 0
      %324 = vmatprep.subr.bf16.mxu0 0
      %325 = vmatpush1.bf16.msra.mxu0 0
      %326 = vmatprep.subr.bf16.mxu0 0
      %327 = vmatpush1.bf16.msra.mxu0 %v302
      %328 = vmatprep.subr.bf16.mxu0 0
      %329 = vmatpush1.bf16.msra.mxu0 %v301
      %330 = vmatprep.subr.bf16.mxu0 0
      %331 = vmatpush1.bf16.msra.mxu0 %v300
      %332 = vmatprep.subr.bf16.mxu0 0
      %333 = vmatpush1.bf16.msra.mxu0 %v299
      %334 = vmatprep.subr.bf16.mxu0 0
      %335 = vmatpush1.bf16.msra.mxu0 %v298
      %336 = vmatprep.subr.bf16.mxu0 0
      %337 = vmatpush1.bf16.msra.mxu0 %v297
      %338 = vmatprep.subr.bf16.mxu0 0
      %339 = vmatpush2.bf16.msra.mxu0 0
      %340 = vmatprep.subr.bf16.mxu0 0
      %341 = vmatpush2.bf16.msra.mxu0 0
      %342 = vmatprep.subr.bf16.mxu0 0
      %343 = vmatpush2.bf16.msra.mxu0 0
      %344 = vmatprep.subr.bf16.mxu0 0
      %345 = vmatpush2.bf16.msra.mxu0 0
      %346 = vmatprep.subr.bf16.mxu0 0
      %347 = vmatpush2.bf16.msra.mxu0 0
      %348 = vmatprep.subr.bf16.mxu0 0
      %349 = vmatpush2.bf16.msra.mxu0 0
      %350 = vmatprep.subr.bf16.mxu0 0
      %351 = vmatpush2.bf16.msra.mxu0 0
      %352 = vmatprep.subr.bf16.mxu0 0
      %353 = vmatpush2.bf16.msra.mxu0 0
      %354 = vmatprep.mubr.bf16.mxu0 0
      %355 = vmatmul.mubr.bf16.gmra.mxu0 %v311
      %v356 = vpop.f32.mrf.mxu0
      %v357 = vadd.f32 0.0, %v356
      %v358 = vpop.f32.mrf.mxu0
      %v359 = vpop.f32.mrf.mxu0
      %v360 = vadd.f32 0.0, %v359
      %v361 = vpop.f32.mrf.mxu0
      %362 = vmatprep.mubr.bf16.mxu0 0
      %363 = vmatmul.mubr.bf16.gmra.mxu0 %v314
      %v364 = vpop.f32.mrf.mxu0
      %v365 = vadd.f32 0.0, %v364
      %v366 = vpop.f32.mrf.mxu0
      %v367 = vpop.f32.mrf.mxu0
      %v368 = vadd.f32 0.0, %v367
      %v369 = vpop.f32.mrf.mxu0
      %370 = vmatprep.mubr.bf16.mxu0 0
      %371 = vmatmul.mubr.bf16.gmra.mxu0 %v317
      %v372 = vpop.f32.mrf.mxu0
      %v373 = vadd.f32 0.0, %v372
      %v374 = vpop.f32.mrf.mxu0
      %v375 = vpop.f32.mrf.mxu0
      %v376 = vadd.f32 0.0, %v375
      %v377 = vpop.f32.mrf.mxu0
      %378 = vmatprep.mubr.bf16.mxu0 0
      %379 = vmatmul.mubr.bf16.gmra.mxu0 %v320
      %v380 = vpop.f32.mrf.mxu0
      %v381 = vadd.f32 0.0, %v380
      %v382 = vpop.f32.mrf.mxu0
      %v383 = vpop.f32.mrf.mxu0
      %v384 = vadd.f32 0.0, %v383
      %v385 = vpop.f32.mrf.mxu0
      %386 = vdwg.mxu0
      %v388 = vunpack.c.l.b16 %v219
      %v389 = vpack.c.b16 %v261, %v388
      %v390 = vpack.c.b16 %v263, %v262
      %v391 = vpack.c.b16 %v265, %v264
      %v392 = vpack.c.b16 %v267, %v266
      %v405 = vunpack.c.l.b16 %v227
      %v406 = vunpack.c.l.b16 %v228
      %v407 = vunpack.c.l.b16 %v229
      %v408 = vunpack.c.l.b16 %v230
      %v409 = vunpack.c.l.b16 %v231
      %v410 = vunpack.c.l.b16 %v232
      %v411 = vunpack.c.l.b16 %v233
      %v412 = vunpack.c.l.b16 %v234
      %v413 = vunpack.c.l.b16 %v235
      %v414 = vunpack.c.l.b16 %v236
      %v415 = vunpack.c.l.b16 %v237
      %v416 = vunpack.c.l.b16 %v238
      %v417 = vpack.c.b16 %v406, %v405
      %v418 = vpack.c.b16 %v408, %v407
      %v419 = vpack.c.b16 %v410, %v409
      %v420 = vpack.c.b16 %v412, %v411
      %v421 = vpack.c.b16 %v414, %v413
      %v422 = vpack.c.b16 %v416, %v415
      %v430 = vsel %vm309, %v389, 0
      %v433 = vsel %vm309, %v390, 0
      %v436 = vsel %vm309, %v391, 0
      %v439 = vsel %vm309, %v392, 0
      %441 = vmatprep.subr.bf16.mxu0 0
      %442 = vmatpush1.bf16.msra.mxu0 0
      %443 = vmatprep.subr.bf16.mxu0 0
      %444 = vmatpush1.bf16.msra.mxu0 0
      %445 = vmatprep.subr.bf16.mxu0 0
      %446 = vmatpush1.bf16.msra.mxu0 %v422
      %447 = vmatprep.subr.bf16.mxu0 0
      %448 = vmatpush1.bf16.msra.mxu0 %v421
      %449 = vmatprep.subr.bf16.mxu0 0
      %450 = vmatpush1.bf16.msra.mxu0 %v420
      %451 = vmatprep.subr.bf16.mxu0 0
      %452 = vmatpush1.bf16.msra.mxu0 %v419
      %453 = vmatprep.subr.bf16.mxu0 0
      %454 = vmatpush1.bf16.msra.mxu0 %v418
      %455 = vmatprep.subr.bf16.mxu0 0
      %456 = vmatpush1.bf16.msra.mxu0 %v417
      %457 = vmatprep.subr.bf16.mxu0 0
      %458 = vmatpush2.bf16.msra.mxu0 0
      %459 = vmatprep.subr.bf16.mxu0 0
      %460 = vmatpush2.bf16.msra.mxu0 0
      %461 = vmatprep.subr.bf16.mxu0 0
      %462 = vmatpush2.bf16.msra.mxu0 0
      %463 = vmatprep.subr.bf16.mxu0 0
      %464 = vmatpush2.bf16.msra.mxu0 0
      %465 = vmatprep.subr.bf16.mxu0 0
      %466 = vmatpush2.bf16.msra.mxu0 0
      %467 = vmatprep.subr.bf16.mxu0 0
      %468 = vmatpush2.bf16.msra.mxu0 0
      %469 = vmatprep.subr.bf16.mxu0 0
      %470 = vmatpush2.bf16.msra.mxu0 0
      %471 = vmatprep.subr.bf16.mxu0 0
      %472 = vmatpush2.bf16.msra.mxu0 0
      %473 = vmatprep.mubr.bf16.mxu0 0
      %474 = vmatmul.mubr.bf16.gmra.mxu0 %v430
      %v475 = vpop.f32.mrf.mxu0
      %v476 = vadd.f32 %v357, %v475
      %v477 = vpop.f32.mrf.mxu0
      %v478 = vpop.f32.mrf.mxu0
      %v479 = vadd.f32 %v360, %v478
      %v480 = vpop.f32.mrf.mxu0
      %481 = vmatprep.mubr.bf16.mxu0 0
      %482 = vmatmul.mubr.bf16.gmra.mxu0 %v433
      %v483 = vpop.f32.mrf.mxu0
      %v484 = vadd.f32 %v365, %v483
      %v485 = vpop.f32.mrf.mxu0
      %v486 = vpop.f32.mrf.mxu0
      %v487 = vadd.f32 %v368, %v486
      %v488 = vpop.f32.mrf.mxu0
      %489 = vmatprep.mubr.bf16.mxu0 0
      %490 = vmatmul.mubr.bf16.gmra.mxu0 %v436
      %v491 = vpop.f32.mrf.mxu0
      %v492 = vadd.f32 %v373, %v491
      %v493 = vpop.f32.mrf.mxu0
      %v494 = vpop.f32.mrf.mxu0
      %v495 = vadd.f32 %v376, %v494
      %v496 = vpop.f32.mrf.mxu0
      %497 = vmatprep.mubr.bf16.mxu0 0
      %498 = vmatmul.mubr.bf16.gmra.mxu0 %v439
      %v499 = vpop.f32.mrf.mxu0
      %v500 = vadd.f32 %v381, %v499
      %v501 = vpop.f32.mrf.mxu0
      %v502 = vpop.f32.mrf.mxu0
      %v503 = vadd.f32 %v384, %v502
      %v504 = vpop.f32.mrf.mxu0
      %505 = vdwg.mxu0
      %v506 = vld [vmem:[%s207 + $0x8] sm:$0xf]
      %v507 = vld [vmem:[%s207 + $0xc] sm:$0xf]
      %v508 = vld [vmem:[%s207 + $0x10] sm:$0xf]
      %v509 = vld [vmem:[%s207 + $0x14] sm:$0xf]
      %v510 = vld [vmem:[%s207 + $0x18] sm:$0xf]
      %v511 = vld [vmem:[%s207 + $0x1c] sm:$0xf]
      %v512 = vld [vmem:[%s207 + $0x20] sm:$0xf]
      %v513 = vld [vmem:[%s207 + $0x24] sm:$0xf]
      %s514 = scalar_lea.vmem %s1, 96
      %v515 = vld [vmem:[%s514] sm:$0xf]
      %v516 = vld [vmem:[%s514 + $0x4] sm:$0xf]
      %v517 = vld [vmem:[%s514 + $0x8] sm:$0xf]
      %v518 = vld [vmem:[%s514 + $0xc] sm:$0xf]
      %v519 = vld [vmem:[%s514 + $0x10] sm:$0xf]
      %v520 = vld [vmem:[%s514 + $0x14] sm:$0xf]
      %v521 = vld [vmem:[%s514 + $0x18] sm:$0xf]
      %v522 = vld [vmem:[%s514 + $0x1c] sm:$0xf]
      %v523 = vld [vmem:[%s514 + $0x20] sm:$0xf]
      %v524 = vld [vmem:[%s514 + $0x24] sm:$0xf]
      %v525 = vld [vmem:[%s514 + $0x28] sm:$0xf]
      %v526 = vld [vmem:[%s514 + $0x2c] sm:$0xf]
      %v535 = vunpack.c.l.b16 %v506
      %v536 = vunpack.c.l.b16 %v507
      %v537 = vunpack.c.l.b16 %v508
      %v538 = vunpack.c.l.b16 %v509
      %v539 = vunpack.c.l.b16 %v510
      %v540 = vunpack.c.l.b16 %v511
      %v541 = vunpack.c.l.b16 %v512
      %v542 = vunpack.c.l.b16 %v513
      %v543 = vpack.c.b16 %v536, %v535
      %v544 = vpack.c.b16 %v538, %v537
      %v545 = vpack.c.b16 %v540, %v539
      %v546 = vpack.c.b16 %v542, %v541
      %v559 = vunpack.c.l.b16 %v515
      %v560 = vunpack.c.l.b16 %v516
      %v561 = vunpack.c.l.b16 %v517
      %v562 = vunpack.c.l.b16 %v518
      %v563 = vunpack.c.l.b16 %v519
      %v564 = vunpack.c.l.b16 %v520
      %v565 = vunpack.c.l.b16 %v521
      %v566 = vunpack.c.l.b16 %v522
      %v567 = vunpack.c.l.b16 %v523
      %v568 = vunpack.c.l.b16 %v524
      %v569 = vunpack.c.l.b16 %v525
      %v570 = vunpack.c.l.b16 %v526
      %v571 = vpack.c.b16 %v560, %v559
      %v572 = vpack.c.b16 %v562, %v561
      %v573 = vpack.c.b16 %v564, %v563
      %v574 = vpack.c.b16 %v566, %v565
      %v575 = vpack.c.b16 %v568, %v567
      %v576 = vpack.c.b16 %v570, %v569
      %v584 = vsel %vm309, %v543, 0
      %v587 = vsel %vm309, %v544, 0
      %v590 = vsel %vm309, %v545, 0
      %v593 = vsel %vm309, %v546, 0
      %595 = vmatprep.subr.bf16.mxu0 0
      %596 = vmatpush1.bf16.msra.mxu0 0
      %597 = vmatprep.subr.bf16.mxu0 0
      %598 = vmatpush1.bf16.msra.mxu0 0
      %599 = vmatprep.subr.bf16.mxu0 0
      %600 = vmatpush1.bf16.msra.mxu0 %v576
      %601 = vmatprep.subr.bf16.mxu0 0
      %602 = vmatpush1.bf16.msra.mxu0 %v575
      %603 = vmatprep.subr.bf16.mxu0 0
      %604 = vmatpush1.bf16.msra.mxu0 %v574
      %605 = vmatprep.subr.bf16.mxu0 0
      %606 = vmatpush1.bf16.msra.mxu0 %v573
      %607 = vmatprep.subr.bf16.mxu0 0
      %608 = vmatpush1.bf16.msra.mxu0 %v572
      %609 = vmatprep.subr.bf16.mxu0 0
      %610 = vmatpush1.bf16.msra.mxu0 %v571
      %611 = vmatprep.subr.bf16.mxu0 0
      %612 = vmatpush2.bf16.msra.mxu0 0
      %613 = vmatprep.subr.bf16.mxu0 0
      %614 = vmatpush2.bf16.msra.mxu0 0
      %615 = vmatprep.subr.bf16.mxu0 0
      %616 = vmatpush2.bf16.msra.mxu0 0
      %617 = vmatprep.subr.bf16.mxu0 0
      %618 = vmatpush2.bf16.msra.mxu0 0
      %619 = vmatprep.subr.bf16.mxu0 0
      %620 = vmatpush2.bf16.msra.mxu0 0
      %621 = vmatprep.subr.bf16.mxu0 0
      %622 = vmatpush2.bf16.msra.mxu0 0
      %623 = vmatprep.subr.bf16.mxu0 0
      %624 = vmatpush2.bf16.msra.mxu0 0
      %625 = vmatprep.subr.bf16.mxu0 0
      %626 = vmatpush2.bf16.msra.mxu0 0
      %627 = vmatprep.mubr.bf16.mxu0 0
      %628 = vmatmul.mubr.bf16.gmra.mxu0 %v584
      %v629 = vpop.f32.mrf.mxu0
      %v630 = vadd.f32 0.0, %v629
      %v631 = vpop.f32.mrf.mxu0
      %v632 = vpop.f32.mrf.mxu0
      %v633 = vadd.f32 0.0, %v632
      %v634 = vpop.f32.mrf.mxu0
      %635 = vmatprep.mubr.bf16.mxu0 0
      %636 = vmatmul.mubr.bf16.gmra.mxu0 %v587
      %v637 = vpop.f32.mrf.mxu0
      %v638 = vadd.f32 0.0, %v637
      %v639 = vpop.f32.mrf.mxu0
      %v640 = vpop.f32.mrf.mxu0
      %v641 = vadd.f32 0.0, %v640
      %v642 = vpop.f32.mrf.mxu0
      %643 = vmatprep.mubr.bf16.mxu0 0
      %644 = vmatmul.mubr.bf16.gmra.mxu0 %v590
      %v645 = vpop.f32.mrf.mxu0
      %v646 = vadd.f32 0.0, %v645
      %v647 = vpop.f32.mrf.mxu0
      %v648 = vpop.f32.mrf.mxu0
      %v649 = vadd.f32 0.0, %v648
      %v650 = vpop.f32.mrf.mxu0
      %651 = vmatprep.mubr.bf16.mxu0 0
      %652 = vmatmul.mubr.bf16.gmra.mxu0 %v593
      %v653 = vpop.f32.mrf.mxu0
      %v654 = vadd.f32 0.0, %v653
      %v655 = vpop.f32.mrf.mxu0
      %v656 = vpop.f32.mrf.mxu0
      %v657 = vadd.f32 0.0, %v656
      %v658 = vpop.f32.mrf.mxu0
      %659 = vdwg.mxu0
      %v660 = vadd.f32 %v476, %v630
      %v661 = vadd.f32 %v479, %v633
      %v662 = vadd.f32 %v484, %v638
      %v663 = vadd.f32 %v487, %v641
      %v664 = vadd.f32 %v492, %v646
      %v665 = vadd.f32 %v495, %v649
      %v666 = vadd.f32 %v500, %v654
      %v667 = vadd.f32 %v503, %v657
      %v668 = vld [vmem:[%s2] sm:$0x1]
      %v670 = vlaneseq
      %v671 = vshrl.u32 %v670, 7
      %v672 = vsub.s32 0, %v671
      %v673 = vrot.slane %v668, %v672
      %v675 = vadd.f32 %v660, %v673
      %v676 = vadd.f32 %v661, %v673
      %v677 = vadd.f32 %v662, %v673
      %v678 = vadd.f32 %v663, %v673
      %v679 = vadd.f32 %v664, %v673
      %v680 = vadd.f32 %v665, %v673
      %v681 = vadd.f32 %v666, %v673
      %v682 = vadd.f32 %v667, %v673
      %v683 = vld [vmem:[%s212] sm:$0xf]
      %v684 = vld [vmem:[%s212 + $0x4] sm:$0xf]
      %v685 = vld [vmem:[%s212 + $0x8] sm:$0xf]
      %v686 = vld [vmem:[%s212 + $0xc] sm:$0xf]
      %v687 = vld [vmem:[%s212 + $0x10] sm:$0xf]
      %v688 = vld [vmem:[%s212 + $0x14] sm:$0xf]
      %v689 = vld [vmem:[%s212 + $0x18] sm:$0xf]
      %v690 = vld [vmem:[%s212 + $0x1c] sm:$0xf]
      %v691 = vunpack.c.l.bf16 %v683
      %v692 = vunpack.c.l.bf16 %v684
      %v693 = vunpack.c.l.bf16 %v685
      %v694 = vunpack.c.l.bf16 %v686
      %v695 = vunpack.c.l.bf16 %v687
      %v696 = vunpack.c.l.bf16 %v688
      %v697 = vunpack.c.l.bf16 %v689
      %v698 = vunpack.c.l.bf16 %v690
      %v699 = vadd.f32 %v675, %v691
      %v700 = vadd.f32 %v676, %v692
      %v701 = vadd.f32 %v677, %v693
      %v702 = vadd.f32 %v678, %v694
      %v703 = vadd.f32 %v679, %v695
      %v704 = vadd.f32 %v680, %v696
      %v705 = vadd.f32 %v681, %v697
      %v706 = vadd.f32 %v682, %v698
      %v707 = vmax.f32 %v699, 0.0
      %v708 = vmax.f32 %v700, 0.0
      %v709 = vmax.f32 %v701, 0.0
      %v710 = vmax.f32 %v702, 0.0
      %v711 = vmax.f32 %v703, 0.0
      %v712 = vmax.f32 %v704, 0.0
      %v713 = vmax.f32 %v705, 0.0
      %v714 = vmax.f32 %v706, 0.0
      %v715 = vpack.c.bf16 %v708, %v707
      %v716 = vpack.c.bf16 %v710, %v709
      %v717 = vpack.c.bf16 %v712, %v711
      %v718 = vpack.c.bf16 %v714, %v713
      %v723 = vunpack.c.l.b16 %v715
      %v724 = vunpack.c.h.b16 %v715
      %v725 = vunpack.c.l.b16 %v716
      %v726 = vunpack.c.h.b16 %v716
      %v727 = vunpack.c.l.b16 %v717
      %v728 = vunpack.c.h.b16 %v717
      %v729 = vunpack.c.l.b16 %v718
      %v730 = vunpack.c.h.b16 %v718
      %v731 = vpack.c.b16 %v723, %v723
      %v732 = vpack.c.b16 %v724, %v724
      %v733 = vpack.c.b16 %v725, %v725
      %v734 = vpack.c.b16 %v726, %v726
      %v735 = vpack.c.b16 %v727, %v727
      %v736 = vpack.c.b16 %v728, %v728
      %v737 = vpack.c.b16 %v729, %v729
      %v738 = vpack.c.b16 %v730, %v730
      %vm747 = vcmask 257024
      %748 = vst.msk [vmem:[%s217] sm:$0xf] %vm747, %v731
      %749 = vst.msk [vmem:[%s217 + $0x4] sm:$0xf] %vm747, %v732
      %750 = vst.msk [vmem:[%s217 + $0x8] sm:$0xf] %vm747, %v733
      %751 = vst.msk [vmem:[%s217 + $0xc] sm:$0xf] %vm747, %v734
      %752 = vst.msk [vmem:[%s217 + $0x10] sm:$0xf] %vm747, %v735
      %753 = vst.msk [vmem:[%s217 + $0x14] sm:$0xf] %vm747, %v736
      %754 = vst.msk [vmem:[%s217 + $0x18] sm:$0xf] %vm747, %v737
      %755 = vst.msk [vmem:[%s217 + $0x1c] sm:$0xf] %vm747, %v738
      %p756 = scmp.lt.s32.totalorder %s15, 1
      %s757 = scalar_select %p756, %s15, 1
      %s758 = smul.addr %s757, 8
      %s759 = smul.addr %s758, 4
      %s760 = scalar_lea.vmem %s4, %s759
      // Predicated region
      $region37: #{_lambda_.30} parent=35 // pred_check
        %p761 = pneg %p127
      $region38: #{_lambda_.30} parent=35 // pred_check_branch
        %763 = sbr.rel (%p761) target = $region40
      $region39: #{_lambda_.30} parent=35 // pred_region
        _
      $region40: #{_lambda_.30} parent=35 // pred_fallthru
        _
    $region36: #{_lambda_.30} parent=5 // pred_fallthru
      _
    %p764 = scmp.le.s32.totalorder 2, %s10
    // Predicated region
    $region41: #{_lambda_.30} parent=5 // pred_check
      %p765 = pneg %p764
    $region42: #{_lambda_.30} parent=5 // pred_check_branch
      %767 = sbr.rel (%p765) target = $region44
    $region43: #{_lambda_.30} parent=5 // pred_region
      %s768 = ssub.s32 %s10, 2
      // Predicated region
      $region45: #{_lambda_.30} parent=43 // pred_check
        %p769 = pneg %p133
      $region46: #{_lambda_.30} parent=43 // pred_check_branch
        %771 = sbr.rel (%p769) target = $region48
      $region47: #{_lambda_.30} parent=43 // pred_region
        %p772 = scmp.lt.s32.totalorder %s16, 1
        %s773 = scalar_select %p772, %s16, 1
        %s774 = smul.addr %s773, 8
        %s775 = smul.addr %s774, 4
        %s776 = scalar_lea.vmem %s4, %s775
      $region48: #{_lambda_.30} parent=43 // pred_fallthru
        _
    $region44: #{_lambda_.30} parent=5 // pred_fallthru
      _
  $region6: #{_lambda_.30} parent=0 // loop_footer
    %s14 = sadd.s32 1, %s10
  $region7: #{_lambda_.30} parent=0 // loop_footer_branch
    %9 = sbr.rel target = $region3
  $region8: #{_lambda_.30} parent=0 // loop_exit
    _

// kernel: _lambda_.31
$region0: #{_lambda_.31}
  #allocation0 [shape = 'u32[]', space=smem, size = 0x4, offset = 0x4, fixed_abs, tag = 'smem constant byte address 0x4 - core index']
  #allocation1 [shape = 'u32[144,128]{1,0:T(1,128)}', space=vmem, size = 0x12000, scoped, tag = 'internal scratch']
  %s0 = inlined_call_operand.vmem [shape: bf16[2,80,96], index: 0, kind: input, shape index: {}]
  %s1 = inlined_call_operand.vmem [shape: bf16[3,96,32], index: 1, kind: input, shape index: {}]
  %s2 = inlined_call_operand.vmem [shape: f32[1,32], index: 2, kind: input, shape index: {}]
  %s3 = inlined_call_operand.vmem [shape: bf16[2,64,32], index: 3, kind: output, shape index: {}]
  %s4 = sld [smem:[#allocation0]]
  $region45: #{_lambda_.31} parent=0
    _
  %s6 = ssub.s32 1, %s4
  %s7 = scalar_select 0, %s6, %s4
  loop: start=0, step=1, limit=4
  $region2: #{_lambda_.31} parent=0 // loop_pre_header
    _
  $region3: #{_lambda_.31} parent=0 // loop_header
    %s9 = sphi 0, %s13
    %p10 = scmp.ge.s32.totalorder %s9, 4
    %s19 = sphi 0, %s21
    %s22 = sphi 0, %s19
    %s23 = sphi 0, %s22
    %s39 = sphi 0, %s23
    %s43 = sphi 0, %s43
    %s45 = sphi 0, %s43
    %s46 = sphi 0, %s45
    %s60 = sphi 0, %s46
    %s64 = sphi 0, %s64
    %s66 = sphi 0, %s64
    %s67 = sphi 0, %s66
    %s81 = sphi 0, %s67
    %s87 = sphi 0, %s89
    %s90 = sphi 0, %s87
    %s91 = sphi 0, %s90
    %s107 = sphi 0, %s91
  $region4: #{_lambda_.31} parent=0 // loop_header_branch
    %12 = sbr.rel (%p10) target = $region8
  $region5: #{_lambda_.31} parent=0 // loop_body
    %s14 = ssub.s32 %s9, 1
    %s15 = ssub.s32 %s9, 2
    %s16 = sadd.s32 %s9, 1
    %s17 = ssub.s32 %s9, %s16
    %p18 = scmp.eq.s32.totalorder %s17, 0
    %s20 = sadd.s32 %s19, 1
    %s21 = scalar_select %p18, %s19, %s20
    %p24 = pneg %p18
    %p25 = scmp.eq.s32.totalorder %s9, 1
    %p26 = por %p24, %p25
    %p27 = scmp.ne.s32.totalorder %s19, %s22
    %p28 = scmp.eq.s32.totalorder %s9, 0
    %p29 = por %p27, %p28
    %p30 = scmp.ne.s32.totalorder %s19, %s22
    %p31 = scmp.eq.s32.totalorder %s14, 1
    %p32 = por %p30, %p31
    %p33 = scmp.ne.s32.totalorder %s22, %s23
    %p34 = scmp.eq.s32.totalorder %s14, 0
    %p35 = por %p33, %p34
    %p36 = scmp.ne.s32.totalorder %s22, %s23
    %p37 = scmp.eq.s32.totalorder %s15, 1
    %p38 = por %p36, %p37
    %p40 = scmp.ne.s32.totalorder %s23, %s39
    %p41 = scmp.eq.s32.totalorder %s15, 0
    %p42 = por %p40, %p41
    %s44 = sadd.s32 %s43, 1
    %p47 = scmp.eq.s32.totalorder %s9, 1
    %p48 = scmp.ne.s32.totalorder %s43, %s45
    %p49 = scmp.eq.s32.totalorder %s9, 0
    %p50 = por %p48, %p49
    %p51 = scmp.ne.s32.totalorder %s43, %s45
    %p52 = scmp.eq.s32.totalorder %s14, 1
    %p53 = por %p51, %p52
    %p54 = scmp.ne.s32.totalorder %s45, %s46
    %p55 = scmp.eq.s32.totalorder %s14, 0
    %p56 = por %p54, %p55
    %p57 = scmp.ne.s32.totalorder %s45, %s46
    %p58 = scmp.eq.s32.totalorder %s15, 1
    %p59 = por %p57, %p58
    %p61 = scmp.ne.s32.totalorder %s46, %s60
    %p62 = scmp.eq.s32.totalorder %s15, 0
    %p63 = por %p61, %p62
    %s65 = sadd.s32 %s64, 1
    %p68 = scmp.eq.s32.totalorder %s9, 1
    %p69 = scmp.ne.s32.totalorder %s64, %s66
    %p70 = scmp.eq.s32.totalorder %s9, 0
    %p71 = por %p69, %p70
    %p72 = scmp.ne.s32.totalorder %s64, %s66
    %p73 = scmp.eq.s32.totalorder %s14, 1
    %p74 = por %p72, %p73
    %p75 = scmp.ne.s32.totalorder %s66, %s67
    %p76 = scmp.eq.s32.totalorder %s14, 0
    %p77 = por %p75, %p76
    %p78 = scmp.ne.s32.totalorder %s66, %s67
    %p79 = scmp.eq.s32.totalorder %s15, 1
    %p80 = por %p78, %p79
    %p82 = scmp.ne.s32.totalorder %s67, %s81
    %p83 = scmp.eq.s32.totalorder %s15, 0
    %p84 = por %p82, %p83
    %s85 = ssub.s32 %s9, %s16
    %p86 = scmp.eq.s32.totalorder %s85, 0
    %s88 = sadd.s32 %s87, 1
    %s89 = scalar_select %p86, %s87, %s88
    %p92 = pneg %p86
    %p93 = scmp.eq.s32.totalorder %s9, 1
    %p94 = por %p92, %p93
    %p95 = scmp.ne.s32.totalorder %s87, %s90
    %p96 = scmp.eq.s32.totalorder %s9, 0
    %p97 = por %p95, %p96
    %p98 = scmp.ne.s32.totalorder %s87, %s90
    %p99 = scmp.eq.s32.totalorder %s14, 1
    %p100 = por %p98, %p99
    %p101 = scmp.ne.s32.totalorder %s90, %s91
    %p102 = scmp.eq.s32.totalorder %s14, 0
    %p103 = por %p101, %p102
    %p104 = scmp.ne.s32.totalorder %s90, %s91
    %p105 = scmp.eq.s32.totalorder %s15, 1
    %p106 = por %p104, %p105
    %p108 = scmp.ne.s32.totalorder %s91, %s107
    %p109 = scmp.eq.s32.totalorder %s15, 0
    %p110 = por %p108, %p109
    %p111 = scmp.le.s32.totalorder 1, %s9
    %p112 = scmp.lt.s32.totalorder %s9, 3
    %p113 = pnand %p111, %p112
    %p114 = pneg %p113
    // Predicated region
    $region9: #{_lambda_.31} parent=5 // pred_check
      _
    $region10: #{_lambda_.31} parent=5 // pred_check_branch
      %116 = sbr.rel (%p113) target = $region12
    $region11: #{_lambda_.31} parent=5 // pred_region
      %s117 = ssub.s32 %s9, 1
      // Predicated region
      $region13: #{_lambda_.31} parent=11 // pred_check
        %p118 = pneg %p56
      $region14: #{_lambda_.31} parent=11 // pred_check_branch
        %120 = sbr.rel (%p118) target = $region16
      $region15: #{_lambda_.31} parent=11 // pred_region
        _
      $region16: #{_lambda_.31} parent=11 // pred_fallthru
        _
      // Predicated region
      $region17: #{_lambda_.31} parent=11 // pred_check
        %p121 = pneg %p77
      $region18: #{_lambda_.31} parent=11 // pred_check_branch
        %123 = sbr.rel (%p121) target = $region20
      $region19: #{_lambda_.31} parent=11 // pred_region
        _
      $region20: #{_lambda_.31} parent=11 // pred_fallthru
        _
    $region12: #{_lambda_.31} parent=5 // pred_fallthru
      _
    %p124 = scmp.lt.s32.totalorder %s9, 2
    // Predicated region
    $region21: #{_lambda_.31} parent=5 // pred_check
      %p125 = pneg %p124
    $region22: #{_lambda_.31} parent=5 // pred_check_branch
      %127 = sbr.rel (%p125) target = $region24
    $region23: #{_lambda_.31} parent=5 // pred_region
      // Predicated region
      $region25: #{_lambda_.31} parent=23 // pred_check
        %p128 = pneg %p29
      $region26: #{_lambda_.31} parent=23 // pred_check_branch
        %130 = sbr.rel (%p128) target = $region28
      $region27: #{_lambda_.31} parent=23 // pred_region
        %p131 = scmp.lt.s32.totalorder %s9, 1
        %s132 = scalar_select %p131, %s9, 1
        %s133 = smul.addr %s132, 10
        %s134 = smul.addr %s133, 4
        %s135 = scalar_lea.vmem %s0, %s134
      $region28: #{_lambda_.31} parent=23 // pred_fallthru
        _
    $region24: #{_lambda_.31} parent=5 // pred_fallthru
      _
    %p136 = scmp.le.s32.totalorder 1, %s9
    %p137 = scmp.lt.s32.totalorder %s9, 3
    %p138 = pnand %p136, %p137
    %p139 = pneg %p138
    // Predicated region
    $region29: #{_lambda_.31} parent=5 // pred_check
      _
    $region30: #{_lambda_.31} parent=5 // pred_check_branch
      %141 = sbr.rel (%p138) target = $region32
    $region31: #{_lambda_.31} parent=5 // pred_region
      %s142 = ssub.s32 %s9, 1
      %p143 = scmp.lt.s32.totalorder %s14, 1
      %s144 = scalar_select %p143, %s14, 1
      %s145 = smul.addr %s144, 10
      %s146 = smul.addr %s145, 4
      %s147 = scalar_lea.vmem %s0, %s146
      %p148 = pneg %p35
      %p149 = pneg %p32
      %p150 = pneg %p56
      %p151 = pneg %p53
      %p152 = pneg %p77
      %p153 = pneg %p74
      %p154 = pneg %p103
      %p155 = pneg %p100
      %p156 = scmp.lt.s32.totalorder %s14, 1
      %s157 = scalar_select %p156, %s14, 1
      %s158 = smul.addr %s157, 8
      %s159 = smul.addr %s158, 4
      %s160 = scalar_lea.vmem %s3, %s159
      %p161 = scmp.lt.s32.totalorder %s14, 1
      %s162 = scalar_select %p161, %s14, 1
      %s163 = smul.addr %s162, 10
      %s164 = smul.addr %s163, 4
      %s165 = scalar_lea.vmem %s0, %s164
      %p166 = scmp.lt.s32.totalorder %s14, 1
      %s167 = scalar_select %p166, %s14, 1
      %s168 = smul.addr %s167, 8
      %s169 = smul.addr %s168, 4
      %s170 = scalar_lea.vmem %s3, %s169
      %v172 = vld [vmem:[%s165] sm:$0xf]
      %v173 = vld [vmem:[%s165 + $0x4] sm:$0xf]
      %v174 = vld [vmem:[%s165 + $0x8] sm:$0xf]
      %v175 = vld [vmem:[%s165 + $0xc] sm:$0xf]
      %v176 = vld [vmem:[%s165 + $0x10] sm:$0xf]
      %v177 = vld [vmem:[%s165 + $0x14] sm:$0xf]
      %v178 = vld [vmem:[%s165 + $0x18] sm:$0xf]
      %v179 = vld [vmem:[%s165 + $0x1c] sm:$0xf]
      %v180 = vld [vmem:[%s1] sm:$0xf]
      %v181 = vld [vmem:[%s1 + $0x4] sm:$0xf]
      %v182 = vld [vmem:[%s1 + $0x8] sm:$0xf]
      %v183 = vld [vmem:[%s1 + $0xc] sm:$0xf]
      %v184 = vld [vmem:[%s1 + $0x10] sm:$0xf]
      %v185 = vld [vmem:[%s1 + $0x14] sm:$0xf]
      %v186 = vld [vmem:[%s1 + $0x18] sm:$0xf]
      %v187 = vld [vmem:[%s1 + $0x1c] sm:$0xf]
      %v188 = vld [vmem:[%s1 + $0x20] sm:$0xf]
      %v189 = vld [vmem:[%s1 + $0x24] sm:$0xf]
      %v190 = vld [vmem:[%s1 + $0x28] sm:$0xf]
      %v191 = vld [vmem:[%s1 + $0x2c] sm:$0xf]
      %v192 = vld [vmem:[%s165 + $0x20] sm:$0xf]
      %s193 = scalar_lea.vmem %s1, 48
      %v194 = vld [vmem:[%s193] sm:$0xf]
      %v195 = vld [vmem:[%s193 + $0x4] sm:$0xf]
      %v196 = vld [vmem:[%s193 + $0x8] sm:$0xf]
      %v197 = vld [vmem:[%s193 + $0xc] sm:$0xf]
      %v198 = vld [vmem:[%s193 + $0x10] sm:$0xf]
      %v199 = vld [vmem:[%s193 + $0x14] sm:$0xf]
      %v200 = vld [vmem:[%s193 + $0x18] sm:$0xf]
      %v201 = vld [vmem:[%s193 + $0x1c] sm:$0xf]
      %v202 = vld [vmem:[%s193 + $0x20] sm:$0xf]
      %v203 = vld [vmem:[%s193 + $0x24] sm:$0xf]
      %v204 = vld [vmem:[%s193 + $0x28] sm:$0xf]
      %v205 = vld [vmem:[%s193 + $0x2c] sm:$0xf]
      %v214 = vunpack.c.l.b16 %v173
      %v215 = vunpack.c.l.b16 %v174
      %v216 = vunpack.c.l.b16 %v175
      %v217 = vunpack.c.l.b16 %v176
      %v218 = vunpack.c.l.b16 %v177
      %v219 = vunpack.c.l.b16 %v178
      %v220 = vunpack.c.l.b16 %v179
      %v221 = vunpack.c.l.b16 %v192
      %v222 = vpack.c.b16 %v215, %v214
      %v223 = vpack.c.b16 %v217, %v216
      %v224 = vpack.c.b16 %v219, %v218
      %v225 = vpack.c.b16 %v221, %v220
      %v238 = vunpack.c.l.b16 %v194
      %v239 = vunpack.c.l.b16 %v195
      %v240 = vunpack.c.l.b16 %v196
      %v241 = vunpack.c.l.b16 %v197
      %v242 = vunpack.c.l.b16 %v198
      %v243 = vunpack.c.l.b16 %v199
      %v244 = vunpack.c.l.b16 %v200
      %v245 = vunpack.c.l.b16 %v201
      %v246 = vunpack.c.l.b16 %v202
      %v247 = vunpack.c.l.b16 %v203
      %v248 = vunpack.c.l.b16 %v204
      %v249 = vunpack.c.l.b16 %v205
      %v250 = vpack.c.b16 %v239, %v238
      %v251 = vpack.c.b16 %v241, %v240
      %v252 = vpack.c.b16 %v243, %v242
      %v253 = vpack.c.b16 %v245, %v244
      %v254 = vpack.c.b16 %v247, %v246
      %v255 = vpack.c.b16 %v249, %v248
      %vm262 = vcmask 785408
      %v264 = vsel %vm262, %v222, 0
      %v267 = vsel %vm262, %v223, 0
      %v270 = vsel %vm262, %v224, 0
      %v273 = vsel %vm262, %v225, 0
      %275 = vmatprep.subr.bf16.mxu0 0
      %276 = vmatpush1.bf16.msra.mxu0 0
      %277 = vmatprep.subr.bf16.mxu0 0
      %278 = vmatpush1.bf16.msra.mxu0 0
      %279 = vmatprep.subr.bf16.mxu0 0
      %280 = vmatpush1.bf16.msra.mxu0 %v255
      %281 = vmatprep.subr.bf16.mxu0 0
      %282 = vmatpush1.bf16.msra.mxu0 %v254
      %283 = vmatprep.subr.bf16.mxu0 0
      %284 = vmatpush1.bf16.msra.mxu0 %v253
      %285 = vmatprep.subr.bf16.mxu0 0
      %286 = vmatpush1.bf16.msra.mxu0 %v252
      %287 = vmatprep.subr.bf16.mxu0 0
      %288 = vmatpush1.bf16.msra.mxu0 %v251
      %289 = vmatprep.subr.bf16.mxu0 0
      %290 = vmatpush1.bf16.msra.mxu0 %v250
      %291 = vmatprep.subr.bf16.mxu0 0
      %292 = vmatpush2.bf16.msra.mxu0 0
      %293 = vmatprep.subr.bf16.mxu0 0
      %294 = vmatpush2.bf16.msra.mxu0 0
      %295 = vmatprep.subr.bf16.mxu0 0
      %296 = vmatpush2.bf16.msra.mxu0 0
      %297 = vmatprep.subr.bf16.mxu0 0
      %298 = vmatpush2.bf16.msra.mxu0 0
      %299 = vmatprep.subr.bf16.mxu0 0
      %300 = vmatpush2.bf16.msra.mxu0 0
      %301 = vmatprep.subr.bf16.mxu0 0
      %302 = vmatpush2.bf16.msra.mxu0 0
      %303 = vmatprep.subr.bf16.mxu0 0
      %304 = vmatpush2.bf16.msra.mxu0 0
      %305 = vmatprep.subr.bf16.mxu0 0
      %306 = vmatpush2.bf16.msra.mxu0 0
      %307 = vmatprep.mubr.bf16.mxu0 0
      %308 = vmatmul.mubr.bf16.gmra.mxu0 %v264
      %v309 = vpop.f32.mrf.mxu0
      %v310 = vadd.f32 0.0, %v309
      %v311 = vpop.f32.mrf.mxu0
      %v312 = vpop.f32.mrf.mxu0
      %v313 = vadd.f32 0.0, %v312
      %v314 = vpop.f32.mrf.mxu0
      %315 = vmatprep.mubr.bf16.mxu0 0
      %316 = vmatmul.mubr.bf16.gmra.mxu0 %v267
      %v317 = vpop.f32.mrf.mxu0
      %v318 = vadd.f32 0.0, %v317
      %v319 = vpop.f32.mrf.mxu0
      %v320 = vpop.f32.mrf.mxu0
      %v321 = vadd.f32 0.0, %v320
      %v322 = vpop.f32.mrf.mxu0
      %323 = vmatprep.mubr.bf16.mxu0 0
      %324 = vmatmul.mubr.bf16.gmra.mxu0 %v270
      %v325 = vpop.f32.mrf.mxu0
      %v326 = vadd.f32 0.0, %v325
      %v327 = vpop.f32.mrf.mxu0
      %v328 = vpop.f32.mrf.mxu0
      %v329 = vadd.f32 0.0, %v328
      %v330 = vpop.f32.mrf.mxu0
      %331 = vmatprep.mubr.bf16.mxu0 0
      %332 = vmatmul.mubr.bf16.gmra.mxu0 %v273
      %v333 = vpop.f32.mrf.mxu0
      %v334 = vadd.f32 0.0, %v333
      %v335 = vpop.f32.mrf.mxu0
      %v336 = vpop.f32.mrf.mxu0
      %v337 = vadd.f32 0.0, %v336
      %v338 = vpop.f32.mrf.mxu0
      %339 = vdwg.mxu0
      %v341 = vunpack.c.l.b16 %v172
      %v342 = vpack.c.b16 %v214, %v341
      %v343 = vpack.c.b16 %v216, %v215
      %v344 = vpack.c.b16 %v218, %v217
      %v345 = vpack.c.b16 %v220, %v219
      %v358 = vunpack.c.l.b16 %v180
      %v359 = vunpack.c.l.b16 %v181
      %v360 = vunpack.c.l.b16 %v182
      %v361 = vunpack.c.l.b16 %v183
      %v362 = vunpack.c.l.b16 %v184
      %v363 = vunpack.c.l.b16 %v185
      %v364 = vunpack.c.l.b16 %v186
      %v365 = vunpack.c.l.b16 %v187
      %v366 = vunpack.c.l.b16 %v188
      %v367 = vunpack.c.l.b16 %v189
      %v368 = vunpack.c.l.b16 %v190
      %v369 = vunpack.c.l.b16 %v191
      %v370 = vpack.c.b16 %v359, %v358
      %v371 = vpack.c.b16 %v361, %v360
      %v372 = vpack.c.b16 %v363, %v362
      %v373 = vpack.c.b16 %v365, %v364
      %v374 = vpack.c.b16 %v367, %v366
      %v375 = vpack.c.b16 %v369, %v368
      %v383 = vsel %vm262, %v342, 0
      %v386 = vsel %vm262, %v343, 0
      %v389 = vsel %vm262, %v344, 0
      %v392 = vsel %vm262, %v345, 0
      %394 = vmatprep.subr.bf16.mxu0 0
      %395 = vmatpush1.bf16.msra.mxu0 0
      %396 = vmatprep.subr.bf16.mxu0 0
      %397 = vmatpush1.bf16.msra.mxu0 0
      %398 = vmatprep.subr.bf16.mxu0 0
      %399 = vmatpush1.bf16.msra.mxu0 %v375
      %400 = vmatprep.subr.bf16.mxu0 0
      %401 = vmatpush1.bf16.msra.mxu0 %v374
      %402 = vmatprep.subr.bf16.mxu0 0
      %403 = vmatpush1.bf16.msra.mxu0 %v373
      %404 = vmatprep.subr.bf16.mxu0 0
      %405 = vmatpush1.bf16.msra.mxu0 %v372
      %406 = vmatprep.subr.bf16.mxu0 0
      %407 = vmatpush1.bf16.msra.mxu0 %v371
      %408 = vmatprep.subr.bf16.mxu0 0
      %409 = vmatpush1.bf16.msra.mxu0 %v370
      %410 = vmatprep.subr.bf16.mxu0 0
      %411 = vmatpush2.bf16.msra.mxu0 0
      %412 = vmatprep.subr.bf16.mxu0 0
      %413 = vmatpush2.bf16.msra.mxu0 0
      %414 = vmatprep.subr.bf16.mxu0 0
      %415 = vmatpush2.bf16.msra.mxu0 0
      %416 = vmatprep.subr.bf16.mxu0 0
      %417 = vmatpush2.bf16.msra.mxu0 0
      %418 = vmatprep.subr.bf16.mxu0 0
      %419 = vmatpush2.bf16.msra.mxu0 0
      %420 = vmatprep.subr.bf16.mxu0 0
      %421 = vmatpush2.bf16.msra.mxu0 0
      %422 = vmatprep.subr.bf16.mxu0 0
      %423 = vmatpush2.bf16.msra.mxu0 0
      %424 = vmatprep.subr.bf16.mxu0 0
      %425 = vmatpush2.bf16.msra.mxu0 0
      %426 = vmatprep.mubr.bf16.mxu0 0
      %427 = vmatmul.mubr.bf16.gmra.mxu0 %v383
      %v428 = vpop.f32.mrf.mxu0
      %v429 = vadd.f32 %v310, %v428
      %v430 = vpop.f32.mrf.mxu0
      %v431 = vpop.f32.mrf.mxu0
      %v432 = vadd.f32 %v313, %v431
      %v433 = vpop.f32.mrf.mxu0
      %434 = vmatprep.mubr.bf16.mxu0 0
      %435 = vmatmul.mubr.bf16.gmra.mxu0 %v386
      %v436 = vpop.f32.mrf.mxu0
      %v437 = vadd.f32 %v318, %v436
      %v438 = vpop.f32.mrf.mxu0
      %v439 = vpop.f32.mrf.mxu0
      %v440 = vadd.f32 %v321, %v439
      %v441 = vpop.f32.mrf.mxu0
      %442 = vmatprep.mubr.bf16.mxu0 0
      %443 = vmatmul.mubr.bf16.gmra.mxu0 %v389
      %v444 = vpop.f32.mrf.mxu0
      %v445 = vadd.f32 %v326, %v444
      %v446 = vpop.f32.mrf.mxu0
      %v447 = vpop.f32.mrf.mxu0
      %v448 = vadd.f32 %v329, %v447
      %v449 = vpop.f32.mrf.mxu0
      %450 = vmatprep.mubr.bf16.mxu0 0
      %451 = vmatmul.mubr.bf16.gmra.mxu0 %v392
      %v452 = vpop.f32.mrf.mxu0
      %v453 = vadd.f32 %v334, %v452
      %v454 = vpop.f32.mrf.mxu0
      %v455 = vpop.f32.mrf.mxu0
      %v456 = vadd.f32 %v337, %v455
      %v457 = vpop.f32.mrf.mxu0
      %458 = vdwg.mxu0
      %v459 = vld [vmem:[%s165 + $0x8] sm:$0xf]
      %v460 = vld [vmem:[%s165 + $0xc] sm:$0xf]
      %v461 = vld [vmem:[%s165 + $0x10] sm:$0xf]
      %v462 = vld [vmem:[%s165 + $0x14] sm:$0xf]
      %v463 = vld [vmem:[%s165 + $0x18] sm:$0xf]
      %v464 = vld [vmem:[%s165 + $0x1c] sm:$0xf]
      %v465 = vld [vmem:[%s165 + $0x20] sm:$0xf]
      %v466 = vld [vmem:[%s165 + $0x24] sm:$0xf]
      %s467 = scalar_lea.vmem %s1, 96
      %v468 = vld [vmem:[%s467] sm:$0xf]
      %v469 = vld [vmem:[%s467 + $0x4] sm:$0xf]
      %v470 = vld [vmem:[%s467 + $0x8] sm:$0xf]
      %v471 = vld [vmem:[%s467 + $0xc] sm:$0xf]
      %v472 = vld [vmem:[%s467 + $0x10] sm:$0xf]
      %v473 = vld [vmem:[%s467 + $0x14] sm:$0xf]
      %v474 = vld [vmem:[%s467 + $0x18] sm:$0xf]
      %v475 = vld [vmem:[%s467 + $0x1c] sm:$0xf]
      %v476 = vld [vmem:[%s467 + $0x20] sm:$0xf]
      %v477 = vld [vmem:[%s467 + $0x24] sm:$0xf]
      %v478 = vld [vmem:[%s467 + $0x28] sm:$0xf]
      %v479 = vld [vmem:[%s467 + $0x2c] sm:$0xf]
      %v488 = vunpack.c.l.b16 %v459
      %v489 = vunpack.c.l.b16 %v460
      %v490 = vunpack.c.l.b16 %v461
      %v491 = vunpack.c.l.b16 %v462
      %v492 = vunpack.c.l.b16 %v463
      %v493 = vunpack.c.l.b16 %v464
      %v494 = vunpack.c.l.b16 %v465
      %v495 = vunpack.c.l.b16 %v466
      %v496 = vpack.c.b16 %v489, %v488
      %v497 = vpack.c.b16 %v491, %v490
      %v498 = vpack.c.b16 %v493, %v492
      %v499 = vpack.c.b16 %v495, %v494
      %v512 = vunpack.c.l.b16 %v468
      %v513 = vunpack.c.l.b16 %v469
      %v514 = vunpack.c.l.b16 %v470
      %v515 = vunpack.c.l.b16 %v471
      %v516 = vunpack.c.l.b16 %v472
      %v517 = vunpack.c.l.b16 %v473
      %v518 = vunpack.c.l.b16 %v474
      %v519 = vunpack.c.l.b16 %v475
      %v520 = vunpack.c.l.b16 %v476
      %v521 = vunpack.c.l.b16 %v477
      %v522 = vunpack.c.l.b16 %v478
      %v523 = vunpack.c.l.b16 %v479
      %v524 = vpack.c.b16 %v513, %v512
      %v525 = vpack.c.b16 %v515, %v514
      %v526 = vpack.c.b16 %v517, %v516
      %v527 = vpack.c.b16 %v519, %v518
      %v528 = vpack.c.b16 %v521, %v520
      %v529 = vpack.c.b16 %v523, %v522
      %v537 = vsel %vm262, %v496, 0
      %v540 = vsel %vm262, %v497, 0
      %v543 = vsel %vm262, %v498, 0
      %v546 = vsel %vm262, %v499, 0
      %548 = vmatprep.subr.bf16.mxu0 0
      %549 = vmatpush1.bf16.msra.mxu0 0
      %550 = vmatprep.subr.bf16.mxu0 0
      %551 = vmatpush1.bf16.msra.mxu0 0
      %552 = vmatprep.subr.bf16.mxu0 0
      %553 = vmatpush1.bf16.msra.mxu0 %v529
      %554 = vmatprep.subr.bf16.mxu0 0
      %555 = vmatpush1.bf16.msra.mxu0 %v528
      %556 = vmatprep.subr.bf16.mxu0 0
      %557 = vmatpush1.bf16.msra.mxu0 %v527
      %558 = vmatprep.subr.bf16.mxu0 0
      %559 = vmatpush1.bf16.msra.mxu0 %v526
      %560 = vmatprep.subr.bf16.mxu0 0
      %561 = vmatpush1.bf16.msra.mxu0 %v525
      %562 = vmatprep.subr.bf16.mxu0 0
      %563 = vmatpush1.bf16.msra.mxu0 %v524
      %564 = vmatprep.subr.bf16.mxu0 0
      %565 = vmatpush2.bf16.msra.mxu0 0
      %566 = vmatprep.subr.bf16.mxu0 0
      %567 = vmatpush2.bf16.msra.mxu0 0
      %568 = vmatprep.subr.bf16.mxu0 0
      %569 = vmatpush2.bf16.msra.mxu0 0
      %570 = vmatprep.subr.bf16.mxu0 0
      %571 = vmatpush2.bf16.msra.mxu0 0
      %572 = vmatprep.subr.bf16.mxu0 0
      %573 = vmatpush2.bf16.msra.mxu0 0
      %574 = vmatprep.subr.bf16.mxu0 0
      %575 = vmatpush2.bf16.msra.mxu0 0
      %576 = vmatprep.subr.bf16.mxu0 0
      %577 = vmatpush2.bf16.msra.mxu0 0
      %578 = vmatprep.subr.bf16.mxu0 0
      %579 = vmatpush2.bf16.msra.mxu0 0
      %580 = vmatprep.mubr.bf16.mxu0 0
      %581 = vmatmul.mubr.bf16.gmra.mxu0 %v537
      %v582 = vpop.f32.mrf.mxu0
      %v583 = vadd.f32 0.0, %v582
      %v584 = vpop.f32.mrf.mxu0
      %v585 = vpop.f32.mrf.mxu0
      %v586 = vadd.f32 0.0, %v585
      %v587 = vpop.f32.mrf.mxu0
      %588 = vmatprep.mubr.bf16.mxu0 0
      %589 = vmatmul.mubr.bf16.gmra.mxu0 %v540
      %v590 = vpop.f32.mrf.mxu0
      %v591 = vadd.f32 0.0, %v590
      %v592 = vpop.f32.mrf.mxu0
      %v593 = vpop.f32.mrf.mxu0
      %v594 = vadd.f32 0.0, %v593
      %v595 = vpop.f32.mrf.mxu0
      %596 = vmatprep.mubr.bf16.mxu0 0
      %597 = vmatmul.mubr.bf16.gmra.mxu0 %v543
      %v598 = vpop.f32.mrf.mxu0
      %v599 = vadd.f32 0.0, %v598
      %v600 = vpop.f32.mrf.mxu0
      %v601 = vpop.f32.mrf.mxu0
      %v602 = vadd.f32 0.0, %v601
      %v603 = vpop.f32.mrf.mxu0
      %604 = vmatprep.mubr.bf16.mxu0 0
      %605 = vmatmul.mubr.bf16.gmra.mxu0 %v546
      %v606 = vpop.f32.mrf.mxu0
      %v607 = vadd.f32 0.0, %v606
      %v608 = vpop.f32.mrf.mxu0
      %v609 = vpop.f32.mrf.mxu0
      %v610 = vadd.f32 0.0, %v609
      %v611 = vpop.f32.mrf.mxu0
      %612 = vdwg.mxu0
      %v613 = vadd.f32 %v429, %v583
      %v614 = vadd.f32 %v432, %v586
      %v615 = vadd.f32 %v437, %v591
      %v616 = vadd.f32 %v440, %v594
      %v617 = vadd.f32 %v445, %v599
      %v618 = vadd.f32 %v448, %v602
      %v619 = vadd.f32 %v453, %v607
      %v620 = vadd.f32 %v456, %v610
      %v621 = vld [vmem:[%s2] sm:$0x1]
      %v623 = vlaneseq
      %v624 = vshrl.u32 %v623, 7
      %v625 = vsub.s32 0, %v624
      %v626 = vrot.slane %v621, %v625
      %v628 = vadd.f32 %v613, %v626
      %v629 = vadd.f32 %v614, %v626
      %v630 = vadd.f32 %v615, %v626
      %v631 = vadd.f32 %v616, %v626
      %v632 = vadd.f32 %v617, %v626
      %v633 = vadd.f32 %v618, %v626
      %v634 = vadd.f32 %v619, %v626
      %v635 = vadd.f32 %v620, %v626
      %v636 = vmax.f32 %v628, 0.0
      %v637 = vmax.f32 %v629, 0.0
      %v638 = vmax.f32 %v630, 0.0
      %v639 = vmax.f32 %v631, 0.0
      %v640 = vmax.f32 %v632, 0.0
      %v641 = vmax.f32 %v633, 0.0
      %v642 = vmax.f32 %v634, 0.0
      %v643 = vmax.f32 %v635, 0.0
      %v644 = vpack.c.bf16 %v637, %v636
      %v645 = vpack.c.bf16 %v639, %v638
      %v646 = vpack.c.bf16 %v641, %v640
      %v647 = vpack.c.bf16 %v643, %v642
      %v652 = vunpack.c.l.b16 %v644
      %v653 = vunpack.c.h.b16 %v644
      %v654 = vunpack.c.l.b16 %v645
      %v655 = vunpack.c.h.b16 %v645
      %v656 = vunpack.c.l.b16 %v646
      %v657 = vunpack.c.h.b16 %v646
      %v658 = vunpack.c.l.b16 %v647
      %v659 = vunpack.c.h.b16 %v647
      %v660 = vpack.c.b16 %v652, %v652
      %v661 = vpack.c.b16 %v653, %v653
      %v662 = vpack.c.b16 %v654, %v654
      %v663 = vpack.c.b16 %v655, %v655
      %v664 = vpack.c.b16 %v656, %v656
      %v665 = vpack.c.b16 %v657, %v657
      %v666 = vpack.c.b16 %v658, %v658
      %v667 = vpack.c.b16 %v659, %v659
      %vm676 = vcmask 257024
      %677 = vst.msk [vmem:[%s170] sm:$0xf] %vm676, %v660
      %678 = vst.msk [vmem:[%s170 + $0x4] sm:$0xf] %vm676, %v661
      %679 = vst.msk [vmem:[%s170 + $0x8] sm:$0xf] %vm676, %v662
      %680 = vst.msk [vmem:[%s170 + $0xc] sm:$0xf] %vm676, %v663
      %681 = vst.msk [vmem:[%s170 + $0x10] sm:$0xf] %vm676, %v664
      %682 = vst.msk [vmem:[%s170 + $0x14] sm:$0xf] %vm676, %v665
      %683 = vst.msk [vmem:[%s170 + $0x18] sm:$0xf] %vm676, %v666
      %684 = vst.msk [vmem:[%s170 + $0x1c] sm:$0xf] %vm676, %v667
      %p685 = scmp.lt.s32.totalorder %s14, 1
      %s686 = scalar_select %p685, %s14, 1
      %s687 = smul.addr %s686, 8
      %s688 = smul.addr %s687, 4
      %s689 = scalar_lea.vmem %s3, %s688
      // Predicated region
      $region33: #{_lambda_.31} parent=31 // pred_check
        %p690 = pneg %p100
      $region34: #{_lambda_.31} parent=31 // pred_check_branch
        %692 = sbr.rel (%p690) target = $region36
      $region35: #{_lambda_.31} parent=31 // pred_region
        _
      $region36: #{_lambda_.31} parent=31 // pred_fallthru
        _
    $region32: #{_lambda_.31} parent=5 // pred_fallthru
      _
    %p693 = scmp.le.s32.totalorder 2, %s9
    // Predicated region
    $region37: #{_lambda_.31} parent=5 // pred_check
      %p694 = pneg %p693
    $region38: #{_lambda_.31} parent=5 // pred_check_branch
      %696 = sbr.rel (%p694) target = $region40
    $region39: #{_lambda_.31} parent=5 // pred_region
      %s697 = ssub.s32 %s9, 2
      // Predicated region
      $region41: #{_lambda_.31} parent=39 // pred_check
        %p698 = pneg %p106
      $region42: #{_lambda_.31} parent=39 // pred_check_branch
        %700 = sbr.rel (%p698) target = $region44
      $region43: #{_lambda_.31} parent=39 // pred_region
        %p701 = scmp.lt.s32.totalorder %s15, 1
        %s702 = scalar_select %p701, %s15, 1
        %s703 = smul.addr %s702, 8
        %s704 = smul.addr %s703, 4
        %s705 = scalar_lea.vmem %s3, %s704
      $region44: #{_lambda_.31} parent=39 // pred_fallthru
        _
    $region40: #{_lambda_.31} parent=5 // pred_fallthru
      _
  $region6: #{_lambda_.31} parent=0 // loop_footer
    %s13 = sadd.s32 1, %s9
  $region7: #{_lambda_.31} parent=0 // loop_footer_branch
    %8 = sbr.rel target = $region3
  $region8: #{_lambda_.31} parent=0 // loop_exit
    _

// kernel: _lambda_.35
$region0: #{_lambda_.35}
  #allocation0 [shape = 'u32[]', space=smem, size = 0x4, offset = 0x4, fixed_abs, tag = 'smem constant byte address 0x4 - core index']
  #allocation1 [shape = 'u32[144,128]{1,0:T(1,128)}', space=vmem, size = 0x12000, scoped, tag = 'internal scratch']
  %s0 = inlined_call_operand.vmem [shape: bf16[2,16,288], index: 0, kind: input, shape index: {}]
  %s1 = inlined_call_operand.vmem [shape: bf16[1,288,64], index: 1, kind: input, shape index: {}]
  %s2 = inlined_call_operand.vmem [shape: f32[1,64], index: 2, kind: input, shape index: {}]
  %s3 = inlined_call_operand.vmem [shape: bf16[2,16,64], index: 3, kind: output, shape index: {}]
  %s4 = sld [smem:[#allocation0]]
  $region45: #{_lambda_.35} parent=0
    _
  %s6 = ssub.s32 1, %s4
  %s7 = scalar_select 0, %s6, %s4
  loop: start=0, step=1, limit=4
  $region2: #{_lambda_.35} parent=0 // loop_pre_header
    _
  $region3: #{_lambda_.35} parent=0 // loop_header
    %s9 = sphi 0, %s13
    %p10 = scmp.ge.s32.totalorder %s9, 4
    %s19 = sphi 0, %s21
    %s22 = sphi 0, %s19
    %s23 = sphi 0, %s22
    %s39 = sphi 0, %s23
    %s43 = sphi 0, %s43
    %s45 = sphi 0, %s43
    %s46 = sphi 0, %s45
    %s60 = sphi 0, %s46
    %s64 = sphi 0, %s64
    %s66 = sphi 0, %s64
    %s67 = sphi 0, %s66
    %s81 = sphi 0, %s67
    %s87 = sphi 0, %s89
    %s90 = sphi 0, %s87
    %s91 = sphi 0, %s90
    %s107 = sphi 0, %s91
  $region4: #{_lambda_.35} parent=0 // loop_header_branch
    %12 = sbr.rel (%p10) target = $region8
  $region5: #{_lambda_.35} parent=0 // loop_body
    %s14 = ssub.s32 %s9, 1
    %s15 = ssub.s32 %s9, 2
    %s16 = sadd.s32 %s9, 1
    %s17 = ssub.s32 %s9, %s16
    %p18 = scmp.eq.s32.totalorder %s17, 0
    %s20 = sadd.s32 %s19, 1
    %s21 = scalar_select %p18, %s19, %s20
    %p24 = pneg %p18
    %p25 = scmp.eq.s32.totalorder %s9, 1
    %p26 = por %p24, %p25
    %p27 = scmp.ne.s32.totalorder %s19, %s22
    %p28 = scmp.eq.s32.totalorder %s9, 0
    %p29 = por %p27, %p28
    %p30 = scmp.ne.s32.totalorder %s19, %s22
    %p31 = scmp.eq.s32.totalorder %s14, 1
    %p32 = por %p30, %p31
    %p33 = scmp.ne.s32.totalorder %s22, %s23
    %p34 = scmp.eq.s32.totalorder %s14, 0
    %p35 = por %p33, %p34
    %p36 = scmp.ne.s32.totalorder %s22, %s23
    %p37 = scmp.eq.s32.totalorder %s15, 1
    %p38 = por %p36, %p37
    %p40 = scmp.ne.s32.totalorder %s23, %s39
    %p41 = scmp.eq.s32.totalorder %s15, 0
    %p42 = por %p40, %p41
    %s44 = sadd.s32 %s43, 1
    %p47 = scmp.eq.s32.totalorder %s9, 1
    %p48 = scmp.ne.s32.totalorder %s43, %s45
    %p49 = scmp.eq.s32.totalorder %s9, 0
    %p50 = por %p48, %p49
    %p51 = scmp.ne.s32.totalorder %s43, %s45
    %p52 = scmp.eq.s32.totalorder %s14, 1
    %p53 = por %p51, %p52
    %p54 = scmp.ne.s32.totalorder %s45, %s46
    %p55 = scmp.eq.s32.totalorder %s14, 0
    %p56 = por %p54, %p55
    %p57 = scmp.ne.s32.totalorder %s45, %s46
    %p58 = scmp.eq.s32.totalorder %s15, 1
    %p59 = por %p57, %p58
    %p61 = scmp.ne.s32.totalorder %s46, %s60
    %p62 = scmp.eq.s32.totalorder %s15, 0
    %p63 = por %p61, %p62
    %s65 = sadd.s32 %s64, 1
    %p68 = scmp.eq.s32.totalorder %s9, 1
    %p69 = scmp.ne.s32.totalorder %s64, %s66
    %p70 = scmp.eq.s32.totalorder %s9, 0
    %p71 = por %p69, %p70
    %p72 = scmp.ne.s32.totalorder %s64, %s66
    %p73 = scmp.eq.s32.totalorder %s14, 1
    %p74 = por %p72, %p73
    %p75 = scmp.ne.s32.totalorder %s66, %s67
    %p76 = scmp.eq.s32.totalorder %s14, 0
    %p77 = por %p75, %p76
    %p78 = scmp.ne.s32.totalorder %s66, %s67
    %p79 = scmp.eq.s32.totalorder %s15, 1
    %p80 = por %p78, %p79
    %p82 = scmp.ne.s32.totalorder %s67, %s81
    %p83 = scmp.eq.s32.totalorder %s15, 0
    %p84 = por %p82, %p83
    %s85 = ssub.s32 %s9, %s16
    %p86 = scmp.eq.s32.totalorder %s85, 0
    %s88 = sadd.s32 %s87, 1
    %s89 = scalar_select %p86, %s87, %s88
    %p92 = pneg %p86
    %p93 = scmp.eq.s32.totalorder %s9, 1
    %p94 = por %p92, %p93
    %p95 = scmp.ne.s32.totalorder %s87, %s90
    %p96 = scmp.eq.s32.totalorder %s9, 0
    %p97 = por %p95, %p96
    %p98 = scmp.ne.s32.totalorder %s87, %s90
    %p99 = scmp.eq.s32.totalorder %s14, 1
    %p100 = por %p98, %p99
    %p101 = scmp.ne.s32.totalorder %s90, %s91
    %p102 = scmp.eq.s32.totalorder %s14, 0
    %p103 = por %p101, %p102
    %p104 = scmp.ne.s32.totalorder %s90, %s91
    %p105 = scmp.eq.s32.totalorder %s15, 1
    %p106 = por %p104, %p105
    %p108 = scmp.ne.s32.totalorder %s91, %s107
    %p109 = scmp.eq.s32.totalorder %s15, 0
    %p110 = por %p108, %p109
    %p111 = scmp.le.s32.totalorder 1, %s9
    %p112 = scmp.lt.s32.totalorder %s9, 3
    %p113 = pnand %p111, %p112
    %p114 = pneg %p113
    // Predicated region
    $region9: #{_lambda_.35} parent=5 // pred_check
      _
    $region10: #{_lambda_.35} parent=5 // pred_check_branch
      %116 = sbr.rel (%p113) target = $region12
    $region11: #{_lambda_.35} parent=5 // pred_region
      %s117 = ssub.s32 %s9, 1
      // Predicated region
      $region13: #{_lambda_.35} parent=11 // pred_check
        %p118 = pneg %p56
      $region14: #{_lambda_.35} parent=11 // pred_check_branch
        %120 = sbr.rel (%p118) target = $region16
      $region15: #{_lambda_.35} parent=11 // pred_region
        _
      $region16: #{_lambda_.35} parent=11 // pred_fallthru
        _
      // Predicated region
      $region17: #{_lambda_.35} parent=11 // pred_check
        %p121 = pneg %p77
      $region18: #{_lambda_.35} parent=11 // pred_check_branch
        %123 = sbr.rel (%p121) target = $region20
      $region19: #{_lambda_.35} parent=11 // pred_region
        _
      $region20: #{_lambda_.35} parent=11 // pred_fallthru
        _
    $region12: #{_lambda_.35} parent=5 // pred_fallthru
      _
    %p124 = scmp.lt.s32.totalorder %s9, 2
    // Predicated region
    $region21: #{_lambda_.35} parent=5 // pred_check
      %p125 = pneg %p124
    $region22: #{_lambda_.35} parent=5 // pred_check_branch
      %127 = sbr.rel (%p125) target = $region24
    $region23: #{_lambda_.35} parent=5 // pred_region
      // Predicated region
      $region25: #{_lambda_.35} parent=23 // pred_check
        %p128 = pneg %p29
      $region26: #{_lambda_.35} parent=23 // pred_check_branch
        %130 = sbr.rel (%p128) target = $region28
      $region27: #{_lambda_.35} parent=23 // pred_region
        %p131 = scmp.lt.s32.totalorder %s9, 1
        %s132 = scalar_select %p131, %s9, 1
        %s133 = smul.addr %s132, 6
        %s134 = smul.addr %s133, 4
        %s135 = scalar_lea.vmem %s0, %s134
      $region28: #{_lambda_.35} parent=23 // pred_fallthru
        _
    $region24: #{_lambda_.35} parent=5 // pred_fallthru
      _
    %p136 = scmp.le.s32.totalorder 1, %s9
    %p137 = scmp.lt.s32.totalorder %s9, 3
    %p138 = pnand %p136, %p137
    %p139 = pneg %p138
    // Predicated region
    $region29: #{_lambda_.35} parent=5 // pred_check
      _
    $region30: #{_lambda_.35} parent=5 // pred_check_branch
      %141 = sbr.rel (%p138) target = $region32
    $region31: #{_lambda_.35} parent=5 // pred_region
      %s142 = ssub.s32 %s9, 1
      %p143 = scmp.lt.s32.totalorder %s14, 1
      %s144 = scalar_select %p143, %s14, 1
      %s145 = smul.addr %s144, 6
      %s146 = smul.addr %s145, 4
      %s147 = scalar_lea.vmem %s0, %s146
      %p148 = pneg %p35
      %p149 = pneg %p32
      %p150 = pneg %p56
      %p151 = pneg %p53
      %p152 = pneg %p77
      %p153 = pneg %p74
      %p154 = pneg %p103
      %p155 = pneg %p100
      %p156 = scmp.lt.s32.totalorder %s14, 1
      %s157 = scalar_select %p156, %s14, 1
      %s158 = smul.addr %s157, 2
      %s159 = smul.addr %s158, 4
      %s160 = scalar_lea.vmem %s3, %s159
      %p161 = scmp.lt.s32.totalorder %s14, 1
      %s162 = scalar_select %p161, %s14, 1
      %s163 = smul.addr %s162, 6
      %s164 = smul.addr %s163, 4
      %s165 = scalar_lea.vmem %s0, %s164
      %p166 = scmp.lt.s32.totalorder %s14, 1
      %s167 = scalar_select %p166, %s14, 1
      %s168 = smul.addr %s167, 2
      %s169 = smul.addr %s168, 4
      %s170 = scalar_lea.vmem %s3, %s169
      %v172 = vld [vmem:[%s165] sm:$0xff]
      %v173 = vld [vmem:[%s165 + $0x8] sm:$0xf]
      %v174 = vld [vmem:[%s165 + $0xc] sm:$0xff]
      %v175 = vld [vmem:[%s165 + $0x14] sm:$0xf]
      %v176 = vld [vmem:[%s1] sm:$0xf]
      %v177 = vld [vmem:[%s1 + $0x4] sm:$0xf]
      %v178 = vld [vmem:[%s1 + $0x8] sm:$0xf]
      %v179 = vld [vmem:[%s1 + $0xc] sm:$0xf]
      %v180 = vld [vmem:[%s1 + $0x10] sm:$0xf]
      %v181 = vld [vmem:[%s1 + $0x14] sm:$0xf]
      %v182 = vld [vmem:[%s1 + $0x18] sm:$0xf]
      %v183 = vld [vmem:[%s1 + $0x1c] sm:$0xf]
      %v184 = vld [vmem:[%s1 + $0x20] sm:$0xf]
      %v185 = vld [vmem:[%s1 + $0x24] sm:$0xf]
      %v186 = vld [vmem:[%s1 + $0x28] sm:$0xf]
      %v187 = vld [vmem:[%s1 + $0x2c] sm:$0xf]
      %v188 = vld [vmem:[%s1 + $0x30] sm:$0xf]
      %v189 = vld [vmem:[%s1 + $0x34] sm:$0xf]
      %v190 = vld [vmem:[%s1 + $0x38] sm:$0xf]
      %v191 = vld [vmem:[%s1 + $0x3c] sm:$0xf]
      %v192 = vld [vmem:[%s1 + $0x40] sm:$0xf]
      %v193 = vld [vmem:[%s1 + $0x44] sm:$0xf]
      %v194 = vld [vmem:[%s1 + $0x48] sm:$0xf]
      %v195 = vld [vmem:[%s1 + $0x4c] sm:$0xf]
      %v196 = vld [vmem:[%s1 + $0x50] sm:$0xf]
      %v197 = vld [vmem:[%s1 + $0x54] sm:$0xf]
      %v198 = vld [vmem:[%s1 + $0x58] sm:$0xf]
      %v199 = vld [vmem:[%s1 + $0x5c] sm:$0xf]
      %v200 = vld [vmem:[%s1 + $0x60] sm:$0xf]
      %v201 = vld [vmem:[%s1 + $0x64] sm:$0xf]
      %v202 = vld [vmem:[%s1 + $0x68] sm:$0xf]
      %v203 = vld [vmem:[%s1 + $0x6c] sm:$0xf]
      %v204 = vld [vmem:[%s1 + $0x70] sm:$0xf]
      %v205 = vld [vmem:[%s1 + $0x74] sm:$0xf]
      %v206 = vld [vmem:[%s1 + $0x78] sm:$0xf]
      %v207 = vld [vmem:[%s1 + $0x7c] sm:$0xf]
      %v208 = vld [vmem:[%s1 + $0x80] sm:$0xf]
      %v209 = vld [vmem:[%s1 + $0x84] sm:$0xf]
      %v210 = vld [vmem:[%s1 + $0x88] sm:$0xf]
      %v211 = vld [vmem:[%s1 + $0x8c] sm:$0xf]
      %v212 = vld [vmem:[%s2] sm:$0x1]
      %v214 = vlaneseq
      %v215 = vshrl.u32 %v214, 7
      %v216 = vsub.s32 0, %v215
      %v217 = vrot.slane %v212, %v216
      %v223 = vunpack.c.l.b16 %v172
      %v224 = vunpack.c.h.b16 %v172
      %v225 = vunpack.c.l.b16 %v173
      %v226 = vunpack.c.l.b16 %v174
      %v227 = vunpack.c.h.b16 %v174
      %v228 = vunpack.c.l.b16 %v175
      %v229 = vpack.c.b16 %v226, %v223
      %v230 = vpack.c.b16 %v227, %v224
      %v231 = vpack.c.b16 %v228, %v225
      %v270 = vunpack.c.l.b16 %v176
      %v271 = vunpack.c.l.b16 %v177
      %v272 = vunpack.c.l.b16 %v178
      %v273 = vunpack.c.l.b16 %v179
      %v274 = vunpack.c.l.b16 %v180
      %v275 = vunpack.c.l.b16 %v181
      %v276 = vunpack.c.l.b16 %v182
      %v277 = vunpack.c.l.b16 %v183
      %v278 = vunpack.c.l.b16 %v184
      %v279 = vunpack.c.l.b16 %v185
      %v280 = vunpack.c.l.b16 %v186
      %v281 = vunpack.c.l.b16 %v187
      %v282 = vunpack.c.l.b16 %v188
      %v283 = vunpack.c.l.b16 %v189
      %v284 = vunpack.c.l.b16 %v190
      %v285 = vunpack.c.l.b16 %v191
      %v286 = vunpack.c.l.b16 %v192
      %v287 = vunpack.c.l.b16 %v193
      %v288 = vunpack.c.l.b16 %v194
      %v289 = vunpack.c.l.b16 %v195
      %v290 = vunpack.c.l.b16 %v196
      %v291 = vunpack.c.l.b16 %v197
      %v292 = vunpack.c.l.b16 %v198
      %v293 = vunpack.c.l.b16 %v199
      %v294 = vunpack.c.l.b16 %v200
      %v295 = vunpack.c.l.b16 %v201
      %v296 = vunpack.c.l.b16 %v202
      %v297 = vunpack.c.l.b16 %v203
      %v298 = vunpack.c.l.b16 %v204
      %v299 = vunpack.c.l.b16 %v205
      %v300 = vunpack.c.l.b16 %v206
      %v301 = vunpack.c.l.b16 %v207
      %v302 = vunpack.c.l.b16 %v208
      %v303 = vunpack.c.l.b16 %v209
      %v304 = vunpack.c.l.b16 %v210
      %v305 = vunpack.c.l.b16 %v211
      %v306 = vpack.c.b16 %v271, %v270
      %v307 = vpack.c.b16 %v273, %v272
      %v308 = vpack.c.b16 %v275, %v274
      %v309 = vpack.c.b16 %v277, %v276
      %v310 = vpack.c.b16 %v279, %v278
      %v311 = vpack.c.b16 %v281, %v280
      %v312 = vpack.c.b16 %v283, %v282
      %v313 = vpack.c.b16 %v285, %v284
      %v314 = vpack.c.b16 %v287, %v286
      %v315 = vpack.c.b16 %v289, %v288
      %v316 = vpack.c.b16 %v291, %v290
      %v317 = vpack.c.b16 %v293, %v292
      %v318 = vpack.c.b16 %v295, %v294
      %v319 = vpack.c.b16 %v297, %v296
      %v320 = vpack.c.b16 %v299, %v298
      %v321 = vpack.c.b16 %v301, %v300
      %v322 = vpack.c.b16 %v303, %v302
      %v323 = vpack.c.b16 %v305, %v304
      %vm342 = vcmask 261120
      %v344 = vsel %vm342, %v231, 0
      %346 = vmatprep.subr.bf16.mxu0 0
      %347 = vmatpush1.bf16.msra.mxu0 %v313
      %348 = vmatprep.subr.bf16.mxu0 0
      %349 = vmatpush1.bf16.msra.mxu0 %v312
      %350 = vmatprep.subr.bf16.mxu0 0
      %351 = vmatpush1.bf16.msra.mxu0 %v311
      %352 = vmatprep.subr.bf16.mxu0 0
      %353 = vmatpush1.bf16.msra.mxu0 %v310
      %354 = vmatprep.subr.bf16.mxu0 0
      %355 = vmatpush1.bf16.msra.mxu0 %v309
      %356 = vmatprep.subr.bf16.mxu0 0
      %357 = vmatpush1.bf16.msra.mxu0 %v308
      %358 = vmatprep.subr.bf16.mxu0 0
      %359 = vmatpush1.bf16.msra.mxu0 %v307
      %360 = vmatprep.subr.bf16.mxu0 0
      %361 = vmatpush1.bf16.msra.mxu0 %v306
      %362 = vmatprep.subr.bf16.mxu0 0
      %363 = vmatpush2.bf16.msra.mxu0 %v321
      %364 = vmatprep.subr.bf16.mxu0 0
      %365 = vmatpush2.bf16.msra.mxu0 %v320
      %366 = vmatprep.subr.bf16.mxu0 0
      %367 = vmatpush2.bf16.msra.mxu0 %v319
      %368 = vmatprep.subr.bf16.mxu0 0
      %369 = vmatpush2.bf16.msra.mxu0 %v318
      %370 = vmatprep.subr.bf16.mxu0 0
      %371 = vmatpush2.bf16.msra.mxu0 %v317
      %372 = vmatprep.subr.bf16.mxu0 0
      %373 = vmatpush2.bf16.msra.mxu0 %v316
      %374 = vmatprep.subr.bf16.mxu0 0
      %375 = vmatpush2.bf16.msra.mxu0 %v315
      %376 = vmatprep.subr.bf16.mxu0 0
      %377 = vmatpush2.bf16.msra.mxu0 %v314
      %378 = vmatprep.mubr.bf16.mxu0 %v230
      %379 = vmatmul.mubr.bf16.gmra.mxu0 %v229
      %v380 = vpop.f32.mrf.mxu0
      %v381 = vadd.f32 %v217, %v380
      %v382 = vpop.f32.mrf.mxu0
      %v383 = vpop.f32.mrf.mxu0
      %v384 = vadd.f32 %v217, %v383
      %v385 = vpop.f32.mrf.mxu0
      %386 = vdwg.mxu0
      %387 = vmatprep.subr.bf16.mxu0 0
      %388 = vmatpush1.bf16.msra.mxu0 0
      %389 = vmatprep.subr.bf16.mxu0 0
      %390 = vmatpush1.bf16.msra.mxu0 0
      %391 = vmatprep.subr.bf16.mxu0 0
      %392 = vmatpush1.bf16.msra.mxu0 0
      %393 = vmatprep.subr.bf16.mxu0 0
      %394 = vmatpush1.bf16.msra.mxu0 0
      %395 = vmatprep.subr.bf16.mxu0 0
      %396 = vmatpush1.bf16.msra.mxu0 0
      %397 = vmatprep.subr.bf16.mxu0 0
      %398 = vmatpush1.bf16.msra.mxu0 0
      %399 = vmatprep.subr.bf16.mxu0 0
      %400 = vmatpush1.bf16.msra.mxu0 %v323
      %401 = vmatprep.subr.bf16.mxu0 0
      %402 = vmatpush1.bf16.msra.mxu0 %v322
      %403 = vmatprep.subr.bf16.mxu0 0
      %404 = vmatpush2.bf16.msra.mxu0 0
      %405 = vmatprep.subr.bf16.mxu0 0
      %406 = vmatpush2.bf16.msra.mxu0 0
      %407 = vmatprep.subr.bf16.mxu0 0
      %408 = vmatpush2.bf16.msra.mxu0 0
      %409 = vmatprep.subr.bf16.mxu0 0
      %410 = vmatpush2.bf16.msra.mxu0 0
      %411 = vmatprep.subr.bf16.mxu0 0
      %412 = vmatpush2.bf16.msra.mxu0 0
      %413 = vmatprep.subr.bf16.mxu0 0
      %414 = vmatpush2.bf16.msra.mxu0 0
      %415 = vmatprep.subr.bf16.mxu0 0
      %416 = vmatpush2.bf16.msra.mxu0 0
      %417 = vmatprep.subr.bf16.mxu0 0
      %418 = vmatpush2.bf16.msra.mxu0 0
      %419 = vmatprep.mubr.bf16.mxu0 0
      %420 = vmatmul.mubr.bf16.gmra.mxu0 %v344
      %v421 = vpop.f32.mrf.mxu0
      %v422 = vadd.f32 %v381, %v421
      %v423 = vpop.f32.mrf.mxu0
      %v424 = vpop.f32.mrf.mxu0
      %v425 = vadd.f32 %v384, %v424
      %v426 = vpop.f32.mrf.mxu0
      %427 = vdwg.mxu0
      %v428 = vmax.f32 %v422, 0.0
      %v429 = vmax.f32 %v425, 0.0
      %v430 = vpack.c.bf16 %v429, %v428
      %v432 = vunpack.c.l.b16 %v430
      %v433 = vunpack.c.h.b16 %v430
      %v434 = vpack.c.b16 %v432, %v432
      %v435 = vpack.c.b16 %v433, %v433
      %vm438 = vcmask 519168
      %439 = vst.msk [vmem:[%s170] sm:$0xf] %vm438, %v434
      %440 = vst.msk [vmem:[%s170 + $0x4] sm:$0xf] %vm438, %v435
      %p441 = scmp.lt.s32.totalorder %s14, 1
      %s442 = scalar_select %p441, %s14, 1
      %s443 = smul.addr %s442, 2
      %s444 = smul.addr %s443, 4
      %s445 = scalar_lea.vmem %s3, %s444
      // Predicated region
      $region33: #{_lambda_.35} parent=31 // pred_check
        %p446 = pneg %p100
      $region34: #{_lambda_.35} parent=31 // pred_check_branch
        %448 = sbr.rel (%p446) target = $region36
      $region35: #{_lambda_.35} parent=31 // pred_region
        _
      $region36: #{_lambda_.35} parent=31 // pred_fallthru
        _
    $region32: #{_lambda_.35} parent=5 // pred_fallthru
      _
    %p449 = scmp.le.s32.totalorder 2, %s9
    // Predicated region
    $region37: #{_lambda_.35} parent=5 // pred_check
      %p450 = pneg %p449
    $region38: #{_lambda_.35} parent=5 // pred_check_branch
      %452 = sbr.rel (%p450) target = $region40
    $region39: #{_lambda_.35} parent=5 // pred_region
      %s453 = ssub.s32 %s9, 2
      // Predicated region
      $region41: #{_lambda_.35} parent=39 // pred_check
        %p454 = pneg %p106
      $region42: #{_lambda_.35} parent=39 // pred_check_branch
        %456 = sbr.rel (%p454) target = $region44
      $region43: #{_lambda_.35} parent=39 // pred_region
        %p457 = scmp.lt.s32.totalorder %s15, 1
        %s458 = scalar_select %p457, %s15, 1
        %s459 = smul.addr %s458, 2
        %s460 = smul.addr %s459, 4
        %s461 = scalar_lea.vmem %s3, %s460
      $region44: #{_lambda_.35} parent=39 // pred_fallthru
        _
    $region40: #{_lambda_.35} parent=5 // pred_fallthru
      _
  $region6: #{_lambda_.35} parent=0 // loop_footer
    %s13 = sadd.s32 1, %s9
  $region7: #{_lambda_.35} parent=0 // loop_footer_branch
    %8 = sbr.rel target = $region3
  $region8: #{_lambda_.35} parent=0 // loop_exit
    _

// kernel: _lambda_.37
$region0: #{_lambda_.37}
  #allocation0 [shape = 'u32[]', space=smem, size = 0x4, offset = 0x4, fixed_abs, tag = 'smem constant byte address 0x4 - core index']
  #allocation1 [shape = 'u32[144,128]{1,0:T(1,128)}', space=vmem, size = 0x12000, scoped, tag = 'internal scratch']
  %s0 = inlined_call_operand.vmem [shape: bf16[2,24,192], index: 0, kind: input, shape index: {}]
  %s1 = inlined_call_operand.vmem [shape: bf16[3,192,64], index: 1, kind: input, shape index: {}]
  %s2 = inlined_call_operand.vmem [shape: f32[1,64], index: 2, kind: input, shape index: {}]
  %s3 = inlined_call_operand.vmem [shape: bf16[2,16,64], index: 3, kind: input, shape index: {}]
  %s4 = inlined_call_operand.vmem [shape: bf16[2,16,64], index: 4, kind: output, shape index: {}]
  %s5 = sld [smem:[#allocation0]]
  $region49: #{_lambda_.37} parent=0
    _
  %s7 = ssub.s32 1, %s5
  %s8 = scalar_select 0, %s7, %s5
  loop: start=0, step=1, limit=4
  $region2: #{_lambda_.37} parent=0 // loop_pre_header
    _
  $region3: #{_lambda_.37} parent=0 // loop_header
    %s10 = sphi 0, %s14
    %p11 = scmp.ge.s32.totalorder %s10, 4
    %s20 = sphi 0, %s22
    %s23 = sphi 0, %s20
    %s24 = sphi 0, %s23
    %s40 = sphi 0, %s24
    %s44 = sphi 0, %s44
    %s46 = sphi 0, %s44
    %s47 = sphi 0, %s46
    %s61 = sphi 0, %s47
    %s65 = sphi 0, %s65
    %s67 = sphi 0, %s65
    %s68 = sphi 0, %s67
    %s82 = sphi 0, %s68
    %s88 = sphi 0, %s90
    %s91 = sphi 0, %s88
    %s92 = sphi 0, %s91
    %s108 = sphi 0, %s92
    %s114 = sphi 0, %s116
    %s117 = sphi 0, %s114
    %s118 = sphi 0, %s117
    %s134 = sphi 0, %s118
  $region4: #{_lambda_.37} parent=0 // loop_header_branch
    %13 = sbr.rel (%p11) target = $region8
  $region5: #{_lambda_.37} parent=0 // loop_body
    %s15 = ssub.s32 %s10, 1
    %s16 = ssub.s32 %s10, 2
    %s17 = sadd.s32 %s10, 1
    %s18 = ssub.s32 %s10, %s17
    %p19 = scmp.eq.s32.totalorder %s18, 0
    %s21 = sadd.s32 %s20, 1
    %s22 = scalar_select %p19, %s20, %s21
    %p25 = pneg %p19
    %p26 = scmp.eq.s32.totalorder %s10, 1
    %p27 = por %p25, %p26
    %p28 = scmp.ne.s32.totalorder %s20, %s23
    %p29 = scmp.eq.s32.totalorder %s10, 0
    %p30 = por %p28, %p29
    %p31 = scmp.ne.s32.totalorder %s20, %s23
    %p32 = scmp.eq.s32.totalorder %s15, 1
    %p33 = por %p31, %p32
    %p34 = scmp.ne.s32.totalorder %s23, %s24
    %p35 = scmp.eq.s32.totalorder %s15, 0
    %p36 = por %p34, %p35
    %p37 = scmp.ne.s32.totalorder %s23, %s24
    %p38 = scmp.eq.s32.totalorder %s16, 1
    %p39 = por %p37, %p38
    %p41 = scmp.ne.s32.totalorder %s24, %s40
    %p42 = scmp.eq.s32.totalorder %s16, 0
    %p43 = por %p41, %p42
    %s45 = sadd.s32 %s44, 1
    %p48 = scmp.eq.s32.totalorder %s10, 1
    %p49 = scmp.ne.s32.totalorder %s44, %s46
    %p50 = scmp.eq.s32.totalorder %s10, 0
    %p51 = por %p49, %p50
    %p52 = scmp.ne.s32.totalorder %s44, %s46
    %p53 = scmp.eq.s32.totalorder %s15, 1
    %p54 = por %p52, %p53
    %p55 = scmp.ne.s32.totalorder %s46, %s47
    %p56 = scmp.eq.s32.totalorder %s15, 0
    %p57 = por %p55, %p56
    %p58 = scmp.ne.s32.totalorder %s46, %s47
    %p59 = scmp.eq.s32.totalorder %s16, 1
    %p60 = por %p58, %p59
    %p62 = scmp.ne.s32.totalorder %s47, %s61
    %p63 = scmp.eq.s32.totalorder %s16, 0
    %p64 = por %p62, %p63
    %s66 = sadd.s32 %s65, 1
    %p69 = scmp.eq.s32.totalorder %s10, 1
    %p70 = scmp.ne.s32.totalorder %s65, %s67
    %p71 = scmp.eq.s32.totalorder %s10, 0
    %p72 = por %p70, %p71
    %p73 = scmp.ne.s32.totalorder %s65, %s67
    %p74 = scmp.eq.s32.totalorder %s15, 1
    %p75 = por %p73, %p74
    %p76 = scmp.ne.s32.totalorder %s67, %s68
    %p77 = scmp.eq.s32.totalorder %s15, 0
    %p78 = por %p76, %p77
    %p79 = scmp.ne.s32.totalorder %s67, %s68
    %p80 = scmp.eq.s32.totalorder %s16, 1
    %p81 = por %p79, %p80
    %p83 = scmp.ne.s32.totalorder %s68, %s82
    %p84 = scmp.eq.s32.totalorder %s16, 0
    %p85 = por %p83, %p84
    %s86 = ssub.s32 %s10, %s17
    %p87 = scmp.eq.s32.totalorder %s86, 0
    %s89 = sadd.s32 %s88, 1
    %s90 = scalar_select %p87, %s88, %s89
    %p93 = pneg %p87
    %p94 = scmp.eq.s32.totalorder %s10, 1
    %p95 = por %p93, %p94
    %p96 = scmp.ne.s32.totalorder %s88, %s91
    %p97 = scmp.eq.s32.totalorder %s10, 0
    %p98 = por %p96, %p97
    %p99 = scmp.ne.s32.totalorder %s88, %s91
    %p100 = scmp.eq.s32.totalorder %s15, 1
    %p101 = por %p99, %p100
    %p102 = scmp.ne.s32.totalorder %s91, %s92
    %p103 = scmp.eq.s32.totalorder %s15, 0
    %p104 = por %p102, %p103
    %p105 = scmp.ne.s32.totalorder %s91, %s92
    %p106 = scmp.eq.s32.totalorder %s16, 1
    %p107 = por %p105, %p106
    %p109 = scmp.ne.s32.totalorder %s92, %s108
    %p110 = scmp.eq.s32.totalorder %s16, 0
    %p111 = por %p109, %p110
    %s112 = ssub.s32 %s10, %s17
    %p113 = scmp.eq.s32.totalorder %s112, 0
    %s115 = sadd.s32 %s114, 1
    %s116 = scalar_select %p113, %s114, %s115
    %p119 = pneg %p113
    %p120 = scmp.eq.s32.totalorder %s10, 1
    %p121 = por %p119, %p120
    %p122 = scmp.ne.s32.totalorder %s114, %s117
    %p123 = scmp.eq.s32.totalorder %s10, 0
    %p124 = por %p122, %p123
    %p125 = scmp.ne.s32.totalorder %s114, %s117
    %p126 = scmp.eq.s32.totalorder %s15, 1
    %p127 = por %p125, %p126
    %p128 = scmp.ne.s32.totalorder %s117, %s118
    %p129 = scmp.eq.s32.totalorder %s15, 0
    %p130 = por %p128, %p129
    %p131 = scmp.ne.s32.totalorder %s117, %s118
    %p132 = scmp.eq.s32.totalorder %s16, 1
    %p133 = por %p131, %p132
    %p135 = scmp.ne.s32.totalorder %s118, %s134
    %p136 = scmp.eq.s32.totalorder %s16, 0
    %p137 = por %p135, %p136
    %p138 = scmp.le.s32.totalorder 1, %s10
    %p139 = scmp.lt.s32.totalorder %s10, 3
    %p140 = pnand %p138, %p139
    %p141 = pneg %p140
    // Predicated region
    $region9: #{_lambda_.37} parent=5 // pred_check
      _
    $region10: #{_lambda_.37} parent=5 // pred_check_branch
      %143 = sbr.rel (%p140) target = $region12
    $region11: #{_lambda_.37} parent=5 // pred_region
      %s144 = ssub.s32 %s10, 1
      // Predicated region
      $region13: #{_lambda_.37} parent=11 // pred_check
        %p145 = pneg %p57
      $region14: #{_lambda_.37} parent=11 // pred_check_branch
        %147 = sbr.rel (%p145) target = $region16
      $region15: #{_lambda_.37} parent=11 // pred_region
        _
      $region16: #{_lambda_.37} parent=11 // pred_fallthru
        _
      // Predicated region
      $region17: #{_lambda_.37} parent=11 // pred_check
        %p148 = pneg %p78
      $region18: #{_lambda_.37} parent=11 // pred_check_branch
        %150 = sbr.rel (%p148) target = $region20
      $region19: #{_lambda_.37} parent=11 // pred_region
        _
      $region20: #{_lambda_.37} parent=11 // pred_fallthru
        _
    $region12: #{_lambda_.37} parent=5 // pred_fallthru
      _
    %p151 = scmp.lt.s32.totalorder %s10, 2
    // Predicated region
    $region21: #{_lambda_.37} parent=5 // pred_check
      %p152 = pneg %p151
    $region22: #{_lambda_.37} parent=5 // pred_check_branch
      %154 = sbr.rel (%p152) target = $region24
    $region23: #{_lambda_.37} parent=5 // pred_region
      // Predicated region
      $region25: #{_lambda_.37} parent=23 // pred_check
        %p155 = pneg %p30
      $region26: #{_lambda_.37} parent=23 // pred_check_branch
        %157 = sbr.rel (%p155) target = $region28
      $region27: #{_lambda_.37} parent=23 // pred_region
        %p158 = scmp.lt.s32.totalorder %s10, 1
        %s159 = scalar_select %p158, %s10, 1
        %s160 = smul.addr %s159, 6
        %s161 = smul.addr %s160, 4
        %s162 = scalar_lea.vmem %s0, %s161
      $region28: #{_lambda_.37} parent=23 // pred_fallthru
        _
      // Predicated region
      $region29: #{_lambda_.37} parent=23 // pred_check
        %p163 = pneg %p98
      $region30: #{_lambda_.37} parent=23 // pred_check_branch
        %165 = sbr.rel (%p163) target = $region32
      $region31: #{_lambda_.37} parent=23 // pred_region
        %p166 = scmp.lt.s32.totalorder %s10, 1
        %s167 = scalar_select %p166, %s10, 1
        %s168 = smul.addr %s167, 2
        %s169 = smul.addr %s168, 4
        %s170 = scalar_lea.vmem %s3, %s169
      $region32: #{_lambda_.37} parent=23 // pred_fallthru
        _
    $region24: #{_lambda_.37} parent=5 // pred_fallthru
      _
    %p171 = scmp.le.s32.totalorder 1, %s10
    %p172 = scmp.lt.s32.totalorder %s10, 3
    %p173 = pnand %p171, %p172
    %p174 = pneg %p173
    // Predicated region
    $region33: #{_lambda_.37} parent=5 // pred_check
      _
    $region34: #{_lambda_.37} parent=5 // pred_check_branch
      %176 = sbr.rel (%p173) target = $region36
    $region35: #{_lambda_.37} parent=5 // pred_region
      %s177 = ssub.s32 %s10, 1
      %p178 = scmp.lt.s32.totalorder %s15, 1
      %s179 = scalar_select %p178, %s15, 1
      %s180 = smul.addr %s179, 6
      %s181 = smul.addr %s180, 4
      %s182 = scalar_lea.vmem %s0, %s181
      %p183 = pneg %p36
      %p184 = pneg %p33
      %p185 = pneg %p57
      %p186 = pneg %p54
      %p187 = pneg %p78
      %p188 = pneg %p75
      %p189 = scmp.lt.s32.totalorder %s15, 1
      %s190 = scalar_select %p189, %s15, 1
      %s191 = smul.addr %s190, 2
      %s192 = smul.addr %s191, 4
      %s193 = scalar_lea.vmem %s3, %s192
      %p194 = pneg %p104
      %p195 = pneg %p101
      %p196 = pneg %p130
      %p197 = pneg %p127
      %p198 = scmp.lt.s32.totalorder %s15, 1
      %s199 = scalar_select %p198, %s15, 1
      %s200 = smul.addr %s199, 2
      %s201 = smul.addr %s200, 4
      %s202 = scalar_lea.vmem %s4, %s201
      %p203 = scmp.lt.s32.totalorder %s15, 1
      %s204 = scalar_select %p203, %s15, 1
      %s205 = smul.addr %s204, 6
      %s206 = smul.addr %s205, 4
      %s207 = scalar_lea.vmem %s0, %s206
      %p208 = scmp.lt.s32.totalorder %s15, 1
      %s209 = scalar_select %p208, %s15, 1
      %s210 = smul.addr %s209, 2
      %s211 = smul.addr %s210, 4
      %s212 = scalar_lea.vmem %s3, %s211
      %p213 = scmp.lt.s32.totalorder %s15, 1
      %s214 = scalar_select %p213, %s15, 1
      %s215 = smul.addr %s214, 2
      %s216 = smul.addr %s215, 4
      %s217 = scalar_lea.vmem %s4, %s216
      %v219 = vld [vmem:[%s207] sm:$0xff]
      %v220 = vld [vmem:[%s207 + $0x8] sm:$0xff]
      %v221 = vld [vmem:[%s1] sm:$0xf]
      %v222 = vld [vmem:[%s1 + $0x4] sm:$0xf]
      %v223 = vld [vmem:[%s1 + $0x8] sm:$0xf]
      %v224 = vld [vmem:[%s1 + $0xc] sm:$0xf]
      %v225 = vld [vmem:[%s1 + $0x10] sm:$0xf]
      %v226 = vld [vmem:[%s1 + $0x14] sm:$0xf]
      %v227 = vld [vmem:[%s1 + $0x18] sm:$0xf]
      %v228 = vld [vmem:[%s1 + $0x1c] sm:$0xf]
      %v229 = vld [vmem:[%s1 + $0x20] sm:$0xf]
      %v230 = vld [vmem:[%s1 + $0x24] sm:$0xf]
      %v231 = vld [vmem:[%s1 + $0x28] sm:$0xf]
      %v232 = vld [vmem:[%s1 + $0x2c] sm:$0xf]
      %v233 = vld [vmem:[%s1 + $0x30] sm:$0xf]
      %v234 = vld [vmem:[%s1 + $0x34] sm:$0xf]
      %v235 = vld [vmem:[%s1 + $0x38] sm:$0xf]
      %v236 = vld [vmem:[%s1 + $0x3c] sm:$0xf]
      %v237 = vld [vmem:[%s1 + $0x40] sm:$0xf]
      %v238 = vld [vmem:[%s1 + $0x44] sm:$0xf]
      %v239 = vld [vmem:[%s1 + $0x48] sm:$0xf]
      %v240 = vld [vmem:[%s1 + $0x4c] sm:$0xf]
      %v241 = vld [vmem:[%s1 + $0x50] sm:$0xf]
      %v242 = vld [vmem:[%s1 + $0x54] sm:$0xf]
      %v243 = vld [vmem:[%s1 + $0x58] sm:$0xf]
      %v244 = vld [vmem:[%s1 + $0x5c] sm:$0xf]
      %v245 = vld [vmem:[%s207] sm:$0xcc]
      %v246 = vld [vmem:[%s207 + $0x10] sm:$0x33]
      %s247 = scalar_lea.vmem %s1, 96
      %v248 = vld [vmem:[%s247] sm:$0xf]
      %v249 = vld [vmem:[%s247 + $0x4] sm:$0xf]
      %v250 = vld [vmem:[%s247 + $0x8] sm:$0xf]
      %v251 = vld [vmem:[%s247 + $0xc] sm:$0xf]
      %v252 = vld [vmem:[%s247 + $0x10] sm:$0xf]
      %v253 = vld [vmem:[%s247 + $0x14] sm:$0xf]
      %v254 = vld [vmem:[%s247 + $0x18] sm:$0xf]
      %v255 = vld [vmem:[%s247 + $0x1c] sm:$0xf]
      %v256 = vld [vmem:[%s247 + $0x20] sm:$0xf]
      %v257 = vld [vmem:[%s247 + $0x24] sm:$0xf]
      %v258 = vld [vmem:[%s247 + $0x28] sm:$0xf]
      %v259 = vld [vmem:[%s247 + $0x2c] sm:$0xf]
      %v260 = vld [vmem:[%s247 + $0x30] sm:$0xf]
      %v261 = vld [vmem:[%s247 + $0x34] sm:$0xf]
      %v262 = vld [vmem:[%s247 + $0x38] sm:$0xf]
      %v263 = vld [vmem:[%s247 + $0x3c] sm:$0xf]
      %v264 = vld [vmem:[%s247 + $0x40] sm:$0xf]
      %v265 = vld [vmem:[%s247 + $0x44] sm:$0xf]
      %v266 = vld [vmem:[%s247 + $0x48] sm:$0xf]
      %v267 = vld [vmem:[%s247 + $0x4c] sm:$0xf]
      %v268 = vld [vmem:[%s247 + $0x50] sm:$0xf]
      %v269 = vld [vmem:[%s247 + $0x54] sm:$0xf]
      %v270 = vld [vmem:[%s247 + $0x58] sm:$0xf]
      %v271 = vld [vmem:[%s247 + $0x5c] sm:$0xf]
      %v275 = vunpack.c.l.b16 %v245
      %v276 = vunpack.c.h.b16 %v245
      %v277 = vunpack.c.l.b16 %v220
      %v278 = vunpack.c.h.b16 %v220
      %v279 = vunpack.c.l.b16 %v246
      %v280 = vunpack.c.h.b16 %v246
      %v281 = vpack.c.b16 %v277, %v275
      %v282 = vpack.c.b16 %v278, %v276
      %v283 = vpack.c.b16 %v279, %v279
      %v284 = vpack.c.b16 %v280, %v280
      %vm285 = vcmask 1045504
      %v286 = vrot.slane %v281, 2
      %v287 = vrot.slane %v283, 2
      %v288 = vsel %vm285, %v286, %v287
      %v289 = vrot.slane %v282, 2
      %v290 = vrot.slane %v284, 2
      %v291 = vsel %vm285, %v289, %v290
      %v317 = vunpack.c.l.b16 %v248
      %v318 = vunpack.c.l.b16 %v249
      %v319 = vunpack.c.l.b16 %v250
      %v320 = vunpack.c.l.b16 %v251
      %v321 = vunpack.c.l.b16 %v252
      %v322 = vunpack.c.l.b16 %v253
      %v323 = vunpack.c.l.b16 %v254
      %v324 = vunpack.c.l.b16 %v255
      %v325 = vunpack.c.l.b16 %v256
      %v326 = vunpack.c.l.b16 %v257
      %v327 = vunpack.c.l.b16 %v258
      %v328 = vunpack.c.l.b16 %v259
      %v329 = vunpack.c.l.b16 %v260
      %v330 = vunpack.c.l.b16 %v261
      %v331 = vunpack.c.l.b16 %v262
      %v332 = vunpack.c.l.b16 %v263
      %v333 = vunpack.c.l.b16 %v264
      %v334 = vunpack.c.l.b16 %v265
      %v335 = vunpack.c.l.b16 %v266
      %v336 = vunpack.c.l.b16 %v267
      %v337 = vunpack.c.l.b16 %v268
      %v338 = vunpack.c.l.b16 %v269
      %v339 = vunpack.c.l.b16 %v270
      %v340 = vunpack.c.l.b16 %v271
      %v341 = vpack.c.b16 %v318, %v317
      %v342 = vpack.c.b16 %v320, %v319
      %v343 = vpack.c.b16 %v322, %v321
      %v344 = vpack.c.b16 %v324, %v323
      %v345 = vpack.c.b16 %v326, %v325
      %v346 = vpack.c.b16 %v328, %v327
      %v347 = vpack.c.b16 %v330, %v329
      %v348 = vpack.c.b16 %v332, %v331
      %v349 = vpack.c.b16 %v334, %v333
      %v350 = vpack.c.b16 %v336, %v335
      %v351 = vpack.c.b16 %v338, %v337
      %v352 = vpack.c.b16 %v340, %v339
      %vm365 = vcmask 523264
      %v367 = vsel %vm365, %v291, 0
      %369 = vmatprep.subr.bf16.mxu0 0
      %370 = vmatpush1.bf16.msra.mxu0 %v348
      %371 = vmatprep.subr.bf16.mxu0 0
      %372 = vmatpush1.bf16.msra.mxu0 %v347
      %373 = vmatprep.subr.bf16.mxu0 0
      %374 = vmatpush1.bf16.msra.mxu0 %v346
      %375 = vmatprep.subr.bf16.mxu0 0
      %376 = vmatpush1.bf16.msra.mxu0 %v345
      %377 = vmatprep.subr.bf16.mxu0 0
      %378 = vmatpush1.bf16.msra.mxu0 %v344
      %379 = vmatprep.subr.bf16.mxu0 0
      %380 = vmatpush1.bf16.msra.mxu0 %v343
      %381 = vmatprep.subr.bf16.mxu0 0
      %382 = vmatpush1.bf16.msra.mxu0 %v342
      %383 = vmatprep.subr.bf16.mxu0 0
      %384 = vmatpush1.bf16.msra.mxu0 %v341
      %385 = vmatprep.subr.bf16.mxu0 0
      %386 = vmatpush2.bf16.msra.mxu0 0
      %387 = vmatprep.subr.bf16.mxu0 0
      %388 = vmatpush2.bf16.msra.mxu0 0
      %389 = vmatprep.subr.bf16.mxu0 0
      %390 = vmatpush2.bf16.msra.mxu0 0
      %391 = vmatprep.subr.bf16.mxu0 0
      %392 = vmatpush2.bf16.msra.mxu0 0
      %393 = vmatprep.subr.bf16.mxu0 0
      %394 = vmatpush2.bf16.msra.mxu0 %v352
      %395 = vmatprep.subr.bf16.mxu0 0
      %396 = vmatpush2.bf16.msra.mxu0 %v351
      %397 = vmatprep.subr.bf16.mxu0 0
      %398 = vmatpush2.bf16.msra.mxu0 %v350
      %399 = vmatprep.subr.bf16.mxu0 0
      %400 = vmatpush2.bf16.msra.mxu0 %v349
      %401 = vmatprep.mubr.bf16.mxu0 %v367
      %402 = vmatmul.mubr.bf16.gmra.mxu0 %v288
      %v403 = vpop.f32.mrf.mxu0
      %v404 = vadd.f32 0.0, %v403
      %v405 = vpop.f32.mrf.mxu0
      %v406 = vpop.f32.mrf.mxu0
      %v407 = vadd.f32 0.0, %v406
      %v408 = vpop.f32.mrf.mxu0
      %409 = vdwg.mxu0
      %v411 = vunpack.c.l.b16 %v219
      %v412 = vunpack.c.h.b16 %v219
      %v413 = vpack.c.b16 %v277, %v411
      %v414 = vpack.c.b16 %v278, %v412
      %v440 = vunpack.c.l.b16 %v221
      %v441 = vunpack.c.l.b16 %v222
      %v442 = vunpack.c.l.b16 %v223
      %v443 = vunpack.c.l.b16 %v224
      %v444 = vunpack.c.l.b16 %v225
      %v445 = vunpack.c.l.b16 %v226
      %v446 = vunpack.c.l.b16 %v227
      %v447 = vunpack.c.l.b16 %v228
      %v448 = vunpack.c.l.b16 %v229
      %v449 = vunpack.c.l.b16 %v230
      %v450 = vunpack.c.l.b16 %v231
      %v451 = vunpack.c.l.b16 %v232
      %v452 = vunpack.c.l.b16 %v233
      %v453 = vunpack.c.l.b16 %v234
      %v454 = vunpack.c.l.b16 %v235
      %v455 = vunpack.c.l.b16 %v236
      %v456 = vunpack.c.l.b16 %v237
      %v457 = vunpack.c.l.b16 %v238
      %v458 = vunpack.c.l.b16 %v239
      %v459 = vunpack.c.l.b16 %v240
      %v460 = vunpack.c.l.b16 %v241
      %v461 = vunpack.c.l.b16 %v242
      %v462 = vunpack.c.l.b16 %v243
      %v463 = vunpack.c.l.b16 %v244
      %v464 = vpack.c.b16 %v441, %v440
      %v465 = vpack.c.b16 %v443, %v442
      %v466 = vpack.c.b16 %v445, %v444
      %v467 = vpack.c.b16 %v447, %v446
      %v468 = vpack.c.b16 %v449, %v448
      %v469 = vpack.c.b16 %v451, %v450
      %v470 = vpack.c.b16 %v453, %v452
      %v471 = vpack.c.b16 %v455, %v454
      %v472 = vpack.c.b16 %v457, %v456
      %v473 = vpack.c.b16 %v459, %v458
      %v474 = vpack.c.b16 %v461, %v460
      %v475 = vpack.c.b16 %v463, %v462
      %v489 = vsel %vm365, %v414, 0
      %491 = vmatprep.subr.bf16.mxu0 0
      %492 = vmatpush1.bf16.msra.mxu0 %v471
      %493 = vmatprep.subr.bf16.mxu0 0
      %494 = vmatpush1.bf16.msra.mxu0 %v470
      %495 = vmatprep.subr.bf16.mxu0 0
      %496 = vmatpush1.bf16.msra.mxu0 %v469
      %497 = vmatprep.subr.bf16.mxu0 0
      %498 = vmatpush1.bf16.msra.mxu0 %v468
      %499 = vmatprep.subr.bf16.mxu0 0
      %500 = vmatpush1.bf16.msra.mxu0 %v467
      %501 = vmatprep.subr.bf16.mxu0 0
      %502 = vmatpush1.bf16.msra.mxu0 %v466
      %503 = vmatprep.subr.bf16.mxu0 0
      %504 = vmatpush1.bf16.msra.mxu0 %v465
      %505 = vmatprep.subr.bf16.mxu0 0
      %506 = vmatpush1.bf16.msra.mxu0 %v464
      %507 = vmatprep.subr.bf16.mxu0 0
      %508 = vmatpush2.bf16.msra.mxu0 0
      %509 = vmatprep.subr.bf16.mxu0 0
      %510 = vmatpush2.bf16.msra.mxu0 0
      %511 = vmatprep.subr.bf16.mxu0 0
      %512 = vmatpush2.bf16.msra.mxu0 0
      %513 = vmatprep.subr.bf16.mxu0 0
      %514 = vmatpush2.bf16.msra.mxu0 0
      %515 = vmatprep.subr.bf16.mxu0 0
      %516 = vmatpush2.bf16.msra.mxu0 %v475
      %517 = vmatprep.subr.bf16.mxu0 0
      %518 = vmatpush2.bf16.msra.mxu0 %v474
      %519 = vmatprep.subr.bf16.mxu0 0
      %520 = vmatpush2.bf16.msra.mxu0 %v473
      %521 = vmatprep.subr.bf16.mxu0 0
      %522 = vmatpush2.bf16.msra.mxu0 %v472
      %523 = vmatprep.mubr.bf16.mxu0 %v489
      %524 = vmatmul.mubr.bf16.gmra.mxu0 %v413
      %v525 = vpop.f32.mrf.mxu0
      %v526 = vadd.f32 %v404, %v525
      %v527 = vpop.f32.mrf.mxu0
      %v528 = vpop.f32.mrf.mxu0
      %v529 = vadd.f32 %v407, %v528
      %v530 = vpop.f32.mrf.mxu0
      %531 = vdwg.mxu0
      %v532 = vld [vmem:[%s207 + $0x10] sm:$0xff]
      %s533 = scalar_lea.vmem %s1, 192
      %v534 = vld [vmem:[%s533] sm:$0xf]
      %v535 = vld [vmem:[%s533 + $0x4] sm:$0xf]
      %v536 = vld [vmem:[%s533 + $0x8] sm:$0xf]
      %v537 = vld [vmem:[%s533 + $0xc] sm:$0xf]
      %v538 = vld [vmem:[%s533 + $0x10] sm:$0xf]
      %v539 = vld [vmem:[%s533 + $0x14] sm:$0xf]
      %v540 = vld [vmem:[%s533 + $0x18] sm:$0xf]
      %v541 = vld [vmem:[%s533 + $0x1c] sm:$0xf]
      %v542 = vld [vmem:[%s533 + $0x20] sm:$0xf]
      %v543 = vld [vmem:[%s533 + $0x24] sm:$0xf]
      %v544 = vld [vmem:[%s533 + $0x28] sm:$0xf]
      %v545 = vld [vmem:[%s533 + $0x2c] sm:$0xf]
      %v546 = vld [vmem:[%s533 + $0x30] sm:$0xf]
      %v547 = vld [vmem:[%s533 + $0x34] sm:$0xf]
      %v548 = vld [vmem:[%s533 + $0x38] sm:$0xf]
      %v549 = vld [vmem:[%s533 + $0x3c] sm:$0xf]
      %v550 = vld [vmem:[%s533 + $0x40] sm:$0xf]
      %v551 = vld [vmem:[%s533 + $0x44] sm:$0xf]
      %v552 = vld [vmem:[%s533 + $0x48] sm:$0xf]
      %v553 = vld [vmem:[%s533 + $0x4c] sm:$0xf]
      %v554 = vld [vmem:[%s533 + $0x50] sm:$0xf]
      %v555 = vld [vmem:[%s533 + $0x54] sm:$0xf]
      %v556 = vld [vmem:[%s533 + $0x58] sm:$0xf]
      %v557 = vld [vmem:[%s533 + $0x5c] sm:$0xf]
      %v559 = vunpack.c.l.b16 %v532
      %v560 = vunpack.c.h.b16 %v532
      %v561 = vpack.c.b16 %v559, %v277
      %v562 = vpack.c.b16 %v560, %v278
      %v588 = vunpack.c.l.b16 %v534
      %v589 = vunpack.c.l.b16 %v535
      %v590 = vunpack.c.l.b16 %v536
      %v591 = vunpack.c.l.b16 %v537
      %v592 = vunpack.c.l.b16 %v538
      %v593 = vunpack.c.l.b16 %v539
      %v594 = vunpack.c.l.b16 %v540
      %v595 = vunpack.c.l.b16 %v541
      %v596 = vunpack.c.l.b16 %v542
      %v597 = vunpack.c.l.b16 %v543
      %v598 = vunpack.c.l.b16 %v544
      %v599 = vunpack.c.l.b16 %v545
      %v600 = vunpack.c.l.b16 %v546
      %v601 = vunpack.c.l.b16 %v547
      %v602 = vunpack.c.l.b16 %v548
      %v603 = vunpack.c.l.b16 %v549
      %v604 = vunpack.c.l.b16 %v550
      %v605 = vunpack.c.l.b16 %v551
      %v606 = vunpack.c.l.b16 %v552
      %v607 = vunpack.c.l.b16 %v553
      %v608 = vunpack.c.l.b16 %v554
      %v609 = vunpack.c.l.b16 %v555
      %v610 = vunpack.c.l.b16 %v556
      %v611 = vunpack.c.l.b16 %v557
      %v612 = vpack.c.b16 %v589, %v588
      %v613 = vpack.c.b16 %v591, %v590
      %v614 = vpack.c.b16 %v593, %v592
      %v615 = vpack.c.b16 %v595, %v594
      %v616 = vpack.c.b16 %v597, %v596
      %v617 = vpack.c.b16 %v599, %v598
      %v618 = vpack.c.b16 %v601, %v600
      %v619 = vpack.c.b16 %v603, %v602
      %v620 = vpack.c.b16 %v605, %v604
      %v621 = vpack.c.b16 %v607, %v606
      %v622 = vpack.c.b16 %v609, %v608
      %v623 = vpack.c.b16 %v611, %v610
      %v637 = vsel %vm365, %v562, 0
      %639 = vmatprep.subr.bf16.mxu0 0
      %640 = vmatpush1.bf16.msra.mxu0 %v619
      %641 = vmatprep.subr.bf16.mxu0 0
      %642 = vmatpush1.bf16.msra.mxu0 %v618
      %643 = vmatprep.subr.bf16.mxu0 0
      %644 = vmatpush1.bf16.msra.mxu0 %v617
      %645 = vmatprep.subr.bf16.mxu0 0
      %646 = vmatpush1.bf16.msra.mxu0 %v616
      %647 = vmatprep.subr.bf16.mxu0 0
      %648 = vmatpush1.bf16.msra.mxu0 %v615
      %649 = vmatprep.subr.bf16.mxu0 0
      %650 = vmatpush1.bf16.msra.mxu0 %v614
      %651 = vmatprep.subr.bf16.mxu0 0
      %652 = vmatpush1.bf16.msra.mxu0 %v613
      %653 = vmatprep.subr.bf16.mxu0 0
      %654 = vmatpush1.bf16.msra.mxu0 %v612
      %655 = vmatprep.subr.bf16.mxu0 0
      %656 = vmatpush2.bf16.msra.mxu0 0
      %657 = vmatprep.subr.bf16.mxu0 0
      %658 = vmatpush2.bf16.msra.mxu0 0
      %659 = vmatprep.subr.bf16.mxu0 0
      %660 = vmatpush2.bf16.msra.mxu0 0
      %661 = vmatprep.subr.bf16.mxu0 0
      %662 = vmatpush2.bf16.msra.mxu0 0
      %663 = vmatprep.subr.bf16.mxu0 0
      %664 = vmatpush2.bf16.msra.mxu0 %v623
      %665 = vmatprep.subr.bf16.mxu0 0
      %666 = vmatpush2.bf16.msra.mxu0 %v622
      %667 = vmatprep.subr.bf16.mxu0 0
      %668 = vmatpush2.bf16.msra.mxu0 %v621
      %669 = vmatprep.subr.bf16.mxu0 0
      %670 = vmatpush2.bf16.msra.mxu0 %v620
      %671 = vmatprep.mubr.bf16.mxu0 %v637
      %672 = vmatmul.mubr.bf16.gmra.mxu0 %v561
      %v673 = vpop.f32.mrf.mxu0
      %v674 = vadd.f32 0.0, %v673
      %v675 = vpop.f32.mrf.mxu0
      %v676 = vpop.f32.mrf.mxu0
      %v677 = vadd.f32 0.0, %v676
      %v678 = vpop.f32.mrf.mxu0
      %679 = vdwg.mxu0
      %v680 = vadd.f32 %v526, %v674
      %v681 = vadd.f32 %v529, %v677
      %v682 = vld [vmem:[%s2] sm:$0x1]
      %v684 = vlaneseq
      %v685 = vshrl.u32 %v684, 7
      %v686 = vsub.s32 0, %v685
      %v687 = vrot.slane %v682, %v686
      %v689 = vadd.f32 %v680, %v687
      %v690 = vadd.f32 %v681, %v687
      %v691 = vld [vmem:[%s212] sm:$0xf]
      %v692 = vld [vmem:[%s212 + $0x4] sm:$0xf]
      %v693 = vunpack.c.l.bf16 %v691
      %v694 = vunpack.c.l.bf16 %v692
      %v695 = vadd.f32 %v689, %v693
      %v696 = vadd.f32 %v690, %v694
      %v697 = vmax.f32 %v695, 0.0
      %v698 = vmax.f32 %v696, 0.0
      %v699 = vpack.c.bf16 %v698, %v697
      %v701 = vunpack.c.l.b16 %v699
      %v702 = vunpack.c.h.b16 %v699
      %v703 = vpack.c.b16 %v701, %v701
      %v704 = vpack.c.b16 %v702, %v702
      %vm707 = vcmask 519168
      %708 = vst.msk [vmem:[%s217] sm:$0xf] %vm707, %v703
      %709 = vst.msk [vmem:[%s217 + $0x4] sm:$0xf] %vm707, %v704
      %p710 = scmp.lt.s32.totalorder %s15, 1
      %s711 = scalar_select %p710, %s15, 1
      %s712 = smul.addr %s711, 2
      %s713 = smul.addr %s712, 4
      %s714 = scalar_lea.vmem %s4, %s713
      // Predicated region
      $region37: #{_lambda_.37} parent=35 // pred_check
        %p715 = pneg %p127
      $region38: #{_lambda_.37} parent=35 // pred_check_branch
        %717 = sbr.rel (%p715) target = $region40
      $region39: #{_lambda_.37} parent=35 // pred_region
        _
      $region40: #{_lambda_.37} parent=35 // pred_fallthru
        _
    $region36: #{_lambda_.37} parent=5 // pred_fallthru
      _
    %p718 = scmp.le.s32.totalorder 2, %s10
    // Predicated region
    $region41: #{_lambda_.37} parent=5 // pred_check
      %p719 = pneg %p718
    $region42: #{_lambda_.37} parent=5 // pred_check_branch
      %721 = sbr.rel (%p719) target = $region44
    $region43: #{_lambda_.37} parent=5 // pred_region
      %s722 = ssub.s32 %s10, 2
      // Predicated region
      $region45: #{_lambda_.37} parent=43 // pred_check
        %p723 = pneg %p133
      $region46: #{_lambda_.37} parent=43 // pred_check_branch
        %725 = sbr.rel (%p723) target = $region48
      $region47: #{_lambda_.37} parent=43 // pred_region
        %p726 = scmp.lt.s32.totalorder %s16, 1
        %s727 = scalar_select %p726, %s16, 1
        %s728 = smul.addr %s727, 2
        %s729 = smul.addr %s728, 4
        %s730 = scalar_lea.vmem %s4, %s729
      $region48: #{_lambda_.37} parent=43 // pred_fallthru
        _
    $region44: #{_lambda_.37} parent=5 // pred_fallthru
      _
  $region6: #{_lambda_.37} parent=0 // loop_footer
    %s14 = sadd.s32 1, %s10
  $region7: #{_lambda_.37} parent=0 // loop_footer_branch
    %9 = sbr.rel target = $region3
  $region8: #{_lambda_.37} parent=0 // loop_exit
    _

// kernel: _lambda_.38
$region0: #{_lambda_.38}
  #allocation0 [shape = 'u32[]', space=smem, size = 0x4, offset = 0x4, fixed_abs, tag = 'smem constant byte address 0x4 - core index']
  #allocation1 [shape = 'u32[144,128]{1,0:T(1,128)}', space=vmem, size = 0x12000, scoped, tag = 'internal scratch']
  %s0 = inlined_call_operand.vmem [shape: bf16[2,24,192], index: 0, kind: input, shape index: {}]
  %s1 = inlined_call_operand.vmem [shape: bf16[3,192,64], index: 1, kind: input, shape index: {}]
  %s2 = inlined_call_operand.vmem [shape: f32[1,64], index: 2, kind: input, shape index: {}]
  %s3 = inlined_call_operand.vmem [shape: bf16[2,16,64], index: 3, kind: output, shape index: {}]
  %s4 = sld [smem:[#allocation0]]
  $region45: #{_lambda_.38} parent=0
    _
  %s6 = ssub.s32 1, %s4
  %s7 = scalar_select 0, %s6, %s4
  loop: start=0, step=1, limit=4
  $region2: #{_lambda_.38} parent=0 // loop_pre_header
    _
  $region3: #{_lambda_.38} parent=0 // loop_header
    %s9 = sphi 0, %s13
    %p10 = scmp.ge.s32.totalorder %s9, 4
    %s19 = sphi 0, %s21
    %s22 = sphi 0, %s19
    %s23 = sphi 0, %s22
    %s39 = sphi 0, %s23
    %s43 = sphi 0, %s43
    %s45 = sphi 0, %s43
    %s46 = sphi 0, %s45
    %s60 = sphi 0, %s46
    %s64 = sphi 0, %s64
    %s66 = sphi 0, %s64
    %s67 = sphi 0, %s66
    %s81 = sphi 0, %s67
    %s87 = sphi 0, %s89
    %s90 = sphi 0, %s87
    %s91 = sphi 0, %s90
    %s107 = sphi 0, %s91
  $region4: #{_lambda_.38} parent=0 // loop_header_branch
    %12 = sbr.rel (%p10) target = $region8
  $region5: #{_lambda_.38} parent=0 // loop_body
    %s14 = ssub.s32 %s9, 1
    %s15 = ssub.s32 %s9, 2
    %s16 = sadd.s32 %s9, 1
    %s17 = ssub.s32 %s9, %s16
    %p18 = scmp.eq.s32.totalorder %s17, 0
    %s20 = sadd.s32 %s19, 1
    %s21 = scalar_select %p18, %s19, %s20
    %p24 = pneg %p18
    %p25 = scmp.eq.s32.totalorder %s9, 1
    %p26 = por %p24, %p25
    %p27 = scmp.ne.s32.totalorder %s19, %s22
    %p28 = scmp.eq.s32.totalorder %s9, 0
    %p29 = por %p27, %p28
    %p30 = scmp.ne.s32.totalorder %s19, %s22
    %p31 = scmp.eq.s32.totalorder %s14, 1
    %p32 = por %p30, %p31
    %p33 = scmp.ne.s32.totalorder %s22, %s23
    %p34 = scmp.eq.s32.totalorder %s14, 0
    %p35 = por %p33, %p34
    %p36 = scmp.ne.s32.totalorder %s22, %s23
    %p37 = scmp.eq.s32.totalorder %s15, 1
    %p38 = por %p36, %p37
    %p40 = scmp.ne.s32.totalorder %s23, %s39
    %p41 = scmp.eq.s32.totalorder %s15, 0
    %p42 = por %p40, %p41
    %s44 = sadd.s32 %s43, 1
    %p47 = scmp.eq.s32.totalorder %s9, 1
    %p48 = scmp.ne.s32.totalorder %s43, %s45
    %p49 = scmp.eq.s32.totalorder %s9, 0
    %p50 = por %p48, %p49
    %p51 = scmp.ne.s32.totalorder %s43, %s45
    %p52 = scmp.eq.s32.totalorder %s14, 1
    %p53 = por %p51, %p52
    %p54 = scmp.ne.s32.totalorder %s45, %s46
    %p55 = scmp.eq.s32.totalorder %s14, 0
    %p56 = por %p54, %p55
    %p57 = scmp.ne.s32.totalorder %s45, %s46
    %p58 = scmp.eq.s32.totalorder %s15, 1
    %p59 = por %p57, %p58
    %p61 = scmp.ne.s32.totalorder %s46, %s60
    %p62 = scmp.eq.s32.totalorder %s15, 0
    %p63 = por %p61, %p62
    %s65 = sadd.s32 %s64, 1
    %p68 = scmp.eq.s32.totalorder %s9, 1
    %p69 = scmp.ne.s32.totalorder %s64, %s66
    %p70 = scmp.eq.s32.totalorder %s9, 0
    %p71 = por %p69, %p70
    %p72 = scmp.ne.s32.totalorder %s64, %s66
    %p73 = scmp.eq.s32.totalorder %s14, 1
    %p74 = por %p72, %p73
    %p75 = scmp.ne.s32.totalorder %s66, %s67
    %p76 = scmp.eq.s32.totalorder %s14, 0
    %p77 = por %p75, %p76
    %p78 = scmp.ne.s32.totalorder %s66, %s67
    %p79 = scmp.eq.s32.totalorder %s15, 1
    %p80 = por %p78, %p79
    %p82 = scmp.ne.s32.totalorder %s67, %s81
    %p83 = scmp.eq.s32.totalorder %s15, 0
    %p84 = por %p82, %p83
    %s85 = ssub.s32 %s9, %s16
    %p86 = scmp.eq.s32.totalorder %s85, 0
    %s88 = sadd.s32 %s87, 1
    %s89 = scalar_select %p86, %s87, %s88
    %p92 = pneg %p86
    %p93 = scmp.eq.s32.totalorder %s9, 1
    %p94 = por %p92, %p93
    %p95 = scmp.ne.s32.totalorder %s87, %s90
    %p96 = scmp.eq.s32.totalorder %s9, 0
    %p97 = por %p95, %p96
    %p98 = scmp.ne.s32.totalorder %s87, %s90
    %p99 = scmp.eq.s32.totalorder %s14, 1
    %p100 = por %p98, %p99
    %p101 = scmp.ne.s32.totalorder %s90, %s91
    %p102 = scmp.eq.s32.totalorder %s14, 0
    %p103 = por %p101, %p102
    %p104 = scmp.ne.s32.totalorder %s90, %s91
    %p105 = scmp.eq.s32.totalorder %s15, 1
    %p106 = por %p104, %p105
    %p108 = scmp.ne.s32.totalorder %s91, %s107
    %p109 = scmp.eq.s32.totalorder %s15, 0
    %p110 = por %p108, %p109
    %p111 = scmp.le.s32.totalorder 1, %s9
    %p112 = scmp.lt.s32.totalorder %s9, 3
    %p113 = pnand %p111, %p112
    %p114 = pneg %p113
    // Predicated region
    $region9: #{_lambda_.38} parent=5 // pred_check
      _
    $region10: #{_lambda_.38} parent=5 // pred_check_branch
      %116 = sbr.rel (%p113) target = $region12
    $region11: #{_lambda_.38} parent=5 // pred_region
      %s117 = ssub.s32 %s9, 1
      // Predicated region
      $region13: #{_lambda_.38} parent=11 // pred_check
        %p118 = pneg %p56
      $region14: #{_lambda_.38} parent=11 // pred_check_branch
        %120 = sbr.rel (%p118) target = $region16
      $region15: #{_lambda_.38} parent=11 // pred_region
        _
      $region16: #{_lambda_.38} parent=11 // pred_fallthru
        _
      // Predicated region
      $region17: #{_lambda_.38} parent=11 // pred_check
        %p121 = pneg %p77
      $region18: #{_lambda_.38} parent=11 // pred_check_branch
        %123 = sbr.rel (%p121) target = $region20
      $region19: #{_lambda_.38} parent=11 // pred_region
        _
      $region20: #{_lambda_.38} parent=11 // pred_fallthru
        _
    $region12: #{_lambda_.38} parent=5 // pred_fallthru
      _
    %p124 = scmp.lt.s32.totalorder %s9, 2
    // Predicated region
    $region21: #{_lambda_.38} parent=5 // pred_check
      %p125 = pneg %p124
    $region22: #{_lambda_.38} parent=5 // pred_check_branch
      %127 = sbr.rel (%p125) target = $region24
    $region23: #{_lambda_.38} parent=5 // pred_region
      // Predicated region
      $region25: #{_lambda_.38} parent=23 // pred_check
        %p128 = pneg %p29
      $region26: #{_lambda_.38} parent=23 // pred_check_branch
        %130 = sbr.rel (%p128) target = $region28
      $region27: #{_lambda_.38} parent=23 // pred_region
        %p131 = scmp.lt.s32.totalorder %s9, 1
        %s132 = scalar_select %p131, %s9, 1
        %s133 = smul.addr %s132, 6
        %s134 = smul.addr %s133, 4
        %s135 = scalar_lea.vmem %s0, %s134
      $region28: #{_lambda_.38} parent=23 // pred_fallthru
        _
    $region24: #{_lambda_.38} parent=5 // pred_fallthru
      _
    %p136 = scmp.le.s32.totalorder 1, %s9
    %p137 = scmp.lt.s32.totalorder %s9, 3
    %p138 = pnand %p136, %p137
    %p139 = pneg %p138
    // Predicated region
    $region29: #{_lambda_.38} parent=5 // pred_check
      _
    $region30: #{_lambda_.38} parent=5 // pred_check_branch
      %141 = sbr.rel (%p138) target = $region32
    $region31: #{_lambda_.38} parent=5 // pred_region
      %s142 = ssub.s32 %s9, 1
      %p143 = scmp.lt.s32.totalorder %s14, 1
      %s144 = scalar_select %p143, %s14, 1
      %s145 = smul.addr %s144, 6
      %s146 = smul.addr %s145, 4
      %s147 = scalar_lea.vmem %s0, %s146
      %p148 = pneg %p35
      %p149 = pneg %p32
      %p150 = pneg %p56
      %p151 = pneg %p53
      %p152 = pneg %p77
      %p153 = pneg %p74
      %p154 = pneg %p103
      %p155 = pneg %p100
      %p156 = scmp.lt.s32.totalorder %s14, 1
      %s157 = scalar_select %p156, %s14, 1
      %s158 = smul.addr %s157, 2
      %s159 = smul.addr %s158, 4
      %s160 = scalar_lea.vmem %s3, %s159
      %p161 = scmp.lt.s32.totalorder %s14, 1
      %s162 = scalar_select %p161, %s14, 1
      %s163 = smul.addr %s162, 6
      %s164 = smul.addr %s163, 4
      %s165 = scalar_lea.vmem %s0, %s164
      %p166 = scmp.lt.s32.totalorder %s14, 1
      %s167 = scalar_select %p166, %s14, 1
      %s168 = smul.addr %s167, 2
      %s169 = smul.addr %s168, 4
      %s170 = scalar_lea.vmem %s3, %s169
      %v172 = vld [vmem:[%s165] sm:$0xff]
      %v173 = vld [vmem:[%s165 + $0x8] sm:$0xff]
      %v174 = vld [vmem:[%s1] sm:$0xf]
      %v175 = vld [vmem:[%s1 + $0x4] sm:$0xf]
      %v176 = vld [vmem:[%s1 + $0x8] sm:$0xf]
      %v177 = vld [vmem:[%s1 + $0xc] sm:$0xf]
      %v178 = vld [vmem:[%s1 + $0x10] sm:$0xf]
      %v179 = vld [vmem:[%s1 + $0x14] sm:$0xf]
      %v180 = vld [vmem:[%s1 + $0x18] sm:$0xf]
      %v181 = vld [vmem:[%s1 + $0x1c] sm:$0xf]
      %v182 = vld [vmem:[%s1 + $0x20] sm:$0xf]
      %v183 = vld [vmem:[%s1 + $0x24] sm:$0xf]
      %v184 = vld [vmem:[%s1 + $0x28] sm:$0xf]
      %v185 = vld [vmem:[%s1 + $0x2c] sm:$0xf]
      %v186 = vld [vmem:[%s1 + $0x30] sm:$0xf]
      %v187 = vld [vmem:[%s1 + $0x34] sm:$0xf]
      %v188 = vld [vmem:[%s1 + $0x38] sm:$0xf]
      %v189 = vld [vmem:[%s1 + $0x3c] sm:$0xf]
      %v190 = vld [vmem:[%s1 + $0x40] sm:$0xf]
      %v191 = vld [vmem:[%s1 + $0x44] sm:$0xf]
      %v192 = vld [vmem:[%s1 + $0x48] sm:$0xf]
      %v193 = vld [vmem:[%s1 + $0x4c] sm:$0xf]
      %v194 = vld [vmem:[%s1 + $0x50] sm:$0xf]
      %v195 = vld [vmem:[%s1 + $0x54] sm:$0xf]
      %v196 = vld [vmem:[%s1 + $0x58] sm:$0xf]
      %v197 = vld [vmem:[%s1 + $0x5c] sm:$0xf]
      %v198 = vld [vmem:[%s165] sm:$0xcc]
      %v199 = vld [vmem:[%s165 + $0x10] sm:$0x33]
      %s200 = scalar_lea.vmem %s1, 96
      %v201 = vld [vmem:[%s200] sm:$0xf]
      %v202 = vld [vmem:[%s200 + $0x4] sm:$0xf]
      %v203 = vld [vmem:[%s200 + $0x8] sm:$0xf]
      %v204 = vld [vmem:[%s200 + $0xc] sm:$0xf]
      %v205 = vld [vmem:[%s200 + $0x10] sm:$0xf]
      %v206 = vld [vmem:[%s200 + $0x14] sm:$0xf]
      %v207 = vld [vmem:[%s200 + $0x18] sm:$0xf]
      %v208 = vld [vmem:[%s200 + $0x1c] sm:$0xf]
      %v209 = vld [vmem:[%s200 + $0x20] sm:$0xf]
      %v210 = vld [vmem:[%s200 + $0x24] sm:$0xf]
      %v211 = vld [vmem:[%s200 + $0x28] sm:$0xf]
      %v212 = vld [vmem:[%s200 + $0x2c] sm:$0xf]
      %v213 = vld [vmem:[%s200 + $0x30] sm:$0xf]
      %v214 = vld [vmem:[%s200 + $0x34] sm:$0xf]
      %v215 = vld [vmem:[%s200 + $0x38] sm:$0xf]
      %v216 = vld [vmem:[%s200 + $0x3c] sm:$0xf]
      %v217 = vld [vmem:[%s200 + $0x40] sm:$0xf]
      %v218 = vld [vmem:[%s200 + $0x44] sm:$0xf]
      %v219 = vld [vmem:[%s200 + $0x48] sm:$0xf]
      %v220 = vld [vmem:[%s200 + $0x4c] sm:$0xf]
      %v221 = vld [vmem:[%s200 + $0x50] sm:$0xf]
      %v222 = vld [vmem:[%s200 + $0x54] sm:$0xf]
      %v223 = vld [vmem:[%s200 + $0x58] sm:$0xf]
      %v224 = vld [vmem:[%s200 + $0x5c] sm:$0xf]
      %v228 = vunpack.c.l.b16 %v198
      %v229 = vunpack.c.h.b16 %v198
      %v230 = vunpack.c.l.b16 %v173
      %v231 = vunpack.c.h.b16 %v173
      %v232 = vunpack.c.l.b16 %v199
      %v233 = vunpack.c.h.b16 %v199
      %v234 = vpack.c.b16 %v230, %v228
      %v235 = vpack.c.b16 %v231, %v229
      %v236 = vpack.c.b16 %v232, %v232
      %v237 = vpack.c.b16 %v233, %v233
      %vm238 = vcmask 1045504
      %v239 = vrot.slane %v234, 2
      %v240 = vrot.slane %v236, 2
      %v241 = vsel %vm238, %v239, %v240
      %v242 = vrot.slane %v235, 2
      %v243 = vrot.slane %v237, 2
      %v244 = vsel %vm238, %v242, %v243
      %v270 = vunpack.c.l.b16 %v201
      %v271 = vunpack.c.l.b16 %v202
      %v272 = vunpack.c.l.b16 %v203
      %v273 = vunpack.c.l.b16 %v204
      %v274 = vunpack.c.l.b16 %v205
      %v275 = vunpack.c.l.b16 %v206
      %v276 = vunpack.c.l.b16 %v207
      %v277 = vunpack.c.l.b16 %v208
      %v278 = vunpack.c.l.b16 %v209
      %v279 = vunpack.c.l.b16 %v210
      %v280 = vunpack.c.l.b16 %v211
      %v281 = vunpack.c.l.b16 %v212
      %v282 = vunpack.c.l.b16 %v213
      %v283 = vunpack.c.l.b16 %v214
      %v284 = vunpack.c.l.b16 %v215
      %v285 = vunpack.c.l.b16 %v216
      %v286 = vunpack.c.l.b16 %v217
      %v287 = vunpack.c.l.b16 %v218
      %v288 = vunpack.c.l.b16 %v219
      %v289 = vunpack.c.l.b16 %v220
      %v290 = vunpack.c.l.b16 %v221
      %v291 = vunpack.c.l.b16 %v222
      %v292 = vunpack.c.l.b16 %v223
      %v293 = vunpack.c.l.b16 %v224
      %v294 = vpack.c.b16 %v271, %v270
      %v295 = vpack.c.b16 %v273, %v272
      %v296 = vpack.c.b16 %v275, %v274
      %v297 = vpack.c.b16 %v277, %v276
      %v298 = vpack.c.b16 %v279, %v278
      %v299 = vpack.c.b16 %v281, %v280
      %v300 = vpack.c.b16 %v283, %v282
      %v301 = vpack.c.b16 %v285, %v284
      %v302 = vpack.c.b16 %v287, %v286
      %v303 = vpack.c.b16 %v289, %v288
      %v304 = vpack.c.b16 %v291, %v290
      %v305 = vpack.c.b16 %v293, %v292
      %vm318 = vcmask 523264
      %v320 = vsel %vm318, %v244, 0
      %322 = vmatprep.subr.bf16.mxu0 0
      %323 = vmatpush1.bf16.msra.mxu0 %v301
      %324 = vmatprep.subr.bf16.mxu0 0
      %325 = vmatpush1.bf16.msra.mxu0 %v300
      %326 = vmatprep.subr.bf16.mxu0 0
      %327 = vmatpush1.bf16.msra.mxu0 %v299
      %328 = vmatprep.subr.bf16.mxu0 0
      %329 = vmatpush1.bf16.msra.mxu0 %v298
      %330 = vmatprep.subr.bf16.mxu0 0
      %331 = vmatpush1.bf16.msra.mxu0 %v297
      %332 = vmatprep.subr.bf16.mxu0 0
      %333 = vmatpush1.bf16.msra.mxu0 %v296
      %334 = vmatprep.subr.bf16.mxu0 0
      %335 = vmatpush1.bf16.msra.mxu0 %v295
      %336 = vmatprep.subr.bf16.mxu0 0
      %337 = vmatpush1.bf16.msra.mxu0 %v294
      %338 = vmatprep.subr.bf16.mxu0 0
      %339 = vmatpush2.bf16.msra.mxu0 0
      %340 = vmatprep.subr.bf16.mxu0 0
      %341 = vmatpush2.bf16.msra.mxu0 0
      %342 = vmatprep.subr.bf16.mxu0 0
      %343 = vmatpush2.bf16.msra.mxu0 0
      %344 = vmatprep.subr.bf16.mxu0 0
      %345 = vmatpush2.bf16.msra.mxu0 0
      %346 = vmatprep.subr.bf16.mxu0 0
      %347 = vmatpush2.bf16.msra.mxu0 %v305
      %348 = vmatprep.subr.bf16.mxu0 0
      %349 = vmatpush2.bf16.msra.mxu0 %v304
      %350 = vmatprep.subr.bf16.mxu0 0
      %351 = vmatpush2.bf16.msra.mxu0 %v303
      %352 = vmatprep.subr.bf16.mxu0 0
      %353 = vmatpush2.bf16.msra.mxu0 %v302
      %354 = vmatprep.mubr.bf16.mxu0 %v320
      %355 = vmatmul.mubr.bf16.gmra.mxu0 %v241
      %v356 = vpop.f32.mrf.mxu0
      %v357 = vadd.f32 0.0, %v356
      %v358 = vpop.f32.mrf.mxu0
      %v359 = vpop.f32.mrf.mxu0
      %v360 = vadd.f32 0.0, %v359
      %v361 = vpop.f32.mrf.mxu0
      %362 = vdwg.mxu0
      %v364 = vunpack.c.l.b16 %v172
      %v365 = vunpack.c.h.b16 %v172
      %v366 = vpack.c.b16 %v230, %v364
      %v367 = vpack.c.b16 %v231, %v365
      %v393 = vunpack.c.l.b16 %v174
      %v394 = vunpack.c.l.b16 %v175
      %v395 = vunpack.c.l.b16 %v176
      %v396 = vunpack.c.l.b16 %v177
      %v397 = vunpack.c.l.b16 %v178
      %v398 = vunpack.c.l.b16 %v179
      %v399 = vunpack.c.l.b16 %v180
      %v400 = vunpack.c.l.b16 %v181
      %v401 = vunpack.c.l.b16 %v182
      %v402 = vunpack.c.l.b16 %v183
      %v403 = vunpack.c.l.b16 %v184
      %v404 = vunpack.c.l.b16 %v185
      %v405 = vunpack.c.l.b16 %v186
      %v406 = vunpack.c.l.b16 %v187
      %v407 = vunpack.c.l.b16 %v188
      %v408 = vunpack.c.l.b16 %v189
      %v409 = vunpack.c.l.b16 %v190
      %v410 = vunpack.c.l.b16 %v191
      %v411 = vunpack.c.l.b16 %v192
      %v412 = vunpack.c.l.b16 %v193
      %v413 = vunpack.c.l.b16 %v194
      %v414 = vunpack.c.l.b16 %v195
      %v415 = vunpack.c.l.b16 %v196
      %v416 = vunpack.c.l.b16 %v197
      %v417 = vpack.c.b16 %v394, %v393
      %v418 = vpack.c.b16 %v396, %v395
      %v419 = vpack.c.b16 %v398, %v397
      %v420 = vpack.c.b16 %v400, %v399
      %v421 = vpack.c.b16 %v402, %v401
      %v422 = vpack.c.b16 %v404, %v403
      %v423 = vpack.c.b16 %v406, %v405
      %v424 = vpack.c.b16 %v408, %v407
      %v425 = vpack.c.b16 %v410, %v409
      %v426 = vpack.c.b16 %v412, %v411
      %v427 = vpack.c.b16 %v414, %v413
      %v428 = vpack.c.b16 %v416, %v415
      %v442 = vsel %vm318, %v367, 0
      %444 = vmatprep.subr.bf16.mxu0 0
      %445 = vmatpush1.bf16.msra.mxu0 %v424
      %446 = vmatprep.subr.bf16.mxu0 0
      %447 = vmatpush1.bf16.msra.mxu0 %v423
      %448 = vmatprep.subr.bf16.mxu0 0
      %449 = vmatpush1.bf16.msra.mxu0 %v422
      %450 = vmatprep.subr.bf16.mxu0 0
      %451 = vmatpush1.bf16.msra.mxu0 %v421
      %452 = vmatprep.subr.bf16.mxu0 0
      %453 = vmatpush1.bf16.msra.mxu0 %v420
      %454 = vmatprep.subr.bf16.mxu0 0
      %455 = vmatpush1.bf16.msra.mxu0 %v419
      %456 = vmatprep.subr.bf16.mxu0 0
      %457 = vmatpush1.bf16.msra.mxu0 %v418
      %458 = vmatprep.subr.bf16.mxu0 0
      %459 = vmatpush1.bf16.msra.mxu0 %v417
      %460 = vmatprep.subr.bf16.mxu0 0
      %461 = vmatpush2.bf16.msra.mxu0 0
      %462 = vmatprep.subr.bf16.mxu0 0
      %463 = vmatpush2.bf16.msra.mxu0 0
      %464 = vmatprep.subr.bf16.mxu0 0
      %465 = vmatpush2.bf16.msra.mxu0 0
      %466 = vmatprep.subr.bf16.mxu0 0
      %467 = vmatpush2.bf16.msra.mxu0 0
      %468 = vmatprep.subr.bf16.mxu0 0
      %469 = vmatpush2.bf16.msra.mxu0 %v428
      %470 = vmatprep.subr.bf16.mxu0 0
      %471 = vmatpush2.bf16.msra.mxu0 %v427
      %472 = vmatprep.subr.bf16.mxu0 0
      %473 = vmatpush2.bf16.msra.mxu0 %v426
      %474 = vmatprep.subr.bf16.mxu0 0
      %475 = vmatpush2.bf16.msra.mxu0 %v425
      %476 = vmatprep.mubr.bf16.mxu0 %v442
      %477 = vmatmul.mubr.bf16.gmra.mxu0 %v366
      %v478 = vpop.f32.mrf.mxu0
      %v479 = vadd.f32 %v357, %v478
      %v480 = vpop.f32.mrf.mxu0
      %v481 = vpop.f32.mrf.mxu0
      %v482 = vadd.f32 %v360, %v481
      %v483 = vpop.f32.mrf.mxu0
      %484 = vdwg.mxu0
      %v485 = vld [vmem:[%s165 + $0x10] sm:$0xff]
      %s486 = scalar_lea.vmem %s1, 192
      %v487 = vld [vmem:[%s486] sm:$0xf]
      %v488 = vld [vmem:[%s486 + $0x4] sm:$0xf]
      %v489 = vld [vmem:[%s486 + $0x8] sm:$0xf]
      %v490 = vld [vmem:[%s486 + $0xc] sm:$0xf]
      %v491 = vld [vmem:[%s486 + $0x10] sm:$0xf]
      %v492 = vld [vmem:[%s486 + $0x14] sm:$0xf]
      %v493 = vld [vmem:[%s486 + $0x18] sm:$0xf]
      %v494 = vld [vmem:[%s486 + $0x1c] sm:$0xf]
      %v495 = vld [vmem:[%s486 + $0x20] sm:$0xf]
      %v496 = vld [vmem:[%s486 + $0x24] sm:$0xf]
      %v497 = vld [vmem:[%s486 + $0x28] sm:$0xf]
      %v498 = vld [vmem:[%s486 + $0x2c] sm:$0xf]
      %v499 = vld [vmem:[%s486 + $0x30] sm:$0xf]
      %v500 = vld [vmem:[%s486 + $0x34] sm:$0xf]
      %v501 = vld [vmem:[%s486 + $0x38] sm:$0xf]
      %v502 = vld [vmem:[%s486 + $0x3c] sm:$0xf]
      %v503 = vld [vmem:[%s486 + $0x40] sm:$0xf]
      %v504 = vld [vmem:[%s486 + $0x44] sm:$0xf]
      %v505 = vld [vmem:[%s486 + $0x48] sm:$0xf]
      %v506 = vld [vmem:[%s486 + $0x4c] sm:$0xf]
      %v507 = vld [vmem:[%s486 + $0x50] sm:$0xf]
      %v508 = vld [vmem:[%s486 + $0x54] sm:$0xf]
      %v509 = vld [vmem:[%s486 + $0x58] sm:$0xf]
      %v510 = vld [vmem:[%s486 + $0x5c] sm:$0xf]
      %v512 = vunpack.c.l.b16 %v485
      %v513 = vunpack.c.h.b16 %v485
      %v514 = vpack.c.b16 %v512, %v230
      %v515 = vpack.c.b16 %v513, %v231
      %v541 = vunpack.c.l.b16 %v487
      %v542 = vunpack.c.l.b16 %v488
      %v543 = vunpack.c.l.b16 %v489
      %v544 = vunpack.c.l.b16 %v490
      %v545 = vunpack.c.l.b16 %v491
      %v546 = vunpack.c.l.b16 %v492
      %v547 = vunpack.c.l.b16 %v493
      %v548 = vunpack.c.l.b16 %v494
      %v549 = vunpack.c.l.b16 %v495
      %v550 = vunpack.c.l.b16 %v496
      %v551 = vunpack.c.l.b16 %v497
      %v552 = vunpack.c.l.b16 %v498
      %v553 = vunpack.c.l.b16 %v499
      %v554 = vunpack.c.l.b16 %v500
      %v555 = vunpack.c.l.b16 %v501
      %v556 = vunpack.c.l.b16 %v502
      %v557 = vunpack.c.l.b16 %v503
      %v558 = vunpack.c.l.b16 %v504
      %v559 = vunpack.c.l.b16 %v505
      %v560 = vunpack.c.l.b16 %v506
      %v561 = vunpack.c.l.b16 %v507
      %v562 = vunpack.c.l.b16 %v508
      %v563 = vunpack.c.l.b16 %v509
      %v564 = vunpack.c.l.b16 %v510
      %v565 = vpack.c.b16 %v542, %v541
      %v566 = vpack.c.b16 %v544, %v543
      %v567 = vpack.c.b16 %v546, %v545
      %v568 = vpack.c.b16 %v548, %v547
      %v569 = vpack.c.b16 %v550, %v549
      %v570 = vpack.c.b16 %v552, %v551
      %v571 = vpack.c.b16 %v554, %v553
      %v572 = vpack.c.b16 %v556, %v555
      %v573 = vpack.c.b16 %v558, %v557
      %v574 = vpack.c.b16 %v560, %v559
      %v575 = vpack.c.b16 %v562, %v561
      %v576 = vpack.c.b16 %v564, %v563
      %v590 = vsel %vm318, %v515, 0
      %592 = vmatprep.subr.bf16.mxu0 0
      %593 = vmatpush1.bf16.msra.mxu0 %v572
      %594 = vmatprep.subr.bf16.mxu0 0
      %595 = vmatpush1.bf16.msra.mxu0 %v571
      %596 = vmatprep.subr.bf16.mxu0 0
      %597 = vmatpush1.bf16.msra.mxu0 %v570
      %598 = vmatprep.subr.bf16.mxu0 0
      %599 = vmatpush1.bf16.msra.mxu0 %v569
      %600 = vmatprep.subr.bf16.mxu0 0
      %601 = vmatpush1.bf16.msra.mxu0 %v568
      %602 = vmatprep.subr.bf16.mxu0 0
      %603 = vmatpush1.bf16.msra.mxu0 %v567
      %604 = vmatprep.subr.bf16.mxu0 0
      %605 = vmatpush1.bf16.msra.mxu0 %v566
      %606 = vmatprep.subr.bf16.mxu0 0
      %607 = vmatpush1.bf16.msra.mxu0 %v565
      %608 = vmatprep.subr.bf16.mxu0 0
      %609 = vmatpush2.bf16.msra.mxu0 0
      %610 = vmatprep.subr.bf16.mxu0 0
      %611 = vmatpush2.bf16.msra.mxu0 0
      %612 = vmatprep.subr.bf16.mxu0 0
      %613 = vmatpush2.bf16.msra.mxu0 0
      %614 = vmatprep.subr.bf16.mxu0 0
      %615 = vmatpush2.bf16.msra.mxu0 0
      %616 = vmatprep.subr.bf16.mxu0 0
      %617 = vmatpush2.bf16.msra.mxu0 %v576
      %618 = vmatprep.subr.bf16.mxu0 0
      %619 = vmatpush2.bf16.msra.mxu0 %v575
      %620 = vmatprep.subr.bf16.mxu0 0
      %621 = vmatpush2.bf16.msra.mxu0 %v574
      %622 = vmatprep.subr.bf16.mxu0 0
      %623 = vmatpush2.bf16.msra.mxu0 %v573
      %624 = vmatprep.mubr.bf16.mxu0 %v590
      %625 = vmatmul.mubr.bf16.gmra.mxu0 %v514
      %v626 = vpop.f32.mrf.mxu0
      %v627 = vadd.f32 0.0, %v626
      %v628 = vpop.f32.mrf.mxu0
      %v629 = vpop.f32.mrf.mxu0
      %v630 = vadd.f32 0.0, %v629
      %v631 = vpop.f32.mrf.mxu0
      %632 = vdwg.mxu0
      %v633 = vadd.f32 %v479, %v627
      %v634 = vadd.f32 %v482, %v630
      %v635 = vld [vmem:[%s2] sm:$0x1]
      %v637 = vlaneseq
      %v638 = vshrl.u32 %v637, 7
      %v639 = vsub.s32 0, %v638
      %v640 = vrot.slane %v635, %v639
      %v642 = vadd.f32 %v633, %v640
      %v643 = vadd.f32 %v634, %v640
      %v644 = vmax.f32 %v642, 0.0
      %v645 = vmax.f32 %v643, 0.0
      %v646 = vpack.c.bf16 %v645, %v644
      %v648 = vunpack.c.l.b16 %v646
      %v649 = vunpack.c.h.b16 %v646
      %v650 = vpack.c.b16 %v648, %v648
      %v651 = vpack.c.b16 %v649, %v649
      %vm654 = vcmask 519168
      %655 = vst.msk [vmem:[%s170] sm:$0xf] %vm654, %v650
      %656 = vst.msk [vmem:[%s170 + $0x4] sm:$0xf] %vm654, %v651
      %p657 = scmp.lt.s32.totalorder %s14, 1
      %s658 = scalar_select %p657, %s14, 1
      %s659 = smul.addr %s658, 2
      %s660 = smul.addr %s659, 4
      %s661 = scalar_lea.vmem %s3, %s660
      // Predicated region
      $region33: #{_lambda_.38} parent=31 // pred_check
        %p662 = pneg %p100
      $region34: #{_lambda_.38} parent=31 // pred_check_branch
        %664 = sbr.rel (%p662) target = $region36
      $region35: #{_lambda_.38} parent=31 // pred_region
        _
      $region36: #{_lambda_.38} parent=31 // pred_fallthru
        _
    $region32: #{_lambda_.38} parent=5 // pred_fallthru
      _
    %p665 = scmp.le.s32.totalorder 2, %s9
    // Predicated region
    $region37: #{_lambda_.38} parent=5 // pred_check
      %p666 = pneg %p665
    $region38: #{_lambda_.38} parent=5 // pred_check_branch
      %668 = sbr.rel (%p666) target = $region40
    $region39: #{_lambda_.38} parent=5 // pred_region
      %s669 = ssub.s32 %s9, 2
      // Predicated region
      $region41: #{_lambda_.38} parent=39 // pred_check
        %p670 = pneg %p106
      $region42: #{_lambda_.38} parent=39 // pred_check_branch
        %672 = sbr.rel (%p670) target = $region44
      $region43: #{_lambda_.38} parent=39 // pred_region
        %p673 = scmp.lt.s32.totalorder %s15, 1
        %s674 = scalar_select %p673, %s15, 1
        %s675 = smul.addr %s674, 2
        %s676 = smul.addr %s675, 4
        %s677 = scalar_lea.vmem %s3, %s676
      $region44: #{_lambda_.38} parent=39 // pred_fallthru
        _
    $region40: #{_lambda_.38} parent=5 // pred_fallthru
      _
  $region6: #{_lambda_.38} parent=0 // loop_footer
    %s13 = sadd.s32 1, %s9
  $region7: #{_lambda_.38} parent=0 // loop_footer_branch
    %8 = sbr.rel target = $region3
  $region8: #{_lambda_.38} parent=0 // loop_exit
    _

</llo_original>
